<compile_context>
chip_gen: v5e
topology: v5e:2x2
jax: 0.10.0
libtpu: 0.0.40
codegen_flags: <defaults>
</compile_context>

<pallas_src>
import functools
import math

import numpy as np

import jax
import jax.numpy as jnp
from jax.experimental import pallas as pl
from jax.experimental.pallas import tpu as pltpu

# ----------------------------- config (small synthetic Flux) ------------------
IN_CHANNELS = 4
VEC_IN_DIM = 8
CONTEXT_IN_DIM = 8
HIDDEN = 32
MLP_RATIO = 2.0
NUM_HEADS = 2
HEAD_DIM = HIDDEN // NUM_HEADS            # 16
AXES_DIM = (4, 6, 6)                      # sums to HEAD_DIM
THETA = 10000
MLP_HIDDEN = int(HIDDEN * MLP_RATIO)      # 64
DEPTH_DOUBLE = 3
DEPTH_SINGLE = 3

COMPUTE_DTYPE = jnp.bfloat16
APPROX_SOFTMAX_RECIP = True   # exact-recip fallback for strict parity tests

_PAR1 = pltpu.CompilerParams(dimension_semantics=("parallel",))


# ----------------------------- in-kernel math helpers --------------------------
def _gelu_tanh(x):
    c = math.sqrt(2.0 / math.pi)
    return 0.5 * x * (1.0 + jnp.tanh(c * (x + 0.044715 * x * x * x)))


def _silu(x):
    return x * jax.nn.sigmoid(x)


def _layernorm_mod(x, scale, shift):
    """LayerNorm(no affine, eps=1e-6) fused with (1+scale)*x + shift (fp32)."""
    mu = jnp.mean(x, axis=-1, keepdims=True)
    var = jnp.mean((x - mu) ** 2, axis=-1, keepdims=True)
    xn = (x - mu) * jax.lax.rsqrt(var + 1e-6)
    return (1.0 + scale) * xn + shift


# ----------------------------- generic (small) linear kernel -------------------
def _linear_kernel(x_ref, w_ref, b_ref, o_ref, *, act_in):
    x = x_ref[...]
    if act_in == "silu":
        x = _silu(x.astype(jnp.float32)).astype(x_ref.dtype)
    y = jnp.dot(x, w_ref[...], preferred_element_type=jnp.float32) \
        + b_ref[...].astype(jnp.float32)
    o_ref[...] = y.astype(o_ref.dtype)


def linear_pallas(x, w, b, act_in="none"):
    """x: (..., K); w: (K, N); b: (N,). Only used for the small projections
    (img_in / txt_in / the fused all-block modulation matmul); the heavy matmuls
    live inside the fused block kernels below."""
    orig = x.shape
    K = orig[-1]
    M = math.prod(orig[:-1])
    N = w.shape[1]
    x2 = x.reshape(M, K)
    # TODO(synk): for large, non-256-aligned M switch to a pl.cdiv grid with a
    # masked remainder tile; at the shapes used here M is a single small tile.
    tm = 256 if (M % 256 == 0) else M
    kern = functools.partial(_linear_kernel, act_in=act_in)
    out = pl.pallas_call(
        kern,
        grid=(M // tm,),
        in_specs=[pl.BlockSpec((tm, K), lambda i: (i, 0)),
                  pl.BlockSpec((K, N), lambda i: (0, 0)),
                  pl.BlockSpec((1, N), lambda i: (0, 0))],
        out_specs=pl.BlockSpec((tm, N), lambda i: (i, 0)),
        out_shape=jax.ShapeDtypeStruct((M, N), x.dtype),
        compiler_params=_PAR1,
    )(x2, w, b.reshape(1, N))
    return out.reshape(*orig[:-1], N)


# ----------------------------- fused MLP embedder kernel -----------------------
def _mlp_embedder_kernel(x_ref, w1_ref, b1_ref, w2_ref, b2_ref, o_ref):
    h = jnp.dot(x_ref[...], w1_ref[...], preferred_element_type=jnp.float32) \
        + b1_ref[...].astype(jnp.float32)
    h = _silu(h).astype(x_ref.dtype)
    o_ref[...] = (jnp.dot(h, w2_ref[...], preferred_element_type=jnp.float32)
                  + b2_ref[...].astype(jnp.float32)).astype(o_ref.dtype)


def mlp_embedder_pallas(x, p):
    """out_layer(silu(in_layer(x))) in one kernel; x: (B, K)."""
    M, K = x.shape
    H1 = p["in"]["w"].shape[1]
    H2 = p["out"]["w"].shape[1]
    return pl.pallas_call(
        _mlp_embedder_kernel,
        grid=(1,),
        in_specs=[pl.BlockSpec((M, K), lambda i: (0, 0)),
                  pl.BlockSpec((K, H1), lambda i: (0, 0)),
                  pl.BlockSpec((1, H1), lambda i: (0, 0)),
                  pl.BlockSpec((H1, H2), lambda i: (0, 0)),
                  pl.BlockSpec((1, H2), lambda i: (0, 0))],
        out_specs=pl.BlockSpec((M, H2), lambda i: (0, 0)),
        out_shape=jax.ShapeDtypeStruct((M, H2), x.dtype),
        compiler_params=pltpu.CompilerParams(dimension_semantics=("arbitrary",)),
    )(x, p["in"]["w"], p["in"]["b"].reshape(1, H1),
      p["out"]["w"], p["out"]["b"].reshape(1, H2))


# ----------------------------- fused premix kernel -----------------------------
# LayerNorm + modulation + Linear(+bias) + (optional) per-head QK-RMSNorm restricted
# to the q|k columns, per batch element.
def _premix_kernel(x_ref, mod_ref, w_ref, b_ref, *rest, head_dim, split, rms_width):
    if rms_width:
        grp_ref, grpt_ref, rsc_ref = rest[:3]
        o_refs = rest[3:]
    else:
        o_refs = rest

    x = x_ref[...].astype(jnp.float32)
    sh = mod_ref[0:1, :].astype(jnp.float32)          # shift row (second-minor index)
    sc = mod_ref[1:2, :].astype(jnp.float32)          # scale row
    xm = _layernorm_mod(x, sc, sh).astype(x_ref.dtype)   # MXU operand stays bf16

    y = jnp.dot(xm, w_ref[...], preferred_element_type=jnp.float32) \
        + b_ref[...].astype(jnp.float32)

    if rms_width:
        # per-head RMS stats only over the q|k columns (first 2*D of y) via a tiny
        # 0/1 grouping matmul.
        # TODO(synk): at prod widths replace with a per-head reshape + mean over
        # head_dim (pure VPU/XLU) to keep the MXU free for the main matmul.
        qk = y[:, :rms_width]
        ss = jnp.dot(qk * qk, grp_ref[...], preferred_element_type=jnp.float32)   # (L, 2H)
        rrms = jax.lax.rsqrt(ss * (1.0 / head_dim) + 1e-6)
        bc = jnp.dot(rrms, grpt_ref[...], preferred_element_type=jnp.float32)     # (L, 2D)
        qk = qk * bc * rsc_ref[...]

    odt = o_refs[0].dtype
    if split is None:
        if rms_width:
            o_refs[0][:, :rms_width] = qk.astype(odt)
            o_refs[0][:, rms_width:] = y[:, rms_width:].astype(odt)
        else:
            o_refs[0][...] = y.astype(odt)
    else:
        if rms_width:
            o_refs[0][:, :rms_width] = qk.astype(odt)
            o_refs[0][:, rms_width:] = y[:, rms_width:split].astype(odt)
        else:
            o_refs[0][...] = y[:, :split].astype(odt)
        o_refs[1][...] = y[:, split:].astype(o_refs[1].dtype)


def premix_pallas(x, mod, w, b, *, rms=None, split=None):
    """x: (B, L, D); mod: (B, C, D) with row0=shift, row1=scale; w: (D, N); b: (N,).
    rms: (grp (2D, 2H), grp_t (2H, 2D), col_scale (1, 2D)) applied to the first 2D
    columns of the matmul output (q|k)."""
    B, L, D = x.shape
    N = w.shape[1]
    C = mod.shape[1]
    use_rms = rms is not None

    in_specs = [
        pl.BlockSpec((None, L, D), lambda i: (i, 0, 0)),
        pl.BlockSpec((None, C, D), lambda i: (i, 0, 0)),
        # TODO(synk): at prod sizes tile (L, N, K) with an fp32 VMEM accumulator and
        # mark the weight spec pl.Buffered(1) (index_map is grid-constant).
        pl.BlockSpec((D, N), lambda i: (0, 0)),
        pl.BlockSpec((1, N), lambda i: (0, 0)),
    ]
    args = [x, mod, w, b.reshape(1, N)]
    rms_width = 0
    if use_rms:
        grp, grpt, rsc = rms
        G = grp.shape[1]
        rms_width = grp.shape[0]
        in_specs += [pl.BlockSpec((rms_width, G), lambda i: (0, 0)),
                     pl.BlockSpec((G, rms_width), lambda i: (0, 0)),
                     pl.BlockSpec((1, rms_width), lambda i: (0, 0))]
        args += [grp, grpt, rsc]

    if split is None:
        out_shape = jax.ShapeDtypeStruct((B, L, N), x.dtype)
        out_specs = pl.BlockSpec((None, L, N), lambda i: (i, 0, 0))
    else:
        out_shape = (jax.ShapeDtypeStruct((B, L, split), x.dtype),
                     jax.ShapeDtypeStruct((B, L, N - split), x.dtype))
        out_specs = (pl.BlockSpec((None, L, split), lambda i: (i, 0, 0)),
                     pl.BlockSpec((None, L, N - split), lambda i: (i, 0, 0)))

    kern = functools.partial(_premix_kernel, head_dim=HEAD_DIM, split=split,
                             rms_width=rms_width)
    return pl.pallas_call(
        kern, grid=(B,), in_specs=in_specs, out_specs=out_specs, out_shape=out_shape,
        compiler_params=_PAR1,
    )(*args)


# ----------------------------- attention kernel (RoPE inside, bf16 MXU) --------
def _attn_kernel(qkv_ref, cos_ref, sin_ref, o_ref, *,
                 num_heads, head_dim, hidden, approx_recip):
    # qkv column layout per head (after the one-time weight permutation):
    #   [even RoPE coords | odd RoPE coords]  -> RoPE is a contiguous-slice VPU op.
    hd2 = head_dim // 2
    cos = cos_ref[...].astype(jnp.float32)            # (L, hd2)
    sin = sin_ref[...].astype(jnp.float32)
    scale = 1.0 / math.sqrt(head_dim)
    dt = qkv_ref.dtype
    nt = (((1,), (1,)), ((), ()))                     # contract last dims (q @ k^T)
    # TODO(synk): at prod (24 heads, L~4K) use lax.fori_loop over heads with pl.ds and
    # flash-tile the kv axis (online softmax) so (L, L) scores never materialize; at
    # prod head_dim=128 the per-head output stores below are already lane-dense.
    for h in range(num_heads):
        b0 = h * head_dim
        q = qkv_ref[:, b0:b0 + head_dim].astype(jnp.float32)
        k = qkv_ref[:, hidden + b0:hidden + b0 + head_dim].astype(jnp.float32)
        v = qkv_ref[:, 2 * hidden + b0:2 * hidden + b0 + head_dim]
        q1, q2 = q[:, :hd2], q[:, hd2:]
        k1, k2 = k[:, :hd2], k[:, hd2:]
        # RoPE in fp32 on the VPU, then back to the input dtype for the MXU.
        qr1 = (cos * q1 - sin * q2).astype(dt)
        qr2 = (sin * q1 + cos * q2).astype(dt)
        kr1 = (cos * k1 - sin * k2).astype(dt)
        kr2 = (sin * k1 + cos * k2).astype(dt)
        # QK^T as two half-width NT contractions (avoids an in-kernel lane concat).
        s = (jax.lax.dot_general(qr1, kr1, nt, preferred_element_type=jnp.float32)
             + jax.lax.dot_general(qr2, kr2, nt, preferred_element_type=jnp.float32))
        s = s * scale
        m = jnp.max(s, axis=-1, keepdims=True)
        e = jnp.exp(s - m)
        den = jnp.sum(e, axis=-1, keepdims=True)
        if approx_recip:
            p = e * pl.reciprocal(den, approx=True)
        else:
            p = e / den
        o = jnp.dot(p.astype(v.dtype), v, preferred_element_type=jnp.float32)
        o_ref[:, b0:b0 + head_dim] = o.astype(o_ref.dtype)


def attention_pallas(qkv, cos, sin, *, approx_recip=APPROX_SOFTMAX_RECIP):
    """qkv: (B, L, 3*HIDDEN) laid out [q | k | v] (q/k columns in NEOX-permuted order).
    cos/sin: (B, L, HEAD_DIM//2) shared across heads. Returns (B, L, HIDDEN) written
    directly in 'B L (H D)' layout by the kernel (no XLA reshape/transpose)."""
    B, L, threeh = qkv.shape
    hidden = threeh // 3
    hd2 = HEAD_DIM // 2
    kern = functools.partial(_attn_kernel, num_heads=NUM_HEADS, head_dim=HEAD_DIM,
                             hidden=hidden, approx_recip=approx_recip)
    return pl.pallas_call(
        kern, grid=(B,),
        in_specs=[pl.BlockSpec((None, L, threeh), lambda i: (i, 0, 0)),
                  pl.BlockSpec((None, L, hd2), lambda i: (i, 0, 0)),
                  pl.BlockSpec((None, L, hd2), lambda i: (i, 0, 0))],
        out_specs=pl.BlockSpec((None, L, hidden), lambda i: (i, 0, 0)),
        out_shape=jax.ShapeDtypeStruct((B, L, hidden), qkv.dtype),
        compiler_params=_PAR1,
    )(qkv, cos, sin)


# ----------------------------- fused post-attention kernels --------------------
def _double_post_kernel(x_ref, a_ref, mod_ref, wp_ref, bp_ref, w0_ref, b0_ref,
                        w2_ref, b2_ref, o_ref):
    g1 = mod_ref[2:3, :].astype(jnp.float32)
    sh2 = mod_ref[3:4, :].astype(jnp.float32)
    sc2 = mod_ref[4:5, :].astype(jnp.float32)
    g2 = mod_ref[5:6, :].astype(jnp.float32)

    x = x_ref[...].astype(jnp.float32)
    proj = jnp.dot(a_ref[...], wp_ref[...], preferred_element_type=jnp.float32) \
        + bp_ref[...].astype(jnp.float32)
    h1 = x + g1 * proj                                             # residual 1

    xm = _layernorm_mod(h1, sc2, sh2).astype(x_ref.dtype)
    hmid = _gelu_tanh(jnp.dot(xm, w0_ref[...], preferred_element_type=jnp.float32)
                      + b0_ref[...].astype(jnp.float32)).astype(x_ref.dtype)
    mlp = jnp.dot(hmid, w2_ref[...], preferred_element_type=jnp.float32) \
        + b2_ref[...].astype(jnp.float32)
    o_ref[...] = (h1 + g2 * mlp).astype(o_ref.dtype)               # residual 2


def double_post_pallas(x, attn, mod, sp):
    B, L, D = x.shape
    C = mod.shape[1]
    MLP = sp["mlp0_w"].shape[1]
    return pl.pallas_call(
        _double_post_kernel, grid=(B,),
        in_specs=[pl.BlockSpec((None, L, D), lambda i: (i, 0, 0)),
                  pl.BlockSpec((None, L, D), lambda i: (i, 0, 0)),
                  pl.BlockSpec((None, C, D), lambda i: (i, 0, 0)),
                  pl.BlockSpec((D, D), lambda i: (0, 0)),
                  pl.BlockSpec((1, D), lambda i: (0, 0)),
                  pl.BlockSpec((D, MLP), lambda i: (0, 0)),
                  pl.BlockSpec((1, MLP), lambda i: (0, 0)),
                  pl.BlockSpec((MLP, D), lambda i: (0, 0)),
                  pl.BlockSpec((1, D), lambda i: (0, 0))],
        out_specs=pl.BlockSpec((None, L, D), lambda i: (i, 0, 0)),
        out_shape=jax.ShapeDtypeStruct((B, L, D), x.dtype),
        compiler_params=_PAR1,
    )(x, attn, mod,
      sp["proj_w"], sp["proj_b"].reshape(1, D),
      sp["mlp0_w"], sp["mlp0_b"].reshape(1, MLP),
      sp["mlp2_w"], sp["mlp2_b"].reshape(1, D))


def _single_post_kernel(x_ref, a_ref, mlp_ref, mod_ref, w2a_ref, w2m_ref, b2_ref,
                        o_ref):
    g = mod_ref[2:3, :].astype(jnp.float32)
    x = x_ref[...].astype(jnp.float32)
    act = _gelu_tanh(mlp_ref[...].astype(jnp.float32)).astype(mlp_ref.dtype)
    out = (jnp.dot(a_ref[...], w2a_ref[...], preferred_element_type=jnp.float32)
           + jnp.dot(act, w2m_ref[...], preferred_element_type=jnp.float32)
           + b2_ref[...].astype(jnp.float32))
    o_ref[...] = (x + g * out).astype(o_ref.dtype)


def single_post_pallas(x, attn, mlp, mod, w2a, w2m, b2):
    B, L, D = x.shape
    MLP = mlp.shape[-1]
    C = mod.shape[1]
    return pl.pallas_call(
        _single_post_kernel, grid=(B,),
        in_specs=[pl.BlockSpec((None, L, D), lambda i: (i, 0, 0)),
                  pl.BlockSpec((None, L, D), lambda i: (i, 0, 0)),
                  pl.BlockSpec((None, L, MLP), lambda i: (i, 0, 0)),
                  pl.BlockSpec((None, C, D), lambda i: (i, 0, 0)),
                  pl.BlockSpec((D, D), lambda i: (0, 0)),
                  pl.BlockSpec((MLP, D), lambda i: (0, 0)),
                  pl.BlockSpec((1, D), lambda i: (0, 0))],
        out_specs=pl.BlockSpec((None, L, D), lambda i: (i, 0, 0)),
        out_shape=jax.ShapeDtypeStruct((B, L, D), x.dtype),
        compiler_params=_PAR1,
    )(x, attn, mlp, mod, w2a, w2m, b2.reshape(1, D))


# ----------------------------- glue (embeddings, rope tables) ------------------
def timestep_embedding(t, dim, max_period=10000, time_factor=1000.0):
    t = time_factor * t
    half = dim // 2
    freqs = jnp.exp(-math.log(max_period) * jnp.arange(half, dtype=jnp.float32) / half)
    args = t[:, None].astype(jnp.float32) * freqs[None]
    return jnp.concatenate([jnp.cos(args), jnp.sin(args)], axis=-1)


def rope_cos_sin(ids):
    """ids: (B, L, n_axes) -> cos, sin each (B, L, HEAD_DIM//2) (one entry per
    rotation pair; pair ordering matches the reference EmbedND axis concatenation)."""
    cos_parts, sin_parts = [], []
    for i, d in enumerate(AXES_DIM):
        scale = jnp.arange(0, d, 2, dtype=jnp.float32) / d
        omega = 1.0 / (THETA ** scale)
        ang = ids[..., i][..., None].astype(jnp.float32) * omega    # (B, L, d//2)
        cos_parts.append(jnp.cos(ang))
        sin_parts.append(jnp.sin(ang))
    return jnp.concatenate(cos_parts, axis=-1), jnp.concatenate(sin_parts, axis=-1)


# ----------------------------- model forward ----------------------------------
def double_block(rt, blk, img, txt, img_mod, txt_mod, cos, sin):
    L_txt = txt.shape[1]
    rms_i = (rt["grp"], rt["grpt"], blk["img"]["rsc"])
    rms_t = (rt["grp"], rt["grpt"], blk["txt"]["rsc"])

    img_qkv = premix_pallas(img, img_mod, blk["img"]["qkv_w"], blk["img"]["qkv_b"],
                            rms=rms_i)
    txt_qkv = premix_pallas(txt, txt_mod, blk["txt"]["qkv_w"], blk["txt"]["qkv_b"],
                            rms=rms_t)

    qkv = jnp.concatenate([txt_qkv, img_qkv], axis=1)          # txt tokens first
    attn = attention_pallas(qkv, cos, sin)                     # (B, L_txt+L_img, HIDDEN)
    txt_attn, img_attn = attn[:, :L_txt], attn[:, L_txt:]

    img = double_post_pallas(img, img_attn, img_mod, blk["img"])
    txt = double_post_pallas(txt, txt_attn, txt_mod, blk["txt"])
    return img, txt


def single_block(rt, blk, x, mod, cos, sin):
    rms = (rt["grp"], rt["grpt"], blk["rsc"])
    qkv, mlp = premix_pallas(x, mod, blk["lin1_w"], blk["lin1_b"],
                             rms=rms, split=3 * HIDDEN)
    attn = attention_pallas(qkv, cos, sin)
    # lin2 split by rows so cat(attn, gelu(mlp)) @ W2 needs no concat
    return single_post_pallas(x, attn, mlp, mod, blk["w2a"], blk["w2m"], blk["lin2_b"])


def flux_forward(rt, img, img_ids, txt, txt_ids, timesteps, y):
    dt = rt["img_in"]["w"].dtype
    img = linear_pallas(img.astype(dt), rt["img_in"]["w"], rt["img_in"]["b"])
    txt = linear_pallas(txt.astype(dt), rt["txt_in"]["w"], rt["txt_in"]["b"])

    temb = timestep_embedding(timesteps, 256).astype(dt)
    vec = mlp_embedder_pallas(temb, rt["time_in"])
    vec = vec + mlp_embedder_pallas(y.astype(dt), rt["vector_in"])

    ids = jnp.concatenate([txt_ids, img_ids], axis=1)
    cos, sin = rope_cos_sin(ids)

    B, D = img.shape[0], HIDDEN
    # One fused silu(vec) @ W matmul for every block's modulation + final adaLN.
    mod_all = linear_pallas(vec, rt["mod_w"], rt["mod_b"], act_in="silu")
    off = 0

    for blk in rt["double"]:
        img_mod = mod_all[:, off:off + 6 * D].reshape(B, 6, D); off += 6 * D
        txt_mod = mod_all[:, off:off + 6 * D].reshape(B, 6, D); off += 6 * D
        img, txt = double_block(rt, blk, img, txt, img_mod, txt_mod, cos, sin)

    x = jnp.concatenate([txt, img], axis=1)
    L_txt = txt.shape[1]
    for blk in rt["single"]:
        smod = mod_all[:, off:off + 3 * D].reshape(B, 3, D); off += 3 * D
        x = single_block(rt, blk, x, smod, cos, sin)
    x = x[:, L_txt:, :]

    fmod = mod_all[:, off:off + 2 * D].reshape(B, 2, D)
    out = premix_pallas(x, fmod, rt["final"]["w"], rt["final"]["b"], rms=None, split=None)
    return out.astype(jnp.float32)


# ----------------------------- parameter preparation ---------------------------
def prepare_params(p, dtype=COMPUTE_DTYPE):
    """One-time (outside jit): cast params to bf16, apply the NEOX column permutation
    to the q/k columns of the QKV / lin1 weights (and the RMS scales), split lin2 by
    rows, and concatenate every block's modulation weights into one fused matmul."""
    def c(a):
        return jnp.asarray(a).astype(dtype)

    within = np.concatenate([np.arange(0, HEAD_DIM, 2), np.arange(1, HEAD_DIM, 2)])
    perm_h = (np.arange(NUM_HEADS)[:, None] * HEAD_DIM + within[None, :]).reshape(-1)

    def qk_col_perm(n_cols):
        return np.concatenate([perm_h, HIDDEN + perm_h, np.arange(2 * HIDDEN, n_cols)])

    def make_rsc(q_scale, k_scale):
        qp = jnp.asarray(q_scale)[within]
        kp = jnp.asarray(k_scale)[within]
        return jnp.concatenate([jnp.tile(qp, NUM_HEADS),
                                jnp.tile(kp, NUM_HEADS)])[None, :].astype(jnp.float32)

    grp = (np.arange(2 * HIDDEN)[:, None] // HEAD_DIM
           == np.arange(2 * NUM_HEADS)[None, :]).astype(np.float32)

    rt = {
        "img_in": {"w": c(p["img_in"]["w"]), "b": c(p["img_in"]["b"])},
        "txt_in": {"w": c(p["txt_in"]["w"]), "b": c(p["txt_in"]["b"])},
        "time_in": {"in": {"w": c(p["time_in"]["in"]["w"]), "b": c(p["time_in"]["in"]["b"])},
                    "out": {"w": c(p["time_in"]["out"]["w"]), "b": c(p["time_in"]["out"]["b"])}},
        "vector_in": {"in": {"w": c(p["vector_in"]["in"]["w"]), "b": c(p["vector_in"]["in"]["b"])},
                      "out": {"w": c(p["vector_in"]["out"]["w"]), "b": c(p["vector_in"]["out"]["b"])}},
        "grp": jnp.asarray(grp),
        "grpt": jnp.asarray(grp.T),
        "double": [],
        "single": [],
    }

    mod_ws, mod_bs = [], []
    for blk in p["double"]:
        dblk = {}
        for s in ("img", "txt"):
            sp = blk[s]
            mod_ws.append(sp["mod"]["w"]); mod_bs.append(sp["mod"]["b"])
            perm = qk_col_perm(3 * HIDDEN)
            dblk[s] = {
                "qkv_w": c(sp["qkv"]["w"][:, perm]),
                "qkv_b": c(sp["qkv"]["b"][perm]),
                "rsc": make_rsc(sp["q_scale"], sp["k_scale"]),
                "proj_w": c(sp["proj"]["w"]), "proj_b": c(sp["proj"]["b"]),
                "mlp0_w": c(sp["mlp0"]["w"]), "mlp0_b": c(sp["mlp0"]["b"]),
                "mlp2_w": c(sp["mlp2"]["w"]), "mlp2_b": c(sp["mlp2"]["b"]),
            }
        rt["double"].append(dblk)

    for blk in p["single"]:
        mod_ws.append(blk["mod"]["w"]); mod_bs.append(blk["mod"]["b"])
        n1 = blk["lin1"]["w"].shape[1]
        perm = qk_col_perm(n1)
        rt["single"].append({
            "lin1_w": c(blk["lin1"]["w"][:, perm]),
            "lin1_b": c(blk["lin1"]["b"][perm]),
            "rsc": make_rsc(blk["q_scale"], blk["k_scale"]),
            "w2a": c(blk["lin2"]["w"][:HIDDEN]),
            "w2m": c(blk["lin2"]["w"][HIDDEN:]),
            "lin2_b": c(blk["lin2"]["b"]),
        })

    mod_ws.append(p["final"]["adaln"]["w"]); mod_bs.append(p["final"]["adaln"]["b"])
    rt["final"] = {"w": c(p["final"]["linear"]["w"]), "b": c(p["final"]["linear"]["b"])}
    rt["mod_w"] = c(jnp.concatenate(mod_ws, axis=1))
    rt["mod_b"] = c(jnp.concatenate(mod_bs, axis=0))
    return rt


# ----------------------------- deterministic parameter init --------------------
class KeyGen:
    def __init__(self, key):
        self.key = key

    def __call__(self):
        self.key, sub = jax.random.split(self.key)
        return sub


def init_linear(kg, din, dout):
    w = jax.random.normal(kg(), (din, dout), jnp.float32) * (1.0 / math.sqrt(din))
    b = jax.random.normal(kg(), (dout,), jnp.float32) * 0.01
    return {"w": w, "b": b}


def init_params(key):
    kg = KeyGen(key)
    p = {
        "img_in": init_linear(kg, IN_CHANNELS, HIDDEN),
        "txt_in": init_linear(kg, CONTEXT_IN_DIM, HIDDEN),
        "time_in": {"in": init_linear(kg, 256, HIDDEN),
                    "out": init_linear(kg, HIDDEN, HIDDEN)},
        "vector_in": {"in": init_linear(kg, VEC_IN_DIM, HIDDEN),
                      "out": init_linear(kg, HIDDEN, HIDDEN)},
        "double": [],
        "single": [],
    }
    for _ in range(DEPTH_DOUBLE):
        blk = {}
        for s in ("img", "txt"):
            blk[s] = {
                "mod": init_linear(kg, HIDDEN, 6 * HIDDEN),
                "qkv": init_linear(kg, HIDDEN, 3 * HIDDEN),
                "q_scale": jnp.ones((HEAD_DIM,), jnp.float32),
                "k_scale": jnp.ones((HEAD_DIM,), jnp.float32),
                "proj": init_linear(kg, HIDDEN, HIDDEN),
                "mlp0": init_linear(kg, HIDDEN, MLP_HIDDEN),
                "mlp2": init_linear(kg, MLP_HIDDEN, HIDDEN),
            }
        p["double"].append(blk)
    for _ in range(DEPTH_SINGLE):
        p["single"].append({
            "mod": init_linear(kg, HIDDEN, 3 * HIDDEN),
            "lin1": init_linear(kg, HIDDEN, 3 * HIDDEN + MLP_HIDDEN),
            "lin2": init_linear(kg, HIDDEN + MLP_HIDDEN, HIDDEN),
            "q_scale": jnp.ones((HEAD_DIM,), jnp.float32),
            "k_scale": jnp.ones((HEAD_DIM,), jnp.float32),
        })
    p["final"] = {
        "adaln": init_linear(kg, HIDDEN, 2 * HIDDEN),
        "linear": init_linear(kg, HIDDEN, 1 * 1 * IN_CHANNELS),
    }
    return p


# ----------------------------- main --------------------------------------------
if __name__ == "__main__":
    params = init_params(jax.random.PRNGKey(0))
    rt_params = prepare_params(params)          # bf16 cast + column permutation, once

    B, L_IMG, L_TXT = 2, 16, 8
    kk = jax.random.split(jax.random.PRNGKey(1), 4)
    img = jax.random.normal(kk[0], (B, L_IMG, IN_CHANNELS), jnp.float32)
    txt = jax.random.normal(kk[1], (B, L_TXT, CONTEXT_IN_DIM), jnp.float32)
    y = jax.random.normal(kk[2], (B, VEC_IN_DIM), jnp.float32)
    timesteps = jax.random.uniform(kk[3], (B,), jnp.float32)

    pos = jnp.arange(L_IMG, dtype=jnp.float32)
    img_ids = jnp.stack([jnp.zeros_like(pos), pos // 4, pos % 4], axis=-1)
    img_ids = jnp.broadcast_to(img_ids[None], (B, L_IMG, 3))
    txt_ids = jnp.zeros((B, L_TXT, 3), jnp.float32)

    fwd = jax.jit(flux_forward)
    out = fwd(rt_params, img, img_ids, txt, txt_ids, timesteps, y)
    jax.block_until_ready(out)
    assert out.shape == (B, L_IMG, IN_CHANNELS), out.shape
    assert bool(jnp.all(jnp.isfinite(out)))
    print("KERNEL_OK")
</pallas_src>

<mosaic_0001>
module attributes {stable_mosaic.version = 11 : i64} {
  func.func @_mlp_embedder_kernel(%arg0: i32, %arg1: memref<2x8xbf16, #tpu.memory_space<vmem>>, %arg2: memref<8x32xbf16, #tpu.memory_space<vmem>>, %arg3: memref<1x32xbf16, #tpu.memory_space<vmem>>, %arg4: memref<32x32xbf16, #tpu.memory_space<vmem>>, %arg5: memref<1x32xbf16, #tpu.memory_space<vmem>>, %arg6: memref<2x32xbf16, #tpu.memory_space<vmem>>) attributes {dimension_semantics = [#tpu.dimension_semantics<arbitrary>], iteration_bounds = array<i64: 1>, scalar_prefetch = 0 : i64, scratch_operands = 0 : i64, tpu.core_type = #tpu.core_type<tc>, window_params = [{pipeline_mode = #tpu.pipeline_mode<synchronous>, transform_indices = @transform_0, window_bounds = array<i64: 2, 8>}, {pipeline_mode = #tpu.pipeline_mode<synchronous>, transform_indices = @transform_1, window_bounds = array<i64: 8, 32>}, {pipeline_mode = #tpu.pipeline_mode<synchronous>, transform_indices = @transform_2, window_bounds = array<i64: 1, 32>}, {pipeline_mode = #tpu.pipeline_mode<synchronous>, transform_indices = @transform_3, window_bounds = array<i64: 32, 32>}, {pipeline_mode = #tpu.pipeline_mode<synchronous>, transform_indices = @transform_4, window_bounds = array<i64: 1, 32>}, {pipeline_mode = #tpu.pipeline_mode<synchronous>, transform_indices = @transform_5, window_bounds = array<i64: 2, 32>}]} {
    %c0 = arith.constant 0 : index
    %c0_0 = arith.constant 0 : index
    %0 = vector.load %arg1[%c0, %c0_0] : memref<2x8xbf16, #tpu.memory_space<vmem>>, vector<2x8xbf16>
    %c0_1 = arith.constant 0 : index
    %c0_2 = arith.constant 0 : index
    %1 = vector.load %arg2[%c0_1, %c0_2] : memref<8x32xbf16, #tpu.memory_space<vmem>>, vector<8x32xbf16>
    %cst = arith.constant dense<0.000000e+00> : vector<2x32xf32>
    %2 = tpu.matmul %0, %1, %cst {dimension_numbers = #tpu.dot_dimension_numbers<[1], [0], [0], [1], [0, 0, 1, 1], [], []>} : vector<2x8xbf16>, vector<8x32xbf16>, vector<2x32xf32> -> vector<2x32xf32>
    %c0_3 = arith.constant 0 : index
    %c0_4 = arith.constant 0 : index
    %3 = vector.load %arg3[%c0_3, %c0_4] : memref<1x32xbf16, #tpu.memory_space<vmem>>, vector<1x32xbf16>
    %4 = arith.extf %3 : vector<1x32xbf16> to vector<1x32xf32>
    %5 = vector.broadcast %4 : vector<1x32xf32> to vector<2x32xf32>
    %6 = arith.addf %2, %5 : vector<2x32xf32>
    %7 = arith.negf %6 : vector<2x32xf32>
    %8 = math.exp %7 : vector<2x32xf32>
    %cst_5 = arith.constant 1.000000e+00 : f32
    %9 = vector.broadcast %cst_5 : f32 to vector<2x32xf32>
    %10 = arith.addf %9, %8 : vector<2x32xf32>
    %11 = arith.divf %9, %10 : vector<2x32xf32>
    %12 = arith.mulf %6, %11 : vector<2x32xf32>
    %13 = arith.truncf %12 : vector<2x32xf32> to vector<2x32xbf16>
    %c0_6 = arith.constant 0 : index
    %c0_7 = arith.constant 0 : index
    %14 = vector.load %arg4[%c0_6, %c0_7] : memref<32x32xbf16, #tpu.memory_space<vmem>>, vector<32x32xbf16>
    %cst_8 = arith.constant dense<0.000000e+00> : vector<2x32xf32>
    %15 = tpu.matmul %13, %14, %cst_8 {dimension_numbers = #tpu.dot_dimension_numbers<[1], [0], [0], [1], [0, 0, 1, 1], [], []>} : vector<2x32xbf16>, vector<32x32xbf16>, vector<2x32xf32> -> vector<2x32xf32>
    %c0_9 = arith.constant 0 : index
    %c0_10 = arith.constant 0 : index
    %16 = vector.load %arg5[%c0_9, %c0_10] : memref<1x32xbf16, #tpu.memory_space<vmem>>, vector<1x32xbf16>
    %17 = arith.extf %16 : vector<1x32xbf16> to vector<1x32xf32>
    %18 = vector.broadcast %17 : vector<1x32xf32> to vector<2x32xf32>
    %19 = arith.addf %15, %18 : vector<2x32xf32>
    %20 = arith.truncf %19 : vector<2x32xf32> to vector<2x32xbf16>
    %c0_11 = arith.constant 0 : index
    %c0_12 = arith.constant 0 : index
    %21 = vector.load %arg6[%c0_11, %c0_12] : memref<2x32xbf16, #tpu.memory_space<vmem>>, vector<2x32xbf16>
    tpu.vector_store %arg6[%c0_11, %c0_12], %20 {strides = array<i32>} : memref<2x32xbf16, #tpu.memory_space<vmem>>, vector<2x32xbf16>,
    return
  }
  func.func @transform_0(%arg0: i32) -> (i32, i32) {
    %c0_i32 = arith.constant 0 : i32
    %c0_i32_0 = arith.constant 0 : i32
    %c0_i32_1 = arith.constant 0 : i32
    return %c0_i32, %c0_i32_0 : i32, i32
  }
  func.func @transform_1(%arg0: i32) -> (i32, i32) {
    %c0_i32 = arith.constant 0 : i32
    %c0_i32_0 = arith.constant 0 : i32
    %c0_i32_1 = arith.constant 0 : i32
    return %c0_i32, %c0_i32_0 : i32, i32
  }
  func.func @transform_2(%arg0: i32) -> (i32, i32) {
    %c0_i32 = arith.constant 0 : i32
    %c0_i32_0 = arith.constant 0 : i32
    %c0_i32_1 = arith.constant 0 : i32
    return %c0_i32, %c0_i32_0 : i32, i32
  }
  func.func @transform_3(%arg0: i32) -> (i32, i32) {
    %c0_i32 = arith.constant 0 : i32
    %c0_i32_0 = arith.constant 0 : i32
    %c0_i32_1 = arith.constant 0 : i32
    return %c0_i32, %c0_i32_0 : i32, i32
  }
  func.func @transform_4(%arg0: i32) -> (i32, i32) {
    %c0_i32 = arith.constant 0 : i32
    %c0_i32_0 = arith.constant 0 : i32
    %c0_i32_1 = arith.constant 0 : i32
    return %c0_i32, %c0_i32_0 : i32, i32
  }
  func.func @transform_5(%arg0: i32) -> (i32, i32) {
    %c0_i32 = arith.constant 0 : i32
    %c0_i32_0 = arith.constant 0 : i32
    %c0_i32_1 = arith.constant 0 : i32
    return %c0_i32, %c0_i32_0 : i32, i32
  }
}

module attributes {stable_mosaic.version = 11 : i64} {
  func.func @_mlp_embedder_kernel(%arg0: i32, %arg1: memref<2x256xbf16, #tpu.memory_space<vmem>>, %arg2: memref<256x32xbf16, #tpu.memory_space<vmem>>, %arg3: memref<1x32xbf16, #tpu.memory_space<vmem>>, %arg4: memref<32x32xbf16, #tpu.memory_space<vmem>>, %arg5: memref<1x32xbf16, #tpu.memory_space<vmem>>, %arg6: memref<2x32xbf16, #tpu.memory_space<vmem>>) attributes {dimension_semantics = [#tpu.dimension_semantics<arbitrary>], iteration_bounds = array<i64: 1>, scalar_prefetch = 0 : i64, scratch_operands = 0 : i64, tpu.core_type = #tpu.core_type<tc>, window_params = [{pipeline_mode = #tpu.pipeline_mode<synchronous>, transform_indices = @transform_0, window_bounds = array<i64: 2, 256>}, {pipeline_mode = #tpu.pipeline_mode<synchronous>, transform_indices = @transform_1, window_bounds = array<i64: 256, 32>}, {pipeline_mode = #tpu.pipeline_mode<synchronous>, transform_indices = @transform_2, window_bounds = array<i64: 1, 32>}, {pipeline_mode = #tpu.pipeline_mode<synchronous>, transform_indices = @transform_3, window_bounds = array<i64: 32, 32>}, {pipeline_mode = #tpu.pipeline_mode<synchronous>, transform_indices = @transform_4, window_bounds = array<i64: 1, 32>}, {pipeline_mode = #tpu.pipeline_mode<synchronous>, transform_indices = @transform_5, window_bounds = array<i64: 2, 32>}]} {
    %c0 = arith.constant 0 : index
    %c0_0 = arith.constant 0 : index
    %0 = vector.load %arg1[%c0, %c0_0] : memref<2x256xbf16, #tpu.memory_space<vmem>>, vector<2x256xbf16>
    %c0_1 = arith.constant 0 : index
    %c0_2 = arith.constant 0 : index
    %1 = vector.load %arg2[%c0_1, %c0_2] : memref<256x32xbf16, #tpu.memory_space<vmem>>, vector<256x32xbf16>
    %cst = arith.constant dense<0.000000e+00> : vector<2x32xf32>
    %2 = tpu.matmul %0, %1, %cst {dimension_numbers = #tpu.dot_dimension_numbers<[1], [0], [0], [1], [0, 0, 1, 1], [], []>} : vector<2x256xbf16>, vector<256x32xbf16>, vector<2x32xf32> -> vector<2x32xf32>
    %c0_3 = arith.constant 0 : index
    %c0_4 = arith.constant 0 : index
    %3 = vector.load %arg3[%c0_3, %c0_4] : memref<1x32xbf16, #tpu.memory_space<vmem>>, vector<1x32xbf16>
    %4 = arith.extf %3 : vector<1x32xbf16> to vector<1x32xf32>
    %5 = vector.broadcast %4 : vector<1x32xf32> to vector<2x32xf32>
    %6 = arith.addf %2, %5 : vector<2x32xf32>
    %7 = arith.negf %6 : vector<2x32xf32>
    %8 = math.exp %7 : vector<2x32xf32>
    %cst_5 = arith.constant 1.000000e+00 : f32
    %9 = vector.broadcast %cst_5 : f32 to vector<2x32xf32>
    %10 = arith.addf %9, %8 : vector<2x32xf32>
    %11 = arith.divf %9, %10 : vector<2x32xf32>
    %12 = arith.mulf %6, %11 : vector<2x32xf32>
    %13 = arith.truncf %12 : vector<2x32xf32> to vector<2x32xbf16>
    %c0_6 = arith.constant 0 : index
    %c0_7 = arith.constant 0 : index
    %14 = vector.load %arg4[%c0_6, %c0_7] : memref<32x32xbf16, #tpu.memory_space<vmem>>, vector<32x32xbf16>
    %cst_8 = arith.constant dense<0.000000e+00> : vector<2x32xf32>
    %15 = tpu.matmul %13, %14, %cst_8 {dimension_numbers = #tpu.dot_dimension_numbers<[1], [0], [0], [1], [0, 0, 1, 1], [], []>} : vector<2x32xbf16>, vector<32x32xbf16>, vector<2x32xf32> -> vector<2x32xf32>
    %c0_9 = arith.constant 0 : index
    %c0_10 = arith.constant 0 : index
    %16 = vector.load %arg5[%c0_9, %c0_10] : memref<1x32xbf16, #tpu.memory_space<vmem>>, vector<1x32xbf16>
    %17 = arith.extf %16 : vector<1x32xbf16> to vector<1x32xf32>
    %18 = vector.broadcast %17 : vector<1x32xf32> to vector<2x32xf32>
    %19 = arith.addf %15, %18 : vector<2x32xf32>
    %20 = arith.truncf %19 : vector<2x32xf32> to vector<2x32xbf16>
    %c0_11 = arith.constant 0 : index
    %c0_12 = arith.constant 0 : index
    %21 = vector.load %arg6[%c0_11, %c0_12] : memref<2x32xbf16, #tpu.memory_space<vmem>>, vector<2x32xbf16>
    tpu.vector_store %arg6[%c0_11, %c0_12], %20 {strides = array<i32>} : memref<2x32xbf16, #tpu.memory_space<vmem>>, vector<2x32xbf16>,
    return
  }
  func.func @transform_0(%arg0: i32) -> (i32, i32) {
    %c0_i32 = arith.constant 0 : i32
    %c0_i32_0 = arith.constant 0 : i32
    %c0_i32_1 = arith.constant 0 : i32
    return %c0_i32, %c0_i32_0 : i32, i32
  }
  func.func @transform_1(%arg0: i32) -> (i32, i32) {
    %c0_i32 = arith.constant 0 : i32
    %c0_i32_0 = arith.constant 0 : i32
    %c0_i32_1 = arith.constant 0 : i32
    return %c0_i32, %c0_i32_0 : i32, i32
  }
  func.func @transform_2(%arg0: i32) -> (i32, i32) {
    %c0_i32 = arith.constant 0 : i32
    %c0_i32_0 = arith.constant 0 : i32
    %c0_i32_1 = arith.constant 0 : i32
    return %c0_i32, %c0_i32_0 : i32, i32
  }
  func.func @transform_3(%arg0: i32) -> (i32, i32) {
    %c0_i32 = arith.constant 0 : i32
    %c0_i32_0 = arith.constant 0 : i32
    %c0_i32_1 = arith.constant 0 : i32
    return %c0_i32, %c0_i32_0 : i32, i32
  }
  func.func @transform_4(%arg0: i32) -> (i32, i32) {
    %c0_i32 = arith.constant 0 : i32
    %c0_i32_0 = arith.constant 0 : i32
    %c0_i32_1 = arith.constant 0 : i32
    return %c0_i32, %c0_i32_0 : i32, i32
  }
  func.func @transform_5(%arg0: i32) -> (i32, i32) {
    %c0_i32 = arith.constant 0 : i32
    %c0_i32_0 = arith.constant 0 : i32
    %c0_i32_1 = arith.constant 0 : i32
    return %c0_i32, %c0_i32_0 : i32, i32
  }
}

module attributes {stable_mosaic.version = 11 : i64} {
  func.func @_linear_kernel(%arg0: i32, %arg1: memref<2x32xbf16, #tpu.memory_space<vmem>>, %arg2: memref<32x1504xbf16, #tpu.memory_space<vmem>>, %arg3: memref<1x1504xbf16, #tpu.memory_space<vmem>>, %arg4: memref<2x1504xbf16, #tpu.memory_space<vmem>>) attributes {dimension_semantics = [#tpu.dimension_semantics<parallel>], iteration_bounds = array<i64: 1>, scalar_prefetch = 0 : i64, scratch_operands = 0 : i64, tpu.core_type = #tpu.core_type<tc>, window_params = [{transform_indices = @transform_0, window_bounds = array<i64: 2, 32>}, {pipeline_mode = #tpu.pipeline_mode<synchronous>, transform_indices = @transform_1, window_bounds = array<i64: 32, 1504>}, {pipeline_mode = #tpu.pipeline_mode<synchronous>, transform_indices = @transform_2, window_bounds = array<i64: 1, 1504>}, {transform_indices = @transform_3, window_bounds = array<i64: 2, 1504>}]} {
    %c0 = arith.constant 0 : index
    %c0_0 = arith.constant 0 : index
    %0 = vector.load %arg1[%c0, %c0_0] : memref<2x32xbf16, #tpu.memory_space<vmem>>, vector<2x32xbf16>
    %1 = arith.extf %0 : vector<2x32xbf16> to vector<2x32xf32>
    %2 = arith.negf %1 : vector<2x32xf32>
    %3 = math.exp %2 : vector<2x32xf32>
    %cst = arith.constant 1.000000e+00 : f32
    %4 = vector.broadcast %cst : f32 to vector<2x32xf32>
    %5 = arith.addf %4, %3 : vector<2x32xf32>
    %6 = arith.divf %4, %5 : vector<2x32xf32>
    %7 = arith.mulf %1, %6 : vector<2x32xf32>
    %8 = arith.truncf %7 : vector<2x32xf32> to vector<2x32xbf16>
    %c0_1 = arith.constant 0 : index
    %c0_2 = arith.constant 0 : index
    %9 = vector.load %arg2[%c0_1, %c0_2] : memref<32x1504xbf16, #tpu.memory_space<vmem>>, vector<32x1504xbf16>
    %cst_3 = arith.constant dense<0.000000e+00> : vector<2x1504xf32>
    %10 = tpu.matmul %8, %9, %cst_3 {dimension_numbers = #tpu.dot_dimension_numbers<[1], [0], [0], [1], [0, 0, 1, 1], [], []>} : vector<2x32xbf16>, vector<32x1504xbf16>, vector<2x1504xf32> -> vector<2x1504xf32>
    %c0_4 = arith.constant 0 : index
    %c0_5 = arith.constant 0 : index
    %11 = vector.load %arg3[%c0_4, %c0_5] : memref<1x1504xbf16, #tpu.memory_space<vmem>>, vector<1x1504xbf16>
    %12 = arith.extf %11 : vector<1x1504xbf16> to vector<1x1504xf32>
    %13 = vector.broadcast %12 : vector<1x1504xf32> to vector<2x1504xf32>
    %14 = arith.addf %10, %13 : vector<2x1504xf32>
    %15 = arith.truncf %14 : vector<2x1504xf32> to vector<2x1504xbf16>
    %c0_6 = arith.constant 0 : index
    %c0_7 = arith.constant 0 : index
    %16 = vector.load %arg4[%c0_6, %c0_7] : memref<2x1504xbf16, #tpu.memory_space<vmem>>, vector<2x1504xbf16>
    tpu.vector_store %arg4[%c0_6, %c0_7], %15 {strides = array<i32>} : memref<2x1504xbf16, #tpu.memory_space<vmem>>, vector<2x1504xbf16>,
    return
  }
  func.func @transform_0(%arg0: i32) -> (i32, i32) {
    %c0_i32 = arith.constant 0 : i32
    %c0_i32_0 = arith.constant 0 : i32
    return %arg0, %c0_i32 : i32, i32
  }
  func.func @transform_1(%arg0: i32) -> (i32, i32) {
    %c0_i32 = arith.constant 0 : i32
    %c0_i32_0 = arith.constant 0 : i32
    %c0_i32_1 = arith.constant 0 : i32
    return %c0_i32, %c0_i32_0 : i32, i32
  }
  func.func @transform_2(%arg0: i32) -> (i32, i32) {
    %c0_i32 = arith.constant 0 : i32
    %c0_i32_0 = arith.constant 0 : i32
    %c0_i32_1 = arith.constant 0 : i32
    return %c0_i32, %c0_i32_0 : i32, i32
  }
  func.func @transform_3(%arg0: i32) -> (i32, i32) {
    %c0_i32 = arith.constant 0 : i32
    %c0_i32_0 = arith.constant 0 : i32
    return %arg0, %c0_i32 : i32, i32
  }
}

module attributes {stable_mosaic.version = 11 : i64} {
  func.func @_linear_kernel(%arg0: i32, %arg1: memref<32x4xbf16, #tpu.memory_space<vmem>>, %arg2: memref<4x32xbf16, #tpu.memory_space<vmem>>, %arg3: memref<1x32xbf16, #tpu.memory_space<vmem>>, %arg4: memref<32x32xbf16, #tpu.memory_space<vmem>>) attributes {dimension_semantics = [#tpu.dimension_semantics<parallel>], iteration_bounds = array<i64: 1>, scalar_prefetch = 0 : i64, scratch_operands = 0 : i64, tpu.core_type = #tpu.core_type<tc>, window_params = [{transform_indices = @transform_0, window_bounds = array<i64: 32, 4>}, {pipeline_mode = #tpu.pipeline_mode<synchronous>, transform_indices = @transform_1, window_bounds = array<i64: 4, 32>}, {pipeline_mode = #tpu.pipeline_mode<synchronous>, transform_indices = @transform_2, window_bounds = array<i64: 1, 32>}, {transform_indices = @transform_3, window_bounds = array<i64: 32, 32>}]} {
    %c0 = arith.constant 0 : index
    %c0_0 = arith.constant 0 : index
    %0 = vector.load %arg1[%c0, %c0_0] : memref<32x4xbf16, #tpu.memory_space<vmem>>, vector<32x4xbf16>
    %c0_1 = arith.constant 0 : index
    %c0_2 = arith.constant 0 : index
    %1 = vector.load %arg2[%c0_1, %c0_2] : memref<4x32xbf16, #tpu.memory_space<vmem>>, vector<4x32xbf16>
    %cst = arith.constant dense<0.000000e+00> : vector<32x32xf32>
    %2 = tpu.matmul %0, %1, %cst {dimension_numbers = #tpu.dot_dimension_numbers<[1], [0], [0], [1], [0, 0, 1, 1], [], []>} : vector<32x4xbf16>, vector<4x32xbf16>, vector<32x32xf32> -> vector<32x32xf32>
    %c0_3 = arith.constant 0 : index
    %c0_4 = arith.constant 0 : index
    %3 = vector.load %arg3[%c0_3, %c0_4] : memref<1x32xbf16, #tpu.memory_space<vmem>>, vector<1x32xbf16>
    %4 = arith.extf %3 : vector<1x32xbf16> to vector<1x32xf32>
    %5 = vector.broadcast %4 : vector<1x32xf32> to vector<32x32xf32>
    %6 = arith.addf %2, %5 : vector<32x32xf32>
    %7 = arith.truncf %6 : vector<32x32xf32> to vector<32x32xbf16>
    %c0_5 = arith.constant 0 : index
    %c0_6 = arith.constant 0 : index
    %8 = vector.load %arg4[%c0_5, %c0_6] : memref<32x32xbf16, #tpu.memory_space<vmem>>, vector<32x32xbf16>
    tpu.vector_store %arg4[%c0_5, %c0_6], %7 {strides = array<i32>} : memref<32x32xbf16, #tpu.memory_space<vmem>>, vector<32x32xbf16>,
    return
  }
  func.func @transform_0(%arg0: i32) -> (i32, i32) {
    %c0_i32 = arith.constant 0 : i32
    %c0_i32_0 = arith.constant 0 : i32
    return %arg0, %c0_i32 : i32, i32
  }
  func.func @transform_1(%arg0: i32) -> (i32, i32) {
    %c0_i32 = arith.constant 0 : i32
    %c0_i32_0 = arith.constant 0 : i32
    %c0_i32_1 = arith.constant 0 : i32
    return %c0_i32, %c0_i32_0 : i32, i32
  }
  func.func @transform_2(%arg0: i32) -> (i32, i32) {
    %c0_i32 = arith.constant 0 : i32
    %c0_i32_0 = arith.constant 0 : i32
    %c0_i32_1 = arith.constant 0 : i32
    return %c0_i32, %c0_i32_0 : i32, i32
  }
  func.func @transform_3(%arg0: i32) -> (i32, i32) {
    %c0_i32 = arith.constant 0 : i32
    %c0_i32_0 = arith.constant 0 : i32
    return %arg0, %c0_i32 : i32, i32
  }
}

module attributes {stable_mosaic.version = 11 : i64} {
  func.func @_premix_kernel(%arg0: i32, %arg1: memref<1x16x32xbf16, #tpu.memory_space<vmem>>, %arg2: memref<1x6x32xbf16, #tpu.memory_space<vmem>>, %arg3: memref<32x96xbf16, #tpu.memory_space<vmem>>, %arg4: memref<1x96xbf16, #tpu.memory_space<vmem>>, %arg5: memref<64x4xf32, #tpu.memory_space<vmem>>, %arg6: memref<4x64xf32, #tpu.memory_space<vmem>>, %arg7: memref<1x64xf32, #tpu.memory_space<vmem>>, %arg8: memref<1x16x96xbf16, #tpu.memory_space<vmem>>) attributes {dimension_semantics = [#tpu.dimension_semantics<parallel>], iteration_bounds = array<i64: 2>, scalar_prefetch = 0 : i64, scratch_operands = 0 : i64, tpu.core_type = #tpu.core_type<tc>, window_params = [{transform_indices = @transform_0, window_bounds = array<i64: 1, 16, 32>}, {transform_indices = @transform_1, window_bounds = array<i64: 1, 6, 32>}, {pipeline_mode = #tpu.pipeline_mode<synchronous>, transform_indices = @transform_2, window_bounds = array<i64: 32, 96>}, {pipeline_mode = #tpu.pipeline_mode<synchronous>, transform_indices = @transform_3, window_bounds = array<i64: 1, 96>}, {pipeline_mode = #tpu.pipeline_mode<synchronous>, transform_indices = @transform_4, window_bounds = array<i64: 64, 4>}, {pipeline_mode = #tpu.pipeline_mode<synchronous>, transform_indices = @transform_5, window_bounds = array<i64: 4, 64>}, {pipeline_mode = #tpu.pipeline_mode<synchronous>, transform_indices = @transform_6, window_bounds = array<i64: 1, 64>}, {transform_indices = @transform_7, window_bounds = array<i64: 1, 16, 96>}]} {
    %c0 = arith.constant 0 : index
    %c0_0 = arith.constant 0 : index
    %c0_1 = arith.constant 0 : index
    %0 = vector.load %arg1[%c0, %c0_0, %c0_1] : memref<1x16x32xbf16, #tpu.memory_space<vmem>>, vector<1x16x32xbf16>
    %1 = vector.shape_cast %0 : vector<1x16x32xbf16> to vector<16x32xbf16>
    %2 = arith.extf %1 : vector<16x32xbf16> to vector<16x32xf32>
    %c0_2 = arith.constant 0 : index
    %c0_3 = arith.constant 0 : index
    %c0_4 = arith.constant 0 : index
    %3 = vector.load %arg2[%c0_2, %c0_3, %c0_4] : memref<1x6x32xbf16, #tpu.memory_space<vmem>>, vector<1x1x32xbf16>
    %4 = vector.shape_cast %3 : vector<1x1x32xbf16> to vector<1x32xbf16>
    %5 = arith.extf %4 : vector<1x32xbf16> to vector<1x32xf32>
    %c0_5 = arith.constant 0 : index
    %c1 = arith.constant 1 : index
    %c0_6 = arith.constant 0 : index
    %6 = vector.load %arg2[%c0_5, %c1, %c0_6] : memref<1x6x32xbf16, #tpu.memory_space<vmem>>, vector<1x1x32xbf16>
    %7 = vector.shape_cast %6 : vector<1x1x32xbf16> to vector<1x32xbf16>
    %8 = arith.extf %7 : vector<1x32xbf16> to vector<1x32xf32>
    %cst = arith.constant dense<0.000000e+00> : vector<16xf32>
    %9 = vector.multi_reduction <add>, %2, %cst [1] : vector<16x32xf32> to vector<16xf32>
    %10 = vector.shape_cast %9 : vector<16xf32> to vector<16x1xf32>
    %cst_7 = arith.constant 3.200000e+01 : f32
    %11 = vector.broadcast %cst_7 : f32 to vector<16x1xf32>
    %12 = arith.divf %10, %11 : vector<16x1xf32>
    %13 = vector.broadcast %12 : vector<16x1xf32> to vector<16x32xf32>
    %14 = arith.subf %2, %13 : vector<16x32xf32>
    %15 = arith.mulf %14, %14 : vector<16x32xf32>
    %cst_8 = arith.constant dense<0.000000e+00> : vector<16xf32>
    %16 = vector.multi_reduction <add>, %15, %cst_8 [1] : vector<16x32xf32> to vector<16xf32>
    %17 = vector.shape_cast %16 : vector<16xf32> to vector<16x1xf32>
    %cst_9 = arith.constant 3.200000e+01 : f32
    %18 = vector.broadcast %cst_9 : f32 to vector<16x1xf32>
    %19 = arith.divf %17, %18 : vector<16x1xf32>
    %20 = vector.broadcast %12 : vector<16x1xf32> to vector<16x32xf32>
    %21 = arith.subf %2, %20 : vector<16x32xf32>
    %cst_10 = arith.constant 9.99999997E-7 : f32
    %22 = vector.broadcast %cst_10 : f32 to vector<16x1xf32>
    %23 = arith.addf %19, %22 : vector<16x1xf32>
    %24 = math.rsqrt %23 : vector<16x1xf32>
    %25 = vector.broadcast %24 : vector<16x1xf32> to vector<16x32xf32>
    %26 = arith.mulf %21, %25 : vector<16x32xf32>
    %cst_11 = arith.constant 1.000000e+00 : f32
    %27 = vector.broadcast %cst_11 : f32 to vector<1x32xf32>
    %28 = arith.addf %27, %8 : vector<1x32xf32>
    %29 = vector.broadcast %28 : vector<1x32xf32> to vector<16x32xf32>
    %30 = arith.mulf %29, %26 : vector<16x32xf32>
    %31 = vector.broadcast %5 : vector<1x32xf32> to vector<16x32xf32>
    %32 = arith.addf %30, %31 : vector<16x32xf32>
    %33 = arith.truncf %32 : vector<16x32xf32> to vector<16x32xbf16>
    %c0_12 = arith.constant 0 : index
    %c0_13 = arith.constant 0 : index
    %34 = vector.load %arg3[%c0_12, %c0_13] : memref<32x96xbf16, #tpu.memory_space<vmem>>, vector<32x96xbf16>
    %cst_14 = arith.constant dense<0.000000e+00> : vector<16x96xf32>
    %35 = tpu.matmul %33, %34, %cst_14 {dimension_numbers = #tpu.dot_dimension_numbers<[1], [0], [0], [1], [0, 0, 1, 1], [], []>} : vector<16x32xbf16>, vector<32x96xbf16>, vector<16x96xf32> -> vector<16x96xf32>
    %c0_15 = arith.constant 0 : index
    %c0_16 = arith.constant 0 : index
    %36 = vector.load %arg4[%c0_15, %c0_16] : memref<1x96xbf16, #tpu.memory_space<vmem>>, vector<1x96xbf16>
    %37 = arith.extf %36 : vector<1x96xbf16> to vector<1x96xf32>
    %38 = vector.broadcast %37 : vector<1x96xf32> to vector<16x96xf32>
    %39 = arith.addf %35, %38 : vector<16x96xf32>
    %40 = vector.extract_strided_slice %39 {offsets = [0, 0], sizes = [16, 64], strides = [1, 1]} : vector<16x96xf32> to vector<16x64xf32>
    %41 = arith.mulf %40, %40 : vector<16x64xf32>
    %c0_17 = arith.constant 0 : index
    %c0_18 = arith.constant 0 : index
    %42 = vector.load %arg5[%c0_17, %c0_18] : memref<64x4xf32, #tpu.memory_space<vmem>>, vector<64x4xf32>
    %cst_19 = arith.constant dense<0.000000e+00> : vector<16x4xf32>
    %43 = tpu.matmul %41, %42, %cst_19 {dimension_numbers = #tpu.dot_dimension_numbers<[1], [0], [0], [1], [0, 0, 1, 1], [], []>} : vector<16x64xf32>, vector<64x4xf32>, vector<16x4xf32> -> vector<16x4xf32>
    %cst_20 = arith.constant 6.250000e-02 : f32
    %44 = vector.broadcast %cst_20 : f32 to vector<16x4xf32>
    %45 = arith.mulf %43, %44 : vector<16x4xf32>
    %cst_21 = arith.constant 9.99999997E-7 : f32
    %46 = vector.broadcast %cst_21 : f32 to vector<16x4xf32>
    %47 = arith.addf %45, %46 : vector<16x4xf32>
    %48 = math.rsqrt %47 : vector<16x4xf32>
    %c0_22 = arith.constant 0 : index
    %c0_23 = arith.constant 0 : index
    %49 = vector.load %arg6[%c0_22, %c0_23] : memref<4x64xf32, #tpu.memory_space<vmem>>, vector<4x64xf32>
    %cst_24 = arith.constant dense<0.000000e+00> : vector<16x64xf32>
    %50 = tpu.matmul %48, %49, %cst_24 {dimension_numbers = #tpu.dot_dimension_numbers<[1], [0], [0], [1], [0, 0, 1, 1], [], []>} : vector<16x4xf32>, vector<4x64xf32>, vector<16x64xf32> -> vector<16x64xf32>
    %51 = arith.mulf %40, %50 : vector<16x64xf32>
    %c0_25 = arith.constant 0 : index
    %c0_26 = arith.constant 0 : index
    %52 = vector.load %arg7[%c0_25, %c0_26] : memref<1x64xf32, #tpu.memory_space<vmem>>, vector<1x64xf32>
    %53 = vector.broadcast %52 : vector<1x64xf32> to vector<16x64xf32>
    %54 = arith.mulf %51, %53 : vector<16x64xf32>
    %55 = arith.truncf %54 : vector<16x64xf32> to vector<16x64xbf16>
    %c0_27 = arith.constant 0 : index
    %c0_28 = arith.constant 0 : index
    %c0_29 = arith.constant 0 : index
    %56 = vector.load %arg8[%c0_27, %c0_28, %c0_29] : memref<1x16x96xbf16, #tpu.memory_space<vmem>>, vector<1x16x64xbf16>
    %57 = vector.shape_cast %56 : vector<1x16x64xbf16> to vector<16x64xbf16>
    %58 = vector.shape_cast %55 : vector<16x64xbf16> to vector<1x16x64xbf16>
    tpu.vector_store %arg8[%c0_27, %c0_28, %c0_29], %58 {strides = array<i32>} : memref<1x16x96xbf16, #tpu.memory_space<vmem>>, vector<1x16x64xbf16>,
    %59 = vector.extract_strided_slice %39 {offsets = [0, 64], sizes = [16, 32], strides = [1, 1]} : vector<16x96xf32> to vector<16x32xf32>
    %60 = arith.truncf %59 : vector<16x32xf32> to vector<16x32xbf16>
    %c0_30 = arith.constant 0 : index
    %c0_31 = arith.constant 0 : index
    %c64 = arith.constant 64 : index
    %61 = vector.load %arg8[%c0_30, %c0_31, %c64] : memref<1x16x96xbf16, #tpu.memory_space<vmem>>, vector<1x16x32xbf16>
    %62 = vector.shape_cast %61 : vector<1x16x32xbf16> to vector<16x32xbf16>
    %63 = vector.shape_cast %60 : vector<16x32xbf16> to vector<1x16x32xbf16>
    tpu.vector_store %arg8[%c0_30, %c0_31, %c64], %63 {strides = array<i32>} : memref<1x16x96xbf16, #tpu.memory_space<vmem>>, vector<1x16x32xbf16>,
    return
  }
  func.func @transform_0(%arg0: i32) -> (i32, i32, i32) {
    %c0_i32 = arith.constant 0 : i32
    %c0_i32_0 = arith.constant 0 : i32
    %c0_i32_1 = arith.constant 0 : i32
    return %arg0, %c0_i32, %c0_i32_0 : i32, i32, i32
  }
  func.func @transform_1(%arg0: i32) -> (i32, i32, i32) {
    %c0_i32 = arith.constant 0 : i32
    %c0_i32_0 = arith.constant 0 : i32
    %c0_i32_1 = arith.constant 0 : i32
    return %arg0, %c0_i32, %c0_i32_0 : i32, i32, i32
  }
  func.func @transform_2(%arg0: i32) -> (i32, i32) {
    %c0_i32 = arith.constant 0 : i32
    %c0_i32_0 = arith.constant 0 : i32
    %c0_i32_1 = arith.constant 0 : i32
    return %c0_i32, %c0_i32_0 : i32, i32
  }
  func.func @transform_3(%arg0: i32) -> (i32, i32) {
    %c0_i32 = arith.constant 0 : i32
    %c0_i32_0 = arith.constant 0 : i32
    %c0_i32_1 = arith.constant 0 : i32
    return %c0_i32, %c0_i32_0 : i32, i32
  }
  func.func @transform_4(%arg0: i32) -> (i32, i32) {
    %c0_i32 = arith.constant 0 : i32
    %c0_i32_0 = arith.constant 0 : i32
    %c0_i32_1 = arith.constant 0 : i32
    return %c0_i32, %c0_i32_0 : i32, i32
  }
  func.func @transform_5(%arg0: i32) -> (i32, i32) {
    %c0_i32 = arith.constant 0 : i32
    %c0_i32_0 = arith.constant 0 : i32
    %c0_i32_1 = arith.constant 0 : i32
    return %c0_i32, %c0_i32_0 : i32, i32
  }
  func.func @transform_6(%arg0: i32) -> (i32, i32) {
    %c0_i32 = arith.constant 0 : i32
    %c0_i32_0 = arith.constant 0 : i32
    %c0_i32_1 = arith.constant 0 : i32
    return %c0_i32, %c0_i32_0 : i32, i32
  }
  func.func @transform_7(%arg0: i32) -> (i32, i32, i32) {
    %c0_i32 = arith.constant 0 : i32
    %c0_i32_0 = arith.constant 0 : i32
    %c0_i32_1 = arith.constant 0 : i32
    return %arg0, %c0_i32, %c0_i32_0 : i32, i32, i32
  }
}

module attributes {stable_mosaic.version = 11 : i64} {
  func.func @_linear_kernel(%arg0: i32, %arg1: memref<16x8xbf16, #tpu.memory_space<vmem>>, %arg2: memref<8x32xbf16, #tpu.memory_space<vmem>>, %arg3: memref<1x32xbf16, #tpu.memory_space<vmem>>, %arg4: memref<16x32xbf16, #tpu.memory_space<vmem>>) attributes {dimension_semantics = [#tpu.dimension_semantics<parallel>], iteration_bounds = array<i64: 1>, scalar_prefetch = 0 : i64, scratch_operands = 0 : i64, tpu.core_type = #tpu.core_type<tc>, window_params = [{transform_indices = @transform_0, window_bounds = array<i64: 16, 8>}, {pipeline_mode = #tpu.pipeline_mode<synchronous>, transform_indices = @transform_1, window_bounds = array<i64: 8, 32>}, {pipeline_mode = #tpu.pipeline_mode<synchronous>, transform_indices = @transform_2, window_bounds = array<i64: 1, 32>}, {transform_indices = @transform_3, window_bounds = array<i64: 16, 32>}]} {
    %c0 = arith.constant 0 : index
    %c0_0 = arith.constant 0 : index
    %0 = vector.load %arg1[%c0, %c0_0] : memref<16x8xbf16, #tpu.memory_space<vmem>>, vector<16x8xbf16>
    %c0_1 = arith.constant 0 : index
    %c0_2 = arith.constant 0 : index
    %1 = vector.load %arg2[%c0_1, %c0_2] : memref<8x32xbf16, #tpu.memory_space<vmem>>, vector<8x32xbf16>
    %cst = arith.constant dense<0.000000e+00> : vector<16x32xf32>
    %2 = tpu.matmul %0, %1, %cst {dimension_numbers = #tpu.dot_dimension_numbers<[1], [0], [0], [1], [0, 0, 1, 1], [], []>} : vector<16x8xbf16>, vector<8x32xbf16>, vector<16x32xf32> -> vector<16x32xf32>
    %c0_3 = arith.constant 0 : index
    %c0_4 = arith.constant 0 : index
    %3 = vector.load %arg3[%c0_3, %c0_4] : memref<1x32xbf16, #tpu.memory_space<vmem>>, vector<1x32xbf16>
    %4 = arith.extf %3 : vector<1x32xbf16> to vector<1x32xf32>
    %5 = vector.broadcast %4 : vector<1x32xf32> to vector<16x32xf32>
    %6 = arith.addf %2, %5 : vector<16x32xf32>
    %7 = arith.truncf %6 : vector<16x32xf32> to vector<16x32xbf16>
    %c0_5 = arith.constant 0 : index
    %c0_6 = arith.constant 0 : index
    %8 = vector.load %arg4[%c0_5, %c0_6] : memref<16x32xbf16, #tpu.memory_space<vmem>>, vector<16x32xbf16>
    tpu.vector_store %arg4[%c0_5, %c0_6], %7 {strides = array<i32>} : memref<16x32xbf16, #tpu.memory_space<vmem>>, vector<16x32xbf16>,
    return
  }
  func.func @transform_0(%arg0: i32) -> (i32, i32) {
    %c0_i32 = arith.constant 0 : i32
    %c0_i32_0 = arith.constant 0 : i32
    return %arg0, %c0_i32 : i32, i32
  }
  func.func @transform_1(%arg0: i32) -> (i32, i32) {
    %c0_i32 = arith.constant 0 : i32
    %c0_i32_0 = arith.constant 0 : i32
    %c0_i32_1 = arith.constant 0 : i32
    return %c0_i32, %c0_i32_0 : i32, i32
  }
  func.func @transform_2(%arg0: i32) -> (i32, i32) {
    %c0_i32 = arith.constant 0 : i32
    %c0_i32_0 = arith.constant 0 : i32
    %c0_i32_1 = arith.constant 0 : i32
    return %c0_i32, %c0_i32_0 : i32, i32
  }
  func.func @transform_3(%arg0: i32) -> (i32, i32) {
    %c0_i32 = arith.constant 0 : i32
    %c0_i32_0 = arith.constant 0 : i32
    return %arg0, %c0_i32 : i32, i32
  }
}

module attributes {stable_mosaic.version = 11 : i64} {
  func.func @_premix_kernel(%arg0: i32, %arg1: memref<1x8x32xbf16, #tpu.memory_space<vmem>>, %arg2: memref<1x6x32xbf16, #tpu.memory_space<vmem>>, %arg3: memref<32x96xbf16, #tpu.memory_space<vmem>>, %arg4: memref<1x96xbf16, #tpu.memory_space<vmem>>, %arg5: memref<64x4xf32, #tpu.memory_space<vmem>>, %arg6: memref<4x64xf32, #tpu.memory_space<vmem>>, %arg7: memref<1x64xf32, #tpu.memory_space<vmem>>, %arg8: memref<1x8x96xbf16, #tpu.memory_space<vmem>>) attributes {dimension_semantics = [#tpu.dimension_semantics<parallel>], iteration_bounds = array<i64: 2>, scalar_prefetch = 0 : i64, scratch_operands = 0 : i64, tpu.core_type = #tpu.core_type<tc>, window_params = [{transform_indices = @transform_0, window_bounds = array<i64: 1, 8, 32>}, {transform_indices = @transform_1, window_bounds = array<i64: 1, 6, 32>}, {pipeline_mode = #tpu.pipeline_mode<synchronous>, transform_indices = @transform_2, window_bounds = array<i64: 32, 96>}, {pipeline_mode = #tpu.pipeline_mode<synchronous>, transform_indices = @transform_3, window_bounds = array<i64: 1, 96>}, {pipeline_mode = #tpu.pipeline_mode<synchronous>, transform_indices = @transform_4, window_bounds = array<i64: 64, 4>}, {pipeline_mode = #tpu.pipeline_mode<synchronous>, transform_indices = @transform_5, window_bounds = array<i64: 4, 64>}, {pipeline_mode = #tpu.pipeline_mode<synchronous>, transform_indices = @transform_6, window_bounds = array<i64: 1, 64>}, {transform_indices = @transform_7, window_bounds = array<i64: 1, 8, 96>}]} {
    %c0 = arith.constant 0 : index
    %c0_0 = arith.constant 0 : index
    %c0_1 = arith.constant 0 : index
    %0 = vector.load %arg1[%c0, %c0_0, %c0_1] : memref<1x8x32xbf16, #tpu.memory_space<vmem>>, vector<1x8x32xbf16>
    %1 = vector.shape_cast %0 : vector<1x8x32xbf16> to vector<8x32xbf16>
    %2 = arith.extf %1 : vector<8x32xbf16> to vector<8x32xf32>
    %c0_2 = arith.constant 0 : index
    %c0_3 = arith.constant 0 : index
    %c0_4 = arith.constant 0 : index
    %3 = vector.load %arg2[%c0_2, %c0_3, %c0_4] : memref<1x6x32xbf16, #tpu.memory_space<vmem>>, vector<1x1x32xbf16>
    %4 = vector.shape_cast %3 : vector<1x1x32xbf16> to vector<1x32xbf16>
    %5 = arith.extf %4 : vector<1x32xbf16> to vector<1x32xf32>
    %c0_5 = arith.constant 0 : index
    %c1 = arith.constant 1 : index
    %c0_6 = arith.constant 0 : index
    %6 = vector.load %arg2[%c0_5, %c1, %c0_6] : memref<1x6x32xbf16, #tpu.memory_space<vmem>>, vector<1x1x32xbf16>
    %7 = vector.shape_cast %6 : vector<1x1x32xbf16> to vector<1x32xbf16>
    %8 = arith.extf %7 : vector<1x32xbf16> to vector<1x32xf32>
    %cst = arith.constant dense<0.000000e+00> : vector<8xf32>
    %9 = vector.multi_reduction <add>, %2, %cst [1] : vector<8x32xf32> to vector<8xf32>
    %10 = vector.shape_cast %9 : vector<8xf32> to vector<8x1xf32>
    %cst_7 = arith.constant 3.200000e+01 : f32
    %11 = vector.broadcast %cst_7 : f32 to vector<8x1xf32>
    %12 = arith.divf %10, %11 : vector<8x1xf32>
    %13 = vector.broadcast %12 : vector<8x1xf32> to vector<8x32xf32>
    %14 = arith.subf %2, %13 : vector<8x32xf32>
    %15 = arith.mulf %14, %14 : vector<8x32xf32>
    %cst_8 = arith.constant dense<0.000000e+00> : vector<8xf32>
    %16 = vector.multi_reduction <add>, %15, %cst_8 [1] : vector<8x32xf32> to vector<8xf32>
    %17 = vector.shape_cast %16 : vector<8xf32> to vector<8x1xf32>
    %cst_9 = arith.constant 3.200000e+01 : f32
    %18 = vector.broadcast %cst_9 : f32 to vector<8x1xf32>
    %19 = arith.divf %17, %18 : vector<8x1xf32>
    %20 = vector.broadcast %12 : vector<8x1xf32> to vector<8x32xf32>
    %21 = arith.subf %2, %20 : vector<8x32xf32>
    %cst_10 = arith.constant 9.99999997E-7 : f32
    %22 = vector.broadcast %cst_10 : f32 to vector<8x1xf32>
    %23 = arith.addf %19, %22 : vector<8x1xf32>
    %24 = math.rsqrt %23 : vector<8x1xf32>
    %25 = vector.broadcast %24 : vector<8x1xf32> to vector<8x32xf32>
    %26 = arith.mulf %21, %25 : vector<8x32xf32>
    %cst_11 = arith.constant 1.000000e+00 : f32
    %27 = vector.broadcast %cst_11 : f32 to vector<1x32xf32>
    %28 = arith.addf %27, %8 : vector<1x32xf32>
    %29 = vector.broadcast %28 : vector<1x32xf32> to vector<8x32xf32>
    %30 = arith.mulf %29, %26 : vector<8x32xf32>
    %31 = vector.broadcast %5 : vector<1x32xf32> to vector<8x32xf32>
    %32 = arith.addf %30, %31 : vector<8x32xf32>
    %33 = arith.truncf %32 : vector<8x32xf32> to vector<8x32xbf16>
    %c0_12 = arith.constant 0 : index
    %c0_13 = arith.constant 0 : index
    %34 = vector.load %arg3[%c0_12, %c0_13] : memref<32x96xbf16, #tpu.memory_space<vmem>>, vector<32x96xbf16>
    %cst_14 = arith.constant dense<0.000000e+00> : vector<8x96xf32>
    %35 = tpu.matmul %33, %34, %cst_14 {dimension_numbers = #tpu.dot_dimension_numbers<[1], [0], [0], [1], [0, 0, 1, 1], [], []>} : vector<8x32xbf16>, vector<32x96xbf16>, vector<8x96xf32> -> vector<8x96xf32>
    %c0_15 = arith.constant 0 : index
    %c0_16 = arith.constant 0 : index
    %36 = vector.load %arg4[%c0_15, %c0_16] : memref<1x96xbf16, #tpu.memory_space<vmem>>, vector<1x96xbf16>
    %37 = arith.extf %36 : vector<1x96xbf16> to vector<1x96xf32>
    %38 = vector.broadcast %37 : vector<1x96xf32> to vector<8x96xf32>
    %39 = arith.addf %35, %38 : vector<8x96xf32>
    %40 = vector.extract_strided_slice %39 {offsets = [0, 0], sizes = [8, 64], strides = [1, 1]} : vector<8x96xf32> to vector<8x64xf32>
    %41 = arith.mulf %40, %40 : vector<8x64xf32>
    %c0_17 = arith.constant 0 : index
    %c0_18 = arith.constant 0 : index
    %42 = vector.load %arg5[%c0_17, %c0_18] : memref<64x4xf32, #tpu.memory_space<vmem>>, vector<64x4xf32>
    %cst_19 = arith.constant dense<0.000000e+00> : vector<8x4xf32>
    %43 = tpu.matmul %41, %42, %cst_19 {dimension_numbers = #tpu.dot_dimension_numbers<[1], [0], [0], [1], [0, 0, 1, 1], [], []>} : vector<8x64xf32>, vector<64x4xf32>, vector<8x4xf32> -> vector<8x4xf32>
    %cst_20 = arith.constant 6.250000e-02 : f32
    %44 = vector.broadcast %cst_20 : f32 to vector<8x4xf32>
    %45 = arith.mulf %43, %44 : vector<8x4xf32>
    %cst_21 = arith.constant 9.99999997E-7 : f32
    %46 = vector.broadcast %cst_21 : f32 to vector<8x4xf32>
    %47 = arith.addf %45, %46 : vector<8x4xf32>
    %48 = math.rsqrt %47 : vector<8x4xf32>
    %c0_22 = arith.constant 0 : index
    %c0_23 = arith.constant 0 : index
    %49 = vector.load %arg6[%c0_22, %c0_23] : memref<4x64xf32, #tpu.memory_space<vmem>>, vector<4x64xf32>
    %cst_24 = arith.constant dense<0.000000e+00> : vector<8x64xf32>
    %50 = tpu.matmul %48, %49, %cst_24 {dimension_numbers = #tpu.dot_dimension_numbers<[1], [0], [0], [1], [0, 0, 1, 1], [], []>} : vector<8x4xf32>, vector<4x64xf32>, vector<8x64xf32> -> vector<8x64xf32>
    %51 = arith.mulf %40, %50 : vector<8x64xf32>
    %c0_25 = arith.constant 0 : index
    %c0_26 = arith.constant 0 : index
    %52 = vector.load %arg7[%c0_25, %c0_26] : memref<1x64xf32, #tpu.memory_space<vmem>>, vector<1x64xf32>
    %53 = vector.broadcast %52 : vector<1x64xf32> to vector<8x64xf32>
    %54 = arith.mulf %51, %53 : vector<8x64xf32>
    %55 = arith.truncf %54 : vector<8x64xf32> to vector<8x64xbf16>
    %c0_27 = arith.constant 0 : index
    %c0_28 = arith.constant 0 : index
    %c0_29 = arith.constant 0 : index
    %56 = vector.load %arg8[%c0_27, %c0_28, %c0_29] : memref<1x8x96xbf16, #tpu.memory_space<vmem>>, vector<1x8x64xbf16>
    %57 = vector.shape_cast %56 : vector<1x8x64xbf16> to vector<8x64xbf16>
    %58 = vector.shape_cast %55 : vector<8x64xbf16> to vector<1x8x64xbf16>
    tpu.vector_store %arg8[%c0_27, %c0_28, %c0_29], %58 {strides = array<i32>} : memref<1x8x96xbf16, #tpu.memory_space<vmem>>, vector<1x8x64xbf16>,
    %59 = vector.extract_strided_slice %39 {offsets = [0, 64], sizes = [8, 32], strides = [1, 1]} : vector<8x96xf32> to vector<8x32xf32>
    %60 = arith.truncf %59 : vector<8x32xf32> to vector<8x32xbf16>
    %c0_30 = arith.constant 0 : index
    %c0_31 = arith.constant 0 : index
    %c64 = arith.constant 64 : index
    %61 = vector.load %arg8[%c0_30, %c0_31, %c64] : memref<1x8x96xbf16, #tpu.memory_space<vmem>>, vector<1x8x32xbf16>
    %62 = vector.shape_cast %61 : vector<1x8x32xbf16> to vector<8x32xbf16>
    %63 = vector.shape_cast %60 : vector<8x32xbf16> to vector<1x8x32xbf16>
    tpu.vector_store %arg8[%c0_30, %c0_31, %c64], %63 {strides = array<i32>} : memref<1x8x96xbf16, #tpu.memory_space<vmem>>, vector<1x8x32xbf16>,
    return
  }
  func.func @transform_0(%arg0: i32) -> (i32, i32, i32) {
    %c0_i32 = arith.constant 0 : i32
    %c0_i32_0 = arith.constant 0 : i32
    %c0_i32_1 = arith.constant 0 : i32
    return %arg0, %c0_i32, %c0_i32_0 : i32, i32, i32
  }
  func.func @transform_1(%arg0: i32) -> (i32, i32, i32) {
    %c0_i32 = arith.constant 0 : i32
    %c0_i32_0 = arith.constant 0 : i32
    %c0_i32_1 = arith.constant 0 : i32
    return %arg0, %c0_i32, %c0_i32_0 : i32, i32, i32
  }
  func.func @transform_2(%arg0: i32) -> (i32, i32) {
    %c0_i32 = arith.constant 0 : i32
    %c0_i32_0 = arith.constant 0 : i32
    %c0_i32_1 = arith.constant 0 : i32
    return %c0_i32, %c0_i32_0 : i32, i32
  }
  func.func @transform_3(%arg0: i32) -> (i32, i32) {
    %c0_i32 = arith.constant 0 : i32
    %c0_i32_0 = arith.constant 0 : i32
    %c0_i32_1 = arith.constant 0 : i32
    return %c0_i32, %c0_i32_0 : i32, i32
  }
  func.func @transform_4(%arg0: i32) -> (i32, i32) {
    %c0_i32 = arith.constant 0 : i32
    %c0_i32_0 = arith.constant 0 : i32
    %c0_i32_1 = arith.constant 0 : i32
    return %c0_i32, %c0_i32_0 : i32, i32
  }
  func.func @transform_5(%arg0: i32) -> (i32, i32) {
    %c0_i32 = arith.constant 0 : i32
    %c0_i32_0 = arith.constant 0 : i32
    %c0_i32_1 = arith.constant 0 : i32
    return %c0_i32, %c0_i32_0 : i32, i32
  }
  func.func @transform_6(%arg0: i32) -> (i32, i32) {
    %c0_i32 = arith.constant 0 : i32
    %c0_i32_0 = arith.constant 0 : i32
    %c0_i32_1 = arith.constant 0 : i32
    return %c0_i32, %c0_i32_0 : i32, i32
  }
  func.func @transform_7(%arg0: i32) -> (i32, i32, i32) {
    %c0_i32 = arith.constant 0 : i32
    %c0_i32_0 = arith.constant 0 : i32
    %c0_i32_1 = arith.constant 0 : i32
    return %arg0, %c0_i32, %c0_i32_0 : i32, i32, i32
  }
}

module attributes {stable_mosaic.version = 11 : i64} {
  func.func @_attn_kernel(%arg0: i32, %arg1: memref<1x24x96xbf16, #tpu.memory_space<vmem>>, %arg2: memref<1x24x8xf32, #tpu.memory_space<vmem>>, %arg3: memref<1x24x8xf32, #tpu.memory_space<vmem>>, %arg4: memref<1x24x32xbf16, #tpu.memory_space<vmem>>) attributes {dimension_semantics = [#tpu.dimension_semantics<parallel>], iteration_bounds = array<i64: 2>, scalar_prefetch = 0 : i64, scratch_operands = 0 : i64, tpu.core_type = #tpu.core_type<tc>, window_params = [{transform_indices = @transform_0, window_bounds = array<i64: 1, 24, 96>}, {transform_indices = @transform_1, window_bounds = array<i64: 1, 24, 8>}, {transform_indices = @transform_2, window_bounds = array<i64: 1, 24, 8>}, {transform_indices = @transform_3, window_bounds = array<i64: 1, 24, 32>}]} {
    %c0 = arith.constant 0 : index
    %c0_0 = arith.constant 0 : index
    %c0_1 = arith.constant 0 : index
    %0 = vector.load %arg2[%c0, %c0_0, %c0_1] : memref<1x24x8xf32, #tpu.memory_space<vmem>>, vector<1x24x8xf32>
    %1 = vector.shape_cast %0 : vector<1x24x8xf32> to vector<24x8xf32>
    %c0_2 = arith.constant 0 : index
    %c0_3 = arith.constant 0 : index
    %c0_4 = arith.constant 0 : index
    %2 = vector.load %arg3[%c0_2, %c0_3, %c0_4] : memref<1x24x8xf32, #tpu.memory_space<vmem>>, vector<1x24x8xf32>
    %3 = vector.shape_cast %2 : vector<1x24x8xf32> to vector<24x8xf32>
    %c0_5 = arith.constant 0 : index
    %c0_6 = arith.constant 0 : index
    %c0_7 = arith.constant 0 : index
    %4 = vector.load %arg1[%c0_5, %c0_6, %c0_7] : memref<1x24x96xbf16, #tpu.memory_space<vmem>>, vector<1x24x16xbf16>
    %5 = vector.shape_cast %4 : vector<1x24x16xbf16> to vector<24x16xbf16>
    %6 = arith.extf %5 : vector<24x16xbf16> to vector<24x16xf32>
    %c0_8 = arith.constant 0 : index
    %c0_9 = arith.constant 0 : index
    %c32 = arith.constant 32 : index
    %7 = vector.load %arg1[%c0_8, %c0_9, %c32] : memref<1x24x96xbf16, #tpu.memory_space<vmem>>, vector<1x24x16xbf16>
    %8 = vector.shape_cast %7 : vector<1x24x16xbf16> to vector<24x16xbf16>
    %9 = arith.extf %8 : vector<24x16xbf16> to vector<24x16xf32>
    %c0_10 = arith.constant 0 : index
    %c0_11 = arith.constant 0 : index
    %c64 = arith.constant 64 : index
    %10 = vector.load %arg1[%c0_10, %c0_11, %c64] : memref<1x24x96xbf16, #tpu.memory_space<vmem>>, vector<1x24x16xbf16>
    %11 = vector.shape_cast %10 : vector<1x24x16xbf16> to vector<24x16xbf16>
    %12 = vector.extract_strided_slice %6 {offsets = [0, 0], sizes = [24, 8], strides = [1, 1]} : vector<24x16xf32> to vector<24x8xf32>
    %13 = vector.extract_strided_slice %6 {offsets = [0, 8], sizes = [24, 8], strides = [1, 1]} : vector<24x16xf32> to vector<24x8xf32>
    %14 = vector.extract_strided_slice %9 {offsets = [0, 0], sizes = [24, 8], strides = [1, 1]} : vector<24x16xf32> to vector<24x8xf32>
    %15 = vector.extract_strided_slice %9 {offsets = [0, 8], sizes = [24, 8], strides = [1, 1]} : vector<24x16xf32> to vector<24x8xf32>
    %16 = arith.mulf %1, %12 : vector<24x8xf32>
    %17 = arith.mulf %3, %13 : vector<24x8xf32>
    %18 = arith.subf %16, %17 : vector<24x8xf32>
    %19 = arith.truncf %18 : vector<24x8xf32> to vector<24x8xbf16>
    %20 = arith.mulf %3, %12 : vector<24x8xf32>
    %21 = arith.mulf %1, %13 : vector<24x8xf32>
    %22 = arith.addf %20, %21 : vector<24x8xf32>
    %23 = arith.truncf %22 : vector<24x8xf32> to vector<24x8xbf16>
    %24 = arith.mulf %1, %14 : vector<24x8xf32>
    %25 = arith.mulf %3, %15 : vector<24x8xf32>
    %26 = arith.subf %24, %25 : vector<24x8xf32>
    %27 = arith.truncf %26 : vector<24x8xf32> to vector<24x8xbf16>
    %28 = arith.mulf %3, %14 : vector<24x8xf32>
    %29 = arith.mulf %1, %15 : vector<24x8xf32>
    %30 = arith.addf %28, %29 : vector<24x8xf32>
    %31 = arith.truncf %30 : vector<24x8xf32> to vector<24x8xbf16>
    %cst = arith.constant dense<0.000000e+00> : vector<24x24xf32>
    %32 = tpu.matmul %19, %27, %cst {dimension_numbers = #tpu.dot_dimension_numbers<[1], [1], [0], [0], [0, 0, 1, 0], [], []>} : vector<24x8xbf16>, vector<24x8xbf16>, vector<24x24xf32> -> vector<24x24xf32>
    %cst_12 = arith.constant dense<0.000000e+00> : vector<24x24xf32>
    %33 = tpu.matmul %23, %31, %cst_12 {dimension_numbers = #tpu.dot_dimension_numbers<[1], [1], [0], [0], [0, 0, 1, 0], [], []>} : vector<24x8xbf16>, vector<24x8xbf16>, vector<24x24xf32> -> vector<24x24xf32>
    %34 = arith.addf %32, %33 : vector<24x24xf32>
    %cst_13 = arith.constant 2.500000e-01 : f32
    %35 = vector.broadcast %cst_13 : f32 to vector<24x24xf32>
    %36 = arith.mulf %34, %35 : vector<24x24xf32>
    %cst_14 = arith.constant dense<0xFF800000> : vector<24xf32>
    %37 = vector.multi_reduction <maximumf>, %36, %cst_14 [1] : vector<24x24xf32> to vector<24xf32>
    %38 = vector.shape_cast %37 : vector<24xf32> to vector<24x1xf32>
    %39 = vector.broadcast %38 : vector<24x1xf32> to vector<24x24xf32>
    %40 = arith.subf %36, %39 : vector<24x24xf32>
    %41 = math.exp %40 : vector<24x24xf32>
    %cst_15 = arith.constant dense<0.000000e+00> : vector<24xf32>
    %42 = vector.multi_reduction <add>, %41, %cst_15 [1] : vector<24x24xf32> to vector<24xf32>
    %43 = vector.shape_cast %42 : vector<24xf32> to vector<24x1xf32>
    %44 = tpu.reciprocal %43 {approx = true} : vector<24x1xf32> -> vector<24x1xf32>
    %45 = vector.broadcast %44 : vector<24x1xf32> to vector<24x24xf32>
    %46 = arith.mulf %41, %45 : vector<24x24xf32>
    %47 = arith.truncf %46 : vector<24x24xf32> to vector<24x24xbf16>
    %cst_16 = arith.constant dense<0.000000e+00> : vector<24x16xf32>
    %48 = tpu.matmul %47, %11, %cst_16 {dimension_numbers = #tpu.dot_dimension_numbers<[1], [0], [0], [1], [0, 0, 1, 1], [], []>} : vector<24x24xbf16>, vector<24x16xbf16>, vector<24x16xf32> -> vector<24x16xf32>
    %49 = arith.truncf %48 : vector<24x16xf32> to vector<24x16xbf16>
    %c0_17 = arith.constant 0 : index
    %c0_18 = arith.constant 0 : index
    %c0_19 = arith.constant 0 : index
    %50 = vector.load %arg4[%c0_17, %c0_18, %c0_19] : memref<1x24x32xbf16, #tpu.memory_space<vmem>>, vector<1x24x16xbf16>
    %51 = vector.shape_cast %50 : vector<1x24x16xbf16> to vector<24x16xbf16>
    %52 = vector.shape_cast %49 : vector<24x16xbf16> to vector<1x24x16xbf16>
    tpu.vector_store %arg4[%c0_17, %c0_18, %c0_19], %52 {strides = array<i32>} : memref<1x24x32xbf16, #tpu.memory_space<vmem>>, vector<1x24x16xbf16>,
    %c0_20 = arith.constant 0 : index
    %c0_21 = arith.constant 0 : index
    %c16 = arith.constant 16 : index
    %53 = vector.load %arg1[%c0_20, %c0_21, %c16] : memref<1x24x96xbf16, #tpu.memory_space<vmem>>, vector<1x24x16xbf16>
    %54 = vector.shape_cast %53 : vector<1x24x16xbf16> to vector<24x16xbf16>
    %55 = arith.extf %54 : vector<24x16xbf16> to vector<24x16xf32>
    %c0_22 = arith.constant 0 : index
    %c0_23 = arith.constant 0 : index
    %c48 = arith.constant 48 : index
    %56 = vector.load %arg1[%c0_22, %c0_23, %c48] : memref<1x24x96xbf16, #tpu.memory_space<vmem>>, vector<1x24x16xbf16>
    %57 = vector.shape_cast %56 : vector<1x24x16xbf16> to vector<24x16xbf16>
    %58 = arith.extf %57 : vector<24x16xbf16> to vector<24x16xf32>
    %c0_24 = arith.constant 0 : index
    %c0_25 = arith.constant 0 : index
    %c80 = arith.constant 80 : index
    %59 = vector.load %arg1[%c0_24, %c0_25, %c80] : memref<1x24x96xbf16, #tpu.memory_space<vmem>>, vector<1x24x16xbf16>
    %60 = vector.shape_cast %59 : vector<1x24x16xbf16> to vector<24x16xbf16>
    %61 = vector.extract_strided_slice %55 {offsets = [0, 0], sizes = [24, 8], strides = [1, 1]} : vector<24x16xf32> to vector<24x8xf32>
    %62 = vector.extract_strided_slice %55 {offsets = [0, 8], sizes = [24, 8], strides = [1, 1]} : vector<24x16xf32> to vector<24x8xf32>
    %63 = vector.extract_strided_slice %58 {offsets = [0, 0], sizes = [24, 8], strides = [1, 1]} : vector<24x16xf32> to vector<24x8xf32>
    %64 = vector.extract_strided_slice %58 {offsets = [0, 8], sizes = [24, 8], strides = [1, 1]} : vector<24x16xf32> to vector<24x8xf32>
    %65 = arith.mulf %1, %61 : vector<24x8xf32>
    %66 = arith.mulf %3, %62 : vector<24x8xf32>
    %67 = arith.subf %65, %66 : vector<24x8xf32>
    %68 = arith.truncf %67 : vector<24x8xf32> to vector<24x8xbf16>
    %69 = arith.mulf %3, %61 : vector<24x8xf32>
    %70 = arith.mulf %1, %62 : vector<24x8xf32>
    %71 = arith.addf %69, %70 : vector<24x8xf32>
    %72 = arith.truncf %71 : vector<24x8xf32> to vector<24x8xbf16>
    %73 = arith.mulf %1, %63 : vector<24x8xf32>
    %74 = arith.mulf %3, %64 : vector<24x8xf32>
    %75 = arith.subf %73, %74 : vector<24x8xf32>
    %76 = arith.truncf %75 : vector<24x8xf32> to vector<24x8xbf16>
    %77 = arith.mulf %3, %63 : vector<24x8xf32>
    %78 = arith.mulf %1, %64 : vector<24x8xf32>
    %79 = arith.addf %77, %78 : vector<24x8xf32>
    %80 = arith.truncf %79 : vector<24x8xf32> to vector<24x8xbf16>
    %cst_26 = arith.constant dense<0.000000e+00> : vector<24x24xf32>
    %81 = tpu.matmul %68, %76, %cst_26 {dimension_numbers = #tpu.dot_dimension_numbers<[1], [1], [0], [0], [0, 0, 1, 0], [], []>} : vector<24x8xbf16>, vector<24x8xbf16>, vector<24x24xf32> -> vector<24x24xf32>
    %cst_27 = arith.constant dense<0.000000e+00> : vector<24x24xf32>
    %82 = tpu.matmul %72, %80, %cst_27 {dimension_numbers = #tpu.dot_dimension_numbers<[1], [1], [0], [0], [0, 0, 1, 0], [], []>} : vector<24x8xbf16>, vector<24x8xbf16>, vector<24x24xf32> -> vector<24x24xf32>
    %83 = arith.addf %81, %82 : vector<24x24xf32>
    %cst_28 = arith.constant 2.500000e-01 : f32
    %84 = vector.broadcast %cst_28 : f32 to vector<24x24xf32>
    %85 = arith.mulf %83, %84 : vector<24x24xf32>
    %cst_29 = arith.constant dense<0xFF800000> : vector<24xf32>
    %86 = vector.multi_reduction <maximumf>, %85, %cst_29 [1] : vector<24x24xf32> to vector<24xf32>
    %87 = vector.shape_cast %86 : vector<24xf32> to vector<24x1xf32>
    %88 = vector.broadcast %87 : vector<24x1xf32> to vector<24x24xf32>
    %89 = arith.subf %85, %88 : vector<24x24xf32>
    %90 = math.exp %89 : vector<24x24xf32>
    %cst_30 = arith.constant dense<0.000000e+00> : vector<24xf32>
    %91 = vector.multi_reduction <add>, %90, %cst_30 [1] : vector<24x24xf32> to vector<24xf32>
    %92 = vector.shape_cast %91 : vector<24xf32> to vector<24x1xf32>
    %93 = tpu.reciprocal %92 {approx = true} : vector<24x1xf32> -> vector<24x1xf32>
    %94 = vector.broadcast %93 : vector<24x1xf32> to vector<24x24xf32>
    %95 = arith.mulf %90, %94 : vector<24x24xf32>
    %96 = arith.truncf %95 : vector<24x24xf32> to vector<24x24xbf16>
    %cst_31 = arith.constant dense<0.000000e+00> : vector<24x16xf32>
    %97 = tpu.matmul %96, %60, %cst_31 {dimension_numbers = #tpu.dot_dimension_numbers<[1], [0], [0], [1], [0, 0, 1, 1], [], []>} : vector<24x24xbf16>, vector<24x16xbf16>, vector<24x16xf32> -> vector<24x16xf32>
    %98 = arith.truncf %97 : vector<24x16xf32> to vector<24x16xbf16>
    %c0_32 = arith.constant 0 : index
    %c0_33 = arith.constant 0 : index
    %c16_34 = arith.constant 16 : index
    %99 = vector.load %arg4[%c0_32, %c0_33, %c16_34] : memref<1x24x32xbf16, #tpu.memory_space<vmem>>, vector<1x24x16xbf16>
    %100 = vector.shape_cast %99 : vector<1x24x16xbf16> to vector<24x16xbf16>
    %101 = vector.shape_cast %98 : vector<24x16xbf16> to vector<1x24x16xbf16>
    tpu.vector_store %arg4[%c0_32, %c0_33, %c16_34], %101 {strides = array<i32>} : memref<1x24x32xbf16, #tpu.memory_space<vmem>>, vector<1x24x16xbf16>,
    return
  }
  func.func @transform_0(%arg0: i32) -> (i32, i32, i32) {
    %c0_i32 = arith.constant 0 : i32
    %c0_i32_0 = arith.constant 0 : i32
    %c0_i32_1 = arith.constant 0 : i32
    return %arg0, %c0_i32, %c0_i32_0 : i32, i32, i32
  }
  func.func @transform_1(%arg0: i32) -> (i32, i32, i32) {
    %c0_i32 = arith.constant 0 : i32
    %c0_i32_0 = arith.constant 0 : i32
    %c0_i32_1 = arith.constant 0 : i32
    return %arg0, %c0_i32, %c0_i32_0 : i32, i32, i32
  }
  func.func @transform_2(%arg0: i32) -> (i32, i32, i32) {
    %c0_i32 = arith.constant 0 : i32
    %c0_i32_0 = arith.constant 0 : i32
    %c0_i32_1 = arith.constant 0 : i32
    return %arg0, %c0_i32, %c0_i32_0 : i32, i32, i32
  }
  func.func @transform_3(%arg0: i32) -> (i32, i32, i32) {
    %c0_i32 = arith.constant 0 : i32
    %c0_i32_0 = arith.constant 0 : i32
    %c0_i32_1 = arith.constant 0 : i32
    return %arg0, %c0_i32, %c0_i32_0 : i32, i32, i32
  }
}

module attributes {stable_mosaic.version = 11 : i64} {
  func.func @_double_post_kernel(%arg0: i32, %arg1: memref<1x8x32xbf16, #tpu.memory_space<vmem>>, %arg2: memref<1x8x32xbf16, #tpu.memory_space<vmem>>, %arg3: memref<1x6x32xbf16, #tpu.memory_space<vmem>>, %arg4: memref<32x32xbf16, #tpu.memory_space<vmem>>, %arg5: memref<1x32xbf16, #tpu.memory_space<vmem>>, %arg6: memref<32x64xbf16, #tpu.memory_space<vmem>>, %arg7: memref<1x64xbf16, #tpu.memory_space<vmem>>, %arg8: memref<64x32xbf16, #tpu.memory_space<vmem>>, %arg9: memref<1x32xbf16, #tpu.memory_space<vmem>>, %arg10: memref<1x8x32xbf16, #tpu.memory_space<vmem>>) attributes {dimension_semantics = [#tpu.dimension_semantics<parallel>], iteration_bounds = array<i64: 2>, scalar_prefetch = 0 : i64, scratch_operands = 0 : i64, tpu.core_type = #tpu.core_type<tc>, window_params = [{transform_indices = @transform_0, window_bounds = array<i64: 1, 8, 32>}, {transform_indices = @transform_1, window_bounds = array<i64: 1, 8, 32>}, {transform_indices = @transform_2, window_bounds = array<i64: 1, 6, 32>}, {pipeline_mode = #tpu.pipeline_mode<synchronous>, transform_indices = @transform_3, window_bounds = array<i64: 32, 32>}, {pipeline_mode = #tpu.pipeline_mode<synchronous>, transform_indices = @transform_4, window_bounds = array<i64: 1, 32>}, {pipeline_mode = #tpu.pipeline_mode<synchronous>, transform_indices = @transform_5, window_bounds = array<i64: 32, 64>}, {pipeline_mode = #tpu.pipeline_mode<synchronous>, transform_indices = @transform_6, window_bounds = array<i64: 1, 64>}, {pipeline_mode = #tpu.pipeline_mode<synchronous>, transform_indices = @transform_7, window_bounds = array<i64: 64, 32>}, {pipeline_mode = #tpu.pipeline_mode<synchronous>, transform_indices = @transform_8, window_bounds = array<i64: 1, 32>}, {transform_indices = @transform_9, window_bounds = array<i64: 1, 8, 32>}]} {
    %c0 = arith.constant 0 : index
    %c2 = arith.constant 2 : index
    %c0_0 = arith.constant 0 : index
    %0 = vector.load %arg3[%c0, %c2, %c0_0] : memref<1x6x32xbf16, #tpu.memory_space<vmem>>, vector<1x1x32xbf16>
    %1 = vector.shape_cast %0 : vector<1x1x32xbf16> to vector<1x32xbf16>
    %2 = arith.extf %1 : vector<1x32xbf16> to vector<1x32xf32>
    %c0_1 = arith.constant 0 : index
    %c3 = arith.constant 3 : index
    %c0_2 = arith.constant 0 : index
    %3 = vector.load %arg3[%c0_1, %c3, %c0_2] : memref<1x6x32xbf16, #tpu.memory_space<vmem>>, vector<1x1x32xbf16>
    %4 = vector.shape_cast %3 : vector<1x1x32xbf16> to vector<1x32xbf16>
    %5 = arith.extf %4 : vector<1x32xbf16> to vector<1x32xf32>
    %c0_3 = arith.constant 0 : index
    %c4 = arith.constant 4 : index
    %c0_4 = arith.constant 0 : index
    %6 = vector.load %arg3[%c0_3, %c4, %c0_4] : memref<1x6x32xbf16, #tpu.memory_space<vmem>>, vector<1x1x32xbf16>
    %7 = vector.shape_cast %6 : vector<1x1x32xbf16> to vector<1x32xbf16>
    %8 = arith.extf %7 : vector<1x32xbf16> to vector<1x32xf32>
    %c0_5 = arith.constant 0 : index
    %c5 = arith.constant 5 : index
    %c0_6 = arith.constant 0 : index
    %9 = vector.load %arg3[%c0_5, %c5, %c0_6] : memref<1x6x32xbf16, #tpu.memory_space<vmem>>, vector<1x1x32xbf16>
    %10 = vector.shape_cast %9 : vector<1x1x32xbf16> to vector<1x32xbf16>
    %11 = arith.extf %10 : vector<1x32xbf16> to vector<1x32xf32>
    %c0_7 = arith.constant 0 : index
    %c0_8 = arith.constant 0 : index
    %c0_9 = arith.constant 0 : index
    %12 = vector.load %arg1[%c0_7, %c0_8, %c0_9] : memref<1x8x32xbf16, #tpu.memory_space<vmem>>, vector<1x8x32xbf16>
    %13 = vector.shape_cast %12 : vector<1x8x32xbf16> to vector<8x32xbf16>
    %14 = arith.extf %13 : vector<8x32xbf16> to vector<8x32xf32>
    %c0_10 = arith.constant 0 : index
    %c0_11 = arith.constant 0 : index
    %c0_12 = arith.constant 0 : index
    %15 = vector.load %arg2[%c0_10, %c0_11, %c0_12] : memref<1x8x32xbf16, #tpu.memory_space<vmem>>, vector<1x8x32xbf16>
    %16 = vector.shape_cast %15 : vector<1x8x32xbf16> to vector<8x32xbf16>
    %c0_13 = arith.constant 0 : index
    %c0_14 = arith.constant 0 : index
    %17 = vector.load %arg4[%c0_13, %c0_14] : memref<32x32xbf16, #tpu.memory_space<vmem>>, vector<32x32xbf16>
    %cst = arith.constant dense<0.000000e+00> : vector<8x32xf32>
    %18 = tpu.matmul %16, %17, %cst {dimension_numbers = #tpu.dot_dimension_numbers<[1], [0], [0], [1], [0, 0, 1, 1], [], []>} : vector<8x32xbf16>, vector<32x32xbf16>, vector<8x32xf32> -> vector<8x32xf32>
    %c0_15 = arith.constant 0 : index
    %c0_16 = arith.constant 0 : index
    %19 = vector.load %arg5[%c0_15, %c0_16] : memref<1x32xbf16, #tpu.memory_space<vmem>>, vector<1x32xbf16>
    %20 = arith.extf %19 : vector<1x32xbf16> to vector<1x32xf32>
    %21 = vector.broadcast %20 : vector<1x32xf32> to vector<8x32xf32>
    %22 = arith.addf %18, %21 : vector<8x32xf32>
    %23 = vector.broadcast %2 : vector<1x32xf32> to vector<8x32xf32>
    %24 = arith.mulf %23, %22 : vector<8x32xf32>
    %25 = arith.addf %14, %24 : vector<8x32xf32>
    %cst_17 = arith.constant dense<0.000000e+00> : vector<8xf32>
    %26 = vector.multi_reduction <add>, %25, %cst_17 [1] : vector<8x32xf32> to vector<8xf32>
    %27 = vector.shape_cast %26 : vector<8xf32> to vector<8x1xf32>
    %cst_18 = arith.constant 3.200000e+01 : f32
    %28 = vector.broadcast %cst_18 : f32 to vector<8x1xf32>
    %29 = arith.divf %27, %28 : vector<8x1xf32>
    %30 = vector.broadcast %29 : vector<8x1xf32> to vector<8x32xf32>
    %31 = arith.subf %25, %30 : vector<8x32xf32>
    %32 = arith.mulf %31, %31 : vector<8x32xf32>
    %cst_19 = arith.constant dense<0.000000e+00> : vector<8xf32>
    %33 = vector.multi_reduction <add>, %32, %cst_19 [1] : vector<8x32xf32> to vector<8xf32>
    %34 = vector.shape_cast %33 : vector<8xf32> to vector<8x1xf32>
    %cst_20 = arith.constant 3.200000e+01 : f32
    %35 = vector.broadcast %cst_20 : f32 to vector<8x1xf32>
    %36 = arith.divf %34, %35 : vector<8x1xf32>
    %37 = vector.broadcast %29 : vector<8x1xf32> to vector<8x32xf32>
    %38 = arith.subf %25, %37 : vector<8x32xf32>
    %cst_21 = arith.constant 9.99999997E-7 : f32
    %39 = vector.broadcast %cst_21 : f32 to vector<8x1xf32>
    %40 = arith.addf %36, %39 : vector<8x1xf32>
    %41 = math.rsqrt %40 : vector<8x1xf32>
    %42 = vector.broadcast %41 : vector<8x1xf32> to vector<8x32xf32>
    %43 = arith.mulf %38, %42 : vector<8x32xf32>
    %cst_22 = arith.constant 1.000000e+00 : f32
    %44 = vector.broadcast %cst_22 : f32 to vector<1x32xf32>
    %45 = arith.addf %44, %8 : vector<1x32xf32>
    %46 = vector.broadcast %45 : vector<1x32xf32> to vector<8x32xf32>
    %47 = arith.mulf %46, %43 : vector<8x32xf32>
    %48 = vector.broadcast %5 : vector<1x32xf32> to vector<8x32xf32>
    %49 = arith.addf %47, %48 : vector<8x32xf32>
    %50 = arith.truncf %49 : vector<8x32xf32> to vector<8x32xbf16>
    %c0_23 = arith.constant 0 : index
    %c0_24 = arith.constant 0 : index
    %51 = vector.load %arg6[%c0_23, %c0_24] : memref<32x64xbf16, #tpu.memory_space<vmem>>, vector<32x64xbf16>
    %cst_25 = arith.constant dense<0.000000e+00> : vector<8x64xf32>
    %52 = tpu.matmul %50, %51, %cst_25 {dimension_numbers = #tpu.dot_dimension_numbers<[1], [0], [0], [1], [0, 0, 1, 1], [], []>} : vector<8x32xbf16>, vector<32x64xbf16>, vector<8x64xf32> -> vector<8x64xf32>
    %c0_26 = arith.constant 0 : index
    %c0_27 = arith.constant 0 : index
    %53 = vector.load %arg7[%c0_26, %c0_27] : memref<1x64xbf16, #tpu.memory_space<vmem>>, vector<1x64xbf16>
    %54 = arith.extf %53 : vector<1x64xbf16> to vector<1x64xf32>
    %55 = vector.broadcast %54 : vector<1x64xf32> to vector<8x64xf32>
    %56 = arith.addf %52, %55 : vector<8x64xf32>
    %cst_28 = arith.constant 5.000000e-01 : f32
    %57 = vector.broadcast %cst_28 : f32 to vector<8x64xf32>
    %58 = arith.mulf %57, %56 : vector<8x64xf32>
    %cst_29 = arith.constant 4.471500e-02 : f32
    %59 = vector.broadcast %cst_29 : f32 to vector<8x64xf32>
    %60 = arith.mulf %59, %56 : vector<8x64xf32>
    %61 = arith.mulf %60, %56 : vector<8x64xf32>
    %62 = arith.mulf %61, %56 : vector<8x64xf32>
    %63 = arith.addf %56, %62 : vector<8x64xf32>
    %cst_30 = arith.constant 0.797884583 : f32
    %64 = vector.broadcast %cst_30 : f32 to vector<8x64xf32>
    %65 = arith.mulf %64, %63 : vector<8x64xf32>
    %66 = math.tanh %65 : vector<8x64xf32>
    %cst_31 = arith.constant 1.000000e+00 : f32
    %67 = vector.broadcast %cst_31 : f32 to vector<8x64xf32>
    %68 = arith.addf %67, %66 : vector<8x64xf32>
    %69 = arith.mulf %58, %68 : vector<8x64xf32>
    %70 = arith.truncf %69 : vector<8x64xf32> to vector<8x64xbf16>
    %c0_32 = arith.constant 0 : index
    %c0_33 = arith.constant 0 : index
    %71 = vector.load %arg8[%c0_32, %c0_33] : memref<64x32xbf16, #tpu.memory_space<vmem>>, vector<64x32xbf16>
    %cst_34 = arith.constant dense<0.000000e+00> : vector<8x32xf32>
    %72 = tpu.matmul %70, %71, %cst_34 {dimension_numbers = #tpu.dot_dimension_numbers<[1], [0], [0], [1], [0, 0, 1, 1], [], []>} : vector<8x64xbf16>, vector<64x32xbf16>, vector<8x32xf32> -> vector<8x32xf32>
    %c0_35 = arith.constant 0 : index
    %c0_36 = arith.constant 0 : index
    %73 = vector.load %arg9[%c0_35, %c0_36] : memref<1x32xbf16, #tpu.memory_space<vmem>>, vector<1x32xbf16>
    %74 = arith.extf %73 : vector<1x32xbf16> to vector<1x32xf32>
    %75 = vector.broadcast %74 : vector<1x32xf32> to vector<8x32xf32>
    %76 = arith.addf %72, %75 : vector<8x32xf32>
    %77 = vector.broadcast %11 : vector<1x32xf32> to vector<8x32xf32>
    %78 = arith.mulf %77, %76 : vector<8x32xf32>
    %79 = arith.addf %25, %78 : vector<8x32xf32>
    %80 = arith.truncf %79 : vector<8x32xf32> to vector<8x32xbf16>
    %c0_37 = arith.constant 0 : index
    %c0_38 = arith.constant 0 : index
    %c0_39 = arith.constant 0 : index
    %81 = vector.load %arg10[%c0_37, %c0_38, %c0_39] : memref<1x8x32xbf16, #tpu.memory_space<vmem>>, vector<1x8x32xbf16>
    %82 = vector.shape_cast %81 : vector<1x8x32xbf16> to vector<8x32xbf16>
    %83 = vector.shape_cast %80 : vector<8x32xbf16> to vector<1x8x32xbf16>
    tpu.vector_store %arg10[%c0_37, %c0_38, %c0_39], %83 {strides = array<i32>} : memref<1x8x32xbf16, #tpu.memory_space<vmem>>, vector<1x8x32xbf16>,
    return
  }
  func.func @transform_0(%arg0: i32) -> (i32, i32, i32) {
    %c0_i32 = arith.constant 0 : i32
    %c0_i32_0 = arith.constant 0 : i32
    %c0_i32_1 = arith.constant 0 : i32
    return %arg0, %c0_i32, %c0_i32_0 : i32, i32, i32
  }
  func.func @transform_1(%arg0: i32) -> (i32, i32, i32) {
    %c0_i32 = arith.constant 0 : i32
    %c0_i32_0 = arith.constant 0 : i32
    %c0_i32_1 = arith.constant 0 : i32
    return %arg0, %c0_i32, %c0_i32_0 : i32, i32, i32
  }
  func.func @transform_2(%arg0: i32) -> (i32, i32, i32) {
    %c0_i32 = arith.constant 0 : i32
    %c0_i32_0 = arith.constant 0 : i32
    %c0_i32_1 = arith.constant 0 : i32
    return %arg0, %c0_i32, %c0_i32_0 : i32, i32, i32
  }
  func.func @transform_3(%arg0: i32) -> (i32, i32) {
    %c0_i32 = arith.constant 0 : i32
    %c0_i32_0 = arith.constant 0 : i32
    %c0_i32_1 = arith.constant 0 : i32
    return %c0_i32, %c0_i32_0 : i32, i32
  }
  func.func @transform_4(%arg0: i32) -> (i32, i32) {
    %c0_i32 = arith.constant 0 : i32
    %c0_i32_0 = arith.constant 0 : i32
    %c0_i32_1 = arith.constant 0 : i32
    return %c0_i32, %c0_i32_0 : i32, i32
  }
  func.func @transform_5(%arg0: i32) -> (i32, i32) {
    %c0_i32 = arith.constant 0 : i32
    %c0_i32_0 = arith.constant 0 : i32
    %c0_i32_1 = arith.constant 0 : i32
    return %c0_i32, %c0_i32_0 : i32, i32
  }
  func.func @transform_6(%arg0: i32) -> (i32, i32) {
    %c0_i32 = arith.constant 0 : i32
    %c0_i32_0 = arith.constant 0 : i32
    %c0_i32_1 = arith.constant 0 : i32
    return %c0_i32, %c0_i32_0 : i32, i32
  }
  func.func @transform_7(%arg0: i32) -> (i32, i32) {
    %c0_i32 = arith.constant 0 : i32
    %c0_i32_0 = arith.constant 0 : i32
    %c0_i32_1 = arith.constant 0 : i32
    return %c0_i32, %c0_i32_0 : i32, i32
  }
  func.func @transform_8(%arg0: i32) -> (i32, i32) {
    %c0_i32 = arith.constant 0 : i32
    %c0_i32_0 = arith.constant 0 : i32
    %c0_i32_1 = arith.constant 0 : i32
    return %c0_i32, %c0_i32_0 : i32, i32
  }
  func.func @transform_9(%arg0: i32) -> (i32, i32, i32) {
    %c0_i32 = arith.constant 0 : i32
    %c0_i32_0 = arith.constant 0 : i32
    %c0_i32_1 = arith.constant 0 : i32
    return %arg0, %c0_i32, %c0_i32_0 : i32, i32, i32
  }
}

module attributes {stable_mosaic.version = 11 : i64} {
  func.func @_double_post_kernel(%arg0: i32, %arg1: memref<1x16x32xbf16, #tpu.memory_space<vmem>>, %arg2: memref<1x16x32xbf16, #tpu.memory_space<vmem>>, %arg3: memref<1x6x32xbf16, #tpu.memory_space<vmem>>, %arg4: memref<32x32xbf16, #tpu.memory_space<vmem>>, %arg5: memref<1x32xbf16, #tpu.memory_space<vmem>>, %arg6: memref<32x64xbf16, #tpu.memory_space<vmem>>, %arg7: memref<1x64xbf16, #tpu.memory_space<vmem>>, %arg8: memref<64x32xbf16, #tpu.memory_space<vmem>>, %arg9: memref<1x32xbf16, #tpu.memory_space<vmem>>, %arg10: memref<1x16x32xbf16, #tpu.memory_space<vmem>>) attributes {dimension_semantics = [#tpu.dimension_semantics<parallel>], iteration_bounds = array<i64: 2>, scalar_prefetch = 0 : i64, scratch_operands = 0 : i64, tpu.core_type = #tpu.core_type<tc>, window_params = [{transform_indices = @transform_0, window_bounds = array<i64: 1, 16, 32>}, {transform_indices = @transform_1, window_bounds = array<i64: 1, 16, 32>}, {transform_indices = @transform_2, window_bounds = array<i64: 1, 6, 32>}, {pipeline_mode = #tpu.pipeline_mode<synchronous>, transform_indices = @transform_3, window_bounds = array<i64: 32, 32>}, {pipeline_mode = #tpu.pipeline_mode<synchronous>, transform_indices = @transform_4, window_bounds = array<i64: 1, 32>}, {pipeline_mode = #tpu.pipeline_mode<synchronous>, transform_indices = @transform_5, window_bounds = array<i64: 32, 64>}, {pipeline_mode = #tpu.pipeline_mode<synchronous>, transform_indices = @transform_6, window_bounds = array<i64: 1, 64>}, {pipeline_mode = #tpu.pipeline_mode<synchronous>, transform_indices = @transform_7, window_bounds = array<i64: 64, 32>}, {pipeline_mode = #tpu.pipeline_mode<synchronous>, transform_indices = @transform_8, window_bounds = array<i64: 1, 32>}, {transform_indices = @transform_9, window_bounds = array<i64: 1, 16, 32>}]} {
    %c0 = arith.constant 0 : index
    %c2 = arith.constant 2 : index
    %c0_0 = arith.constant 0 : index
    %0 = vector.load %arg3[%c0, %c2, %c0_0] : memref<1x6x32xbf16, #tpu.memory_space<vmem>>, vector<1x1x32xbf16>
    %1 = vector.shape_cast %0 : vector<1x1x32xbf16> to vector<1x32xbf16>
    %2 = arith.extf %1 : vector<1x32xbf16> to vector<1x32xf32>
    %c0_1 = arith.constant 0 : index
    %c3 = arith.constant 3 : index
    %c0_2 = arith.constant 0 : index
    %3 = vector.load %arg3[%c0_1, %c3, %c0_2] : memref<1x6x32xbf16, #tpu.memory_space<vmem>>, vector<1x1x32xbf16>
    %4 = vector.shape_cast %3 : vector<1x1x32xbf16> to vector<1x32xbf16>
    %5 = arith.extf %4 : vector<1x32xbf16> to vector<1x32xf32>
    %c0_3 = arith.constant 0 : index
    %c4 = arith.constant 4 : index
    %c0_4 = arith.constant 0 : index
    %6 = vector.load %arg3[%c0_3, %c4, %c0_4] : memref<1x6x32xbf16, #tpu.memory_space<vmem>>, vector<1x1x32xbf16>
    %7 = vector.shape_cast %6 : vector<1x1x32xbf16> to vector<1x32xbf16>
    %8 = arith.extf %7 : vector<1x32xbf16> to vector<1x32xf32>
    %c0_5 = arith.constant 0 : index
    %c5 = arith.constant 5 : index
    %c0_6 = arith.constant 0 : index
    %9 = vector.load %arg3[%c0_5, %c5, %c0_6] : memref<1x6x32xbf16, #tpu.memory_space<vmem>>, vector<1x1x32xbf16>
    %10 = vector.shape_cast %9 : vector<1x1x32xbf16> to vector<1x32xbf16>
    %11 = arith.extf %10 : vector<1x32xbf16> to vector<1x32xf32>
    %c0_7 = arith.constant 0 : index
    %c0_8 = arith.constant 0 : index
    %c0_9 = arith.constant 0 : index
    %12 = vector.load %arg1[%c0_7, %c0_8, %c0_9] : memref<1x16x32xbf16, #tpu.memory_space<vmem>>, vector<1x16x32xbf16>
    %13 = vector.shape_cast %12 : vector<1x16x32xbf16> to vector<16x32xbf16>
    %14 = arith.extf %13 : vector<16x32xbf16> to vector<16x32xf32>
    %c0_10 = arith.constant 0 : index
    %c0_11 = arith.constant 0 : index
    %c0_12 = arith.constant 0 : index
    %15 = vector.load %arg2[%c0_10, %c0_11, %c0_12] : memref<1x16x32xbf16, #tpu.memory_space<vmem>>, vector<1x16x32xbf16>
    %16 = vector.shape_cast %15 : vector<1x16x32xbf16> to vector<16x32xbf16>
    %c0_13 = arith.constant 0 : index
    %c0_14 = arith.constant 0 : index
    %17 = vector.load %arg4[%c0_13, %c0_14] : memref<32x32xbf16, #tpu.memory_space<vmem>>, vector<32x32xbf16>
    %cst = arith.constant dense<0.000000e+00> : vector<16x32xf32>
    %18 = tpu.matmul %16, %17, %cst {dimension_numbers = #tpu.dot_dimension_numbers<[1], [0], [0], [1], [0, 0, 1, 1], [], []>} : vector<16x32xbf16>, vector<32x32xbf16>, vector<16x32xf32> -> vector<16x32xf32>
    %c0_15 = arith.constant 0 : index
    %c0_16 = arith.constant 0 : index
    %19 = vector.load %arg5[%c0_15, %c0_16] : memref<1x32xbf16, #tpu.memory_space<vmem>>, vector<1x32xbf16>
    %20 = arith.extf %19 : vector<1x32xbf16> to vector<1x32xf32>
    %21 = vector.broadcast %20 : vector<1x32xf32> to vector<16x32xf32>
    %22 = arith.addf %18, %21 : vector<16x32xf32>
    %23 = vector.broadcast %2 : vector<1x32xf32> to vector<16x32xf32>
    %24 = arith.mulf %23, %22 : vector<16x32xf32>
    %25 = arith.addf %14, %24 : vector<16x32xf32>
    %cst_17 = arith.constant dense<0.000000e+00> : vector<16xf32>
    %26 = vector.multi_reduction <add>, %25, %cst_17 [1] : vector<16x32xf32> to vector<16xf32>
    %27 = vector.shape_cast %26 : vector<16xf32> to vector<16x1xf32>
    %cst_18 = arith.constant 3.200000e+01 : f32
    %28 = vector.broadcast %cst_18 : f32 to vector<16x1xf32>
    %29 = arith.divf %27, %28 : vector<16x1xf32>
    %30 = vector.broadcast %29 : vector<16x1xf32> to vector<16x32xf32>
    %31 = arith.subf %25, %30 : vector<16x32xf32>
    %32 = arith.mulf %31, %31 : vector<16x32xf32>
    %cst_19 = arith.constant dense<0.000000e+00> : vector<16xf32>
    %33 = vector.multi_reduction <add>, %32, %cst_19 [1] : vector<16x32xf32> to vector<16xf32>
    %34 = vector.shape_cast %33 : vector<16xf32> to vector<16x1xf32>
    %cst_20 = arith.constant 3.200000e+01 : f32
    %35 = vector.broadcast %cst_20 : f32 to vector<16x1xf32>
    %36 = arith.divf %34, %35 : vector<16x1xf32>
    %37 = vector.broadcast %29 : vector<16x1xf32> to vector<16x32xf32>
    %38 = arith.subf %25, %37 : vector<16x32xf32>
    %cst_21 = arith.constant 9.99999997E-7 : f32
    %39 = vector.broadcast %cst_21 : f32 to vector<16x1xf32>
    %40 = arith.addf %36, %39 : vector<16x1xf32>
    %41 = math.rsqrt %40 : vector<16x1xf32>
    %42 = vector.broadcast %41 : vector<16x1xf32> to vector<16x32xf32>
    %43 = arith.mulf %38, %42 : vector<16x32xf32>
    %cst_22 = arith.constant 1.000000e+00 : f32
    %44 = vector.broadcast %cst_22 : f32 to vector<1x32xf32>
    %45 = arith.addf %44, %8 : vector<1x32xf32>
    %46 = vector.broadcast %45 : vector<1x32xf32> to vector<16x32xf32>
    %47 = arith.mulf %46, %43 : vector<16x32xf32>
    %48 = vector.broadcast %5 : vector<1x32xf32> to vector<16x32xf32>
    %49 = arith.addf %47, %48 : vector<16x32xf32>
    %50 = arith.truncf %49 : vector<16x32xf32> to vector<16x32xbf16>
    %c0_23 = arith.constant 0 : index
    %c0_24 = arith.constant 0 : index
    %51 = vector.load %arg6[%c0_23, %c0_24] : memref<32x64xbf16, #tpu.memory_space<vmem>>, vector<32x64xbf16>
    %cst_25 = arith.constant dense<0.000000e+00> : vector<16x64xf32>
    %52 = tpu.matmul %50, %51, %cst_25 {dimension_numbers = #tpu.dot_dimension_numbers<[1], [0], [0], [1], [0, 0, 1, 1], [], []>} : vector<16x32xbf16>, vector<32x64xbf16>, vector<16x64xf32> -> vector<16x64xf32>
    %c0_26 = arith.constant 0 : index
    %c0_27 = arith.constant 0 : index
    %53 = vector.load %arg7[%c0_26, %c0_27] : memref<1x64xbf16, #tpu.memory_space<vmem>>, vector<1x64xbf16>
    %54 = arith.extf %53 : vector<1x64xbf16> to vector<1x64xf32>
    %55 = vector.broadcast %54 : vector<1x64xf32> to vector<16x64xf32>
    %56 = arith.addf %52, %55 : vector<16x64xf32>
    %cst_28 = arith.constant 5.000000e-01 : f32
    %57 = vector.broadcast %cst_28 : f32 to vector<16x64xf32>
    %58 = arith.mulf %57, %56 : vector<16x64xf32>
    %cst_29 = arith.constant 4.471500e-02 : f32
    %59 = vector.broadcast %cst_29 : f32 to vector<16x64xf32>
    %60 = arith.mulf %59, %56 : vector<16x64xf32>
    %61 = arith.mulf %60, %56 : vector<16x64xf32>
    %62 = arith.mulf %61, %56 : vector<16x64xf32>
    %63 = arith.addf %56, %62 : vector<16x64xf32>
    %cst_30 = arith.constant 0.797884583 : f32
    %64 = vector.broadcast %cst_30 : f32 to vector<16x64xf32>
    %65 = arith.mulf %64, %63 : vector<16x64xf32>
    %66 = math.tanh %65 : vector<16x64xf32>
    %cst_31 = arith.constant 1.000000e+00 : f32
    %67 = vector.broadcast %cst_31 : f32 to vector<16x64xf32>
    %68 = arith.addf %67, %66 : vector<16x64xf32>
    %69 = arith.mulf %58, %68 : vector<16x64xf32>
    %70 = arith.truncf %69 : vector<16x64xf32> to vector<16x64xbf16>
    %c0_32 = arith.constant 0 : index
    %c0_33 = arith.constant 0 : index
    %71 = vector.load %arg8[%c0_32, %c0_33] : memref<64x32xbf16, #tpu.memory_space<vmem>>, vector<64x32xbf16>
    %cst_34 = arith.constant dense<0.000000e+00> : vector<16x32xf32>
    %72 = tpu.matmul %70, %71, %cst_34 {dimension_numbers = #tpu.dot_dimension_numbers<[1], [0], [0], [1], [0, 0, 1, 1], [], []>} : vector<16x64xbf16>, vector<64x32xbf16>, vector<16x32xf32> -> vector<16x32xf32>
    %c0_35 = arith.constant 0 : index
    %c0_36 = arith.constant 0 : index
    %73 = vector.load %arg9[%c0_35, %c0_36] : memref<1x32xbf16, #tpu.memory_space<vmem>>, vector<1x32xbf16>
    %74 = arith.extf %73 : vector<1x32xbf16> to vector<1x32xf32>
    %75 = vector.broadcast %74 : vector<1x32xf32> to vector<16x32xf32>
    %76 = arith.addf %72, %75 : vector<16x32xf32>
    %77 = vector.broadcast %11 : vector<1x32xf32> to vector<16x32xf32>
    %78 = arith.mulf %77, %76 : vector<16x32xf32>
    %79 = arith.addf %25, %78 : vector<16x32xf32>
    %80 = arith.truncf %79 : vector<16x32xf32> to vector<16x32xbf16>
    %c0_37 = arith.constant 0 : index
    %c0_38 = arith.constant 0 : index
    %c0_39 = arith.constant 0 : index
    %81 = vector.load %arg10[%c0_37, %c0_38, %c0_39] : memref<1x16x32xbf16, #tpu.memory_space<vmem>>, vector<1x16x32xbf16>
    %82 = vector.shape_cast %81 : vector<1x16x32xbf16> to vector<16x32xbf16>
    %83 = vector.shape_cast %80 : vector<16x32xbf16> to vector<1x16x32xbf16>
    tpu.vector_store %arg10[%c0_37, %c0_38, %c0_39], %83 {strides = array<i32>} : memref<1x16x32xbf16, #tpu.memory_space<vmem>>, vector<1x16x32xbf16>,
    return
  }
  func.func @transform_0(%arg0: i32) -> (i32, i32, i32) {
    %c0_i32 = arith.constant 0 : i32
    %c0_i32_0 = arith.constant 0 : i32
    %c0_i32_1 = arith.constant 0 : i32
    return %arg0, %c0_i32, %c0_i32_0 : i32, i32, i32
  }
  func.func @transform_1(%arg0: i32) -> (i32, i32, i32) {
    %c0_i32 = arith.constant 0 : i32
    %c0_i32_0 = arith.constant 0 : i32
    %c0_i32_1 = arith.constant 0 : i32
    return %arg0, %c0_i32, %c0_i32_0 : i32, i32, i32
  }
  func.func @transform_2(%arg0: i32) -> (i32, i32, i32) {
    %c0_i32 = arith.constant 0 : i32
    %c0_i32_0 = arith.constant 0 : i32
    %c0_i32_1 = arith.constant 0 : i32
    return %arg0, %c0_i32, %c0_i32_0 : i32, i32, i32
  }
  func.func @transform_3(%arg0: i32) -> (i32, i32) {
    %c0_i32 = arith.constant 0 : i32
    %c0_i32_0 = arith.constant 0 : i32
    %c0_i32_1 = arith.constant 0 : i32
    return %c0_i32, %c0_i32_0 : i32, i32
  }
  func.func @transform_4(%arg0: i32) -> (i32, i32) {
    %c0_i32 = arith.constant 0 : i32
    %c0_i32_0 = arith.constant 0 : i32
    %c0_i32_1 = arith.constant 0 : i32
    return %c0_i32, %c0_i32_0 : i32, i32
  }
  func.func @transform_5(%arg0: i32) -> (i32, i32) {
    %c0_i32 = arith.constant 0 : i32
    %c0_i32_0 = arith.constant 0 : i32
    %c0_i32_1 = arith.constant 0 : i32
    return %c0_i32, %c0_i32_0 : i32, i32
  }
  func.func @transform_6(%arg0: i32) -> (i32, i32) {
    %c0_i32 = arith.constant 0 : i32
    %c0_i32_0 = arith.constant 0 : i32
    %c0_i32_1 = arith.constant 0 : i32
    return %c0_i32, %c0_i32_0 : i32, i32
  }
  func.func @transform_7(%arg0: i32) -> (i32, i32) {
    %c0_i32 = arith.constant 0 : i32
    %c0_i32_0 = arith.constant 0 : i32
    %c0_i32_1 = arith.constant 0 : i32
    return %c0_i32, %c0_i32_0 : i32, i32
  }
  func.func @transform_8(%arg0: i32) -> (i32, i32) {
    %c0_i32 = arith.constant 0 : i32
    %c0_i32_0 = arith.constant 0 : i32
    %c0_i32_1 = arith.constant 0 : i32
    return %c0_i32, %c0_i32_0 : i32, i32
  }
  func.func @transform_9(%arg0: i32) -> (i32, i32, i32) {
    %c0_i32 = arith.constant 0 : i32
    %c0_i32_0 = arith.constant 0 : i32
    %c0_i32_1 = arith.constant 0 : i32
    return %arg0, %c0_i32, %c0_i32_0 : i32, i32, i32
  }
}

module attributes {stable_mosaic.version = 11 : i64} {
  func.func @_single_post_kernel(%arg0: i32, %arg1: memref<1x24x32xbf16, #tpu.memory_space<vmem>>, %arg2: memref<1x24x32xbf16, #tpu.memory_space<vmem>>, %arg3: memref<1x24x64xbf16, #tpu.memory_space<vmem>>, %arg4: memref<1x3x32xbf16, #tpu.memory_space<vmem>>, %arg5: memref<32x32xbf16, #tpu.memory_space<vmem>>, %arg6: memref<64x32xbf16, #tpu.memory_space<vmem>>, %arg7: memref<1x32xbf16, #tpu.memory_space<vmem>>, %arg8: memref<1x24x32xbf16, #tpu.memory_space<vmem>>) attributes {dimension_semantics = [#tpu.dimension_semantics<parallel>], iteration_bounds = array<i64: 2>, scalar_prefetch = 0 : i64, scratch_operands = 0 : i64, tpu.core_type = #tpu.core_type<tc>, window_params = [{transform_indices = @transform_0, window_bounds = array<i64: 1, 24, 32>}, {transform_indices = @transform_1, window_bounds = array<i64: 1, 24, 32>}, {transform_indices = @transform_2, window_bounds = array<i64: 1, 24, 64>}, {transform_indices = @transform_3, window_bounds = array<i64: 1, 3, 32>}, {pipeline_mode = #tpu.pipeline_mode<synchronous>, transform_indices = @transform_4, window_bounds = array<i64: 32, 32>}, {pipeline_mode = #tpu.pipeline_mode<synchronous>, transform_indices = @transform_5, window_bounds = array<i64: 64, 32>}, {pipeline_mode = #tpu.pipeline_mode<synchronous>, transform_indices = @transform_6, window_bounds = array<i64: 1, 32>}, {transform_indices = @transform_7, window_bounds = array<i64: 1, 24, 32>}]} {
    %c0 = arith.constant 0 : index
    %c2 = arith.constant 2 : index
    %c0_0 = arith.constant 0 : index
    %0 = vector.load %arg4[%c0, %c2, %c0_0] : memref<1x3x32xbf16, #tpu.memory_space<vmem>>, vector<1x1x32xbf16>
    %1 = vector.shape_cast %0 : vector<1x1x32xbf16> to vector<1x32xbf16>
    %2 = arith.extf %1 : vector<1x32xbf16> to vector<1x32xf32>
    %c0_1 = arith.constant 0 : index
    %c0_2 = arith.constant 0 : index
    %c0_3 = arith.constant 0 : index
    %3 = vector.load %arg1[%c0_1, %c0_2, %c0_3] : memref<1x24x32xbf16, #tpu.memory_space<vmem>>, vector<1x24x32xbf16>
    %4 = vector.shape_cast %3 : vector<1x24x32xbf16> to vector<24x32xbf16>
    %5 = arith.extf %4 : vector<24x32xbf16> to vector<24x32xf32>
    %c0_4 = arith.constant 0 : index
    %c0_5 = arith.constant 0 : index
    %c0_6 = arith.constant 0 : index
    %6 = vector.load %arg3[%c0_4, %c0_5, %c0_6] : memref<1x24x64xbf16, #tpu.memory_space<vmem>>, vector<1x24x64xbf16>
    %7 = vector.shape_cast %6 : vector<1x24x64xbf16> to vector<24x64xbf16>
    %8 = arith.extf %7 : vector<24x64xbf16> to vector<24x64xf32>
    %cst = arith.constant 5.000000e-01 : f32
    %9 = vector.broadcast %cst : f32 to vector<24x64xf32>
    %10 = arith.mulf %9, %8 : vector<24x64xf32>
    %cst_7 = arith.constant 4.471500e-02 : f32
    %11 = vector.broadcast %cst_7 : f32 to vector<24x64xf32>
    %12 = arith.mulf %11, %8 : vector<24x64xf32>
    %13 = arith.mulf %12, %8 : vector<24x64xf32>
    %14 = arith.mulf %13, %8 : vector<24x64xf32>
    %15 = arith.addf %8, %14 : vector<24x64xf32>
    %cst_8 = arith.constant 0.797884583 : f32
    %16 = vector.broadcast %cst_8 : f32 to vector<24x64xf32>
    %17 = arith.mulf %16, %15 : vector<24x64xf32>
    %18 = math.tanh %17 : vector<24x64xf32>
    %cst_9 = arith.constant 1.000000e+00 : f32
    %19 = vector.broadcast %cst_9 : f32 to vector<24x64xf32>
    %20 = arith.addf %19, %18 : vector<24x64xf32>
    %21 = arith.mulf %10, %20 : vector<24x64xf32>
    %22 = arith.truncf %21 : vector<24x64xf32> to vector<24x64xbf16>
    %c0_10 = arith.constant 0 : index
    %c0_11 = arith.constant 0 : index
    %c0_12 = arith.constant 0 : index
    %23 = vector.load %arg2[%c0_10, %c0_11, %c0_12] : memref<1x24x32xbf16, #tpu.memory_space<vmem>>, vector<1x24x32xbf16>
    %24 = vector.shape_cast %23 : vector<1x24x32xbf16> to vector<24x32xbf16>
    %c0_13 = arith.constant 0 : index
    %c0_14 = arith.constant 0 : index
    %25 = vector.load %arg5[%c0_13, %c0_14] : memref<32x32xbf16, #tpu.memory_space<vmem>>, vector<32x32xbf16>
    %cst_15 = arith.constant dense<0.000000e+00> : vector<24x32xf32>
    %26 = tpu.matmul %24, %25, %cst_15 {dimension_numbers = #tpu.dot_dimension_numbers<[1], [0], [0], [1], [0, 0, 1, 1], [], []>} : vector<24x32xbf16>, vector<32x32xbf16>, vector<24x32xf32> -> vector<24x32xf32>
    %c0_16 = arith.constant 0 : index
    %c0_17 = arith.constant 0 : index
    %27 = vector.load %arg6[%c0_16, %c0_17] : memref<64x32xbf16, #tpu.memory_space<vmem>>, vector<64x32xbf16>
    %cst_18 = arith.constant dense<0.000000e+00> : vector<24x32xf32>
    %28 = tpu.matmul %22, %27, %cst_18 {dimension_numbers = #tpu.dot_dimension_numbers<[1], [0], [0], [1], [0, 0, 1, 1], [], []>} : vector<24x64xbf16>, vector<64x32xbf16>, vector<24x32xf32> -> vector<24x32xf32>
    %29 = arith.addf %26, %28 : vector<24x32xf32>
    %c0_19 = arith.constant 0 : index
    %c0_20 = arith.constant 0 : index
    %30 = vector.load %arg7[%c0_19, %c0_20] : memref<1x32xbf16, #tpu.memory_space<vmem>>, vector<1x32xbf16>
    %31 = arith.extf %30 : vector<1x32xbf16> to vector<1x32xf32>
    %32 = vector.broadcast %31 : vector<1x32xf32> to vector<24x32xf32>
    %33 = arith.addf %29, %32 : vector<24x32xf32>
    %34 = vector.broadcast %2 : vector<1x32xf32> to vector<24x32xf32>
    %35 = arith.mulf %34, %33 : vector<24x32xf32>
    %36 = arith.addf %5, %35 : vector<24x32xf32>
    %37 = arith.truncf %36 : vector<24x32xf32> to vector<24x32xbf16>
    %c0_21 = arith.constant 0 : index
    %c0_22 = arith.constant 0 : index
    %c0_23 = arith.constant 0 : index
    %38 = vector.load %arg8[%c0_21, %c0_22, %c0_23] : memref<1x24x32xbf16, #tpu.memory_space<vmem>>, vector<1x24x32xbf16>
    %39 = vector.shape_cast %38 : vector<1x24x32xbf16> to vector<24x32xbf16>
    %40 = vector.shape_cast %37 : vector<24x32xbf16> to vector<1x24x32xbf16>
    tpu.vector_store %arg8[%c0_21, %c0_22, %c0_23], %40 {strides = array<i32>} : memref<1x24x32xbf16, #tpu.memory_space<vmem>>, vector<1x24x32xbf16>,
    return
  }
  func.func @transform_0(%arg0: i32) -> (i32, i32, i32) {
    %c0_i32 = arith.constant 0 : i32
    %c0_i32_0 = arith.constant 0 : i32
    %c0_i32_1 = arith.constant 0 : i32
    return %arg0, %c0_i32, %c0_i32_0 : i32, i32, i32
  }
  func.func @transform_1(%arg0: i32) -> (i32, i32, i32) {
    %c0_i32 = arith.constant 0 : i32
    %c0_i32_0 = arith.constant 0 : i32
    %c0_i32_1 = arith.constant 0 : i32
    return %arg0, %c0_i32, %c0_i32_0 : i32, i32, i32
  }
  func.func @transform_2(%arg0: i32) -> (i32, i32, i32) {
    %c0_i32 = arith.constant 0 : i32
    %c0_i32_0 = arith.constant 0 : i32
    %c0_i32_1 = arith.constant 0 : i32
    return %arg0, %c0_i32, %c0_i32_0 : i32, i32, i32
  }
  func.func @transform_3(%arg0: i32) -> (i32, i32, i32) {
    %c0_i32 = arith.constant 0 : i32
    %c0_i32_0 = arith.constant 0 : i32
    %c0_i32_1 = arith.constant 0 : i32
    return %arg0, %c0_i32, %c0_i32_0 : i32, i32, i32
  }
  func.func @transform_4(%arg0: i32) -> (i32, i32) {
    %c0_i32 = arith.constant 0 : i32
    %c0_i32_0 = arith.constant 0 : i32
    %c0_i32_1 = arith.constant 0 : i32
    return %c0_i32, %c0_i32_0 : i32, i32
  }
  func.func @transform_5(%arg0: i32) -> (i32, i32) {
    %c0_i32 = arith.constant 0 : i32
    %c0_i32_0 = arith.constant 0 : i32
    %c0_i32_1 = arith.constant 0 : i32
    return %c0_i32, %c0_i32_0 : i32, i32
  }
  func.func @transform_6(%arg0: i32) -> (i32, i32) {
    %c0_i32 = arith.constant 0 : i32
    %c0_i32_0 = arith.constant 0 : i32
    %c0_i32_1 = arith.constant 0 : i32
    return %c0_i32, %c0_i32_0 : i32, i32
  }
  func.func @transform_7(%arg0: i32) -> (i32, i32, i32) {
    %c0_i32 = arith.constant 0 : i32
    %c0_i32_0 = arith.constant 0 : i32
    %c0_i32_1 = arith.constant 0 : i32
    return %arg0, %c0_i32, %c0_i32_0 : i32, i32, i32
  }
}

module attributes {stable_mosaic.version = 11 : i64} {
  func.func @_premix_kernel(%arg0: i32, %arg1: memref<1x24x32xbf16, #tpu.memory_space<vmem>>, %arg2: memref<1x3x32xbf16, #tpu.memory_space<vmem>>, %arg3: memref<32x160xbf16, #tpu.memory_space<vmem>>, %arg4: memref<1x160xbf16, #tpu.memory_space<vmem>>, %arg5: memref<64x4xf32, #tpu.memory_space<vmem>>, %arg6: memref<4x64xf32, #tpu.memory_space<vmem>>, %arg7: memref<1x64xf32, #tpu.memory_space<vmem>>, %arg8: memref<1x24x96xbf16, #tpu.memory_space<vmem>>, %arg9: memref<1x24x64xbf16, #tpu.memory_space<vmem>>) attributes {dimension_semantics = [#tpu.dimension_semantics<parallel>], iteration_bounds = array<i64: 2>, scalar_prefetch = 0 : i64, scratch_operands = 0 : i64, tpu.core_type = #tpu.core_type<tc>, window_params = [{transform_indices = @transform_0, window_bounds = array<i64: 1, 24, 32>}, {transform_indices = @transform_1, window_bounds = array<i64: 1, 3, 32>}, {pipeline_mode = #tpu.pipeline_mode<synchronous>, transform_indices = @transform_2, window_bounds = array<i64: 32, 160>}, {pipeline_mode = #tpu.pipeline_mode<synchronous>, transform_indices = @transform_3, window_bounds = array<i64: 1, 160>}, {pipeline_mode = #tpu.pipeline_mode<synchronous>, transform_indices = @transform_4, window_bounds = array<i64: 64, 4>}, {pipeline_mode = #tpu.pipeline_mode<synchronous>, transform_indices = @transform_5, window_bounds = array<i64: 4, 64>}, {pipeline_mode = #tpu.pipeline_mode<synchronous>, transform_indices = @transform_6, window_bounds = array<i64: 1, 64>}, {transform_indices = @transform_7, window_bounds = array<i64: 1, 24, 96>}, {transform_indices = @transform_8, window_bounds = array<i64: 1, 24, 64>}]} {
    %c0 = arith.constant 0 : index
    %c0_0 = arith.constant 0 : index
    %c0_1 = arith.constant 0 : index
    %0 = vector.load %arg1[%c0, %c0_0, %c0_1] : memref<1x24x32xbf16, #tpu.memory_space<vmem>>, vector<1x24x32xbf16>
    %1 = vector.shape_cast %0 : vector<1x24x32xbf16> to vector<24x32xbf16>
    %2 = arith.extf %1 : vector<24x32xbf16> to vector<24x32xf32>
    %c0_2 = arith.constant 0 : index
    %c0_3 = arith.constant 0 : index
    %c0_4 = arith.constant 0 : index
    %3 = vector.load %arg2[%c0_2, %c0_3, %c0_4] : memref<1x3x32xbf16, #tpu.memory_space<vmem>>, vector<1x1x32xbf16>
    %4 = vector.shape_cast %3 : vector<1x1x32xbf16> to vector<1x32xbf16>
    %5 = arith.extf %4 : vector<1x32xbf16> to vector<1x32xf32>
    %c0_5 = arith.constant 0 : index
    %c1 = arith.constant 1 : index
    %c0_6 = arith.constant 0 : index
    %6 = vector.load %arg2[%c0_5, %c1, %c0_6] : memref<1x3x32xbf16, #tpu.memory_space<vmem>>, vector<1x1x32xbf16>
    %7 = vector.shape_cast %6 : vector<1x1x32xbf16> to vector<1x32xbf16>
    %8 = arith.extf %7 : vector<1x32xbf16> to vector<1x32xf32>
    %cst = arith.constant dense<0.000000e+00> : vector<24xf32>
    %9 = vector.multi_reduction <add>, %2, %cst [1] : vector<24x32xf32> to vector<24xf32>
    %10 = vector.shape_cast %9 : vector<24xf32> to vector<24x1xf32>
    %cst_7 = arith.constant 3.200000e+01 : f32
    %11 = vector.broadcast %cst_7 : f32 to vector<24x1xf32>
    %12 = arith.divf %10, %11 : vector<24x1xf32>
    %13 = vector.broadcast %12 : vector<24x1xf32> to vector<24x32xf32>
    %14 = arith.subf %2, %13 : vector<24x32xf32>
    %15 = arith.mulf %14, %14 : vector<24x32xf32>
    %cst_8 = arith.constant dense<0.000000e+00> : vector<24xf32>
    %16 = vector.multi_reduction <add>, %15, %cst_8 [1] : vector<24x32xf32> to vector<24xf32>
    %17 = vector.shape_cast %16 : vector<24xf32> to vector<24x1xf32>
    %cst_9 = arith.constant 3.200000e+01 : f32
    %18 = vector.broadcast %cst_9 : f32 to vector<24x1xf32>
    %19 = arith.divf %17, %18 : vector<24x1xf32>
    %20 = vector.broadcast %12 : vector<24x1xf32> to vector<24x32xf32>
    %21 = arith.subf %2, %20 : vector<24x32xf32>
    %cst_10 = arith.constant 9.99999997E-7 : f32
    %22 = vector.broadcast %cst_10 : f32 to vector<24x1xf32>
    %23 = arith.addf %19, %22 : vector<24x1xf32>
    %24 = math.rsqrt %23 : vector<24x1xf32>
    %25 = vector.broadcast %24 : vector<24x1xf32> to vector<24x32xf32>
    %26 = arith.mulf %21, %25 : vector<24x32xf32>
    %cst_11 = arith.constant 1.000000e+00 : f32
    %27 = vector.broadcast %cst_11 : f32 to vector<1x32xf32>
    %28 = arith.addf %27, %8 : vector<1x32xf32>
    %29 = vector.broadcast %28 : vector<1x32xf32> to vector<24x32xf32>
    %30 = arith.mulf %29, %26 : vector<24x32xf32>
    %31 = vector.broadcast %5 : vector<1x32xf32> to vector<24x32xf32>
    %32 = arith.addf %30, %31 : vector<24x32xf32>
    %33 = arith.truncf %32 : vector<24x32xf32> to vector<24x32xbf16>
    %c0_12 = arith.constant 0 : index
    %c0_13 = arith.constant 0 : index
    %34 = vector.load %arg3[%c0_12, %c0_13] : memref<32x160xbf16, #tpu.memory_space<vmem>>, vector<32x160xbf16>
    %cst_14 = arith.constant dense<0.000000e+00> : vector<24x160xf32>
    %35 = tpu.matmul %33, %34, %cst_14 {dimension_numbers = #tpu.dot_dimension_numbers<[1], [0], [0], [1], [0, 0, 1, 1], [], []>} : vector<24x32xbf16>, vector<32x160xbf16>, vector<24x160xf32> -> vector<24x160xf32>
    %c0_15 = arith.constant 0 : index
    %c0_16 = arith.constant 0 : index
    %36 = vector.load %arg4[%c0_15, %c0_16] : memref<1x160xbf16, #tpu.memory_space<vmem>>, vector<1x160xbf16>
    %37 = arith.extf %36 : vector<1x160xbf16> to vector<1x160xf32>
    %38 = vector.broadcast %37 : vector<1x160xf32> to vector<24x160xf32>
    %39 = arith.addf %35, %38 : vector<24x160xf32>
    %40 = vector.extract_strided_slice %39 {offsets = [0, 0], sizes = [24, 64], strides = [1, 1]} : vector<24x160xf32> to vector<24x64xf32>
    %41 = arith.mulf %40, %40 : vector<24x64xf32>
    %c0_17 = arith.constant 0 : index
    %c0_18 = arith.constant 0 : index
    %42 = vector.load %arg5[%c0_17, %c0_18] : memref<64x4xf32, #tpu.memory_space<vmem>>, vector<64x4xf32>
    %cst_19 = arith.constant dense<0.000000e+00> : vector<24x4xf32>
    %43 = tpu.matmul %41, %42, %cst_19 {dimension_numbers = #tpu.dot_dimension_numbers<[1], [0], [0], [1], [0, 0, 1, 1], [], []>} : vector<24x64xf32>, vector<64x4xf32>, vector<24x4xf32> -> vector<24x4xf32>
    %cst_20 = arith.constant 6.250000e-02 : f32
    %44 = vector.broadcast %cst_20 : f32 to vector<24x4xf32>
    %45 = arith.mulf %43, %44 : vector<24x4xf32>
    %cst_21 = arith.constant 9.99999997E-7 : f32
    %46 = vector.broadcast %cst_21 : f32 to vector<24x4xf32>
    %47 = arith.addf %45, %46 : vector<24x4xf32>
    %48 = math.rsqrt %47 : vector<24x4xf32>
    %c0_22 = arith.constant 0 : index
    %c0_23 = arith.constant 0 : index
    %49 = vector.load %arg6[%c0_22, %c0_23] : memref<4x64xf32, #tpu.memory_space<vmem>>, vector<4x64xf32>
    %cst_24 = arith.constant dense<0.000000e+00> : vector<24x64xf32>
    %50 = tpu.matmul %48, %49, %cst_24 {dimension_numbers = #tpu.dot_dimension_numbers<[1], [0], [0], [1], [0, 0, 1, 1], [], []>} : vector<24x4xf32>, vector<4x64xf32>, vector<24x64xf32> -> vector<24x64xf32>
    %51 = arith.mulf %40, %50 : vector<24x64xf32>
    %c0_25 = arith.constant 0 : index
    %c0_26 = arith.constant 0 : index
    %52 = vector.load %arg7[%c0_25, %c0_26] : memref<1x64xf32, #tpu.memory_space<vmem>>, vector<1x64xf32>
    %53 = vector.broadcast %52 : vector<1x64xf32> to vector<24x64xf32>
    %54 = arith.mulf %51, %53 : vector<24x64xf32>
    %55 = arith.truncf %54 : vector<24x64xf32> to vector<24x64xbf16>
    %c0_27 = arith.constant 0 : index
    %c0_28 = arith.constant 0 : index
    %c0_29 = arith.constant 0 : index
    %56 = vector.load %arg8[%c0_27, %c0_28, %c0_29] : memref<1x24x96xbf16, #tpu.memory_space<vmem>>, vector<1x24x64xbf16>
    %57 = vector.shape_cast %56 : vector<1x24x64xbf16> to vector<24x64xbf16>
    %58 = vector.shape_cast %55 : vector<24x64xbf16> to vector<1x24x64xbf16>
    tpu.vector_store %arg8[%c0_27, %c0_28, %c0_29], %58 {strides = array<i32>} : memref<1x24x96xbf16, #tpu.memory_space<vmem>>, vector<1x24x64xbf16>,
    %59 = vector.extract_strided_slice %39 {offsets = [0, 64], sizes = [24, 32], strides = [1, 1]} : vector<24x160xf32> to vector<24x32xf32>
    %60 = arith.truncf %59 : vector<24x32xf32> to vector<24x32xbf16>
    %c0_30 = arith.constant 0 : index
    %c0_31 = arith.constant 0 : index
    %c64 = arith.constant 64 : index
    %61 = vector.load %arg8[%c0_30, %c0_31, %c64] : memref<1x24x96xbf16, #tpu.memory_space<vmem>>, vector<1x24x32xbf16>
    %62 = vector.shape_cast %61 : vector<1x24x32xbf16> to vector<24x32xbf16>
    %63 = vector.shape_cast %60 : vector<24x32xbf16> to vector<1x24x32xbf16>
    tpu.vector_store %arg8[%c0_30, %c0_31, %c64], %63 {strides = array<i32>} : memref<1x24x96xbf16, #tpu.memory_space<vmem>>, vector<1x24x32xbf16>,
    %64 = vector.extract_strided_slice %39 {offsets = [0, 96], sizes = [24, 64], strides = [1, 1]} : vector<24x160xf32> to vector<24x64xf32>
    %65 = arith.truncf %64 : vector<24x64xf32> to vector<24x64xbf16>
    %c0_32 = arith.constant 0 : index
    %c0_33 = arith.constant 0 : index
    %c0_34 = arith.constant 0 : index
    %66 = vector.load %arg9[%c0_32, %c0_33, %c0_34] : memref<1x24x64xbf16, #tpu.memory_space<vmem>>, vector<1x24x64xbf16>
    %67 = vector.shape_cast %66 : vector<1x24x64xbf16> to vector<24x64xbf16>
    %68 = vector.shape_cast %65 : vector<24x64xbf16> to vector<1x24x64xbf16>
    tpu.vector_store %arg9[%c0_32, %c0_33, %c0_34], %68 {strides = array<i32>} : memref<1x24x64xbf16, #tpu.memory_space<vmem>>, vector<1x24x64xbf16>,
    return
  }
  func.func @transform_0(%arg0: i32) -> (i32, i32, i32) {
    %c0_i32 = arith.constant 0 : i32
    %c0_i32_0 = arith.constant 0 : i32
    %c0_i32_1 = arith.constant 0 : i32
    return %arg0, %c0_i32, %c0_i32_0 : i32, i32, i32
  }
  func.func @transform_1(%arg0: i32) -> (i32, i32, i32) {
    %c0_i32 = arith.constant 0 : i32
    %c0_i32_0 = arith.constant 0 : i32
    %c0_i32_1 = arith.constant 0 : i32
    return %arg0, %c0_i32, %c0_i32_0 : i32, i32, i32
  }
  func.func @transform_2(%arg0: i32) -> (i32, i32) {
    %c0_i32 = arith.constant 0 : i32
    %c0_i32_0 = arith.constant 0 : i32
    %c0_i32_1 = arith.constant 0 : i32
    return %c0_i32, %c0_i32_0 : i32, i32
  }
  func.func @transform_3(%arg0: i32) -> (i32, i32) {
    %c0_i32 = arith.constant 0 : i32
    %c0_i32_0 = arith.constant 0 : i32
    %c0_i32_1 = arith.constant 0 : i32
    return %c0_i32, %c0_i32_0 : i32, i32
  }
  func.func @transform_4(%arg0: i32) -> (i32, i32) {
    %c0_i32 = arith.constant 0 : i32
    %c0_i32_0 = arith.constant 0 : i32
    %c0_i32_1 = arith.constant 0 : i32
    return %c0_i32, %c0_i32_0 : i32, i32
  }
  func.func @transform_5(%arg0: i32) -> (i32, i32) {
    %c0_i32 = arith.constant 0 : i32
    %c0_i32_0 = arith.constant 0 : i32
    %c0_i32_1 = arith.constant 0 : i32
    return %c0_i32, %c0_i32_0 : i32, i32
  }
  func.func @transform_6(%arg0: i32) -> (i32, i32) {
    %c0_i32 = arith.constant 0 : i32
    %c0_i32_0 = arith.constant 0 : i32
    %c0_i32_1 = arith.constant 0 : i32
    return %c0_i32, %c0_i32_0 : i32, i32
  }
  func.func @transform_7(%arg0: i32) -> (i32, i32, i32) {
    %c0_i32 = arith.constant 0 : i32
    %c0_i32_0 = arith.constant 0 : i32
    %c0_i32_1 = arith.constant 0 : i32
    return %arg0, %c0_i32, %c0_i32_0 : i32, i32, i32
  }
  func.func @transform_8(%arg0: i32) -> (i32, i32, i32) {
    %c0_i32 = arith.constant 0 : i32
    %c0_i32_0 = arith.constant 0 : i32
    %c0_i32_1 = arith.constant 0 : i32
    return %arg0, %c0_i32, %c0_i32_0 : i32, i32, i32
  }
}

module attributes {stable_mosaic.version = 11 : i64} {
  func.func @_premix_kernel(%arg0: i32, %arg1: memref<1x16x32xbf16, #tpu.memory_space<vmem>>, %arg2: memref<1x2x32xbf16, #tpu.memory_space<vmem>>, %arg3: memref<32x4xbf16, #tpu.memory_space<vmem>>, %arg4: memref<1x4xbf16, #tpu.memory_space<vmem>>, %arg5: memref<1x16x4xbf16, #tpu.memory_space<vmem>>) attributes {dimension_semantics = [#tpu.dimension_semantics<parallel>], iteration_bounds = array<i64: 2>, scalar_prefetch = 0 : i64, scratch_operands = 0 : i64, tpu.core_type = #tpu.core_type<tc>, window_params = [{transform_indices = @transform_0, window_bounds = array<i64: 1, 16, 32>}, {transform_indices = @transform_1, window_bounds = array<i64: 1, 2, 32>}, {pipeline_mode = #tpu.pipeline_mode<synchronous>, transform_indices = @transform_2, window_bounds = array<i64: 32, 4>}, {pipeline_mode = #tpu.pipeline_mode<synchronous>, transform_indices = @transform_3, window_bounds = array<i64: 1, 4>}, {transform_indices = @transform_4, window_bounds = array<i64: 1, 16, 4>}]} {
    %c0 = arith.constant 0 : index
    %c0_0 = arith.constant 0 : index
    %c0_1 = arith.constant 0 : index
    %0 = vector.load %arg1[%c0, %c0_0, %c0_1] : memref<1x16x32xbf16, #tpu.memory_space<vmem>>, vector<1x16x32xbf16>
    %1 = vector.shape_cast %0 : vector<1x16x32xbf16> to vector<16x32xbf16>
    %2 = arith.extf %1 : vector<16x32xbf16> to vector<16x32xf32>
    %c0_2 = arith.constant 0 : index
    %c0_3 = arith.constant 0 : index
    %c0_4 = arith.constant 0 : index
    %3 = vector.load %arg2[%c0_2, %c0_3, %c0_4] : memref<1x2x32xbf16, #tpu.memory_space<vmem>>, vector<1x1x32xbf16>
    %4 = vector.shape_cast %3 : vector<1x1x32xbf16> to vector<1x32xbf16>
    %5 = arith.extf %4 : vector<1x32xbf16> to vector<1x32xf32>
    %c0_5 = arith.constant 0 : index
    %c1 = arith.constant 1 : index
    %c0_6 = arith.constant 0 : index
    %6 = vector.load %arg2[%c0_5, %c1, %c0_6] : memref<1x2x32xbf16, #tpu.memory_space<vmem>>, vector<1x1x32xbf16>
    %7 = vector.shape_cast %6 : vector<1x1x32xbf16> to vector<1x32xbf16>
    %8 = arith.extf %7 : vector<1x32xbf16> to vector<1x32xf32>
    %cst = arith.constant dense<0.000000e+00> : vector<16xf32>
    %9 = vector.multi_reduction <add>, %2, %cst [1] : vector<16x32xf32> to vector<16xf32>
    %10 = vector.shape_cast %9 : vector<16xf32> to vector<16x1xf32>
    %cst_7 = arith.constant 3.200000e+01 : f32
    %11 = vector.broadcast %cst_7 : f32 to vector<16x1xf32>
    %12 = arith.divf %10, %11 : vector<16x1xf32>
    %13 = vector.broadcast %12 : vector<16x1xf32> to vector<16x32xf32>
    %14 = arith.subf %2, %13 : vector<16x32xf32>
    %15 = arith.mulf %14, %14 : vector<16x32xf32>
    %cst_8 = arith.constant dense<0.000000e+00> : vector<16xf32>
    %16 = vector.multi_reduction <add>, %15, %cst_8 [1] : vector<16x32xf32> to vector<16xf32>
    %17 = vector.shape_cast %16 : vector<16xf32> to vector<16x1xf32>
    %cst_9 = arith.constant 3.200000e+01 : f32
    %18 = vector.broadcast %cst_9 : f32 to vector<16x1xf32>
    %19 = arith.divf %17, %18 : vector<16x1xf32>
    %20 = vector.broadcast %12 : vector<16x1xf32> to vector<16x32xf32>
    %21 = arith.subf %2, %20 : vector<16x32xf32>
    %cst_10 = arith.constant 9.99999997E-7 : f32
    %22 = vector.broadcast %cst_10 : f32 to vector<16x1xf32>
    %23 = arith.addf %19, %22 : vector<16x1xf32>
    %24 = math.rsqrt %23 : vector<16x1xf32>
    %25 = vector.broadcast %24 : vector<16x1xf32> to vector<16x32xf32>
    %26 = arith.mulf %21, %25 : vector<16x32xf32>
    %cst_11 = arith.constant 1.000000e+00 : f32
    %27 = vector.broadcast %cst_11 : f32 to vector<1x32xf32>
    %28 = arith.addf %27, %8 : vector<1x32xf32>
    %29 = vector.broadcast %28 : vector<1x32xf32> to vector<16x32xf32>
    %30 = arith.mulf %29, %26 : vector<16x32xf32>
    %31 = vector.broadcast %5 : vector<1x32xf32> to vector<16x32xf32>
    %32 = arith.addf %30, %31 : vector<16x32xf32>
    %33 = arith.truncf %32 : vector<16x32xf32> to vector<16x32xbf16>
    %c0_12 = arith.constant 0 : index
    %c0_13 = arith.constant 0 : index
    %34 = vector.load %arg3[%c0_12, %c0_13] : memref<32x4xbf16, #tpu.memory_space<vmem>>, vector<32x4xbf16>
    %cst_14 = arith.constant dense<0.000000e+00> : vector<16x4xf32>
    %35 = tpu.matmul %33, %34, %cst_14 {dimension_numbers = #tpu.dot_dimension_numbers<[1], [0], [0], [1], [0, 0, 1, 1], [], []>} : vector<16x32xbf16>, vector<32x4xbf16>, vector<16x4xf32> -> vector<16x4xf32>
    %c0_15 = arith.constant 0 : index
    %c0_16 = arith.constant 0 : index
    %36 = vector.load %arg4[%c0_15, %c0_16] : memref<1x4xbf16, #tpu.memory_space<vmem>>, vector<1x4xbf16>
    %37 = arith.extf %36 : vector<1x4xbf16> to vector<1x4xf32>
    %38 = vector.broadcast %37 : vector<1x4xf32> to vector<16x4xf32>
    %39 = arith.addf %35, %38 : vector<16x4xf32>
    %40 = arith.truncf %39 : vector<16x4xf32> to vector<16x4xbf16>
    %c0_17 = arith.constant 0 : index
    %c0_18 = arith.constant 0 : index
    %c0_19 = arith.constant 0 : index
    %41 = vector.load %arg5[%c0_17, %c0_18, %c0_19] : memref<1x16x4xbf16, #tpu.memory_space<vmem>>, vector<1x16x4xbf16>
    %42 = vector.shape_cast %41 : vector<1x16x4xbf16> to vector<16x4xbf16>
    %43 = vector.shape_cast %40 : vector<16x4xbf16> to vector<1x16x4xbf16>
    tpu.vector_store %arg5[%c0_17, %c0_18, %c0_19], %43 {strides = array<i32>} : memref<1x16x4xbf16, #tpu.memory_space<vmem>>, vector<1x16x4xbf16>,
    return
  }
  func.func @transform_0(%arg0: i32) -> (i32, i32, i32) {
    %c0_i32 = arith.constant 0 : i32
    %c0_i32_0 = arith.constant 0 : i32
    %c0_i32_1 = arith.constant 0 : i32
    return %arg0, %c0_i32, %c0_i32_0 : i32, i32, i32
  }
  func.func @transform_1(%arg0: i32) -> (i32, i32, i32) {
    %c0_i32 = arith.constant 0 : i32
    %c0_i32_0 = arith.constant 0 : i32
    %c0_i32_1 = arith.constant 0 : i32
    return %arg0, %c0_i32, %c0_i32_0 : i32, i32, i32
  }
  func.func @transform_2(%arg0: i32) -> (i32, i32) {
    %c0_i32 = arith.constant 0 : i32
    %c0_i32_0 = arith.constant 0 : i32
    %c0_i32_1 = arith.constant 0 : i32
    return %c0_i32, %c0_i32_0 : i32, i32
  }
  func.func @transform_3(%arg0: i32) -> (i32, i32) {
    %c0_i32 = arith.constant 0 : i32
    %c0_i32_0 = arith.constant 0 : i32
    %c0_i32_1 = arith.constant 0 : i32
    return %c0_i32, %c0_i32_0 : i32, i32
  }
  func.func @transform_4(%arg0: i32) -> (i32, i32, i32) {
    %c0_i32 = arith.constant 0 : i32
    %c0_i32_0 = arith.constant 0 : i32
    %c0_i32_1 = arith.constant 0 : i32
    return %arg0, %c0_i32, %c0_i32_0 : i32, i32, i32
  }
}

</mosaic_0001>

<llo_original>
// kernel: flux_forward.33
$region0: #{flux_forward.33}
  #allocation0 [shape = 'u32[]', space=smem, size = 0x4, offset = 0x4, fixed_abs, tag = 'smem constant byte address 0x4 - core index']
  #allocation1 [shape = 'u32[72,128]{1,0:T(1,128)}', space=vmem, size = 0x9000, scoped, tag = 'internal scratch']
  %s0 = inlined_call_operand.vmem [shape: bf16[2,8], index: 0, kind: input, shape index: {}]
  %s1 = inlined_call_operand.vmem [shape: bf16[8,32], index: 1, kind: input, shape index: {}]
  %s2 = inlined_call_operand.vmem [shape: bf16[1,32], index: 2, kind: input, shape index: {}]
  %s3 = inlined_call_operand.vmem [shape: bf16[32,32], index: 3, kind: input, shape index: {}]
  %s4 = inlined_call_operand.vmem [shape: bf16[1,32], index: 4, kind: input, shape index: {}]
  %s5 = inlined_call_operand.vmem [shape: bf16[2,32], index: 5, kind: output, shape index: {}]
  %s6 = sld [smem:[#allocation0]]
  $region30: #{flux_forward.33} parent=0
    _
  %s8 = ssub.s32 1, %s6
  %s9 = scalar_select 0, %s8, %s6
  // Predicated region
  $region2: #{flux_forward.33} parent=0 // pred_check
    _
  $region3: #{flux_forward.33} parent=0 // pred_check_branch
    %11 = sbr.rel (0) target = $region5
  $region4: #{flux_forward.33} parent=0 // pred_region
    _
  $region5: #{flux_forward.33} parent=0 // pred_fallthru
    _
  // Predicated region
  $region6: #{flux_forward.33} parent=0 // pred_check
    _
  $region7: #{flux_forward.33} parent=0 // pred_check_branch
    %13 = sbr.rel (0) target = $region9
  $region8: #{flux_forward.33} parent=0 // pred_region
    _
  $region9: #{flux_forward.33} parent=0 // pred_fallthru
    _
  // Predicated region
  $region10: #{flux_forward.33} parent=0 // pred_check
    _
  $region11: #{flux_forward.33} parent=0 // pred_check_branch
    %15 = sbr.rel (0) target = $region13
  $region12: #{flux_forward.33} parent=0 // pred_region
    _
  $region13: #{flux_forward.33} parent=0 // pred_fallthru
    _
  // Predicated region
  $region14: #{flux_forward.33} parent=0 // pred_check
    _
  $region15: #{flux_forward.33} parent=0 // pred_check_branch
    %17 = sbr.rel (0) target = $region17
  $region16: #{flux_forward.33} parent=0 // pred_region
    _
  $region17: #{flux_forward.33} parent=0 // pred_fallthru
    _
  // Predicated region
  $region18: #{flux_forward.33} parent=0 // pred_check
    _
  $region19: #{flux_forward.33} parent=0 // pred_check_branch
    %19 = sbr.rel (0) target = $region21
  $region20: #{flux_forward.33} parent=0 // pred_region
    _
  $region21: #{flux_forward.33} parent=0 // pred_fallthru
    _
  %v21 = vld [vmem:[%s0] sm:$0x1]
  %v22 = vld [vmem:[%s1] sm:$0xf]
  %v23 = vld [vmem:[%s2] sm:$0x1]
  %v24 = vunpack.c.l.bf16 %v23
  %v25 = vperm.slane %v24, 0
  %vm26 = vcmask 64512
  %v28 = vsel %vm26, %v21, 0
  %vm30 = vcmask 1043456
  %v32 = vsel %vm30, %v22, 0
  %34 = vmatpush.bf16.msra.mxu0 0
  %35 = vmatpush.bf16.msra.mxu0 0
  %36 = vmatpush.bf16.msra.mxu0 0
  %37 = vmatpush.bf16.msra.mxu0 0
  %38 = vmatpush.bf16.msra.mxu0 0
  %39 = vmatpush.bf16.msra.mxu0 0
  %40 = vmatpush.bf16.msra.mxu0 0
  %41 = vmatpush.bf16.msra.mxu0 %v32
  %42 = vmatmul.bf16.gmra.mxu0 %v28
  %v43 = vpop.f32.mrf.mxu0
  %v44 = vadd.f32 %v25, %v43
  %v45 = vpop.f32.mrf.mxu0
  %46 = vdwg.mxu0
  %v47 = vxor.u32 %v44, 2147483648
  %v48 = vmul.f32 %v47, 1.442695
  %v49 = vpow.pop %v48
  %v50 = vadd.f32 %v49, 1.0
  %v51 = vrcp.pop %v50
  %v52 = vmul.f32 %v50, %v51
  %v53 = vsub.f32 1.0, %v52
  %v54 = vmul.f32 %v51, %v53
  %v55 = vadd.f32 %v51, %v54
  %vm56 = vweird.f32 %v50
  %vm57 = vweird.f32 %v51
  %vm58 = vmor %vm56, %vm57
  %v59 = vsel %vm58, %v51, %v55
  %v60 = vand.u32 2147483647, %v50
  %vm61 = vcmp.eq.f32.partialorder %v60, 8.507059e+37
  %v62 = vand.u32 %v50, 2147483648
  %v63 = vor.u32 1.1754944e-38, %v62
  %v64 = vsel %vm61, %v63, %v59
  %v65 = vmul.f32 1.0, %v64
  %v66 = vmul.f32 %v44, %v65
  %v67 = vpack.c.bf16 %v66, %v66
  %v68 = vld [vmem:[%s3] sm:$0xf]
  %v69 = vld [vmem:[%s3 + $0x4] sm:$0xf]
  %v70 = vld [vmem:[%s3 + $0x8] sm:$0xf]
  %v71 = vld [vmem:[%s3 + $0xc] sm:$0xf]
  %v72 = vld [vmem:[%s4] sm:$0x1]
  %v73 = vunpack.c.l.bf16 %v72
  %v74 = vperm.slane %v73, 0
  %v79 = vunpack.c.l.b16 %v68
  %v80 = vunpack.c.l.b16 %v69
  %v81 = vunpack.c.l.b16 %v70
  %v82 = vunpack.c.l.b16 %v71
  %v83 = vpack.c.b16 %v80, %v79
  %v84 = vpack.c.b16 %v82, %v81
  %vm87 = vcmask 261120
  %v89 = vsel %vm87, %v67, 0
  %91 = vmatpush.bf16.msra.mxu0 0
  %92 = vmatpush.bf16.msra.mxu0 0
  %93 = vmatpush.bf16.msra.mxu0 0
  %94 = vmatpush.bf16.msra.mxu0 0
  %95 = vmatpush.bf16.msra.mxu0 0
  %96 = vmatpush.bf16.msra.mxu0 0
  %97 = vmatpush.bf16.msra.mxu0 %v84
  %98 = vmatpush.bf16.msra.mxu0 %v83
  %99 = vmatmul.bf16.gmra.mxu0 %v89
  %v100 = vpop.f32.mrf.mxu0
  %v101 = vadd.f32 %v74, %v100
  %v102 = vpop.f32.mrf.mxu0
  %103 = vdwg.mxu0
  %v104 = vpack.c.bf16 %v101, %v101
  %vm105 = vcmask 253952
  %106 = vst.msk [vmem:[%s5] sm:$0x1] %vm105, %v104
  // Predicated region
  $region22: #{flux_forward.33} parent=0 // pred_check
    _
  $region23: #{flux_forward.33} parent=0 // pred_check_branch
    %108 = sbr.rel (0) target = $region25
  $region24: #{flux_forward.33} parent=0 // pred_region
    _
  $region25: #{flux_forward.33} parent=0 // pred_fallthru
    _
  // Predicated region
  $region26: #{flux_forward.33} parent=0 // pred_check
    _
  $region27: #{flux_forward.33} parent=0 // pred_check_branch
    %110 = sbr.rel (0) target = $region29
  $region28: #{flux_forward.33} parent=0 // pred_region
    _
  $region29: #{flux_forward.33} parent=0 // pred_fallthru
    _

// kernel: flux_forward.32
$region0: #{flux_forward.32}
  #allocation0 [shape = 'u32[]', space=smem, size = 0x4, offset = 0x4, fixed_abs, tag = 'smem constant byte address 0x4 - core index']
  #allocation1 [shape = 'u32[72,128]{1,0:T(1,128)}', space=vmem, size = 0x9000, scoped, tag = 'internal scratch']
  %s0 = inlined_call_operand.vmem [shape: bf16[2,256], index: 0, kind: input, shape index: {}]
  %s1 = inlined_call_operand.vmem [shape: bf16[256,32], index: 1, kind: input, shape index: {}]
  %s2 = inlined_call_operand.vmem [shape: bf16[1,32], index: 2, kind: input, shape index: {}]
  %s3 = inlined_call_operand.vmem [shape: bf16[32,32], index: 3, kind: input, shape index: {}]
  %s4 = inlined_call_operand.vmem [shape: bf16[1,32], index: 4, kind: input, shape index: {}]
  %s5 = inlined_call_operand.vmem [shape: bf16[2,32], index: 5, kind: output, shape index: {}]
  %s6 = sld [smem:[#allocation0]]
  $region30: #{flux_forward.32} parent=0
    _
  %s8 = ssub.s32 1, %s6
  %s9 = scalar_select 0, %s8, %s6
  // Predicated region
  $region2: #{flux_forward.32} parent=0 // pred_check
    _
  $region3: #{flux_forward.32} parent=0 // pred_check_branch
    %11 = sbr.rel (0) target = $region5
  $region4: #{flux_forward.32} parent=0 // pred_region
    _
  $region5: #{flux_forward.32} parent=0 // pred_fallthru
    _
  // Predicated region
  $region6: #{flux_forward.32} parent=0 // pred_check
    _
  $region7: #{flux_forward.32} parent=0 // pred_check_branch
    %13 = sbr.rel (0) target = $region9
  $region8: #{flux_forward.32} parent=0 // pred_region
    _
  $region9: #{flux_forward.32} parent=0 // pred_fallthru
    _
  // Predicated region
  $region10: #{flux_forward.32} parent=0 // pred_check
    _
  $region11: #{flux_forward.32} parent=0 // pred_check_branch
    %15 = sbr.rel (0) target = $region13
  $region12: #{flux_forward.32} parent=0 // pred_region
    _
  $region13: #{flux_forward.32} parent=0 // pred_fallthru
    _
  // Predicated region
  $region14: #{flux_forward.32} parent=0 // pred_check
    _
  $region15: #{flux_forward.32} parent=0 // pred_check_branch
    %17 = sbr.rel (0) target = $region17
  $region16: #{flux_forward.32} parent=0 // pred_region
    _
  $region17: #{flux_forward.32} parent=0 // pred_fallthru
    _
  // Predicated region
  $region18: #{flux_forward.32} parent=0 // pred_check
    _
  $region19: #{flux_forward.32} parent=0 // pred_check_branch
    %19 = sbr.rel (0) target = $region21
  $region20: #{flux_forward.32} parent=0 // pred_region
    _
  $region21: #{flux_forward.32} parent=0 // pred_fallthru
    _
  %v21 = vld [vmem:[%s0] sm:$0x3]
  %v22 = vld [vmem:[%s1] sm:$0xf]
  %v23 = vld [vmem:[%s1 + $0x4] sm:$0xf]
  %v24 = vld [vmem:[%s1 + $0x8] sm:$0xf]
  %v25 = vld [vmem:[%s1 + $0xc] sm:$0xf]
  %v26 = vld [vmem:[%s1 + $0x10] sm:$0xf]
  %v27 = vld [vmem:[%s1 + $0x14] sm:$0xf]
  %v28 = vld [vmem:[%s1 + $0x18] sm:$0xf]
  %v29 = vld [vmem:[%s1 + $0x1c] sm:$0xf]
  %v30 = vld [vmem:[%s1 + $0x20] sm:$0xf]
  %v31 = vld [vmem:[%s1 + $0x24] sm:$0xf]
  %v32 = vld [vmem:[%s1 + $0x28] sm:$0xf]
  %v33 = vld [vmem:[%s1 + $0x2c] sm:$0xf]
  %v34 = vld [vmem:[%s1 + $0x30] sm:$0xf]
  %v35 = vld [vmem:[%s1 + $0x34] sm:$0xf]
  %v36 = vld [vmem:[%s1 + $0x38] sm:$0xf]
  %v37 = vld [vmem:[%s1 + $0x3c] sm:$0xf]
  %v38 = vld [vmem:[%s1 + $0x40] sm:$0xf]
  %v39 = vld [vmem:[%s1 + $0x44] sm:$0xf]
  %v40 = vld [vmem:[%s1 + $0x48] sm:$0xf]
  %v41 = vld [vmem:[%s1 + $0x4c] sm:$0xf]
  %v42 = vld [vmem:[%s1 + $0x50] sm:$0xf]
  %v43 = vld [vmem:[%s1 + $0x54] sm:$0xf]
  %v44 = vld [vmem:[%s1 + $0x58] sm:$0xf]
  %v45 = vld [vmem:[%s1 + $0x5c] sm:$0xf]
  %v46 = vld [vmem:[%s1 + $0x60] sm:$0xf]
  %v47 = vld [vmem:[%s1 + $0x64] sm:$0xf]
  %v48 = vld [vmem:[%s1 + $0x68] sm:$0xf]
  %v49 = vld [vmem:[%s1 + $0x6c] sm:$0xf]
  %v50 = vld [vmem:[%s1 + $0x70] sm:$0xf]
  %v51 = vld [vmem:[%s1 + $0x74] sm:$0xf]
  %v52 = vld [vmem:[%s1 + $0x78] sm:$0xf]
  %v53 = vld [vmem:[%s1 + $0x7c] sm:$0xf]
  %v54 = vld [vmem:[%s2] sm:$0x1]
  %v55 = vunpack.c.l.bf16 %v54
  %v56 = vperm.slane %v55, 0
  %58 = vst [vmem:[#allocation1] ss:$9 sm:$0xff] %v21
  %v59 = vld [vmem:[#allocation1] sm:$0xff]
  %v60 = vld [vmem:[#allocation1 + $0x9] sm:$0xff]
  %v95 = vunpack.c.l.b16 %v22
  %v96 = vunpack.c.l.b16 %v23
  %v97 = vunpack.c.l.b16 %v24
  %v98 = vunpack.c.l.b16 %v25
  %v99 = vunpack.c.l.b16 %v26
  %v100 = vunpack.c.l.b16 %v27
  %v101 = vunpack.c.l.b16 %v28
  %v102 = vunpack.c.l.b16 %v29
  %v103 = vunpack.c.l.b16 %v30
  %v104 = vunpack.c.l.b16 %v31
  %v105 = vunpack.c.l.b16 %v32
  %v106 = vunpack.c.l.b16 %v33
  %v107 = vunpack.c.l.b16 %v34
  %v108 = vunpack.c.l.b16 %v35
  %v109 = vunpack.c.l.b16 %v36
  %v110 = vunpack.c.l.b16 %v37
  %v111 = vunpack.c.l.b16 %v38
  %v112 = vunpack.c.l.b16 %v39
  %v113 = vunpack.c.l.b16 %v40
  %v114 = vunpack.c.l.b16 %v41
  %v115 = vunpack.c.l.b16 %v42
  %v116 = vunpack.c.l.b16 %v43
  %v117 = vunpack.c.l.b16 %v44
  %v118 = vunpack.c.l.b16 %v45
  %v119 = vunpack.c.l.b16 %v46
  %v120 = vunpack.c.l.b16 %v47
  %v121 = vunpack.c.l.b16 %v48
  %v122 = vunpack.c.l.b16 %v49
  %v123 = vunpack.c.l.b16 %v50
  %v124 = vunpack.c.l.b16 %v51
  %v125 = vunpack.c.l.b16 %v52
  %v126 = vunpack.c.l.b16 %v53
  %v127 = vpack.c.b16 %v96, %v95
  %v128 = vpack.c.b16 %v98, %v97
  %v129 = vpack.c.b16 %v100, %v99
  %v130 = vpack.c.b16 %v102, %v101
  %v131 = vpack.c.b16 %v104, %v103
  %v132 = vpack.c.b16 %v106, %v105
  %v133 = vpack.c.b16 %v108, %v107
  %v134 = vpack.c.b16 %v110, %v109
  %v135 = vpack.c.b16 %v112, %v111
  %v136 = vpack.c.b16 %v114, %v113
  %v137 = vpack.c.b16 %v116, %v115
  %v138 = vpack.c.b16 %v118, %v117
  %v139 = vpack.c.b16 %v120, %v119
  %v140 = vpack.c.b16 %v122, %v121
  %v141 = vpack.c.b16 %v124, %v123
  %v142 = vpack.c.b16 %v126, %v125
  %159 = vmatpush.bf16.msra.mxu0 %v134
  %160 = vmatpush.bf16.msra.mxu0 %v133
  %161 = vmatpush.bf16.msra.mxu0 %v132
  %162 = vmatpush.bf16.msra.mxu0 %v131
  %163 = vmatpush.bf16.msra.mxu0 %v130
  %164 = vmatpush.bf16.msra.mxu0 %v129
  %165 = vmatpush.bf16.msra.mxu0 %v128
  %166 = vmatpush.bf16.msra.mxu0 %v127
  %167 = vmatmul.bf16.gmra.mxu0 %v59
  %v168 = vpop.f32.mrf.mxu0
  %v169 = vadd.f32 %v56, %v168
  %v170 = vpop.f32.mrf.mxu0
  %171 = vdwg.mxu0
  %172 = vmatpush.bf16.msra.mxu0 %v142
  %173 = vmatpush.bf16.msra.mxu0 %v141
  %174 = vmatpush.bf16.msra.mxu0 %v140
  %175 = vmatpush.bf16.msra.mxu0 %v139
  %176 = vmatpush.bf16.msra.mxu0 %v138
  %177 = vmatpush.bf16.msra.mxu0 %v137
  %178 = vmatpush.bf16.msra.mxu0 %v136
  %179 = vmatpush.bf16.msra.mxu0 %v135
  %180 = vmatmul.bf16.gmra.mxu0 %v60
  %v181 = vpop.f32.mrf.mxu0
  %v182 = vadd.f32 %v169, %v181
  %v183 = vpop.f32.mrf.mxu0
  %184 = vdwg.mxu0
  %v185 = vxor.u32 %v182, 2147483648
  %v186 = vmul.f32 %v185, 1.442695
  %v187 = vpow.pop %v186
  %v188 = vadd.f32 %v187, 1.0
  %v189 = vrcp.pop %v188
  %v190 = vmul.f32 %v188, %v189
  %v191 = vsub.f32 1.0, %v190
  %v192 = vmul.f32 %v189, %v191
  %v193 = vadd.f32 %v189, %v192
  %vm194 = vweird.f32 %v188
  %vm195 = vweird.f32 %v189
  %vm196 = vmor %vm194, %vm195
  %v197 = vsel %vm196, %v189, %v193
  %v198 = vand.u32 2147483647, %v188
  %vm199 = vcmp.eq.f32.partialorder %v198, 8.507059e+37
  %v200 = vand.u32 %v188, 2147483648
  %v201 = vor.u32 1.1754944e-38, %v200
  %v202 = vsel %vm199, %v201, %v197
  %v203 = vmul.f32 1.0, %v202
  %v204 = vmul.f32 %v182, %v203
  %v205 = vpack.c.bf16 %v204, %v204
  %v206 = vld [vmem:[%s3] sm:$0xf]
  %v207 = vld [vmem:[%s3 + $0x4] sm:$0xf]
  %v208 = vld [vmem:[%s3 + $0x8] sm:$0xf]
  %v209 = vld [vmem:[%s3 + $0xc] sm:$0xf]
  %v210 = vld [vmem:[%s4] sm:$0x1]
  %v211 = vunpack.c.l.bf16 %v210
  %v212 = vperm.slane %v211, 0
  %v217 = vunpack.c.l.b16 %v206
  %v218 = vunpack.c.l.b16 %v207
  %v219 = vunpack.c.l.b16 %v208
  %v220 = vunpack.c.l.b16 %v209
  %v221 = vpack.c.b16 %v218, %v217
  %v222 = vpack.c.b16 %v220, %v219
  %vm225 = vcmask 261120
  %v227 = vsel %vm225, %v205, 0
  %229 = vmatpush.bf16.msra.mxu0 0
  %230 = vmatpush.bf16.msra.mxu0 0
  %231 = vmatpush.bf16.msra.mxu0 0
  %232 = vmatpush.bf16.msra.mxu0 0
  %233 = vmatpush.bf16.msra.mxu0 0
  %234 = vmatpush.bf16.msra.mxu0 0
  %235 = vmatpush.bf16.msra.mxu0 %v222
  %236 = vmatpush.bf16.msra.mxu0 %v221
  %237 = vmatmul.bf16.gmra.mxu0 %v227
  %v238 = vpop.f32.mrf.mxu0
  %v239 = vadd.f32 %v212, %v238
  %v240 = vpop.f32.mrf.mxu0
  %241 = vdwg.mxu0
  %v242 = vpack.c.bf16 %v239, %v239
  %vm243 = vcmask 253952
  %244 = vst.msk [vmem:[%s5] sm:$0x1] %vm243, %v242
  // Predicated region
  $region22: #{flux_forward.32} parent=0 // pred_check
    _
  $region23: #{flux_forward.32} parent=0 // pred_check_branch
    %246 = sbr.rel (0) target = $region25
  $region24: #{flux_forward.32} parent=0 // pred_region
    _
  $region25: #{flux_forward.32} parent=0 // pred_fallthru
    _
  // Predicated region
  $region26: #{flux_forward.32} parent=0 // pred_check
    _
  $region27: #{flux_forward.32} parent=0 // pred_check_branch
    %248 = sbr.rel (0) target = $region29
  $region28: #{flux_forward.32} parent=0 // pred_region
    _
  $region29: #{flux_forward.32} parent=0 // pred_fallthru
    _

// kernel: flux_forward.34
$region0: #{flux_forward.34}
  #allocation0 [shape = 'u32[]', space=smem, size = 0x4, offset = 0x4, fixed_abs, tag = 'smem constant byte address 0x4 - core index']
  #allocation1 [shape = 'u32[72,128]{1,0:T(1,128)}', space=vmem, size = 0x9000, scoped, tag = 'internal scratch']
  %s0 = inlined_call_operand.vmem [shape: bf16[2,32], index: 0, kind: input, shape index: {}]
  %s1 = inlined_call_operand.hbm [shape: bf16[32,1504], index: 1, kind: input, shape index: {}]
  %s2 = inlined_call_operand.vmem [shape: bf16[1,1504], index: 2, kind: input, shape index: {}]
  %s3 = inlined_call_operand.vmem [shape: bf16[2,1504], index: 3, kind: output, shape index: {}]
  %s4 = sld [smem:[#allocation0]]
  $region26: #{flux_forward.34} parent=0
    _
  %s6 = ssub.s32 1, %s4
  %s7 = scalar_select 0, %s6, %s4
  $region1: #{flux_forward.34} parent=0
    #allocation2 [shape = 'u8[98304]{0}', space=vmem, size = 0x18000, scoped, tag = 'input window, operand 1, single buffered']
    #allocation3 [shape = 's32[1]{0}', space=sflag, size = 0x4, scoped, tag = 'scoped memory for flux_forward.34']
    %8 = vsyncpa [#allocation3], 0
    // Predicated region
    $region2: #{flux_forward.34} parent=1 // pred_check
      _
    $region3: #{flux_forward.34} parent=1 // pred_check_branch
      %10 = sbr.rel (0) target = $region5
    $region4: #{flux_forward.34} parent=1 // pred_region
      _
    $region5: #{flux_forward.34} parent=1 // pred_fallthru
      _
    // Predicated region
    $region6: #{flux_forward.34} parent=1 // pred_check
      _
    $region7: #{flux_forward.34} parent=1 // pred_check_branch
      %12 = sbr.rel (0) target = $region9
    $region8: #{flux_forward.34} parent=1 // pred_region
      %14 = vsyncadd [#allocation3], 0
      %s15 = sshll.u32 %s1, 4
      %s16 = int_to_ptr.hbm [resolvable:$true] %s15
      %s17 = sshll.u32 [#allocation2], 4
      %s18 = int_to_ptr.vmem [resolvable:$true] %s17
      %23 = dma.hbm_to_vmem [thread:$0]  %s16, 3072, %s18, [#allocation3], 768, 768, 48
    $region9: #{flux_forward.34} parent=1 // pred_fallthru
      _
    // Predicated region
    $region10: #{flux_forward.34} parent=1 // pred_check
      _
    $region11: #{flux_forward.34} parent=1 // pred_check_branch
      %25 = sbr.rel (0) target = $region13
    $region12: #{flux_forward.34} parent=1 // pred_region
      _
    $region13: #{flux_forward.34} parent=1 // pred_fallthru
      _
    // Predicated region
    $region14: #{flux_forward.34} parent=1 // pred_check
      _
    $region15: #{flux_forward.34} parent=1 // pred_check_branch
      %27 = sbr.rel (0) target = $region17
    $region16: #{flux_forward.34} parent=1 // pred_region
      %29 = dma.done [#allocation3], 3072
    $region17: #{flux_forward.34} parent=1 // pred_fallthru
      _
    %v31 = vld [vmem:[%s0] sm:$0x1]
    %v32 = vunpack.c.l.bf16 %v31
    %v33 = vxor.u32 %v32, 2147483648
    %v34 = vmul.f32 %v33, 1.442695
    %v35 = vpow.pop %v34
    %v36 = vadd.f32 %v35, 1.0
    %v37 = vrcp.pop %v36
    %v38 = vmul.f32 %v36, %v37
    %v39 = vsub.f32 1.0, %v38
    %v40 = vmul.f32 %v37, %v39
    %v41 = vadd.f32 %v37, %v40
    %vm42 = vweird.f32 %v36
    %vm43 = vweird.f32 %v37
    %vm44 = vmor %vm42, %vm43
    %v45 = vsel %vm44, %v37, %v41
    %v46 = vand.u32 2147483647, %v36
    %vm47 = vcmp.eq.f32.partialorder %v46, 8.507059e+37
    %v48 = vand.u32 %v36, 2147483648
    %v49 = vor.u32 1.1754944e-38, %v48
    %v50 = vsel %vm47, %v49, %v45
    %v51 = vmul.f32 1.0, %v50
    %v52 = vmul.f32 %v32, %v51
    %v53 = vpack.c.bf16 %v52, %v52
    %v54 = vld [vmem:[#allocation2] sm:$0xff]
    %v55 = vld [vmem:[#allocation2 + $0x8] sm:$0xff]
    %v56 = vld [vmem:[#allocation2 + $0x10] sm:$0xff]
    %v57 = vld [vmem:[#allocation2 + $0x18] sm:$0xff]
    %v58 = vld [vmem:[#allocation2 + $0x20] sm:$0xff]
    %v59 = vld [vmem:[#allocation2 + $0x28] sm:$0xff]
    %v60 = vld [vmem:[#allocation2 + $0x30] sm:$0xff]
    %v61 = vld [vmem:[#allocation2 + $0x38] sm:$0xff]
    %v62 = vld [vmem:[#allocation2 + $0x40] sm:$0xff]
    %v63 = vld [vmem:[#allocation2 + $0x48] sm:$0xff]
    %v64 = vld [vmem:[#allocation2 + $0x50] sm:$0xff]
    %v65 = vld [vmem:[#allocation2 + $0x58] sm:$0xff]
    %v66 = vld [vmem:[#allocation2 + $0x60] sm:$0xff]
    %v67 = vld [vmem:[#allocation2 + $0x68] sm:$0xff]
    %v68 = vld [vmem:[#allocation2 + $0x70] sm:$0xff]
    %v69 = vld [vmem:[#allocation2 + $0x78] sm:$0xff]
    %v70 = vld [vmem:[#allocation2 + $0x80] sm:$0xff]
    %v71 = vld [vmem:[#allocation2 + $0x88] sm:$0xff]
    %v72 = vld [vmem:[#allocation2 + $0x90] sm:$0xff]
    %v73 = vld [vmem:[#allocation2 + $0x98] sm:$0xff]
    %v74 = vld [vmem:[#allocation2 + $0xa0] sm:$0xff]
    %v75 = vld [vmem:[#allocation2 + $0xa8] sm:$0xff]
    %v76 = vld [vmem:[#allocation2 + $0xb0] sm:$0xff]
    %v77 = vld [vmem:[#allocation2 + $0xb8] sm:$0xff]
    %v78 = vld [vmem:[%s2] sm:$0xff]
    %v79 = vld [vmem:[%s2 + $0x8] sm:$0xf]
    %v80 = vunpack.c.l.bf16 %v78
    %v81 = vunpack.c.h.bf16 %v78
    %v82 = vunpack.c.l.bf16 %v79
    %v86 = vperm.slane %v80, 0
    %v87 = vperm.slane %v80, 2
    %v88 = vperm.slane %v80, 4
    %v89 = vperm.slane %v80, 6
    %v90 = vperm.slane %v81, 0
    %v91 = vperm.slane %v81, 2
    %v92 = vperm.slane %v81, 4
    %v93 = vperm.slane %v81, 6
    %v94 = vperm.slane %v82, 0
    %v95 = vperm.slane %v82, 2
    %v96 = vperm.slane %v82, 4
    %v97 = vperm.slane %v82, 6
    %v110 = vperm.slane %v86, 0
    %v111 = vperm.slane %v87, 0
    %v112 = vperm.slane %v88, 0
    %v113 = vperm.slane %v89, 0
    %v114 = vperm.slane %v90, 0
    %v115 = vperm.slane %v91, 0
    %v116 = vperm.slane %v92, 0
    %v117 = vperm.slane %v93, 0
    %v118 = vperm.slane %v94, 0
    %v119 = vperm.slane %v95, 0
    %v120 = vperm.slane %v96, 0
    %v121 = vperm.slane %v97, 0
    %v146 = vunpack.c.l.b16 %v54
    %v147 = vunpack.c.h.b16 %v54
    %v148 = vunpack.c.l.b16 %v55
    %v149 = vunpack.c.h.b16 %v55
    %v150 = vunpack.c.l.b16 %v56
    %v151 = vunpack.c.h.b16 %v56
    %v152 = vunpack.c.l.b16 %v57
    %v153 = vunpack.c.h.b16 %v57
    %v154 = vunpack.c.l.b16 %v58
    %v155 = vunpack.c.h.b16 %v58
    %v156 = vunpack.c.l.b16 %v59
    %v157 = vunpack.c.h.b16 %v59
    %v158 = vunpack.c.l.b16 %v60
    %v159 = vunpack.c.h.b16 %v60
    %v160 = vunpack.c.l.b16 %v61
    %v161 = vunpack.c.h.b16 %v61
    %v162 = vunpack.c.l.b16 %v62
    %v163 = vunpack.c.h.b16 %v62
    %v164 = vunpack.c.l.b16 %v63
    %v165 = vunpack.c.h.b16 %v63
    %v166 = vunpack.c.l.b16 %v64
    %v167 = vunpack.c.h.b16 %v64
    %v168 = vunpack.c.l.b16 %v65
    %v169 = vunpack.c.h.b16 %v65
    %v170 = vunpack.c.l.b16 %v66
    %v171 = vunpack.c.h.b16 %v66
    %v172 = vunpack.c.l.b16 %v67
    %v173 = vunpack.c.h.b16 %v67
    %v174 = vunpack.c.l.b16 %v68
    %v175 = vunpack.c.h.b16 %v68
    %v176 = vunpack.c.l.b16 %v69
    %v177 = vunpack.c.h.b16 %v69
    %v178 = vunpack.c.l.b16 %v70
    %v179 = vunpack.c.h.b16 %v70
    %v180 = vunpack.c.l.b16 %v71
    %v181 = vunpack.c.h.b16 %v71
    %v182 = vunpack.c.l.b16 %v72
    %v183 = vunpack.c.h.b16 %v72
    %v184 = vunpack.c.l.b16 %v73
    %v185 = vunpack.c.h.b16 %v73
    %v186 = vunpack.c.l.b16 %v74
    %v187 = vunpack.c.h.b16 %v74
    %v188 = vunpack.c.l.b16 %v75
    %v189 = vunpack.c.h.b16 %v75
    %v190 = vunpack.c.l.b16 %v76
    %v191 = vunpack.c.h.b16 %v76
    %v192 = vunpack.c.l.b16 %v77
    %v193 = vunpack.c.h.b16 %v77
    %v194 = vpack.c.b16 %v158, %v146
    %v195 = vpack.c.b16 %v159, %v147
    %v196 = vpack.c.b16 %v160, %v148
    %v197 = vpack.c.b16 %v161, %v149
    %v198 = vpack.c.b16 %v162, %v150
    %v199 = vpack.c.b16 %v163, %v151
    %v200 = vpack.c.b16 %v164, %v152
    %v201 = vpack.c.b16 %v165, %v153
    %v202 = vpack.c.b16 %v166, %v154
    %v203 = vpack.c.b16 %v167, %v155
    %v204 = vpack.c.b16 %v168, %v156
    %v205 = vpack.c.b16 %v169, %v157
    %v206 = vpack.c.b16 %v182, %v170
    %v207 = vpack.c.b16 %v183, %v171
    %v208 = vpack.c.b16 %v184, %v172
    %v209 = vpack.c.b16 %v185, %v173
    %v210 = vpack.c.b16 %v186, %v174
    %v211 = vpack.c.b16 %v187, %v175
    %v212 = vpack.c.b16 %v188, %v176
    %v213 = vpack.c.b16 %v189, %v177
    %v214 = vpack.c.b16 %v190, %v178
    %v215 = vpack.c.b16 %v191, %v179
    %v216 = vpack.c.b16 %v192, %v180
    %v217 = vpack.c.b16 %v193, %v181
    %vm242 = vcmask 261120
    %v244 = vsel %vm242, %v53, 0
    %246 = vmatpush.bf16.msra.mxu0 0
    %247 = vmatpush.bf16.msra.mxu0 0
    %248 = vmatpush.bf16.msra.mxu0 0
    %249 = vmatpush.bf16.msra.mxu0 0
    %250 = vmatpush.bf16.msra.mxu0 0
    %251 = vmatpush.bf16.msra.mxu0 0
    %252 = vmatpush.bf16.msra.mxu0 %v206
    %253 = vmatpush.bf16.msra.mxu0 %v194
    %254 = vmatmul.bf16.gmra.mxu0 %v244
    %v255 = vpop.f32.mrf.mxu0
    %v256 = vadd.f32 %v110, %v255
    %v257 = vpop.f32.mrf.mxu0
    %258 = vdwg.mxu0
    %259 = vmatpush.bf16.msra.mxu0 0
    %260 = vmatpush.bf16.msra.mxu0 0
    %261 = vmatpush.bf16.msra.mxu0 0
    %262 = vmatpush.bf16.msra.mxu0 0
    %263 = vmatpush.bf16.msra.mxu0 0
    %264 = vmatpush.bf16.msra.mxu0 0
    %265 = vmatpush.bf16.msra.mxu0 %v207
    %266 = vmatpush.bf16.msra.mxu0 %v195
    %267 = vmatmul.bf16.gmra.mxu0 %v244
    %v268 = vpop.f32.mrf.mxu0
    %v269 = vadd.f32 %v111, %v268
    %v270 = vpop.f32.mrf.mxu0
    %271 = vdwg.mxu0
    %272 = vmatpush.bf16.msra.mxu0 0
    %273 = vmatpush.bf16.msra.mxu0 0
    %274 = vmatpush.bf16.msra.mxu0 0
    %275 = vmatpush.bf16.msra.mxu0 0
    %276 = vmatpush.bf16.msra.mxu0 0
    %277 = vmatpush.bf16.msra.mxu0 0
    %278 = vmatpush.bf16.msra.mxu0 %v208
    %279 = vmatpush.bf16.msra.mxu0 %v196
    %280 = vmatmul.bf16.gmra.mxu0 %v244
    %v281 = vpop.f32.mrf.mxu0
    %v282 = vadd.f32 %v112, %v281
    %v283 = vpop.f32.mrf.mxu0
    %284 = vdwg.mxu0
    %285 = vmatpush.bf16.msra.mxu0 0
    %286 = vmatpush.bf16.msra.mxu0 0
    %287 = vmatpush.bf16.msra.mxu0 0
    %288 = vmatpush.bf16.msra.mxu0 0
    %289 = vmatpush.bf16.msra.mxu0 0
    %290 = vmatpush.bf16.msra.mxu0 0
    %291 = vmatpush.bf16.msra.mxu0 %v209
    %292 = vmatpush.bf16.msra.mxu0 %v197
    %293 = vmatmul.bf16.gmra.mxu0 %v244
    %v294 = vpop.f32.mrf.mxu0
    %v295 = vadd.f32 %v113, %v294
    %v296 = vpop.f32.mrf.mxu0
    %297 = vdwg.mxu0
    %298 = vmatpush.bf16.msra.mxu0 0
    %299 = vmatpush.bf16.msra.mxu0 0
    %300 = vmatpush.bf16.msra.mxu0 0
    %301 = vmatpush.bf16.msra.mxu0 0
    %302 = vmatpush.bf16.msra.mxu0 0
    %303 = vmatpush.bf16.msra.mxu0 0
    %304 = vmatpush.bf16.msra.mxu0 %v210
    %305 = vmatpush.bf16.msra.mxu0 %v198
    %306 = vmatmul.bf16.gmra.mxu0 %v244
    %v307 = vpop.f32.mrf.mxu0
    %v308 = vadd.f32 %v114, %v307
    %v309 = vpop.f32.mrf.mxu0
    %310 = vdwg.mxu0
    %311 = vmatpush.bf16.msra.mxu0 0
    %312 = vmatpush.bf16.msra.mxu0 0
    %313 = vmatpush.bf16.msra.mxu0 0
    %314 = vmatpush.bf16.msra.mxu0 0
    %315 = vmatpush.bf16.msra.mxu0 0
    %316 = vmatpush.bf16.msra.mxu0 0
    %317 = vmatpush.bf16.msra.mxu0 %v211
    %318 = vmatpush.bf16.msra.mxu0 %v199
    %319 = vmatmul.bf16.gmra.mxu0 %v244
    %v320 = vpop.f32.mrf.mxu0
    %v321 = vadd.f32 %v115, %v320
    %v322 = vpop.f32.mrf.mxu0
    %323 = vdwg.mxu0
    %324 = vmatpush.bf16.msra.mxu0 0
    %325 = vmatpush.bf16.msra.mxu0 0
    %326 = vmatpush.bf16.msra.mxu0 0
    %327 = vmatpush.bf16.msra.mxu0 0
    %328 = vmatpush.bf16.msra.mxu0 0
    %329 = vmatpush.bf16.msra.mxu0 0
    %330 = vmatpush.bf16.msra.mxu0 %v212
    %331 = vmatpush.bf16.msra.mxu0 %v200
    %332 = vmatmul.bf16.gmra.mxu0 %v244
    %v333 = vpop.f32.mrf.mxu0
    %v334 = vadd.f32 %v116, %v333
    %v335 = vpop.f32.mrf.mxu0
    %336 = vdwg.mxu0
    %337 = vmatpush.bf16.msra.mxu0 0
    %338 = vmatpush.bf16.msra.mxu0 0
    %339 = vmatpush.bf16.msra.mxu0 0
    %340 = vmatpush.bf16.msra.mxu0 0
    %341 = vmatpush.bf16.msra.mxu0 0
    %342 = vmatpush.bf16.msra.mxu0 0
    %343 = vmatpush.bf16.msra.mxu0 %v213
    %344 = vmatpush.bf16.msra.mxu0 %v201
    %345 = vmatmul.bf16.gmra.mxu0 %v244
    %v346 = vpop.f32.mrf.mxu0
    %v347 = vadd.f32 %v117, %v346
    %v348 = vpop.f32.mrf.mxu0
    %349 = vdwg.mxu0
    %350 = vmatpush.bf16.msra.mxu0 0
    %351 = vmatpush.bf16.msra.mxu0 0
    %352 = vmatpush.bf16.msra.mxu0 0
    %353 = vmatpush.bf16.msra.mxu0 0
    %354 = vmatpush.bf16.msra.mxu0 0
    %355 = vmatpush.bf16.msra.mxu0 0
    %356 = vmatpush.bf16.msra.mxu0 %v214
    %357 = vmatpush.bf16.msra.mxu0 %v202
    %358 = vmatmul.bf16.gmra.mxu0 %v244
    %v359 = vpop.f32.mrf.mxu0
    %v360 = vadd.f32 %v118, %v359
    %v361 = vpop.f32.mrf.mxu0
    %362 = vdwg.mxu0
    %363 = vmatpush.bf16.msra.mxu0 0
    %364 = vmatpush.bf16.msra.mxu0 0
    %365 = vmatpush.bf16.msra.mxu0 0
    %366 = vmatpush.bf16.msra.mxu0 0
    %367 = vmatpush.bf16.msra.mxu0 0
    %368 = vmatpush.bf16.msra.mxu0 0
    %369 = vmatpush.bf16.msra.mxu0 %v215
    %370 = vmatpush.bf16.msra.mxu0 %v203
    %371 = vmatmul.bf16.gmra.mxu0 %v244
    %v372 = vpop.f32.mrf.mxu0
    %v373 = vadd.f32 %v119, %v372
    %v374 = vpop.f32.mrf.mxu0
    %375 = vdwg.mxu0
    %376 = vmatpush.bf16.msra.mxu0 0
    %377 = vmatpush.bf16.msra.mxu0 0
    %378 = vmatpush.bf16.msra.mxu0 0
    %379 = vmatpush.bf16.msra.mxu0 0
    %380 = vmatpush.bf16.msra.mxu0 0
    %381 = vmatpush.bf16.msra.mxu0 0
    %382 = vmatpush.bf16.msra.mxu0 %v216
    %383 = vmatpush.bf16.msra.mxu0 %v204
    %384 = vmatmul.bf16.gmra.mxu0 %v244
    %v385 = vpop.f32.mrf.mxu0
    %v386 = vadd.f32 %v120, %v385
    %v387 = vpop.f32.mrf.mxu0
    %388 = vdwg.mxu0
    %389 = vmatpush.bf16.msra.mxu0 0
    %390 = vmatpush.bf16.msra.mxu0 0
    %391 = vmatpush.bf16.msra.mxu0 0
    %392 = vmatpush.bf16.msra.mxu0 0
    %393 = vmatpush.bf16.msra.mxu0 0
    %394 = vmatpush.bf16.msra.mxu0 0
    %395 = vmatpush.bf16.msra.mxu0 %v217
    %396 = vmatpush.bf16.msra.mxu0 %v205
    %397 = vmatmul.bf16.gmra.mxu0 %v244
    %v398 = vpop.f32.mrf.mxu0
    %v399 = vadd.f32 %v121, %v398
    %v400 = vpop.f32.mrf.mxu0
    %401 = vdwg.mxu0
    %v402 = vpack.c.bf16 %v269, %v256
    %v403 = vpack.c.bf16 %v295, %v282
    %v404 = vpack.c.bf16 %v321, %v308
    %v405 = vpack.c.bf16 %v347, %v334
    %v406 = vpack.c.bf16 %v373, %v360
    %v407 = vpack.c.bf16 %v399, %v386
    %v414 = vrot.slane %v402, 3
    %v415 = vrot.slane %v403, 6
    %v416 = vrot.slane %v403, 1
    %v417 = vrot.slane %v404, 4
    %v418 = vrot.slane %v404, 7
    %v419 = vrot.slane %v405, 2
    %v420 = vrot.slane %v405, 5
    %v421 = vrot.slane %v406, 3
    %v422 = vrot.slane %v407, 6
    %v423 = vrot.slane %v407, 1
    %vm424 = vcmask 1040384
    %v427 = vsel %vm424, %v402, %v414
    %vm428 = vcmask 1042434
    %v431 = vsel %vm428, %v415, %v416
    %vm432 = vcmask 1041408
    %v433 = vsel %vm432, %v427, %v431
    %vm434 = vcmask 1044484
    %v437 = vsel %vm434, %v417, %v418
    %vm438 = vcmask 1046534
    %v441 = vsel %vm438, %v419, %v420
    %vm442 = vcmask 1045508
    %v443 = vsel %vm442, %v437, %v441
    %vm444 = vcmask 1043456
    %v445 = vsel %vm444, %v433, %v443
    %v448 = vsel %vm424, %v406, %v421
    %v451 = vsel %vm428, %v422, %v423
    %v452 = vsel %vm432, %v448, %v451
    %455 = vst [vmem:[%s3] sm:$0xff] %v445
    %vm456 = vcmask 1041409
    %vm457 = vmor %vm456, %vm424
    %vm458 = vmor %vm428, %vm457
    %vm459 = vcmask 781315
    %vm460 = vmor %vm459, %vm458
    %461 = vst.msk [vmem:[%s3 + $0x8] sm:$0xf] %vm460, %v452
    // Predicated region
    $region18: #{flux_forward.34} parent=1 // pred_check
      _
    $region19: #{flux_forward.34} parent=1 // pred_check_branch
      %463 = sbr.rel (0) target = $region21
    $region20: #{flux_forward.34} parent=1 // pred_region
      _
    $region21: #{flux_forward.34} parent=1 // pred_fallthru
      _
    // Predicated region
    $region22: #{flux_forward.34} parent=1 // pred_check
      _
    $region23: #{flux_forward.34} parent=1 // pred_check_branch
      %465 = sbr.rel (0) target = $region25
    $region24: #{flux_forward.34} parent=1 // pred_region
      _
    $region25: #{flux_forward.34} parent=1 // pred_fallthru
      _
    %466 = vsyncpa [#allocation3], 1

// kernel: flux_forward.30
$region0: #{flux_forward.30}
  #allocation0 [shape = 'u32[]', space=smem, size = 0x4, offset = 0x4, fixed_abs, tag = 'smem constant byte address 0x4 - core index']
  #allocation1 [shape = 'u32[72,128]{1,0:T(1,128)}', space=vmem, size = 0x9000, scoped, tag = 'internal scratch']
  %s0 = inlined_call_operand.vmem [shape: bf16[32,4], index: 0, kind: input, shape index: {}]
  %s1 = inlined_call_operand.vmem [shape: bf16[4,32], index: 1, kind: input, shape index: {}]
  %s2 = inlined_call_operand.vmem [shape: bf16[1,32], index: 2, kind: input, shape index: {}]
  %s3 = inlined_call_operand.vmem [shape: bf16[32,32], index: 3, kind: output, shape index: {}]
  %s4 = sld [smem:[#allocation0]]
  $region22: #{flux_forward.30} parent=0
    _
  %s6 = ssub.s32 1, %s4
  %s7 = scalar_select 0, %s6, %s4
  // Predicated region
  $region2: #{flux_forward.30} parent=0 // pred_check
    _
  $region3: #{flux_forward.30} parent=0 // pred_check_branch
    %9 = sbr.rel (0) target = $region5
  $region4: #{flux_forward.30} parent=0 // pred_region
    _
  $region5: #{flux_forward.30} parent=0 // pred_fallthru
    _
  // Predicated region
  $region6: #{flux_forward.30} parent=0 // pred_check
    _
  $region7: #{flux_forward.30} parent=0 // pred_check_branch
    %11 = sbr.rel (0) target = $region9
  $region8: #{flux_forward.30} parent=0 // pred_region
    _
  $region9: #{flux_forward.30} parent=0 // pred_fallthru
    _
  // Predicated region
  $region10: #{flux_forward.30} parent=0 // pred_check
    _
  $region11: #{flux_forward.30} parent=0 // pred_check_branch
    %13 = sbr.rel (0) target = $region13
  $region12: #{flux_forward.30} parent=0 // pred_region
    _
  $region13: #{flux_forward.30} parent=0 // pred_fallthru
    _
  %v15 = vld [vmem:[%s0] sm:$0xf]
  %v16 = vld [vmem:[%s0 + $0x4] sm:$0xf]
  %v17 = vld [vmem:[%s0 + $0x8] sm:$0xf]
  %v18 = vld [vmem:[%s0 + $0xc] sm:$0xf]
  %v19 = vld [vmem:[%s1] sm:$0x3]
  %v20 = vld [vmem:[%s2] sm:$0x1]
  %v21 = vunpack.c.l.bf16 %v20
  %v22 = vperm.slane %v21, 0
  %v27 = vunpack.c.l.b16 %v15
  %v28 = vunpack.c.l.b16 %v16
  %v29 = vunpack.c.l.b16 %v17
  %v30 = vunpack.c.l.b16 %v18
  %v31 = vpack.c.b16 %v28, %v27
  %v32 = vpack.c.b16 %v30, %v29
  %vm33 = vcmask 31744
  %v35 = vsel %vm33, %v31, 0
  %v38 = vsel %vm33, %v32, 0
  %vm40 = vcmask 1041408
  %v42 = vsel %vm40, %v19, 0
  %44 = vmatpush.bf16.msra.mxu0 0
  %45 = vmatpush.bf16.msra.mxu0 0
  %46 = vmatpush.bf16.msra.mxu0 0
  %47 = vmatpush.bf16.msra.mxu0 0
  %48 = vmatpush.bf16.msra.mxu0 0
  %49 = vmatpush.bf16.msra.mxu0 0
  %50 = vmatpush.bf16.msra.mxu0 0
  %51 = vmatpush.bf16.msra.mxu0 %v42
  %52 = vmatmul.bf16.gmra.mxu0 %v35
  %v53 = vpop.f32.mrf.mxu0
  %v54 = vadd.f32 %v22, %v53
  %v55 = vpop.f32.mrf.mxu0
  %v56 = vadd.f32 %v22, %v55
  %57 = vmatmul.bf16.gmra.mxu0 %v38
  %v58 = vpop.f32.mrf.mxu0
  %v59 = vadd.f32 %v22, %v58
  %v60 = vpop.f32.mrf.mxu0
  %v61 = vadd.f32 %v22, %v60
  %62 = vdwg.mxu0
  %v63 = vpack.c.bf16 %v54, %v54
  %v64 = vpack.c.bf16 %v56, %v56
  %v65 = vpack.c.bf16 %v59, %v59
  %v66 = vpack.c.bf16 %v61, %v61
  %vm67 = vcmask 257024
  %68 = vst.msk [vmem:[%s3] sm:$0xf] %vm67, %v63
  %69 = vst.msk [vmem:[%s3 + $0x4] sm:$0xf] %vm67, %v64
  %70 = vst.msk [vmem:[%s3 + $0x8] sm:$0xf] %vm67, %v65
  %71 = vst.msk [vmem:[%s3 + $0xc] sm:$0xf] %vm67, %v66
  // Predicated region
  $region14: #{flux_forward.30} parent=0 // pred_check
    _
  $region15: #{flux_forward.30} parent=0 // pred_check_branch
    %73 = sbr.rel (0) target = $region17
  $region16: #{flux_forward.30} parent=0 // pred_region
    _
  $region17: #{flux_forward.30} parent=0 // pred_fallthru
    _
  // Predicated region
  $region18: #{flux_forward.30} parent=0 // pred_check
    _
  $region19: #{flux_forward.30} parent=0 // pred_check_branch
    %75 = sbr.rel (0) target = $region21
  $region20: #{flux_forward.30} parent=0 // pred_region
    _
  $region21: #{flux_forward.30} parent=0 // pred_fallthru
    _

// kernel: flux_forward.35
$region0: #{flux_forward.35}
  #allocation0 [shape = 'u32[]', space=smem, size = 0x4, offset = 0x4, fixed_abs, tag = 'smem constant byte address 0x4 - core index']
  #allocation1 [shape = 'u32[72,128]{1,0:T(1,128)}', space=vmem, size = 0x9000, scoped, tag = 'internal scratch']
  %s0 = inlined_call_operand.vmem [shape: bf16[2,16,32], index: 0, kind: input, shape index: {}]
  %s1 = inlined_call_operand.vmem [shape: bf16[2,6,32], index: 1, kind: input, shape index: {}]
  %s2 = inlined_call_operand.vmem [shape: bf16[32,96], index: 2, kind: input, shape index: {}]
  %s3 = inlined_call_operand.vmem [shape: bf16[1,96], index: 3, kind: input, shape index: {}]
  %s4 = inlined_call_operand.vmem [shape: f32[64,4], index: 4, kind: input, shape index: {}]
  %s5 = inlined_call_operand.vmem [shape: f32[4,64], index: 5, kind: input, shape index: {}]
  %s6 = inlined_call_operand.vmem [shape: f32[1,64], index: 6, kind: input, shape index: {}]
  %s7 = inlined_call_operand.vmem [shape: bf16[2,16,96], index: 7, kind: output, shape index: {}]
  %s8 = sld [smem:[#allocation0]]
  $region61: #{flux_forward.35} parent=0
    _
  %s10 = ssub.s32 1, %s8
  %s11 = scalar_select 0, %s10, %s8
  loop: start=0, step=1, limit=4
  $region2: #{flux_forward.35} parent=0 // loop_pre_header
    _
  $region3: #{flux_forward.35} parent=0 // loop_header
    %s13 = sphi 0, %s17
    %p14 = scmp.ge.s32.totalorder %s13, 4
    %s23 = sphi 0, %s25
    %s26 = sphi 0, %s23
    %s27 = sphi 0, %s26
    %s43 = sphi 0, %s27
    %s49 = sphi 0, %s51
    %s52 = sphi 0, %s49
    %s53 = sphi 0, %s52
    %s69 = sphi 0, %s53
    %s73 = sphi 0, %s73
    %s75 = sphi 0, %s73
    %s76 = sphi 0, %s75
    %s90 = sphi 0, %s76
    %s94 = sphi 0, %s94
    %s96 = sphi 0, %s94
    %s97 = sphi 0, %s96
    %s111 = sphi 0, %s97
    %s115 = sphi 0, %s115
    %s117 = sphi 0, %s115
    %s118 = sphi 0, %s117
    %s132 = sphi 0, %s118
    %s136 = sphi 0, %s136
    %s138 = sphi 0, %s136
    %s139 = sphi 0, %s138
    %s153 = sphi 0, %s139
    %s157 = sphi 0, %s157
    %s159 = sphi 0, %s157
    %s160 = sphi 0, %s159
    %s174 = sphi 0, %s160
    %s180 = sphi 0, %s182
    %s183 = sphi 0, %s180
    %s184 = sphi 0, %s183
    %s200 = sphi 0, %s184
  $region4: #{flux_forward.35} parent=0 // loop_header_branch
    %16 = sbr.rel (%p14) target = $region8
  $region5: #{flux_forward.35} parent=0 // loop_body
    %s18 = ssub.s32 %s13, 1
    %s19 = ssub.s32 %s13, 2
    %s20 = sadd.s32 %s13, 1
    %s21 = ssub.s32 %s13, %s20
    %p22 = scmp.eq.s32.totalorder %s21, 0
    %s24 = sadd.s32 %s23, 1
    %s25 = scalar_select %p22, %s23, %s24
    %p28 = pneg %p22
    %p29 = scmp.eq.s32.totalorder %s13, 1
    %p30 = por %p28, %p29
    %p31 = scmp.ne.s32.totalorder %s23, %s26
    %p32 = scmp.eq.s32.totalorder %s13, 0
    %p33 = por %p31, %p32
    %p34 = scmp.ne.s32.totalorder %s23, %s26
    %p35 = scmp.eq.s32.totalorder %s18, 1
    %p36 = por %p34, %p35
    %p37 = scmp.ne.s32.totalorder %s26, %s27
    %p38 = scmp.eq.s32.totalorder %s18, 0
    %p39 = por %p37, %p38
    %p40 = scmp.ne.s32.totalorder %s26, %s27
    %p41 = scmp.eq.s32.totalorder %s19, 1
    %p42 = por %p40, %p41
    %p44 = scmp.ne.s32.totalorder %s27, %s43
    %p45 = scmp.eq.s32.totalorder %s19, 0
    %p46 = por %p44, %p45
    %s47 = ssub.s32 %s13, %s20
    %p48 = scmp.eq.s32.totalorder %s47, 0
    %s50 = sadd.s32 %s49, 1
    %s51 = scalar_select %p48, %s49, %s50
    %p54 = pneg %p48
    %p55 = scmp.eq.s32.totalorder %s13, 1
    %p56 = por %p54, %p55
    %p57 = scmp.ne.s32.totalorder %s49, %s52
    %p58 = scmp.eq.s32.totalorder %s13, 0
    %p59 = por %p57, %p58
    %p60 = scmp.ne.s32.totalorder %s49, %s52
    %p61 = scmp.eq.s32.totalorder %s18, 1
    %p62 = por %p60, %p61
    %p63 = scmp.ne.s32.totalorder %s52, %s53
    %p64 = scmp.eq.s32.totalorder %s18, 0
    %p65 = por %p63, %p64
    %p66 = scmp.ne.s32.totalorder %s52, %s53
    %p67 = scmp.eq.s32.totalorder %s19, 1
    %p68 = por %p66, %p67
    %p70 = scmp.ne.s32.totalorder %s53, %s69
    %p71 = scmp.eq.s32.totalorder %s19, 0
    %p72 = por %p70, %p71
    %s74 = sadd.s32 %s73, 1
    %p77 = scmp.eq.s32.totalorder %s13, 1
    %p78 = scmp.ne.s32.totalorder %s73, %s75
    %p79 = scmp.eq.s32.totalorder %s13, 0
    %p80 = por %p78, %p79
    %p81 = scmp.ne.s32.totalorder %s73, %s75
    %p82 = scmp.eq.s32.totalorder %s18, 1
    %p83 = por %p81, %p82
    %p84 = scmp.ne.s32.totalorder %s75, %s76
    %p85 = scmp.eq.s32.totalorder %s18, 0
    %p86 = por %p84, %p85
    %p87 = scmp.ne.s32.totalorder %s75, %s76
    %p88 = scmp.eq.s32.totalorder %s19, 1
    %p89 = por %p87, %p88
    %p91 = scmp.ne.s32.totalorder %s76, %s90
    %p92 = scmp.eq.s32.totalorder %s19, 0
    %p93 = por %p91, %p92
    %s95 = sadd.s32 %s94, 1
    %p98 = scmp.eq.s32.totalorder %s13, 1
    %p99 = scmp.ne.s32.totalorder %s94, %s96
    %p100 = scmp.eq.s32.totalorder %s13, 0
    %p101 = por %p99, %p100
    %p102 = scmp.ne.s32.totalorder %s94, %s96
    %p103 = scmp.eq.s32.totalorder %s18, 1
    %p104 = por %p102, %p103
    %p105 = scmp.ne.s32.totalorder %s96, %s97
    %p106 = scmp.eq.s32.totalorder %s18, 0
    %p107 = por %p105, %p106
    %p108 = scmp.ne.s32.totalorder %s96, %s97
    %p109 = scmp.eq.s32.totalorder %s19, 1
    %p110 = por %p108, %p109
    %p112 = scmp.ne.s32.totalorder %s97, %s111
    %p113 = scmp.eq.s32.totalorder %s19, 0
    %p114 = por %p112, %p113
    %s116 = sadd.s32 %s115, 1
    %p119 = scmp.eq.s32.totalorder %s13, 1
    %p120 = scmp.ne.s32.totalorder %s115, %s117
    %p121 = scmp.eq.s32.totalorder %s13, 0
    %p122 = por %p120, %p121
    %p123 = scmp.ne.s32.totalorder %s115, %s117
    %p124 = scmp.eq.s32.totalorder %s18, 1
    %p125 = por %p123, %p124
    %p126 = scmp.ne.s32.totalorder %s117, %s118
    %p127 = scmp.eq.s32.totalorder %s18, 0
    %p128 = por %p126, %p127
    %p129 = scmp.ne.s32.totalorder %s117, %s118
    %p130 = scmp.eq.s32.totalorder %s19, 1
    %p131 = por %p129, %p130
    %p133 = scmp.ne.s32.totalorder %s118, %s132
    %p134 = scmp.eq.s32.totalorder %s19, 0
    %p135 = por %p133, %p134
    %s137 = sadd.s32 %s136, 1
    %p140 = scmp.eq.s32.totalorder %s13, 1
    %p141 = scmp.ne.s32.totalorder %s136, %s138
    %p142 = scmp.eq.s32.totalorder %s13, 0
    %p143 = por %p141, %p142
    %p144 = scmp.ne.s32.totalorder %s136, %s138
    %p145 = scmp.eq.s32.totalorder %s18, 1
    %p146 = por %p144, %p145
    %p147 = scmp.ne.s32.totalorder %s138, %s139
    %p148 = scmp.eq.s32.totalorder %s18, 0
    %p149 = por %p147, %p148
    %p150 = scmp.ne.s32.totalorder %s138, %s139
    %p151 = scmp.eq.s32.totalorder %s19, 1
    %p152 = por %p150, %p151
    %p154 = scmp.ne.s32.totalorder %s139, %s153
    %p155 = scmp.eq.s32.totalorder %s19, 0
    %p156 = por %p154, %p155
    %s158 = sadd.s32 %s157, 1
    %p161 = scmp.eq.s32.totalorder %s13, 1
    %p162 = scmp.ne.s32.totalorder %s157, %s159
    %p163 = scmp.eq.s32.totalorder %s13, 0
    %p164 = por %p162, %p163
    %p165 = scmp.ne.s32.totalorder %s157, %s159
    %p166 = scmp.eq.s32.totalorder %s18, 1
    %p167 = por %p165, %p166
    %p168 = scmp.ne.s32.totalorder %s159, %s160
    %p169 = scmp.eq.s32.totalorder %s18, 0
    %p170 = por %p168, %p169
    %p171 = scmp.ne.s32.totalorder %s159, %s160
    %p172 = scmp.eq.s32.totalorder %s19, 1
    %p173 = por %p171, %p172
    %p175 = scmp.ne.s32.totalorder %s160, %s174
    %p176 = scmp.eq.s32.totalorder %s19, 0
    %p177 = por %p175, %p176
    %s178 = ssub.s32 %s13, %s20
    %p179 = scmp.eq.s32.totalorder %s178, 0
    %s181 = sadd.s32 %s180, 1
    %s182 = scalar_select %p179, %s180, %s181
    %p185 = pneg %p179
    %p186 = scmp.eq.s32.totalorder %s13, 1
    %p187 = por %p185, %p186
    %p188 = scmp.ne.s32.totalorder %s180, %s183
    %p189 = scmp.eq.s32.totalorder %s13, 0
    %p190 = por %p188, %p189
    %p191 = scmp.ne.s32.totalorder %s180, %s183
    %p192 = scmp.eq.s32.totalorder %s18, 1
    %p193 = por %p191, %p192
    %p194 = scmp.ne.s32.totalorder %s183, %s184
    %p195 = scmp.eq.s32.totalorder %s18, 0
    %p196 = por %p194, %p195
    %p197 = scmp.ne.s32.totalorder %s183, %s184
    %p198 = scmp.eq.s32.totalorder %s19, 1
    %p199 = por %p197, %p198
    %p201 = scmp.ne.s32.totalorder %s184, %s200
    %p202 = scmp.eq.s32.totalorder %s19, 0
    %p203 = por %p201, %p202
    %p204 = scmp.le.s32.totalorder 1, %s13
    %p205 = scmp.lt.s32.totalorder %s13, 3
    %p206 = pnand %p204, %p205
    %p207 = pneg %p206
    // Predicated region
    $region9: #{flux_forward.35} parent=5 // pred_check
      _
    $region10: #{flux_forward.35} parent=5 // pred_check_branch
      %209 = sbr.rel (%p206) target = $region12
    $region11: #{flux_forward.35} parent=5 // pred_region
      %s210 = ssub.s32 %s13, 1
      // Predicated region
      $region13: #{flux_forward.35} parent=11 // pred_check
        %p211 = pneg %p86
      $region14: #{flux_forward.35} parent=11 // pred_check_branch
        %213 = sbr.rel (%p211) target = $region16
      $region15: #{flux_forward.35} parent=11 // pred_region
        _
      $region16: #{flux_forward.35} parent=11 // pred_fallthru
        _
      // Predicated region
      $region17: #{flux_forward.35} parent=11 // pred_check
        %p214 = pneg %p107
      $region18: #{flux_forward.35} parent=11 // pred_check_branch
        %216 = sbr.rel (%p214) target = $region20
      $region19: #{flux_forward.35} parent=11 // pred_region
        _
      $region20: #{flux_forward.35} parent=11 // pred_fallthru
        _
      // Predicated region
      $region21: #{flux_forward.35} parent=11 // pred_check
        %p217 = pneg %p128
      $region22: #{flux_forward.35} parent=11 // pred_check_branch
        %219 = sbr.rel (%p217) target = $region24
      $region23: #{flux_forward.35} parent=11 // pred_region
        _
      $region24: #{flux_forward.35} parent=11 // pred_fallthru
        _
      // Predicated region
      $region25: #{flux_forward.35} parent=11 // pred_check
        %p220 = pneg %p149
      $region26: #{flux_forward.35} parent=11 // pred_check_branch
        %222 = sbr.rel (%p220) target = $region28
      $region27: #{flux_forward.35} parent=11 // pred_region
        _
      $region28: #{flux_forward.35} parent=11 // pred_fallthru
        _
      // Predicated region
      $region29: #{flux_forward.35} parent=11 // pred_check
        %p223 = pneg %p170
      $region30: #{flux_forward.35} parent=11 // pred_check_branch
        %225 = sbr.rel (%p223) target = $region32
      $region31: #{flux_forward.35} parent=11 // pred_region
        _
      $region32: #{flux_forward.35} parent=11 // pred_fallthru
        _
    $region12: #{flux_forward.35} parent=5 // pred_fallthru
      _
    %p226 = scmp.lt.s32.totalorder %s13, 2
    // Predicated region
    $region33: #{flux_forward.35} parent=5 // pred_check
      %p227 = pneg %p226
    $region34: #{flux_forward.35} parent=5 // pred_check_branch
      %229 = sbr.rel (%p227) target = $region36
    $region35: #{flux_forward.35} parent=5 // pred_region
      // Predicated region
      $region37: #{flux_forward.35} parent=35 // pred_check
        %p230 = pneg %p33
      $region38: #{flux_forward.35} parent=35 // pred_check_branch
        %232 = sbr.rel (%p230) target = $region40
      $region39: #{flux_forward.35} parent=35 // pred_region
        %p233 = scmp.lt.s32.totalorder %s13, 1
        %s234 = scalar_select %p233, %s13, 1
        %s235 = smul.addr %s234, 2
        %s236 = smul.addr %s235, 4
        %s237 = scalar_lea.vmem %s0, %s236
      $region40: #{flux_forward.35} parent=35 // pred_fallthru
        _
      // Predicated region
      $region41: #{flux_forward.35} parent=35 // pred_check
        %p238 = pneg %p59
      $region42: #{flux_forward.35} parent=35 // pred_check_branch
        %240 = sbr.rel (%p238) target = $region44
      $region43: #{flux_forward.35} parent=35 // pred_region
        %p241 = scmp.lt.s32.totalorder %s13, 1
        %s242 = scalar_select %p241, %s13, 1
        %s243 = smul.addr %s242, 4
        %s244 = scalar_lea.vmem %s1, %s243
      $region44: #{flux_forward.35} parent=35 // pred_fallthru
        _
    $region36: #{flux_forward.35} parent=5 // pred_fallthru
      _
    %p245 = scmp.le.s32.totalorder 1, %s13
    %p246 = scmp.lt.s32.totalorder %s13, 3
    %p247 = pnand %p245, %p246
    %p248 = pneg %p247
    // Predicated region
    $region45: #{flux_forward.35} parent=5 // pred_check
      _
    $region46: #{flux_forward.35} parent=5 // pred_check_branch
      %250 = sbr.rel (%p247) target = $region48
    $region47: #{flux_forward.35} parent=5 // pred_region
      %s251 = ssub.s32 %s13, 1
      %p252 = scmp.lt.s32.totalorder %s18, 1
      %s253 = scalar_select %p252, %s18, 1
      %s254 = smul.addr %s253, 2
      %s255 = smul.addr %s254, 4
      %s256 = scalar_lea.vmem %s0, %s255
      %p257 = pneg %p39
      %p258 = pneg %p36
      %p259 = scmp.lt.s32.totalorder %s18, 1
      %s260 = scalar_select %p259, %s18, 1
      %s261 = smul.addr %s260, 4
      %s262 = scalar_lea.vmem %s1, %s261
      %p263 = pneg %p65
      %p264 = pneg %p62
      %p265 = pneg %p86
      %p266 = pneg %p83
      %p267 = pneg %p107
      %p268 = pneg %p104
      %p269 = pneg %p128
      %p270 = pneg %p125
      %p271 = pneg %p149
      %p272 = pneg %p146
      %p273 = pneg %p170
      %p274 = pneg %p167
      %p275 = pneg %p196
      %p276 = pneg %p193
      %p277 = scmp.lt.s32.totalorder %s18, 1
      %s278 = scalar_select %p277, %s18, 1
      %s279 = smul.addr %s278, 2
      %s280 = smul.addr %s279, 4
      %s281 = scalar_lea.vmem %s7, %s280
      %p282 = scmp.lt.s32.totalorder %s18, 1
      %s283 = scalar_select %p282, %s18, 1
      %s284 = smul.addr %s283, 2
      %s285 = smul.addr %s284, 4
      %s286 = scalar_lea.vmem %s0, %s285
      %p287 = scmp.lt.s32.totalorder %s18, 1
      %s288 = scalar_select %p287, %s18, 1
      %s289 = smul.addr %s288, 4
      %s290 = scalar_lea.vmem %s1, %s289
      %p291 = scmp.lt.s32.totalorder %s18, 1
      %s292 = scalar_select %p291, %s18, 1
      %s293 = smul.addr %s292, 2
      %s294 = smul.addr %s293, 4
      %s295 = scalar_lea.vmem %s7, %s294
      %v297 = vld [vmem:[%s286] sm:$0xf]
      %v298 = vld [vmem:[%s286 + $0x4] sm:$0xf]
      %v299 = vunpack.c.l.bf16 %v297
      %v300 = vunpack.c.l.bf16 %v298
      %v301 = vld [vmem:[%s290] sm:$0x1]
      %v302 = vunpack.c.l.bf16 %v301
      %vm303 = vcmask 261120
      %v304 = vsel %vm303, %v299, 0.0
      %305 = vadd.xlane.f32.xlu0 %v304
      %v306 = vpop.xlane.xlu0 %305
      %v307 = vsel %vm303, %v300, 0.0
      %308 = vadd.xlane.f32.xlu0 %v307
      %v309 = vpop.xlane.xlu0 %308
      %v310 = vrcp.pop 32.0
      %v311 = vmul.f32 32.0, %v310
      %v312 = vsub.f32 1.0, %v311
      %v313 = vmul.f32 %v310, %v312
      %v314 = vadd.f32 %v310, %v313
      %vm315 = vweird.f32 %v310
      %v316 = vsel %vm315, %v310, %v314
      %v317 = vmul.f32 %v306, %v316
      %v318 = vmul.f32 %v309, %v316
      %v319 = vsub.f32 %v299, %v317
      %v320 = vsub.f32 %v300, %v318
      %v321 = vmul.f32 %v319, %v319
      %v322 = vmul.f32 %v320, %v320
      %v323 = vsel %vm303, %v321, 0.0
      %324 = vadd.xlane.f32.xlu0 %v323
      %v325 = vpop.xlane.xlu0 %324
      %v326 = vsel %vm303, %v322, 0.0
      %327 = vadd.xlane.f32.xlu0 %v326
      %v328 = vpop.xlane.xlu0 %327
      %v329 = vmul.f32 %v325, %v316
      %v330 = vmul.f32 %v328, %v316
      %v331 = vadd.f32 %v329, 1e-06
      %v332 = vadd.f32 %v330, 1e-06
      %v333 = vrsqrt.pop %v331
      %v334 = vmul.f32 %v333, %v331
      %v335 = vmul.f32 %v334, %v333
      %v336 = vmul.f32 0.5, %v335
      %v337 = vsub.f32 1.5, %v336
      %v338 = vmul.f32 %v333, %v337
      %vm339 = vweird.f32 %v331
      %vm340 = vweird.f32 %v333
      %vm341 = vmor %vm339, %vm340
      %v342 = vsel %vm341, %v333, %v338
      %v343 = vrsqrt.pop %v332
      %v344 = vmul.f32 %v343, %v332
      %v345 = vmul.f32 %v344, %v343
      %v346 = vmul.f32 0.5, %v345
      %v347 = vsub.f32 1.5, %v346
      %v348 = vmul.f32 %v343, %v347
      %vm349 = vweird.f32 %v332
      %vm350 = vweird.f32 %v343
      %vm351 = vmor %vm349, %vm350
      %v352 = vsel %vm351, %v343, %v348
      %v353 = vmul.f32 %v319, %v342
      %v354 = vmul.f32 %v320, %v352
      %v355 = vadd.f32 %v302, 1.0
      %v356 = vperm.slane %v355, 1
      %v357 = vmul.f32 %v356, %v353
      %v358 = vmul.f32 %v356, %v354
      %v359 = vperm.slane %v302, 0
      %v360 = vadd.f32 %v357, %v359
      %v361 = vadd.f32 %v358, %v359
      %v362 = vpack.c.bf16 %v361, %v360
      %v363 = vld [vmem:[%s2] sm:$0xf]
      %v364 = vld [vmem:[%s2 + $0x4] sm:$0xf]
      %v365 = vld [vmem:[%s2 + $0x8] sm:$0xf]
      %v366 = vld [vmem:[%s2 + $0xc] sm:$0xf]
      %v367 = vld [vmem:[%s3] sm:$0x1]
      %v368 = vunpack.c.l.bf16 %v367
      %v369 = vperm.slane %v368, 0
      %v374 = vunpack.c.l.b16 %v363
      %v375 = vunpack.c.l.b16 %v364
      %v376 = vunpack.c.l.b16 %v365
      %v377 = vunpack.c.l.b16 %v366
      %v378 = vpack.c.b16 %v375, %v374
      %v379 = vpack.c.b16 %v377, %v376
      %v383 = vsel %vm303, %v362, 0
      %385 = vmatpush.bf16.msra.mxu0 0
      %386 = vmatpush.bf16.msra.mxu0 0
      %387 = vmatpush.bf16.msra.mxu0 0
      %388 = vmatpush.bf16.msra.mxu0 0
      %389 = vmatpush.bf16.msra.mxu0 0
      %390 = vmatpush.bf16.msra.mxu0 0
      %391 = vmatpush.bf16.msra.mxu0 %v379
      %392 = vmatpush.bf16.msra.mxu0 %v378
      %393 = vmatmul.bf16.gmra.mxu0 %v383
      %v394 = vpop.f32.mrf.mxu0
      %v395 = vadd.f32 %v369, %v394
      %v396 = vpop.f32.mrf.mxu0
      %v397 = vadd.f32 %v369, %v396
      %398 = vdwg.mxu0
      %v399 = vmul.f32 %v395, %v395
      %v400 = vmul.f32 %v397, %v397
      %v401 = vld [vmem:[%s4] sm:$0xff]
      %v402 = vld [vmem:[%s4 + $0x8] sm:$0xff]
      %v403 = vld [vmem:[%s4 + $0x10] sm:$0xff]
      %v404 = vld [vmem:[%s4 + $0x18] sm:$0xff]
      %v405 = vld [vmem:[%s4 + $0x20] sm:$0xff]
      %v406 = vld [vmem:[%s4 + $0x28] sm:$0xff]
      %v407 = vld [vmem:[%s4 + $0x30] sm:$0xff]
      %v408 = vld [vmem:[%s4 + $0x38] sm:$0xff]
      %vm409 = vcmask 523264
      %v411 = vsel %vm409, %v399, 0
      %v414 = vsel %vm409, %v400, 0
      %416 = vmatpush.msra.mxu0 0.0
      %417 = vmatpush.msra.mxu0 0.0
      %418 = vmatpush.msra.mxu0 0.0
      %419 = vmatpush.msra.mxu0 0.0
      %420 = vmatpush.msra.mxu0 0.0
      %421 = vmatpush.msra.mxu0 0.0
      %422 = vmatpush.msra.mxu0 0.0
      %423 = vmatpush.msra.mxu0 0.0
      %424 = vmatpush.msra.mxu0 %v408
      %425 = vmatpush.msra.mxu0 %v407
      %426 = vmatpush.msra.mxu0 %v406
      %427 = vmatpush.msra.mxu0 %v405
      %428 = vmatpush.msra.mxu0 %v404
      %429 = vmatpush.msra.mxu0 %v403
      %430 = vmatpush.msra.mxu0 %v402
      %431 = vmatpush.msra.mxu0 %v401
      %432 = vmatmul.f32.gmra.mxu0 %v411
      %v433 = vpop.f32.mrf.mxu0
      %v434 = vadd.f32 0.0, %v433
      %435 = vmatmul.f32.gmra.mxu0 %v414
      %v436 = vpop.f32.mrf.mxu0
      %v437 = vadd.f32 0.0, %v436
      %438 = vdwg.mxu0
      %v439 = vmul.f32 %v434, 0.0625
      %v440 = vmul.f32 %v437, 0.0625
      %v441 = vadd.f32 %v439, 1e-06
      %v442 = vadd.f32 %v440, 1e-06
      %v443 = vrsqrt.pop %v441
      %v444 = vmul.f32 %v443, %v441
      %v445 = vmul.f32 %v444, %v443
      %v446 = vmul.f32 0.5, %v445
      %v447 = vsub.f32 1.5, %v446
      %v448 = vmul.f32 %v443, %v447
      %vm449 = vweird.f32 %v441
      %vm450 = vweird.f32 %v443
      %vm451 = vmor %vm449, %vm450
      %v452 = vsel %vm451, %v443, %v448
      %v453 = vrsqrt.pop %v442
      %v454 = vmul.f32 %v453, %v442
      %v455 = vmul.f32 %v454, %v453
      %v456 = vmul.f32 0.5, %v455
      %v457 = vsub.f32 1.5, %v456
      %v458 = vmul.f32 %v453, %v457
      %vm459 = vweird.f32 %v442
      %vm460 = vweird.f32 %v453
      %vm461 = vmor %vm459, %vm460
      %v462 = vsel %vm461, %v453, %v458
      %v463 = vld [vmem:[%s5] sm:$0xf]
      %vm464 = vcmask 31744
      %v466 = vsel %vm464, %v452, 0
      %v469 = vsel %vm464, %v462, 0
      %vm471 = vcmask 1043456
      %v473 = vsel %vm471, %v463, 0
      %475 = vmatpush.msra.mxu0 0.0
      %476 = vmatpush.msra.mxu0 0.0
      %477 = vmatpush.msra.mxu0 0.0
      %478 = vmatpush.msra.mxu0 0.0
      %479 = vmatpush.msra.mxu0 0.0
      %480 = vmatpush.msra.mxu0 0.0
      %481 = vmatpush.msra.mxu0 0.0
      %482 = vmatpush.msra.mxu0 0.0
      %483 = vmatpush.msra.mxu0 0.0
      %484 = vmatpush.msra.mxu0 0.0
      %485 = vmatpush.msra.mxu0 0.0
      %486 = vmatpush.msra.mxu0 0.0
      %487 = vmatpush.msra.mxu0 0.0
      %488 = vmatpush.msra.mxu0 0.0
      %489 = vmatpush.msra.mxu0 0.0
      %490 = vmatpush.msra.mxu0 %v473
      %491 = vmatmul.f32.gmra.mxu0 %v466
      %v492 = vpop.f32.mrf.mxu0
      %v493 = vadd.f32 0.0, %v492
      %494 = vmatmul.f32.gmra.mxu0 %v469
      %v495 = vpop.f32.mrf.mxu0
      %v496 = vadd.f32 0.0, %v495
      %497 = vdwg.mxu0
      %v498 = vmul.f32 %v395, %v493
      %v499 = vmul.f32 %v397, %v496
      %v500 = vld [vmem:[%s6] sm:$0x1]
      %v502 = vperm.slane %v500, 0
      %v504 = vmul.f32 %v498, %v502
      %v505 = vmul.f32 %v499, %v502
      %v506 = vpack.c.bf16 %v504, %v504
      %v507 = vpack.c.bf16 %v505, %v505
      %vm508 = vcmask 519168
      %509 = vst.msk [vmem:[%s295] sm:$0xf] %vm508, %v506
      %510 = vst.msk [vmem:[%s295 + $0x4] sm:$0xf] %vm508, %v507
      %v511 = vpack.c.bf16 %v395, %v395
      %v512 = vpack.c.bf16 %v397, %v397
      %vm513 = vcmask 781824
      %514 = vst.msk [vmem:[%s295] sm:$0xf] %vm513, %v511
      %515 = vst.msk [vmem:[%s295 + $0x4] sm:$0xf] %vm513, %v512
      %p516 = scmp.lt.s32.totalorder %s18, 1
      %s517 = scalar_select %p516, %s18, 1
      %s518 = smul.addr %s517, 2
      %s519 = smul.addr %s518, 4
      %s520 = scalar_lea.vmem %s7, %s519
      // Predicated region
      $region49: #{flux_forward.35} parent=47 // pred_check
        %p521 = pneg %p193
      $region50: #{flux_forward.35} parent=47 // pred_check_branch
        %523 = sbr.rel (%p521) target = $region52
      $region51: #{flux_forward.35} parent=47 // pred_region
        _
      $region52: #{flux_forward.35} parent=47 // pred_fallthru
        _
    $region48: #{flux_forward.35} parent=5 // pred_fallthru
      _
    %p524 = scmp.le.s32.totalorder 2, %s13
    // Predicated region
    $region53: #{flux_forward.35} parent=5 // pred_check
      %p525 = pneg %p524
    $region54: #{flux_forward.35} parent=5 // pred_check_branch
      %527 = sbr.rel (%p525) target = $region56
    $region55: #{flux_forward.35} parent=5 // pred_region
      %s528 = ssub.s32 %s13, 2
      // Predicated region
      $region57: #{flux_forward.35} parent=55 // pred_check
        %p529 = pneg %p199
      $region58: #{flux_forward.35} parent=55 // pred_check_branch
        %531 = sbr.rel (%p529) target = $region60
      $region59: #{flux_forward.35} parent=55 // pred_region
        %p532 = scmp.lt.s32.totalorder %s19, 1
        %s533 = scalar_select %p532, %s19, 1
        %s534 = smul.addr %s533, 2
        %s535 = smul.addr %s534, 4
        %s536 = scalar_lea.vmem %s7, %s535
      $region60: #{flux_forward.35} parent=55 // pred_fallthru
        _
    $region56: #{flux_forward.35} parent=5 // pred_fallthru
      _
  $region6: #{flux_forward.35} parent=0 // loop_footer
    %s17 = sadd.s32 1, %s13
  $region7: #{flux_forward.35} parent=0 // loop_footer_branch
    %12 = sbr.rel target = $region3
  $region8: #{flux_forward.35} parent=0 // loop_exit
    _

// kernel: flux_forward.31
$region0: #{flux_forward.31}
  #allocation0 [shape = 'u32[]', space=smem, size = 0x4, offset = 0x4, fixed_abs, tag = 'smem constant byte address 0x4 - core index']
  #allocation1 [shape = 'u32[72,128]{1,0:T(1,128)}', space=vmem, size = 0x9000, scoped, tag = 'internal scratch']
  %s0 = inlined_call_operand.vmem [shape: bf16[16,8], index: 0, kind: input, shape index: {}]
  %s1 = inlined_call_operand.vmem [shape: bf16[8,32], index: 1, kind: input, shape index: {}]
  %s2 = inlined_call_operand.vmem [shape: bf16[1,32], index: 2, kind: input, shape index: {}]
  %s3 = inlined_call_operand.vmem [shape: bf16[16,32], index: 3, kind: output, shape index: {}]
  %s4 = sld [smem:[#allocation0]]
  $region22: #{flux_forward.31} parent=0
    _
  %s6 = ssub.s32 1, %s4
  %s7 = scalar_select 0, %s6, %s4
  // Predicated region
  $region2: #{flux_forward.31} parent=0 // pred_check
    _
  $region3: #{flux_forward.31} parent=0 // pred_check_branch
    %9 = sbr.rel (0) target = $region5
  $region4: #{flux_forward.31} parent=0 // pred_region
    _
  $region5: #{flux_forward.31} parent=0 // pred_fallthru
    _
  // Predicated region
  $region6: #{flux_forward.31} parent=0 // pred_check
    _
  $region7: #{flux_forward.31} parent=0 // pred_check_branch
    %11 = sbr.rel (0) target = $region9
  $region8: #{flux_forward.31} parent=0 // pred_region
    _
  $region9: #{flux_forward.31} parent=0 // pred_fallthru
    _
  // Predicated region
  $region10: #{flux_forward.31} parent=0 // pred_check
    _
  $region11: #{flux_forward.31} parent=0 // pred_check_branch
    %13 = sbr.rel (0) target = $region13
  $region12: #{flux_forward.31} parent=0 // pred_region
    _
  $region13: #{flux_forward.31} parent=0 // pred_fallthru
    _
  %v15 = vld [vmem:[%s0] sm:$0xf]
  %v16 = vld [vmem:[%s0 + $0x4] sm:$0xf]
  %v17 = vld [vmem:[%s1] sm:$0xf]
  %v18 = vld [vmem:[%s2] sm:$0x1]
  %v19 = vunpack.c.l.bf16 %v18
  %v20 = vperm.slane %v19, 0
  %v23 = vunpack.c.l.b16 %v15
  %v24 = vunpack.c.l.b16 %v16
  %v25 = vpack.c.b16 %v24, %v23
  %vm26 = vcmask 64512
  %v28 = vsel %vm26, %v25, 0
  %vm30 = vcmask 1043456
  %v32 = vsel %vm30, %v17, 0
  %34 = vmatpush.bf16.msra.mxu0 0
  %35 = vmatpush.bf16.msra.mxu0 0
  %36 = vmatpush.bf16.msra.mxu0 0
  %37 = vmatpush.bf16.msra.mxu0 0
  %38 = vmatpush.bf16.msra.mxu0 0
  %39 = vmatpush.bf16.msra.mxu0 0
  %40 = vmatpush.bf16.msra.mxu0 0
  %41 = vmatpush.bf16.msra.mxu0 %v32
  %42 = vmatmul.bf16.gmra.mxu0 %v28
  %v43 = vpop.f32.mrf.mxu0
  %v44 = vadd.f32 %v20, %v43
  %v45 = vpop.f32.mrf.mxu0
  %v46 = vadd.f32 %v20, %v45
  %47 = vdwg.mxu0
  %v48 = vpack.c.bf16 %v44, %v44
  %v49 = vpack.c.bf16 %v46, %v46
  %vm50 = vcmask 257024
  %51 = vst.msk [vmem:[%s3] sm:$0xf] %vm50, %v48
  %52 = vst.msk [vmem:[%s3 + $0x4] sm:$0xf] %vm50, %v49
  // Predicated region
  $region14: #{flux_forward.31} parent=0 // pred_check
    _
  $region15: #{flux_forward.31} parent=0 // pred_check_branch
    %54 = sbr.rel (0) target = $region17
  $region16: #{flux_forward.31} parent=0 // pred_region
    _
  $region17: #{flux_forward.31} parent=0 // pred_fallthru
    _
  // Predicated region
  $region18: #{flux_forward.31} parent=0 // pred_check
    _
  $region19: #{flux_forward.31} parent=0 // pred_check_branch
    %56 = sbr.rel (0) target = $region21
  $region20: #{flux_forward.31} parent=0 // pred_region
    _
  $region21: #{flux_forward.31} parent=0 // pred_fallthru
    _

// kernel: flux_forward.36
$region0: #{flux_forward.36}
  #allocation0 [shape = 'u32[]', space=smem, size = 0x4, offset = 0x4, fixed_abs, tag = 'smem constant byte address 0x4 - core index']
  #allocation1 [shape = 'u32[72,128]{1,0:T(1,128)}', space=vmem, size = 0x9000, scoped, tag = 'internal scratch']
  %s0 = inlined_call_operand.vmem [shape: bf16[2,8,32], index: 0, kind: input, shape index: {}]
  %s1 = inlined_call_operand.vmem [shape: bf16[2,6,32], index: 1, kind: input, shape index: {}]
  %s2 = inlined_call_operand.vmem [shape: bf16[32,96], index: 2, kind: input, shape index: {}]
  %s3 = inlined_call_operand.vmem [shape: bf16[1,96], index: 3, kind: input, shape index: {}]
  %s4 = inlined_call_operand.vmem [shape: f32[64,4], index: 4, kind: input, shape index: {}]
  %s5 = inlined_call_operand.vmem [shape: f32[4,64], index: 5, kind: input, shape index: {}]
  %s6 = inlined_call_operand.vmem [shape: f32[1,64], index: 6, kind: input, shape index: {}]
  %s7 = inlined_call_operand.vmem [shape: bf16[2,8,96], index: 7, kind: output, shape index: {}]
  %s8 = sld [smem:[#allocation0]]
  $region61: #{flux_forward.36} parent=0
    _
  %s10 = ssub.s32 1, %s8
  %s11 = scalar_select 0, %s10, %s8
  loop: start=0, step=1, limit=4
  $region2: #{flux_forward.36} parent=0 // loop_pre_header
    _
  $region3: #{flux_forward.36} parent=0 // loop_header
    %s13 = sphi 0, %s17
    %p14 = scmp.ge.s32.totalorder %s13, 4
    %s23 = sphi 0, %s25
    %s26 = sphi 0, %s23
    %s27 = sphi 0, %s26
    %s43 = sphi 0, %s27
    %s49 = sphi 0, %s51
    %s52 = sphi 0, %s49
    %s53 = sphi 0, %s52
    %s69 = sphi 0, %s53
    %s73 = sphi 0, %s73
    %s75 = sphi 0, %s73
    %s76 = sphi 0, %s75
    %s90 = sphi 0, %s76
    %s94 = sphi 0, %s94
    %s96 = sphi 0, %s94
    %s97 = sphi 0, %s96
    %s111 = sphi 0, %s97
    %s115 = sphi 0, %s115
    %s117 = sphi 0, %s115
    %s118 = sphi 0, %s117
    %s132 = sphi 0, %s118
    %s136 = sphi 0, %s136
    %s138 = sphi 0, %s136
    %s139 = sphi 0, %s138
    %s153 = sphi 0, %s139
    %s157 = sphi 0, %s157
    %s159 = sphi 0, %s157
    %s160 = sphi 0, %s159
    %s174 = sphi 0, %s160
    %s180 = sphi 0, %s182
    %s183 = sphi 0, %s180
    %s184 = sphi 0, %s183
    %s200 = sphi 0, %s184
  $region4: #{flux_forward.36} parent=0 // loop_header_branch
    %16 = sbr.rel (%p14) target = $region8
  $region5: #{flux_forward.36} parent=0 // loop_body
    %s18 = ssub.s32 %s13, 1
    %s19 = ssub.s32 %s13, 2
    %s20 = sadd.s32 %s13, 1
    %s21 = ssub.s32 %s13, %s20
    %p22 = scmp.eq.s32.totalorder %s21, 0
    %s24 = sadd.s32 %s23, 1
    %s25 = scalar_select %p22, %s23, %s24
    %p28 = pneg %p22
    %p29 = scmp.eq.s32.totalorder %s13, 1
    %p30 = por %p28, %p29
    %p31 = scmp.ne.s32.totalorder %s23, %s26
    %p32 = scmp.eq.s32.totalorder %s13, 0
    %p33 = por %p31, %p32
    %p34 = scmp.ne.s32.totalorder %s23, %s26
    %p35 = scmp.eq.s32.totalorder %s18, 1
    %p36 = por %p34, %p35
    %p37 = scmp.ne.s32.totalorder %s26, %s27
    %p38 = scmp.eq.s32.totalorder %s18, 0
    %p39 = por %p37, %p38
    %p40 = scmp.ne.s32.totalorder %s26, %s27
    %p41 = scmp.eq.s32.totalorder %s19, 1
    %p42 = por %p40, %p41
    %p44 = scmp.ne.s32.totalorder %s27, %s43
    %p45 = scmp.eq.s32.totalorder %s19, 0
    %p46 = por %p44, %p45
    %s47 = ssub.s32 %s13, %s20
    %p48 = scmp.eq.s32.totalorder %s47, 0
    %s50 = sadd.s32 %s49, 1
    %s51 = scalar_select %p48, %s49, %s50
    %p54 = pneg %p48
    %p55 = scmp.eq.s32.totalorder %s13, 1
    %p56 = por %p54, %p55
    %p57 = scmp.ne.s32.totalorder %s49, %s52
    %p58 = scmp.eq.s32.totalorder %s13, 0
    %p59 = por %p57, %p58
    %p60 = scmp.ne.s32.totalorder %s49, %s52
    %p61 = scmp.eq.s32.totalorder %s18, 1
    %p62 = por %p60, %p61
    %p63 = scmp.ne.s32.totalorder %s52, %s53
    %p64 = scmp.eq.s32.totalorder %s18, 0
    %p65 = por %p63, %p64
    %p66 = scmp.ne.s32.totalorder %s52, %s53
    %p67 = scmp.eq.s32.totalorder %s19, 1
    %p68 = por %p66, %p67
    %p70 = scmp.ne.s32.totalorder %s53, %s69
    %p71 = scmp.eq.s32.totalorder %s19, 0
    %p72 = por %p70, %p71
    %s74 = sadd.s32 %s73, 1
    %p77 = scmp.eq.s32.totalorder %s13, 1
    %p78 = scmp.ne.s32.totalorder %s73, %s75
    %p79 = scmp.eq.s32.totalorder %s13, 0
    %p80 = por %p78, %p79
    %p81 = scmp.ne.s32.totalorder %s73, %s75
    %p82 = scmp.eq.s32.totalorder %s18, 1
    %p83 = por %p81, %p82
    %p84 = scmp.ne.s32.totalorder %s75, %s76
    %p85 = scmp.eq.s32.totalorder %s18, 0
    %p86 = por %p84, %p85
    %p87 = scmp.ne.s32.totalorder %s75, %s76
    %p88 = scmp.eq.s32.totalorder %s19, 1
    %p89 = por %p87, %p88
    %p91 = scmp.ne.s32.totalorder %s76, %s90
    %p92 = scmp.eq.s32.totalorder %s19, 0
    %p93 = por %p91, %p92
    %s95 = sadd.s32 %s94, 1
    %p98 = scmp.eq.s32.totalorder %s13, 1
    %p99 = scmp.ne.s32.totalorder %s94, %s96
    %p100 = scmp.eq.s32.totalorder %s13, 0
    %p101 = por %p99, %p100
    %p102 = scmp.ne.s32.totalorder %s94, %s96
    %p103 = scmp.eq.s32.totalorder %s18, 1
    %p104 = por %p102, %p103
    %p105 = scmp.ne.s32.totalorder %s96, %s97
    %p106 = scmp.eq.s32.totalorder %s18, 0
    %p107 = por %p105, %p106
    %p108 = scmp.ne.s32.totalorder %s96, %s97
    %p109 = scmp.eq.s32.totalorder %s19, 1
    %p110 = por %p108, %p109
    %p112 = scmp.ne.s32.totalorder %s97, %s111
    %p113 = scmp.eq.s32.totalorder %s19, 0
    %p114 = por %p112, %p113
    %s116 = sadd.s32 %s115, 1
    %p119 = scmp.eq.s32.totalorder %s13, 1
    %p120 = scmp.ne.s32.totalorder %s115, %s117
    %p121 = scmp.eq.s32.totalorder %s13, 0
    %p122 = por %p120, %p121
    %p123 = scmp.ne.s32.totalorder %s115, %s117
    %p124 = scmp.eq.s32.totalorder %s18, 1
    %p125 = por %p123, %p124
    %p126 = scmp.ne.s32.totalorder %s117, %s118
    %p127 = scmp.eq.s32.totalorder %s18, 0
    %p128 = por %p126, %p127
    %p129 = scmp.ne.s32.totalorder %s117, %s118
    %p130 = scmp.eq.s32.totalorder %s19, 1
    %p131 = por %p129, %p130
    %p133 = scmp.ne.s32.totalorder %s118, %s132
    %p134 = scmp.eq.s32.totalorder %s19, 0
    %p135 = por %p133, %p134
    %s137 = sadd.s32 %s136, 1
    %p140 = scmp.eq.s32.totalorder %s13, 1
    %p141 = scmp.ne.s32.totalorder %s136, %s138
    %p142 = scmp.eq.s32.totalorder %s13, 0
    %p143 = por %p141, %p142
    %p144 = scmp.ne.s32.totalorder %s136, %s138
    %p145 = scmp.eq.s32.totalorder %s18, 1
    %p146 = por %p144, %p145
    %p147 = scmp.ne.s32.totalorder %s138, %s139
    %p148 = scmp.eq.s32.totalorder %s18, 0
    %p149 = por %p147, %p148
    %p150 = scmp.ne.s32.totalorder %s138, %s139
    %p151 = scmp.eq.s32.totalorder %s19, 1
    %p152 = por %p150, %p151
    %p154 = scmp.ne.s32.totalorder %s139, %s153
    %p155 = scmp.eq.s32.totalorder %s19, 0
    %p156 = por %p154, %p155
    %s158 = sadd.s32 %s157, 1
    %p161 = scmp.eq.s32.totalorder %s13, 1
    %p162 = scmp.ne.s32.totalorder %s157, %s159
    %p163 = scmp.eq.s32.totalorder %s13, 0
    %p164 = por %p162, %p163
    %p165 = scmp.ne.s32.totalorder %s157, %s159
    %p166 = scmp.eq.s32.totalorder %s18, 1
    %p167 = por %p165, %p166
    %p168 = scmp.ne.s32.totalorder %s159, %s160
    %p169 = scmp.eq.s32.totalorder %s18, 0
    %p170 = por %p168, %p169
    %p171 = scmp.ne.s32.totalorder %s159, %s160
    %p172 = scmp.eq.s32.totalorder %s19, 1
    %p173 = por %p171, %p172
    %p175 = scmp.ne.s32.totalorder %s160, %s174
    %p176 = scmp.eq.s32.totalorder %s19, 0
    %p177 = por %p175, %p176
    %s178 = ssub.s32 %s13, %s20
    %p179 = scmp.eq.s32.totalorder %s178, 0
    %s181 = sadd.s32 %s180, 1
    %s182 = scalar_select %p179, %s180, %s181
    %p185 = pneg %p179
    %p186 = scmp.eq.s32.totalorder %s13, 1
    %p187 = por %p185, %p186
    %p188 = scmp.ne.s32.totalorder %s180, %s183
    %p189 = scmp.eq.s32.totalorder %s13, 0
    %p190 = por %p188, %p189
    %p191 = scmp.ne.s32.totalorder %s180, %s183
    %p192 = scmp.eq.s32.totalorder %s18, 1
    %p193 = por %p191, %p192
    %p194 = scmp.ne.s32.totalorder %s183, %s184
    %p195 = scmp.eq.s32.totalorder %s18, 0
    %p196 = por %p194, %p195
    %p197 = scmp.ne.s32.totalorder %s183, %s184
    %p198 = scmp.eq.s32.totalorder %s19, 1
    %p199 = por %p197, %p198
    %p201 = scmp.ne.s32.totalorder %s184, %s200
    %p202 = scmp.eq.s32.totalorder %s19, 0
    %p203 = por %p201, %p202
    %p204 = scmp.le.s32.totalorder 1, %s13
    %p205 = scmp.lt.s32.totalorder %s13, 3
    %p206 = pnand %p204, %p205
    %p207 = pneg %p206
    // Predicated region
    $region9: #{flux_forward.36} parent=5 // pred_check
      _
    $region10: #{flux_forward.36} parent=5 // pred_check_branch
      %209 = sbr.rel (%p206) target = $region12
    $region11: #{flux_forward.36} parent=5 // pred_region
      %s210 = ssub.s32 %s13, 1
      // Predicated region
      $region13: #{flux_forward.36} parent=11 // pred_check
        %p211 = pneg %p86
      $region14: #{flux_forward.36} parent=11 // pred_check_branch
        %213 = sbr.rel (%p211) target = $region16
      $region15: #{flux_forward.36} parent=11 // pred_region
        _
      $region16: #{flux_forward.36} parent=11 // pred_fallthru
        _
      // Predicated region
      $region17: #{flux_forward.36} parent=11 // pred_check
        %p214 = pneg %p107
      $region18: #{flux_forward.36} parent=11 // pred_check_branch
        %216 = sbr.rel (%p214) target = $region20
      $region19: #{flux_forward.36} parent=11 // pred_region
        _
      $region20: #{flux_forward.36} parent=11 // pred_fallthru
        _
      // Predicated region
      $region21: #{flux_forward.36} parent=11 // pred_check
        %p217 = pneg %p128
      $region22: #{flux_forward.36} parent=11 // pred_check_branch
        %219 = sbr.rel (%p217) target = $region24
      $region23: #{flux_forward.36} parent=11 // pred_region
        _
      $region24: #{flux_forward.36} parent=11 // pred_fallthru
        _
      // Predicated region
      $region25: #{flux_forward.36} parent=11 // pred_check
        %p220 = pneg %p149
      $region26: #{flux_forward.36} parent=11 // pred_check_branch
        %222 = sbr.rel (%p220) target = $region28
      $region27: #{flux_forward.36} parent=11 // pred_region
        _
      $region28: #{flux_forward.36} parent=11 // pred_fallthru
        _
      // Predicated region
      $region29: #{flux_forward.36} parent=11 // pred_check
        %p223 = pneg %p170
      $region30: #{flux_forward.36} parent=11 // pred_check_branch
        %225 = sbr.rel (%p223) target = $region32
      $region31: #{flux_forward.36} parent=11 // pred_region
        _
      $region32: #{flux_forward.36} parent=11 // pred_fallthru
        _
    $region12: #{flux_forward.36} parent=5 // pred_fallthru
      _
    %p226 = scmp.lt.s32.totalorder %s13, 2
    // Predicated region
    $region33: #{flux_forward.36} parent=5 // pred_check
      %p227 = pneg %p226
    $region34: #{flux_forward.36} parent=5 // pred_check_branch
      %229 = sbr.rel (%p227) target = $region36
    $region35: #{flux_forward.36} parent=5 // pred_region
      // Predicated region
      $region37: #{flux_forward.36} parent=35 // pred_check
        %p230 = pneg %p33
      $region38: #{flux_forward.36} parent=35 // pred_check_branch
        %232 = sbr.rel (%p230) target = $region40
      $region39: #{flux_forward.36} parent=35 // pred_region
        %p233 = scmp.lt.s32.totalorder %s13, 1
        %s234 = scalar_select %p233, %s13, 1
        %s235 = smul.addr %s234, 4
        %s236 = scalar_lea.vmem %s0, %s235
      $region40: #{flux_forward.36} parent=35 // pred_fallthru
        _
      // Predicated region
      $region41: #{flux_forward.36} parent=35 // pred_check
        %p237 = pneg %p59
      $region42: #{flux_forward.36} parent=35 // pred_check_branch
        %239 = sbr.rel (%p237) target = $region44
      $region43: #{flux_forward.36} parent=35 // pred_region
        %p240 = scmp.lt.s32.totalorder %s13, 1
        %s241 = scalar_select %p240, %s13, 1
        %s242 = smul.addr %s241, 4
        %s243 = scalar_lea.vmem %s1, %s242
      $region44: #{flux_forward.36} parent=35 // pred_fallthru
        _
    $region36: #{flux_forward.36} parent=5 // pred_fallthru
      _
    %p244 = scmp.le.s32.totalorder 1, %s13
    %p245 = scmp.lt.s32.totalorder %s13, 3
    %p246 = pnand %p244, %p245
    %p247 = pneg %p246
    // Predicated region
    $region45: #{flux_forward.36} parent=5 // pred_check
      _
    $region46: #{flux_forward.36} parent=5 // pred_check_branch
      %249 = sbr.rel (%p246) target = $region48
    $region47: #{flux_forward.36} parent=5 // pred_region
      %s250 = ssub.s32 %s13, 1
      %p251 = scmp.lt.s32.totalorder %s18, 1
      %s252 = scalar_select %p251, %s18, 1
      %s253 = smul.addr %s252, 4
      %s254 = scalar_lea.vmem %s0, %s253
      %p255 = pneg %p39
      %p256 = pneg %p36
      %p257 = scmp.lt.s32.totalorder %s18, 1
      %s258 = scalar_select %p257, %s18, 1
      %s259 = smul.addr %s258, 4
      %s260 = scalar_lea.vmem %s1, %s259
      %p261 = pneg %p65
      %p262 = pneg %p62
      %p263 = pneg %p86
      %p264 = pneg %p83
      %p265 = pneg %p107
      %p266 = pneg %p104
      %p267 = pneg %p128
      %p268 = pneg %p125
      %p269 = pneg %p149
      %p270 = pneg %p146
      %p271 = pneg %p170
      %p272 = pneg %p167
      %p273 = pneg %p196
      %p274 = pneg %p193
      %p275 = scmp.lt.s32.totalorder %s18, 1
      %s276 = scalar_select %p275, %s18, 1
      %s277 = smul.addr %s276, 4
      %s278 = scalar_lea.vmem %s7, %s277
      %p279 = scmp.lt.s32.totalorder %s18, 1
      %s280 = scalar_select %p279, %s18, 1
      %s281 = smul.addr %s280, 4
      %s282 = scalar_lea.vmem %s0, %s281
      %p283 = scmp.lt.s32.totalorder %s18, 1
      %s284 = scalar_select %p283, %s18, 1
      %s285 = smul.addr %s284, 4
      %s286 = scalar_lea.vmem %s1, %s285
      %p287 = scmp.lt.s32.totalorder %s18, 1
      %s288 = scalar_select %p287, %s18, 1
      %s289 = smul.addr %s288, 4
      %s290 = scalar_lea.vmem %s7, %s289
      %v292 = vld [vmem:[%s282] sm:$0xf]
      %v293 = vunpack.c.l.bf16 %v292
      %v294 = vld [vmem:[%s286] sm:$0x1]
      %v295 = vunpack.c.l.bf16 %v294
      %vm296 = vcmask 261120
      %v297 = vsel %vm296, %v293, 0.0
      %298 = vadd.xlane.f32.xlu0 %v297
      %v299 = vpop.xlane.xlu0 %298
      %v300 = vrcp.pop 32.0
      %v301 = vmul.f32 32.0, %v300
      %v302 = vsub.f32 1.0, %v301
      %v303 = vmul.f32 %v300, %v302
      %v304 = vadd.f32 %v300, %v303
      %vm305 = vweird.f32 %v300
      %v306 = vsel %vm305, %v300, %v304
      %v307 = vmul.f32 %v299, %v306
      %v308 = vsub.f32 %v293, %v307
      %v309 = vmul.f32 %v308, %v308
      %v310 = vsel %vm296, %v309, 0.0
      %311 = vadd.xlane.f32.xlu0 %v310
      %v312 = vpop.xlane.xlu0 %311
      %v313 = vmul.f32 %v312, %v306
      %v314 = vadd.f32 %v313, 1e-06
      %v315 = vrsqrt.pop %v314
      %v316 = vmul.f32 %v315, %v314
      %v317 = vmul.f32 %v316, %v315
      %v318 = vmul.f32 0.5, %v317
      %v319 = vsub.f32 1.5, %v318
      %v320 = vmul.f32 %v315, %v319
      %vm321 = vweird.f32 %v314
      %vm322 = vweird.f32 %v315
      %vm323 = vmor %vm321, %vm322
      %v324 = vsel %vm323, %v315, %v320
      %v325 = vmul.f32 %v308, %v324
      %v326 = vadd.f32 %v295, 1.0
      %v327 = vperm.slane %v326, 1
      %v328 = vmul.f32 %v327, %v325
      %v329 = vperm.slane %v295, 0
      %v330 = vadd.f32 %v328, %v329
      %v331 = vpack.c.bf16 %v330, %v330
      %v332 = vld [vmem:[%s2] sm:$0xf]
      %v333 = vld [vmem:[%s2 + $0x4] sm:$0xf]
      %v334 = vld [vmem:[%s2 + $0x8] sm:$0xf]
      %v335 = vld [vmem:[%s2 + $0xc] sm:$0xf]
      %v336 = vld [vmem:[%s3] sm:$0x1]
      %v337 = vunpack.c.l.bf16 %v336
      %v338 = vperm.slane %v337, 0
      %v343 = vunpack.c.l.b16 %v332
      %v344 = vunpack.c.l.b16 %v333
      %v345 = vunpack.c.l.b16 %v334
      %v346 = vunpack.c.l.b16 %v335
      %v347 = vpack.c.b16 %v344, %v343
      %v348 = vpack.c.b16 %v346, %v345
      %v352 = vsel %vm296, %v331, 0
      %354 = vmatpush.bf16.msra.mxu0 0
      %355 = vmatpush.bf16.msra.mxu0 0
      %356 = vmatpush.bf16.msra.mxu0 0
      %357 = vmatpush.bf16.msra.mxu0 0
      %358 = vmatpush.bf16.msra.mxu0 0
      %359 = vmatpush.bf16.msra.mxu0 0
      %360 = vmatpush.bf16.msra.mxu0 %v348
      %361 = vmatpush.bf16.msra.mxu0 %v347
      %362 = vmatmul.bf16.gmra.mxu0 %v352
      %v363 = vpop.f32.mrf.mxu0
      %v364 = vadd.f32 %v338, %v363
      %v365 = vpop.f32.mrf.mxu0
      %366 = vdwg.mxu0
      %v367 = vmul.f32 %v364, %v364
      %v368 = vld [vmem:[%s4] sm:$0xff]
      %v369 = vld [vmem:[%s4 + $0x8] sm:$0xff]
      %v370 = vld [vmem:[%s4 + $0x10] sm:$0xff]
      %v371 = vld [vmem:[%s4 + $0x18] sm:$0xff]
      %v372 = vld [vmem:[%s4 + $0x20] sm:$0xff]
      %v373 = vld [vmem:[%s4 + $0x28] sm:$0xff]
      %v374 = vld [vmem:[%s4 + $0x30] sm:$0xff]
      %v375 = vld [vmem:[%s4 + $0x38] sm:$0xff]
      %vm376 = vcmask 523264
      %v378 = vsel %vm376, %v367, 0
      %380 = vmatpush.msra.mxu0 0.0
      %381 = vmatpush.msra.mxu0 0.0
      %382 = vmatpush.msra.mxu0 0.0
      %383 = vmatpush.msra.mxu0 0.0
      %384 = vmatpush.msra.mxu0 0.0
      %385 = vmatpush.msra.mxu0 0.0
      %386 = vmatpush.msra.mxu0 0.0
      %387 = vmatpush.msra.mxu0 0.0
      %388 = vmatpush.msra.mxu0 %v375
      %389 = vmatpush.msra.mxu0 %v374
      %390 = vmatpush.msra.mxu0 %v373
      %391 = vmatpush.msra.mxu0 %v372
      %392 = vmatpush.msra.mxu0 %v371
      %393 = vmatpush.msra.mxu0 %v370
      %394 = vmatpush.msra.mxu0 %v369
      %395 = vmatpush.msra.mxu0 %v368
      %396 = vmatmul.f32.gmra.mxu0 %v378
      %v397 = vpop.f32.mrf.mxu0
      %v398 = vadd.f32 0.0, %v397
      %399 = vdwg.mxu0
      %v400 = vmul.f32 %v398, 0.0625
      %v401 = vadd.f32 %v400, 1e-06
      %v402 = vrsqrt.pop %v401
      %v403 = vmul.f32 %v402, %v401
      %v404 = vmul.f32 %v403, %v402
      %v405 = vmul.f32 0.5, %v404
      %v406 = vsub.f32 1.5, %v405
      %v407 = vmul.f32 %v402, %v406
      %vm408 = vweird.f32 %v401
      %vm409 = vweird.f32 %v402
      %vm410 = vmor %vm408, %vm409
      %v411 = vsel %vm410, %v402, %v407
      %v412 = vld [vmem:[%s5] sm:$0xf]
      %vm413 = vcmask 31744
      %v415 = vsel %vm413, %v411, 0
      %vm417 = vcmask 1043456
      %v419 = vsel %vm417, %v412, 0
      %421 = vmatpush.msra.mxu0 0.0
      %422 = vmatpush.msra.mxu0 0.0
      %423 = vmatpush.msra.mxu0 0.0
      %424 = vmatpush.msra.mxu0 0.0
      %425 = vmatpush.msra.mxu0 0.0
      %426 = vmatpush.msra.mxu0 0.0
      %427 = vmatpush.msra.mxu0 0.0
      %428 = vmatpush.msra.mxu0 0.0
      %429 = vmatpush.msra.mxu0 0.0
      %430 = vmatpush.msra.mxu0 0.0
      %431 = vmatpush.msra.mxu0 0.0
      %432 = vmatpush.msra.mxu0 0.0
      %433 = vmatpush.msra.mxu0 0.0
      %434 = vmatpush.msra.mxu0 0.0
      %435 = vmatpush.msra.mxu0 0.0
      %436 = vmatpush.msra.mxu0 %v419
      %437 = vmatmul.f32.gmra.mxu0 %v415
      %v438 = vpop.f32.mrf.mxu0
      %v439 = vadd.f32 0.0, %v438
      %440 = vdwg.mxu0
      %v441 = vmul.f32 %v364, %v439
      %v442 = vld [vmem:[%s6] sm:$0x1]
      %v444 = vperm.slane %v442, 0
      %v446 = vmul.f32 %v441, %v444
      %v447 = vpack.c.bf16 %v446, %v446
      %vm448 = vcmask 519168
      %449 = vst.msk [vmem:[%s290] sm:$0xf] %vm448, %v447
      %v450 = vpack.c.bf16 %v364, %v364
      %vm451 = vcmask 781824
      %452 = vst.msk [vmem:[%s290] sm:$0xf] %vm451, %v450
      %p453 = scmp.lt.s32.totalorder %s18, 1
      %s454 = scalar_select %p453, %s18, 1
      %s455 = smul.addr %s454, 4
      %s456 = scalar_lea.vmem %s7, %s455
      // Predicated region
      $region49: #{flux_forward.36} parent=47 // pred_check
        %p457 = pneg %p193
      $region50: #{flux_forward.36} parent=47 // pred_check_branch
        %459 = sbr.rel (%p457) target = $region52
      $region51: #{flux_forward.36} parent=47 // pred_region
        _
      $region52: #{flux_forward.36} parent=47 // pred_fallthru
        _
    $region48: #{flux_forward.36} parent=5 // pred_fallthru
      _
    %p460 = scmp.le.s32.totalorder 2, %s13
    // Predicated region
    $region53: #{flux_forward.36} parent=5 // pred_check
      %p461 = pneg %p460
    $region54: #{flux_forward.36} parent=5 // pred_check_branch
      %463 = sbr.rel (%p461) target = $region56
    $region55: #{flux_forward.36} parent=5 // pred_region
      %s464 = ssub.s32 %s13, 2
      // Predicated region
      $region57: #{flux_forward.36} parent=55 // pred_check
        %p465 = pneg %p199
      $region58: #{flux_forward.36} parent=55 // pred_check_branch
        %467 = sbr.rel (%p465) target = $region60
      $region59: #{flux_forward.36} parent=55 // pred_region
        %p468 = scmp.lt.s32.totalorder %s19, 1
        %s469 = scalar_select %p468, %s19, 1
        %s470 = smul.addr %s469, 4
        %s471 = scalar_lea.vmem %s7, %s470
      $region60: #{flux_forward.36} parent=55 // pred_fallthru
        _
    $region56: #{flux_forward.36} parent=5 // pred_fallthru
      _
  $region6: #{flux_forward.36} parent=0 // loop_footer
    %s17 = sadd.s32 1, %s13
  $region7: #{flux_forward.36} parent=0 // loop_footer_branch
    %12 = sbr.rel target = $region3
  $region8: #{flux_forward.36} parent=0 // loop_exit
    _

// kernel: flux_forward.37
$region0: #{flux_forward.37}
  #allocation0 [shape = 'u32[]', space=smem, size = 0x4, offset = 0x4, fixed_abs, tag = 'smem constant byte address 0x4 - core index']
  #allocation1 [shape = 'u32[72,128]{1,0:T(1,128)}', space=vmem, size = 0x9000, scoped, tag = 'internal scratch']
  %s0 = inlined_call_operand.vmem [shape: bf16[2,24,96], index: 0, kind: input, shape index: {}]
  %s1 = inlined_call_operand.vmem [shape: f32[2,24,8], index: 1, kind: input, shape index: {}]
  %s2 = inlined_call_operand.vmem [shape: f32[2,24,8], index: 2, kind: input, shape index: {}]
  %s3 = inlined_call_operand.vmem [shape: bf16[2,24,32], index: 3, kind: output, shape index: {}]
  %s4 = sld [smem:[#allocation0]]
  $region45: #{flux_forward.37} parent=0
    _
  %s6 = ssub.s32 1, %s4
  %s7 = scalar_select 0, %s6, %s4
  loop: start=0, step=1, limit=4
  $region2: #{flux_forward.37} parent=0 // loop_pre_header
    _
  $region3: #{flux_forward.37} parent=0 // loop_header
    %s9 = sphi 0, %s13
    %p10 = scmp.ge.s32.totalorder %s9, 4
    %s19 = sphi 0, %s21
    %s22 = sphi 0, %s19
    %s23 = sphi 0, %s22
    %s39 = sphi 0, %s23
    %s45 = sphi 0, %s47
    %s48 = sphi 0, %s45
    %s49 = sphi 0, %s48
    %s65 = sphi 0, %s49
    %s71 = sphi 0, %s73
    %s74 = sphi 0, %s71
    %s75 = sphi 0, %s74
    %s91 = sphi 0, %s75
    %s97 = sphi 0, %s99
    %s100 = sphi 0, %s97
    %s101 = sphi 0, %s100
    %s117 = sphi 0, %s101
  $region4: #{flux_forward.37} parent=0 // loop_header_branch
    %12 = sbr.rel (%p10) target = $region8
  $region5: #{flux_forward.37} parent=0 // loop_body
    %s14 = ssub.s32 %s9, 1
    %s15 = ssub.s32 %s9, 2
    %s16 = sadd.s32 %s9, 1
    %s17 = ssub.s32 %s9, %s16
    %p18 = scmp.eq.s32.totalorder %s17, 0
    %s20 = sadd.s32 %s19, 1
    %s21 = scalar_select %p18, %s19, %s20
    %p24 = pneg %p18
    %p25 = scmp.eq.s32.totalorder %s9, 1
    %p26 = por %p24, %p25
    %p27 = scmp.ne.s32.totalorder %s19, %s22
    %p28 = scmp.eq.s32.totalorder %s9, 0
    %p29 = por %p27, %p28
    %p30 = scmp.ne.s32.totalorder %s19, %s22
    %p31 = scmp.eq.s32.totalorder %s14, 1
    %p32 = por %p30, %p31
    %p33 = scmp.ne.s32.totalorder %s22, %s23
    %p34 = scmp.eq.s32.totalorder %s14, 0
    %p35 = por %p33, %p34
    %p36 = scmp.ne.s32.totalorder %s22, %s23
    %p37 = scmp.eq.s32.totalorder %s15, 1
    %p38 = por %p36, %p37
    %p40 = scmp.ne.s32.totalorder %s23, %s39
    %p41 = scmp.eq.s32.totalorder %s15, 0
    %p42 = por %p40, %p41
    %s43 = ssub.s32 %s9, %s16
    %p44 = scmp.eq.s32.totalorder %s43, 0
    %s46 = sadd.s32 %s45, 1
    %s47 = scalar_select %p44, %s45, %s46
    %p50 = pneg %p44
    %p51 = scmp.eq.s32.totalorder %s9, 1
    %p52 = por %p50, %p51
    %p53 = scmp.ne.s32.totalorder %s45, %s48
    %p54 = scmp.eq.s32.totalorder %s9, 0
    %p55 = por %p53, %p54
    %p56 = scmp.ne.s32.totalorder %s45, %s48
    %p57 = scmp.eq.s32.totalorder %s14, 1
    %p58 = por %p56, %p57
    %p59 = scmp.ne.s32.totalorder %s48, %s49
    %p60 = scmp.eq.s32.totalorder %s14, 0
    %p61 = por %p59, %p60
    %p62 = scmp.ne.s32.totalorder %s48, %s49
    %p63 = scmp.eq.s32.totalorder %s15, 1
    %p64 = por %p62, %p63
    %p66 = scmp.ne.s32.totalorder %s49, %s65
    %p67 = scmp.eq.s32.totalorder %s15, 0
    %p68 = por %p66, %p67
    %s69 = ssub.s32 %s9, %s16
    %p70 = scmp.eq.s32.totalorder %s69, 0
    %s72 = sadd.s32 %s71, 1
    %s73 = scalar_select %p70, %s71, %s72
    %p76 = pneg %p70
    %p77 = scmp.eq.s32.totalorder %s9, 1
    %p78 = por %p76, %p77
    %p79 = scmp.ne.s32.totalorder %s71, %s74
    %p80 = scmp.eq.s32.totalorder %s9, 0
    %p81 = por %p79, %p80
    %p82 = scmp.ne.s32.totalorder %s71, %s74
    %p83 = scmp.eq.s32.totalorder %s14, 1
    %p84 = por %p82, %p83
    %p85 = scmp.ne.s32.totalorder %s74, %s75
    %p86 = scmp.eq.s32.totalorder %s14, 0
    %p87 = por %p85, %p86
    %p88 = scmp.ne.s32.totalorder %s74, %s75
    %p89 = scmp.eq.s32.totalorder %s15, 1
    %p90 = por %p88, %p89
    %p92 = scmp.ne.s32.totalorder %s75, %s91
    %p93 = scmp.eq.s32.totalorder %s15, 0
    %p94 = por %p92, %p93
    %s95 = ssub.s32 %s9, %s16
    %p96 = scmp.eq.s32.totalorder %s95, 0
    %s98 = sadd.s32 %s97, 1
    %s99 = scalar_select %p96, %s97, %s98
    %p102 = pneg %p96
    %p103 = scmp.eq.s32.totalorder %s9, 1
    %p104 = por %p102, %p103
    %p105 = scmp.ne.s32.totalorder %s97, %s100
    %p106 = scmp.eq.s32.totalorder %s9, 0
    %p107 = por %p105, %p106
    %p108 = scmp.ne.s32.totalorder %s97, %s100
    %p109 = scmp.eq.s32.totalorder %s14, 1
    %p110 = por %p108, %p109
    %p111 = scmp.ne.s32.totalorder %s100, %s101
    %p112 = scmp.eq.s32.totalorder %s14, 0
    %p113 = por %p111, %p112
    %p114 = scmp.ne.s32.totalorder %s100, %s101
    %p115 = scmp.eq.s32.totalorder %s15, 1
    %p116 = por %p114, %p115
    %p118 = scmp.ne.s32.totalorder %s101, %s117
    %p119 = scmp.eq.s32.totalorder %s15, 0
    %p120 = por %p118, %p119
    %p121 = scmp.le.s32.totalorder 1, %s9
    %p122 = scmp.lt.s32.totalorder %s9, 3
    %p123 = pnand %p121, %p122
    %p124 = pneg %p123
    // Predicated region
    $region9: #{flux_forward.37} parent=5 // pred_check
      _
    $region10: #{flux_forward.37} parent=5 // pred_check_branch
      %126 = sbr.rel (%p123) target = $region12
    $region11: #{flux_forward.37} parent=5 // pred_region
      %s127 = ssub.s32 %s9, 1
    $region12: #{flux_forward.37} parent=5 // pred_fallthru
      _
    %p128 = scmp.lt.s32.totalorder %s9, 2
    // Predicated region
    $region13: #{flux_forward.37} parent=5 // pred_check
      %p129 = pneg %p128
    $region14: #{flux_forward.37} parent=5 // pred_check_branch
      %131 = sbr.rel (%p129) target = $region16
    $region15: #{flux_forward.37} parent=5 // pred_region
      // Predicated region
      $region17: #{flux_forward.37} parent=15 // pred_check
        %p132 = pneg %p29
      $region18: #{flux_forward.37} parent=15 // pred_check_branch
        %134 = sbr.rel (%p132) target = $region20
      $region19: #{flux_forward.37} parent=15 // pred_region
        %p135 = scmp.lt.s32.totalorder %s9, 1
        %s136 = scalar_select %p135, %s9, 1
        %s137 = smul.addr %s136, 3
        %s138 = smul.addr %s137, 4
        %s139 = scalar_lea.vmem %s0, %s138
      $region20: #{flux_forward.37} parent=15 // pred_fallthru
        _
      // Predicated region
      $region21: #{flux_forward.37} parent=15 // pred_check
        %p140 = pneg %p55
      $region22: #{flux_forward.37} parent=15 // pred_check_branch
        %142 = sbr.rel (%p140) target = $region24
      $region23: #{flux_forward.37} parent=15 // pred_region
        %p143 = scmp.lt.s32.totalorder %s9, 1
        %s144 = scalar_select %p143, %s9, 1
        %s145 = smul.addr %s144, 3
        %s146 = smul.addr %s145, 8
        %s147 = scalar_lea.vmem %s1, %s146
      $region24: #{flux_forward.37} parent=15 // pred_fallthru
        _
      // Predicated region
      $region25: #{flux_forward.37} parent=15 // pred_check
        %p148 = pneg %p81
      $region26: #{flux_forward.37} parent=15 // pred_check_branch
        %150 = sbr.rel (%p148) target = $region28
      $region27: #{flux_forward.37} parent=15 // pred_region
        %p151 = scmp.lt.s32.totalorder %s9, 1
        %s152 = scalar_select %p151, %s9, 1
        %s153 = smul.addr %s152, 3
        %s154 = smul.addr %s153, 8
        %s155 = scalar_lea.vmem %s2, %s154
      $region28: #{flux_forward.37} parent=15 // pred_fallthru
        _
    $region16: #{flux_forward.37} parent=5 // pred_fallthru
      _
    %p156 = scmp.le.s32.totalorder 1, %s9
    %p157 = scmp.lt.s32.totalorder %s9, 3
    %p158 = pnand %p156, %p157
    %p159 = pneg %p158
    // Predicated region
    $region29: #{flux_forward.37} parent=5 // pred_check
      _
    $region30: #{flux_forward.37} parent=5 // pred_check_branch
      %161 = sbr.rel (%p158) target = $region32
    $region31: #{flux_forward.37} parent=5 // pred_region
      %s162 = ssub.s32 %s9, 1
      %p163 = scmp.lt.s32.totalorder %s14, 1
      %s164 = scalar_select %p163, %s14, 1
      %s165 = smul.addr %s164, 3
      %s166 = smul.addr %s165, 4
      %s167 = scalar_lea.vmem %s0, %s166
      %p168 = pneg %p35
      %p169 = pneg %p32
      %p170 = scmp.lt.s32.totalorder %s14, 1
      %s171 = scalar_select %p170, %s14, 1
      %s172 = smul.addr %s171, 3
      %s173 = smul.addr %s172, 8
      %s174 = scalar_lea.vmem %s1, %s173
      %p175 = pneg %p61
      %p176 = pneg %p58
      %p177 = scmp.lt.s32.totalorder %s14, 1
      %s178 = scalar_select %p177, %s14, 1
      %s179 = smul.addr %s178, 3
      %s180 = smul.addr %s179, 8
      %s181 = scalar_lea.vmem %s2, %s180
      %p182 = pneg %p87
      %p183 = pneg %p84
      %p184 = pneg %p113
      %p185 = pneg %p110
      %p186 = scmp.lt.s32.totalorder %s14, 1
      %s187 = scalar_select %p186, %s14, 1
      %s188 = smul.addr %s187, 3
      %s189 = smul.addr %s188, 4
      %s190 = scalar_lea.vmem %s3, %s189
      %p191 = scmp.lt.s32.totalorder %s14, 1
      %s192 = scalar_select %p191, %s14, 1
      %s193 = smul.addr %s192, 3
      %s194 = smul.addr %s193, 4
      %s195 = scalar_lea.vmem %s0, %s194
      %p196 = scmp.lt.s32.totalorder %s14, 1
      %s197 = scalar_select %p196, %s14, 1
      %s198 = smul.addr %s197, 3
      %s199 = smul.addr %s198, 8
      %s200 = scalar_lea.vmem %s1, %s199
      %p201 = scmp.lt.s32.totalorder %s14, 1
      %s202 = scalar_select %p201, %s14, 1
      %s203 = smul.addr %s202, 3
      %s204 = smul.addr %s203, 8
      %s205 = scalar_lea.vmem %s2, %s204
      %p206 = scmp.lt.s32.totalorder %s14, 1
      %s207 = scalar_select %p206, %s14, 1
      %s208 = smul.addr %s207, 3
      %s209 = smul.addr %s208, 4
      %s210 = scalar_lea.vmem %s3, %s209
      %v212 = vld [vmem:[%s200] sm:$0xff]
      %v213 = vld [vmem:[%s200 + $0x8] sm:$0xff]
      %v214 = vld [vmem:[%s200 + $0x10] sm:$0xff]
      %v215 = vld [vmem:[%s205] sm:$0xff]
      %v216 = vld [vmem:[%s205 + $0x8] sm:$0xff]
      %v217 = vld [vmem:[%s205 + $0x10] sm:$0xff]
      %v218 = vld [vmem:[%s195] sm:$0xf]
      %v219 = vld [vmem:[%s195 + $0x4] sm:$0xf]
      %v220 = vld [vmem:[%s195 + $0x8] sm:$0xf]
      %v221 = vunpack.c.l.bf16 %v218
      %v222 = vunpack.c.l.bf16 %v219
      %v223 = vunpack.c.l.bf16 %v220
      %v224 = vmul.f32 %v212, %v221
      %v225 = vmul.f32 %v213, %v222
      %v226 = vmul.f32 %v214, %v223
      %230 = vrot.lane.b32.xlu0 %v221, 120
      %v231 = vpop.permute.xlu0 %230
      %232 = vrot.lane.b32.xlu0 %v222, 120
      %v233 = vpop.permute.xlu0 %232
      %234 = vrot.lane.b32.xlu0 %v223, 120
      %v235 = vpop.permute.xlu0 %234
      %v239 = vmul.f32 %v215, %v231
      %v240 = vmul.f32 %v216, %v233
      %v241 = vmul.f32 %v217, %v235
      %v242 = vsub.f32 %v224, %v239
      %v243 = vsub.f32 %v225, %v240
      %v244 = vsub.f32 %v226, %v241
      %v245 = vpack.c.bf16 %v243, %v242
      %v246 = vpack.c.bf16 %v244, %v244
      %v247 = vmul.f32 %v215, %v221
      %v248 = vmul.f32 %v216, %v222
      %v249 = vmul.f32 %v217, %v223
      %v250 = vmul.f32 %v212, %v231
      %v251 = vmul.f32 %v213, %v233
      %v252 = vmul.f32 %v214, %v235
      %v253 = vadd.f32 %v247, %v250
      %v254 = vadd.f32 %v248, %v251
      %v255 = vadd.f32 %v249, %v252
      %v256 = vpack.c.bf16 %v254, %v253
      %v257 = vpack.c.bf16 %v255, %v255
      %258 = vrot.lane.b32.xlu0 %v221, 96
      %v259 = vpop.permute.xlu0 %258
      %260 = vrot.lane.b32.xlu0 %v222, 96
      %v261 = vpop.permute.xlu0 %260
      %262 = vrot.lane.b32.xlu0 %v223, 96
      %v263 = vpop.permute.xlu0 %262
      %v267 = vmul.f32 %v212, %v259
      %v268 = vmul.f32 %v213, %v261
      %v269 = vmul.f32 %v214, %v263
      %270 = vrot.lane.b32.xlu0 %v221, 88
      %v271 = vpop.permute.xlu0 %270
      %272 = vrot.lane.b32.xlu0 %v222, 88
      %v273 = vpop.permute.xlu0 %272
      %274 = vrot.lane.b32.xlu0 %v223, 88
      %v275 = vpop.permute.xlu0 %274
      %v279 = vmul.f32 %v215, %v271
      %v280 = vmul.f32 %v216, %v273
      %v281 = vmul.f32 %v217, %v275
      %v282 = vsub.f32 %v267, %v279
      %v283 = vsub.f32 %v268, %v280
      %v284 = vsub.f32 %v269, %v281
      %v285 = vpack.c.bf16 %v283, %v282
      %v286 = vpack.c.bf16 %v284, %v284
      %v287 = vmul.f32 %v215, %v259
      %v288 = vmul.f32 %v216, %v261
      %v289 = vmul.f32 %v217, %v263
      %v290 = vmul.f32 %v212, %v271
      %v291 = vmul.f32 %v213, %v273
      %v292 = vmul.f32 %v214, %v275
      %v293 = vadd.f32 %v287, %v290
      %v294 = vadd.f32 %v288, %v291
      %v295 = vadd.f32 %v289, %v292
      %v296 = vpack.c.bf16 %v294, %v293
      %v297 = vpack.c.bf16 %v295, %v295
      %vm298 = vcmask 64512
      %v300 = vsel %vm298, %v256, 0
      %v303 = vsel %vm298, %v257, 0
      %v306 = vsel %vm298, %v296, 0
      %v309 = vsel %vm298, %v297, 0
      %311 = vmatpush.bf16.xpose.msra.mxu0 0
      %312 = vmatpush.bf16.xpose.msra.mxu0 0
      %313 = vmatpush.bf16.xpose.msra.mxu0 0
      %314 = vmatpush.bf16.xpose.msra.mxu0 0
      %315 = vmatpush.bf16.xpose.msra.mxu0 0
      %316 = vmatpush.bf16.xpose.msra.mxu0 0
      %317 = vmatpush.bf16.xpose.msra.mxu0 %v309
      %318 = vmatpush.bf16.xpose.msra.mxu0 %v306
      %319 = vmatmul.bf16.gmra.mxu0 %v300
      %v320 = vpop.f32.mrf.mxu0
      %v321 = vadd.f32 0.0, %v320
      %v322 = vpop.f32.mrf.mxu0
      %v323 = vadd.f32 0.0, %v322
      %324 = vmatmul.bf16.gmra.mxu0 %v303
      %v325 = vpop.f32.mrf.mxu0
      %v326 = vadd.f32 0.0, %v325
      %v327 = vpop.f32.mrf.mxu0
      %328 = vdwg.mxu0
      %v330 = vsel %vm298, %v245, 0
      %v333 = vsel %vm298, %v246, 0
      %v336 = vsel %vm298, %v285, 0
      %v339 = vsel %vm298, %v286, 0
      %341 = vmatpush.bf16.xpose.msra.mxu0 0
      %342 = vmatpush.bf16.xpose.msra.mxu0 0
      %343 = vmatpush.bf16.xpose.msra.mxu0 0
      %344 = vmatpush.bf16.xpose.msra.mxu0 0
      %345 = vmatpush.bf16.xpose.msra.mxu0 0
      %346 = vmatpush.bf16.xpose.msra.mxu0 0
      %347 = vmatpush.bf16.xpose.msra.mxu0 %v339
      %348 = vmatpush.bf16.xpose.msra.mxu0 %v336
      %349 = vmatmul.bf16.gmra.mxu0 %v330
      %v350 = vpop.f32.mrf.mxu0
      %v351 = vadd.f32 %v321, %v350
      %v352 = vpop.f32.mrf.mxu0
      %v353 = vadd.f32 %v323, %v352
      %354 = vmatmul.bf16.gmra.mxu0 %v333
      %v355 = vpop.f32.mrf.mxu0
      %v356 = vadd.f32 %v326, %v355
      %v357 = vpop.f32.mrf.mxu0
      %358 = vdwg.mxu0
      %v359 = vmul.f32 %v351, 0.25
      %v360 = vmul.f32 %v353, 0.25
      %v361 = vmul.f32 %v356, 0.25
      %vm362 = vcmask 195584
      %v363 = vsel %vm362, %v359, -inf
      %364 = vmax.xlane.f32.xlu0 %v363
      %v365 = vpop.xlane.xlu0 %364
      %v366 = vsel %vm362, %v360, -inf
      %367 = vmax.xlane.f32.xlu0 %v366
      %v368 = vpop.xlane.xlu0 %367
      %v369 = vsel %vm362, %v361, -inf
      %370 = vmax.xlane.f32.xlu0 %v369
      %v371 = vpop.xlane.xlu0 %370
      %v372 = vsub.f32 %v359, %v365
      %v373 = vsub.f32 %v360, %v368
      %v374 = vsub.f32 %v361, %v371
      %v375 = vmul.f32 %v372, 1.442695
      %v376 = vpow.pop %v375
      %v377 = vmul.f32 %v373, 1.442695
      %v378 = vpow.pop %v377
      %v379 = vmul.f32 %v374, 1.442695
      %v380 = vpow.pop %v379
      %v381 = vsel %vm362, %v376, 0.0
      %382 = vadd.xlane.f32.xlu0 %v381
      %v383 = vpop.xlane.xlu0 %382
      %v384 = vsel %vm362, %v378, 0.0
      %385 = vadd.xlane.f32.xlu0 %v384
      %v386 = vpop.xlane.xlu0 %385
      %v387 = vsel %vm362, %v380, 0.0
      %388 = vadd.xlane.f32.xlu0 %v387
      %v389 = vpop.xlane.xlu0 %388
      %v390 = vrcp.pop %v383
      %v391 = vrcp.pop %v386
      %v392 = vrcp.pop %v389
      %v393 = vmul.f32 %v376, %v390
      %v394 = vmul.f32 %v378, %v391
      %v395 = vmul.f32 %v380, %v392
      %v396 = vpack.c.bf16 %v394, %v393
      %v397 = vpack.c.bf16 %v395, %v395
      %v401 = vunpack.c.l.b16 %v218
      %v402 = vunpack.c.l.b16 %v219
      %v403 = vunpack.c.l.b16 %v220
      %v404 = vpack.c.b16 %v402, %v401
      %v405 = vpack.c.b16 %v403, %v403
      %406 = vrot.lane.b32.xlu0 %v404, 64
      %v407 = vpop.permute.xlu0 %406
      %408 = vrot.lane.b32.xlu0 %v405, 64
      %v409 = vpop.permute.xlu0 %408
      %v412 = vsel %vm362, %v396, 0
      %v415 = vsel %vm362, %v397, 0
      %vm417 = vcmask 1043456
      %v419 = vsel %vm417, %v409, 0
      %421 = vmatpush.bf16.msra.mxu0 0
      %422 = vmatpush.bf16.msra.mxu0 0
      %423 = vmatpush.bf16.msra.mxu0 0
      %424 = vmatpush.bf16.msra.mxu0 0
      %425 = vmatpush.bf16.msra.mxu0 0
      %426 = vmatpush.bf16.msra.mxu0 0
      %427 = vmatpush.bf16.msra.mxu0 %v419
      %428 = vmatpush.bf16.msra.mxu0 %v407
      %429 = vmatmul.bf16.gmra.mxu0 %v412
      %v430 = vpop.f32.mrf.mxu0
      %v431 = vadd.f32 0.0, %v430
      %v432 = vpop.f32.mrf.mxu0
      %v433 = vadd.f32 0.0, %v432
      %434 = vmatmul.bf16.gmra.mxu0 %v415
      %v435 = vpop.f32.mrf.mxu0
      %v436 = vadd.f32 0.0, %v435
      %v437 = vpop.f32.mrf.mxu0
      %438 = vdwg.mxu0
      %v439 = vpack.c.bf16 %v431, %v431
      %v440 = vpack.c.bf16 %v433, %v433
      %v441 = vpack.c.bf16 %v436, %v436
      %vm442 = vcmask 125952
      %443 = vst.msk [vmem:[%s210] sm:$0xf] %vm442, %v439
      %444 = vst.msk [vmem:[%s210 + $0x4] sm:$0xf] %vm442, %v440
      %445 = vst.msk [vmem:[%s210 + $0x8] sm:$0xf] %vm442, %v441
      %v446 = vld [vmem:[%s195] sm:$0xf]
      %v447 = vld [vmem:[%s195 + $0x4] sm:$0xf]
      %v448 = vld [vmem:[%s195 + $0x8] sm:$0xf]
      %v449 = vunpack.c.l.bf16 %v446
      %v450 = vunpack.c.l.bf16 %v447
      %v451 = vunpack.c.l.bf16 %v448
      %455 = vrot.lane.b32.xlu0 %v449, 112
      %v456 = vpop.permute.xlu0 %455
      %457 = vrot.lane.b32.xlu0 %v450, 112
      %v458 = vpop.permute.xlu0 %457
      %459 = vrot.lane.b32.xlu0 %v451, 112
      %v460 = vpop.permute.xlu0 %459
      %v464 = vmul.f32 %v212, %v456
      %v465 = vmul.f32 %v213, %v458
      %v466 = vmul.f32 %v214, %v460
      %467 = vrot.lane.b32.xlu0 %v449, 104
      %v468 = vpop.permute.xlu0 %467
      %469 = vrot.lane.b32.xlu0 %v450, 104
      %v470 = vpop.permute.xlu0 %469
      %471 = vrot.lane.b32.xlu0 %v451, 104
      %v472 = vpop.permute.xlu0 %471
      %v476 = vmul.f32 %v215, %v468
      %v477 = vmul.f32 %v216, %v470
      %v478 = vmul.f32 %v217, %v472
      %v479 = vsub.f32 %v464, %v476
      %v480 = vsub.f32 %v465, %v477
      %v481 = vsub.f32 %v466, %v478
      %v482 = vpack.c.bf16 %v480, %v479
      %v483 = vpack.c.bf16 %v481, %v481
      %v484 = vmul.f32 %v215, %v456
      %v485 = vmul.f32 %v216, %v458
      %v486 = vmul.f32 %v217, %v460
      %v487 = vmul.f32 %v212, %v468
      %v488 = vmul.f32 %v213, %v470
      %v489 = vmul.f32 %v214, %v472
      %v490 = vadd.f32 %v484, %v487
      %v491 = vadd.f32 %v485, %v488
      %v492 = vadd.f32 %v486, %v489
      %v493 = vpack.c.bf16 %v491, %v490
      %v494 = vpack.c.bf16 %v492, %v492
      %495 = vrot.lane.b32.xlu0 %v449, 80
      %v496 = vpop.permute.xlu0 %495
      %497 = vrot.lane.b32.xlu0 %v450, 80
      %v498 = vpop.permute.xlu0 %497
      %499 = vrot.lane.b32.xlu0 %v451, 80
      %v500 = vpop.permute.xlu0 %499
      %v504 = vmul.f32 %v212, %v496
      %v505 = vmul.f32 %v213, %v498
      %v506 = vmul.f32 %v214, %v500
      %507 = vrot.lane.b32.xlu0 %v449, 72
      %v508 = vpop.permute.xlu0 %507
      %509 = vrot.lane.b32.xlu0 %v450, 72
      %v510 = vpop.permute.xlu0 %509
      %511 = vrot.lane.b32.xlu0 %v451, 72
      %v512 = vpop.permute.xlu0 %511
      %v516 = vmul.f32 %v215, %v508
      %v517 = vmul.f32 %v216, %v510
      %v518 = vmul.f32 %v217, %v512
      %v519 = vsub.f32 %v504, %v516
      %v520 = vsub.f32 %v505, %v517
      %v521 = vsub.f32 %v506, %v518
      %v522 = vpack.c.bf16 %v520, %v519
      %v523 = vpack.c.bf16 %v521, %v521
      %v524 = vmul.f32 %v215, %v496
      %v525 = vmul.f32 %v216, %v498
      %v526 = vmul.f32 %v217, %v500
      %v527 = vmul.f32 %v212, %v508
      %v528 = vmul.f32 %v213, %v510
      %v529 = vmul.f32 %v214, %v512
      %v530 = vadd.f32 %v524, %v527
      %v531 = vadd.f32 %v525, %v528
      %v532 = vadd.f32 %v526, %v529
      %v533 = vpack.c.bf16 %v531, %v530
      %v534 = vpack.c.bf16 %v532, %v532
      %v536 = vsel %vm298, %v493, 0
      %v539 = vsel %vm298, %v494, 0
      %v542 = vsel %vm298, %v533, 0
      %v545 = vsel %vm298, %v534, 0
      %547 = vmatpush.bf16.xpose.msra.mxu0 0
      %548 = vmatpush.bf16.xpose.msra.mxu0 0
      %549 = vmatpush.bf16.xpose.msra.mxu0 0
      %550 = vmatpush.bf16.xpose.msra.mxu0 0
      %551 = vmatpush.bf16.xpose.msra.mxu0 0
      %552 = vmatpush.bf16.xpose.msra.mxu0 0
      %553 = vmatpush.bf16.xpose.msra.mxu0 %v545
      %554 = vmatpush.bf16.xpose.msra.mxu0 %v542
      %555 = vmatmul.bf16.gmra.mxu0 %v536
      %v556 = vpop.f32.mrf.mxu0
      %v557 = vadd.f32 0.0, %v556
      %v558 = vpop.f32.mrf.mxu0
      %v559 = vadd.f32 0.0, %v558
      %560 = vmatmul.bf16.gmra.mxu0 %v539
      %v561 = vpop.f32.mrf.mxu0
      %v562 = vadd.f32 0.0, %v561
      %v563 = vpop.f32.mrf.mxu0
      %564 = vdwg.mxu0
      %v566 = vsel %vm298, %v482, 0
      %v569 = vsel %vm298, %v483, 0
      %v572 = vsel %vm298, %v522, 0
      %v575 = vsel %vm298, %v523, 0
      %577 = vmatpush.bf16.xpose.msra.mxu0 0
      %578 = vmatpush.bf16.xpose.msra.mxu0 0
      %579 = vmatpush.bf16.xpose.msra.mxu0 0
      %580 = vmatpush.bf16.xpose.msra.mxu0 0
      %581 = vmatpush.bf16.xpose.msra.mxu0 0
      %582 = vmatpush.bf16.xpose.msra.mxu0 0
      %583 = vmatpush.bf16.xpose.msra.mxu0 %v575
      %584 = vmatpush.bf16.xpose.msra.mxu0 %v572
      %585 = vmatmul.bf16.gmra.mxu0 %v566
      %v586 = vpop.f32.mrf.mxu0
      %v587 = vadd.f32 %v557, %v586
      %v588 = vpop.f32.mrf.mxu0
      %v589 = vadd.f32 %v559, %v588
      %590 = vmatmul.bf16.gmra.mxu0 %v569
      %v591 = vpop.f32.mrf.mxu0
      %v592 = vadd.f32 %v562, %v591
      %v593 = vpop.f32.mrf.mxu0
      %594 = vdwg.mxu0
      %v595 = vmul.f32 %v587, 0.25
      %v596 = vmul.f32 %v589, 0.25
      %v597 = vmul.f32 %v592, 0.25
      %v598 = vsel %vm362, %v595, -inf
      %599 = vmax.xlane.f32.xlu0 %v598
      %v600 = vpop.xlane.xlu0 %599
      %v601 = vsel %vm362, %v596, -inf
      %602 = vmax.xlane.f32.xlu0 %v601
      %v603 = vpop.xlane.xlu0 %602
      %v604 = vsel %vm362, %v597, -inf
      %605 = vmax.xlane.f32.xlu0 %v604
      %v606 = vpop.xlane.xlu0 %605
      %v607 = vsub.f32 %v595, %v600
      %v608 = vsub.f32 %v596, %v603
      %v609 = vsub.f32 %v597, %v606
      %v610 = vmul.f32 %v607, 1.442695
      %v611 = vpow.pop %v610
      %v612 = vmul.f32 %v608, 1.442695
      %v613 = vpow.pop %v612
      %v614 = vmul.f32 %v609, 1.442695
      %v615 = vpow.pop %v614
      %v616 = vsel %vm362, %v611, 0.0
      %617 = vadd.xlane.f32.xlu0 %v616
      %v618 = vpop.xlane.xlu0 %617
      %v619 = vsel %vm362, %v613, 0.0
      %620 = vadd.xlane.f32.xlu0 %v619
      %v621 = vpop.xlane.xlu0 %620
      %v622 = vsel %vm362, %v615, 0.0
      %623 = vadd.xlane.f32.xlu0 %v622
      %v624 = vpop.xlane.xlu0 %623
      %v625 = vrcp.pop %v618
      %v626 = vrcp.pop %v621
      %v627 = vrcp.pop %v624
      %v628 = vmul.f32 %v611, %v625
      %v629 = vmul.f32 %v613, %v626
      %v630 = vmul.f32 %v615, %v627
      %v631 = vpack.c.bf16 %v629, %v628
      %v632 = vpack.c.bf16 %v630, %v630
      %v636 = vunpack.c.l.b16 %v446
      %v637 = vunpack.c.l.b16 %v447
      %v638 = vunpack.c.l.b16 %v448
      %v639 = vpack.c.b16 %v637, %v636
      %v640 = vpack.c.b16 %v638, %v638
      %641 = vrot.lane.b32.xlu0 %v639, 48
      %v642 = vpop.permute.xlu0 %641
      %643 = vrot.lane.b32.xlu0 %v640, 48
      %v644 = vpop.permute.xlu0 %643
      %v647 = vsel %vm362, %v631, 0
      %v650 = vsel %vm362, %v632, 0
      %v653 = vsel %vm417, %v644, 0
      %655 = vmatpush.bf16.msra.mxu0 0
      %656 = vmatpush.bf16.msra.mxu0 0
      %657 = vmatpush.bf16.msra.mxu0 0
      %658 = vmatpush.bf16.msra.mxu0 0
      %659 = vmatpush.bf16.msra.mxu0 0
      %660 = vmatpush.bf16.msra.mxu0 0
      %661 = vmatpush.bf16.msra.mxu0 %v653
      %662 = vmatpush.bf16.msra.mxu0 %v642
      %663 = vmatmul.bf16.gmra.mxu0 %v647
      %v664 = vpop.f32.mrf.mxu0
      %v665 = vadd.f32 0.0, %v664
      %v666 = vpop.f32.mrf.mxu0
      %v667 = vadd.f32 0.0, %v666
      %668 = vmatmul.bf16.gmra.mxu0 %v650
      %v669 = vpop.f32.mrf.mxu0
      %v670 = vadd.f32 0.0, %v669
      %v671 = vpop.f32.mrf.mxu0
      %672 = vdwg.mxu0
      %v673 = vpack.c.bf16 %v665, %v665
      %v674 = vpack.c.bf16 %v667, %v667
      %v675 = vpack.c.bf16 %v670, %v670
      %679 = vrot.lane.b32.xlu0 %v673, 16
      %v680 = vpop.permute.xlu0 %679
      %681 = vrot.lane.b32.xlu0 %v674, 16
      %v682 = vpop.permute.xlu0 %681
      %683 = vrot.lane.b32.xlu0 %v675, 16
      %v684 = vpop.permute.xlu0 %683
      %vm688 = vcmask 257152
      %689 = vst.msk [vmem:[%s210] sm:$0xf] %vm688, %v680
      %690 = vst.msk [vmem:[%s210 + $0x4] sm:$0xf] %vm688, %v682
      %691 = vst.msk [vmem:[%s210 + $0x8] sm:$0xf] %vm688, %v684
      %p692 = scmp.lt.s32.totalorder %s14, 1
      %s693 = scalar_select %p692, %s14, 1
      %s694 = smul.addr %s693, 3
      %s695 = smul.addr %s694, 4
      %s696 = scalar_lea.vmem %s3, %s695
      // Predicated region
      $region33: #{flux_forward.37} parent=31 // pred_check
        %p697 = pneg %p110
      $region34: #{flux_forward.37} parent=31 // pred_check_branch
        %699 = sbr.rel (%p697) target = $region36
      $region35: #{flux_forward.37} parent=31 // pred_region
        _
      $region36: #{flux_forward.37} parent=31 // pred_fallthru
        _
    $region32: #{flux_forward.37} parent=5 // pred_fallthru
      _
    %p700 = scmp.le.s32.totalorder 2, %s9
    // Predicated region
    $region37: #{flux_forward.37} parent=5 // pred_check
      %p701 = pneg %p700
    $region38: #{flux_forward.37} parent=5 // pred_check_branch
      %703 = sbr.rel (%p701) target = $region40
    $region39: #{flux_forward.37} parent=5 // pred_region
      %s704 = ssub.s32 %s9, 2
      // Predicated region
      $region41: #{flux_forward.37} parent=39 // pred_check
        %p705 = pneg %p116
      $region42: #{flux_forward.37} parent=39 // pred_check_branch
        %707 = sbr.rel (%p705) target = $region44
      $region43: #{flux_forward.37} parent=39 // pred_region
        %p708 = scmp.lt.s32.totalorder %s15, 1
        %s709 = scalar_select %p708, %s15, 1
        %s710 = smul.addr %s709, 3
        %s711 = smul.addr %s710, 4
        %s712 = scalar_lea.vmem %s3, %s711
      $region44: #{flux_forward.37} parent=39 // pred_fallthru
        _
    $region40: #{flux_forward.37} parent=5 // pred_fallthru
      _
  $region6: #{flux_forward.37} parent=0 // loop_footer
    %s13 = sadd.s32 1, %s9
  $region7: #{flux_forward.37} parent=0 // loop_footer_branch
    %8 = sbr.rel target = $region3
  $region8: #{flux_forward.37} parent=0 // loop_exit
    _

// kernel: flux_forward.39
$region0: #{flux_forward.39}
  #allocation0 [shape = 'u32[]', space=smem, size = 0x4, offset = 0x4, fixed_abs, tag = 'smem constant byte address 0x4 - core index']
  #allocation1 [shape = 'u32[72,128]{1,0:T(1,128)}', space=vmem, size = 0x9000, scoped, tag = 'internal scratch']
  %s0 = inlined_call_operand.vmem [shape: bf16[2,8,32], index: 0, kind: input, shape index: {}]
  %s1 = inlined_call_operand.vmem [shape: bf16[2,8,32], index: 1, kind: input, shape index: {}]
  %s2 = inlined_call_operand.vmem [shape: bf16[2,6,32], index: 2, kind: input, shape index: {}]
  %s3 = inlined_call_operand.vmem [shape: bf16[32,32], index: 3, kind: input, shape index: {}]
  %s4 = inlined_call_operand.vmem [shape: bf16[1,32], index: 4, kind: input, shape index: {}]
  %s5 = inlined_call_operand.vmem [shape: bf16[32,64], index: 5, kind: input, shape index: {}]
  %s6 = inlined_call_operand.vmem [shape: bf16[1,64], index: 6, kind: input, shape index: {}]
  %s7 = inlined_call_operand.vmem [shape: bf16[64,32], index: 7, kind: input, shape index: {}]
  %s8 = inlined_call_operand.vmem [shape: bf16[1,32], index: 8, kind: input, shape index: {}]
  %s9 = inlined_call_operand.vmem [shape: bf16[2,8,32], index: 9, kind: output, shape index: {}]
  %s10 = sld [smem:[#allocation0]]
  $region69: #{flux_forward.39} parent=0
    _
  %s12 = ssub.s32 1, %s10
  %s13 = scalar_select 0, %s12, %s10
  loop: start=0, step=1, limit=4
  $region2: #{flux_forward.39} parent=0 // loop_pre_header
    _
  $region3: #{flux_forward.39} parent=0 // loop_header
    %s15 = sphi 0, %s19
    %p16 = scmp.ge.s32.totalorder %s15, 4
    %s25 = sphi 0, %s27
    %s28 = sphi 0, %s25
    %s29 = sphi 0, %s28
    %s45 = sphi 0, %s29
    %s51 = sphi 0, %s53
    %s54 = sphi 0, %s51
    %s55 = sphi 0, %s54
    %s71 = sphi 0, %s55
    %s77 = sphi 0, %s79
    %s80 = sphi 0, %s77
    %s81 = sphi 0, %s80
    %s97 = sphi 0, %s81
    %s101 = sphi 0, %s101
    %s103 = sphi 0, %s101
    %s104 = sphi 0, %s103
    %s118 = sphi 0, %s104
    %s122 = sphi 0, %s122
    %s124 = sphi 0, %s122
    %s125 = sphi 0, %s124
    %s139 = sphi 0, %s125
    %s143 = sphi 0, %s143
    %s145 = sphi 0, %s143
    %s146 = sphi 0, %s145
    %s160 = sphi 0, %s146
    %s164 = sphi 0, %s164
    %s166 = sphi 0, %s164
    %s167 = sphi 0, %s166
    %s181 = sphi 0, %s167
    %s185 = sphi 0, %s185
    %s187 = sphi 0, %s185
    %s188 = sphi 0, %s187
    %s202 = sphi 0, %s188
    %s206 = sphi 0, %s206
    %s208 = sphi 0, %s206
    %s209 = sphi 0, %s208
    %s223 = sphi 0, %s209
    %s229 = sphi 0, %s231
    %s232 = sphi 0, %s229
    %s233 = sphi 0, %s232
    %s249 = sphi 0, %s233
  $region4: #{flux_forward.39} parent=0 // loop_header_branch
    %18 = sbr.rel (%p16) target = $region8
  $region5: #{flux_forward.39} parent=0 // loop_body
    %s20 = ssub.s32 %s15, 1
    %s21 = ssub.s32 %s15, 2
    %s22 = sadd.s32 %s15, 1
    %s23 = ssub.s32 %s15, %s22
    %p24 = scmp.eq.s32.totalorder %s23, 0
    %s26 = sadd.s32 %s25, 1
    %s27 = scalar_select %p24, %s25, %s26
    %p30 = pneg %p24
    %p31 = scmp.eq.s32.totalorder %s15, 1
    %p32 = por %p30, %p31
    %p33 = scmp.ne.s32.totalorder %s25, %s28
    %p34 = scmp.eq.s32.totalorder %s15, 0
    %p35 = por %p33, %p34
    %p36 = scmp.ne.s32.totalorder %s25, %s28
    %p37 = scmp.eq.s32.totalorder %s20, 1
    %p38 = por %p36, %p37
    %p39 = scmp.ne.s32.totalorder %s28, %s29
    %p40 = scmp.eq.s32.totalorder %s20, 0
    %p41 = por %p39, %p40
    %p42 = scmp.ne.s32.totalorder %s28, %s29
    %p43 = scmp.eq.s32.totalorder %s21, 1
    %p44 = por %p42, %p43
    %p46 = scmp.ne.s32.totalorder %s29, %s45
    %p47 = scmp.eq.s32.totalorder %s21, 0
    %p48 = por %p46, %p47
    %s49 = ssub.s32 %s15, %s22
    %p50 = scmp.eq.s32.totalorder %s49, 0
    %s52 = sadd.s32 %s51, 1
    %s53 = scalar_select %p50, %s51, %s52
    %p56 = pneg %p50
    %p57 = scmp.eq.s32.totalorder %s15, 1
    %p58 = por %p56, %p57
    %p59 = scmp.ne.s32.totalorder %s51, %s54
    %p60 = scmp.eq.s32.totalorder %s15, 0
    %p61 = por %p59, %p60
    %p62 = scmp.ne.s32.totalorder %s51, %s54
    %p63 = scmp.eq.s32.totalorder %s20, 1
    %p64 = por %p62, %p63
    %p65 = scmp.ne.s32.totalorder %s54, %s55
    %p66 = scmp.eq.s32.totalorder %s20, 0
    %p67 = por %p65, %p66
    %p68 = scmp.ne.s32.totalorder %s54, %s55
    %p69 = scmp.eq.s32.totalorder %s21, 1
    %p70 = por %p68, %p69
    %p72 = scmp.ne.s32.totalorder %s55, %s71
    %p73 = scmp.eq.s32.totalorder %s21, 0
    %p74 = por %p72, %p73
    %s75 = ssub.s32 %s15, %s22
    %p76 = scmp.eq.s32.totalorder %s75, 0
    %s78 = sadd.s32 %s77, 1
    %s79 = scalar_select %p76, %s77, %s78
    %p82 = pneg %p76
    %p83 = scmp.eq.s32.totalorder %s15, 1
    %p84 = por %p82, %p83
    %p85 = scmp.ne.s32.totalorder %s77, %s80
    %p86 = scmp.eq.s32.totalorder %s15, 0
    %p87 = por %p85, %p86
    %p88 = scmp.ne.s32.totalorder %s77, %s80
    %p89 = scmp.eq.s32.totalorder %s20, 1
    %p90 = por %p88, %p89
    %p91 = scmp.ne.s32.totalorder %s80, %s81
    %p92 = scmp.eq.s32.totalorder %s20, 0
    %p93 = por %p91, %p92
    %p94 = scmp.ne.s32.totalorder %s80, %s81
    %p95 = scmp.eq.s32.totalorder %s21, 1
    %p96 = por %p94, %p95
    %p98 = scmp.ne.s32.totalorder %s81, %s97
    %p99 = scmp.eq.s32.totalorder %s21, 0
    %p100 = por %p98, %p99
    %s102 = sadd.s32 %s101, 1
    %p105 = scmp.eq.s32.totalorder %s15, 1
    %p106 = scmp.ne.s32.totalorder %s101, %s103
    %p107 = scmp.eq.s32.totalorder %s15, 0
    %p108 = por %p106, %p107
    %p109 = scmp.ne.s32.totalorder %s101, %s103
    %p110 = scmp.eq.s32.totalorder %s20, 1
    %p111 = por %p109, %p110
    %p112 = scmp.ne.s32.totalorder %s103, %s104
    %p113 = scmp.eq.s32.totalorder %s20, 0
    %p114 = por %p112, %p113
    %p115 = scmp.ne.s32.totalorder %s103, %s104
    %p116 = scmp.eq.s32.totalorder %s21, 1
    %p117 = por %p115, %p116
    %p119 = scmp.ne.s32.totalorder %s104, %s118
    %p120 = scmp.eq.s32.totalorder %s21, 0
    %p121 = por %p119, %p120
    %s123 = sadd.s32 %s122, 1
    %p126 = scmp.eq.s32.totalorder %s15, 1
    %p127 = scmp.ne.s32.totalorder %s122, %s124
    %p128 = scmp.eq.s32.totalorder %s15, 0
    %p129 = por %p127, %p128
    %p130 = scmp.ne.s32.totalorder %s122, %s124
    %p131 = scmp.eq.s32.totalorder %s20, 1
    %p132 = por %p130, %p131
    %p133 = scmp.ne.s32.totalorder %s124, %s125
    %p134 = scmp.eq.s32.totalorder %s20, 0
    %p135 = por %p133, %p134
    %p136 = scmp.ne.s32.totalorder %s124, %s125
    %p137 = scmp.eq.s32.totalorder %s21, 1
    %p138 = por %p136, %p137
    %p140 = scmp.ne.s32.totalorder %s125, %s139
    %p141 = scmp.eq.s32.totalorder %s21, 0
    %p142 = por %p140, %p141
    %s144 = sadd.s32 %s143, 1
    %p147 = scmp.eq.s32.totalorder %s15, 1
    %p148 = scmp.ne.s32.totalorder %s143, %s145
    %p149 = scmp.eq.s32.totalorder %s15, 0
    %p150 = por %p148, %p149
    %p151 = scmp.ne.s32.totalorder %s143, %s145
    %p152 = scmp.eq.s32.totalorder %s20, 1
    %p153 = por %p151, %p152
    %p154 = scmp.ne.s32.totalorder %s145, %s146
    %p155 = scmp.eq.s32.totalorder %s20, 0
    %p156 = por %p154, %p155
    %p157 = scmp.ne.s32.totalorder %s145, %s146
    %p158 = scmp.eq.s32.totalorder %s21, 1
    %p159 = por %p157, %p158
    %p161 = scmp.ne.s32.totalorder %s146, %s160
    %p162 = scmp.eq.s32.totalorder %s21, 0
    %p163 = por %p161, %p162
    %s165 = sadd.s32 %s164, 1
    %p168 = scmp.eq.s32.totalorder %s15, 1
    %p169 = scmp.ne.s32.totalorder %s164, %s166
    %p170 = scmp.eq.s32.totalorder %s15, 0
    %p171 = por %p169, %p170
    %p172 = scmp.ne.s32.totalorder %s164, %s166
    %p173 = scmp.eq.s32.totalorder %s20, 1
    %p174 = por %p172, %p173
    %p175 = scmp.ne.s32.totalorder %s166, %s167
    %p176 = scmp.eq.s32.totalorder %s20, 0
    %p177 = por %p175, %p176
    %p178 = scmp.ne.s32.totalorder %s166, %s167
    %p179 = scmp.eq.s32.totalorder %s21, 1
    %p180 = por %p178, %p179
    %p182 = scmp.ne.s32.totalorder %s167, %s181
    %p183 = scmp.eq.s32.totalorder %s21, 0
    %p184 = por %p182, %p183
    %s186 = sadd.s32 %s185, 1
    %p189 = scmp.eq.s32.totalorder %s15, 1
    %p190 = scmp.ne.s32.totalorder %s185, %s187
    %p191 = scmp.eq.s32.totalorder %s15, 0
    %p192 = por %p190, %p191
    %p193 = scmp.ne.s32.totalorder %s185, %s187
    %p194 = scmp.eq.s32.totalorder %s20, 1
    %p195 = por %p193, %p194
    %p196 = scmp.ne.s32.totalorder %s187, %s188
    %p197 = scmp.eq.s32.totalorder %s20, 0
    %p198 = por %p196, %p197
    %p199 = scmp.ne.s32.totalorder %s187, %s188
    %p200 = scmp.eq.s32.totalorder %s21, 1
    %p201 = por %p199, %p200
    %p203 = scmp.ne.s32.totalorder %s188, %s202
    %p204 = scmp.eq.s32.totalorder %s21, 0
    %p205 = por %p203, %p204
    %s207 = sadd.s32 %s206, 1
    %p210 = scmp.eq.s32.totalorder %s15, 1
    %p211 = scmp.ne.s32.totalorder %s206, %s208
    %p212 = scmp.eq.s32.totalorder %s15, 0
    %p213 = por %p211, %p212
    %p214 = scmp.ne.s32.totalorder %s206, %s208
    %p215 = scmp.eq.s32.totalorder %s20, 1
    %p216 = por %p214, %p215
    %p217 = scmp.ne.s32.totalorder %s208, %s209
    %p218 = scmp.eq.s32.totalorder %s20, 0
    %p219 = por %p217, %p218
    %p220 = scmp.ne.s32.totalorder %s208, %s209
    %p221 = scmp.eq.s32.totalorder %s21, 1
    %p222 = por %p220, %p221
    %p224 = scmp.ne.s32.totalorder %s209, %s223
    %p225 = scmp.eq.s32.totalorder %s21, 0
    %p226 = por %p224, %p225
    %s227 = ssub.s32 %s15, %s22
    %p228 = scmp.eq.s32.totalorder %s227, 0
    %s230 = sadd.s32 %s229, 1
    %s231 = scalar_select %p228, %s229, %s230
    %p234 = pneg %p228
    %p235 = scmp.eq.s32.totalorder %s15, 1
    %p236 = por %p234, %p235
    %p237 = scmp.ne.s32.totalorder %s229, %s232
    %p238 = scmp.eq.s32.totalorder %s15, 0
    %p239 = por %p237, %p238
    %p240 = scmp.ne.s32.totalorder %s229, %s232
    %p241 = scmp.eq.s32.totalorder %s20, 1
    %p242 = por %p240, %p241
    %p243 = scmp.ne.s32.totalorder %s232, %s233
    %p244 = scmp.eq.s32.totalorder %s20, 0
    %p245 = por %p243, %p244
    %p246 = scmp.ne.s32.totalorder %s232, %s233
    %p247 = scmp.eq.s32.totalorder %s21, 1
    %p248 = por %p246, %p247
    %p250 = scmp.ne.s32.totalorder %s233, %s249
    %p251 = scmp.eq.s32.totalorder %s21, 0
    %p252 = por %p250, %p251
    %p253 = scmp.le.s32.totalorder 1, %s15
    %p254 = scmp.lt.s32.totalorder %s15, 3
    %p255 = pnand %p253, %p254
    %p256 = pneg %p255
    // Predicated region
    $region9: #{flux_forward.39} parent=5 // pred_check
      _
    $region10: #{flux_forward.39} parent=5 // pred_check_branch
      %258 = sbr.rel (%p255) target = $region12
    $region11: #{flux_forward.39} parent=5 // pred_region
      %s259 = ssub.s32 %s15, 1
      // Predicated region
      $region13: #{flux_forward.39} parent=11 // pred_check
        %p260 = pneg %p114
      $region14: #{flux_forward.39} parent=11 // pred_check_branch
        %262 = sbr.rel (%p260) target = $region16
      $region15: #{flux_forward.39} parent=11 // pred_region
        _
      $region16: #{flux_forward.39} parent=11 // pred_fallthru
        _
      // Predicated region
      $region17: #{flux_forward.39} parent=11 // pred_check
        %p263 = pneg %p135
      $region18: #{flux_forward.39} parent=11 // pred_check_branch
        %265 = sbr.rel (%p263) target = $region20
      $region19: #{flux_forward.39} parent=11 // pred_region
        _
      $region20: #{flux_forward.39} parent=11 // pred_fallthru
        _
      // Predicated region
      $region21: #{flux_forward.39} parent=11 // pred_check
        %p266 = pneg %p156
      $region22: #{flux_forward.39} parent=11 // pred_check_branch
        %268 = sbr.rel (%p266) target = $region24
      $region23: #{flux_forward.39} parent=11 // pred_region
        _
      $region24: #{flux_forward.39} parent=11 // pred_fallthru
        _
      // Predicated region
      $region25: #{flux_forward.39} parent=11 // pred_check
        %p269 = pneg %p177
      $region26: #{flux_forward.39} parent=11 // pred_check_branch
        %271 = sbr.rel (%p269) target = $region28
      $region27: #{flux_forward.39} parent=11 // pred_region
        _
      $region28: #{flux_forward.39} parent=11 // pred_fallthru
        _
      // Predicated region
      $region29: #{flux_forward.39} parent=11 // pred_check
        %p272 = pneg %p198
      $region30: #{flux_forward.39} parent=11 // pred_check_branch
        %274 = sbr.rel (%p272) target = $region32
      $region31: #{flux_forward.39} parent=11 // pred_region
        _
      $region32: #{flux_forward.39} parent=11 // pred_fallthru
        _
      // Predicated region
      $region33: #{flux_forward.39} parent=11 // pred_check
        %p275 = pneg %p219
      $region34: #{flux_forward.39} parent=11 // pred_check_branch
        %277 = sbr.rel (%p275) target = $region36
      $region35: #{flux_forward.39} parent=11 // pred_region
        _
      $region36: #{flux_forward.39} parent=11 // pred_fallthru
        _
    $region12: #{flux_forward.39} parent=5 // pred_fallthru
      _
    %p278 = scmp.lt.s32.totalorder %s15, 2
    // Predicated region
    $region37: #{flux_forward.39} parent=5 // pred_check
      %p279 = pneg %p278
    $region38: #{flux_forward.39} parent=5 // pred_check_branch
      %281 = sbr.rel (%p279) target = $region40
    $region39: #{flux_forward.39} parent=5 // pred_region
      // Predicated region
      $region41: #{flux_forward.39} parent=39 // pred_check
        %p282 = pneg %p35
      $region42: #{flux_forward.39} parent=39 // pred_check_branch
        %284 = sbr.rel (%p282) target = $region44
      $region43: #{flux_forward.39} parent=39 // pred_region
        %p285 = scmp.lt.s32.totalorder %s15, 1
        %s286 = scalar_select %p285, %s15, 1
        %s287 = smul.addr %s286, 4
        %s288 = scalar_lea.vmem %s0, %s287
      $region44: #{flux_forward.39} parent=39 // pred_fallthru
        _
      // Predicated region
      $region45: #{flux_forward.39} parent=39 // pred_check
        %p289 = pneg %p61
      $region46: #{flux_forward.39} parent=39 // pred_check_branch
        %291 = sbr.rel (%p289) target = $region48
      $region47: #{flux_forward.39} parent=39 // pred_region
        %p292 = scmp.lt.s32.totalorder %s15, 1
        %s293 = scalar_select %p292, %s15, 1
        %s294 = smul.addr %s293, 4
        %s295 = scalar_lea.vmem %s1, %s294
      $region48: #{flux_forward.39} parent=39 // pred_fallthru
        _
      // Predicated region
      $region49: #{flux_forward.39} parent=39 // pred_check
        %p296 = pneg %p87
      $region50: #{flux_forward.39} parent=39 // pred_check_branch
        %298 = sbr.rel (%p296) target = $region52
      $region51: #{flux_forward.39} parent=39 // pred_region
        %p299 = scmp.lt.s32.totalorder %s15, 1
        %s300 = scalar_select %p299, %s15, 1
        %s301 = smul.addr %s300, 4
        %s302 = scalar_lea.vmem %s2, %s301
      $region52: #{flux_forward.39} parent=39 // pred_fallthru
        _
    $region40: #{flux_forward.39} parent=5 // pred_fallthru
      _
    %p303 = scmp.le.s32.totalorder 1, %s15
    %p304 = scmp.lt.s32.totalorder %s15, 3
    %p305 = pnand %p303, %p304
    %p306 = pneg %p305
    // Predicated region
    $region53: #{flux_forward.39} parent=5 // pred_check
      _
    $region54: #{flux_forward.39} parent=5 // pred_check_branch
      %308 = sbr.rel (%p305) target = $region56
    $region55: #{flux_forward.39} parent=5 // pred_region
      %s309 = ssub.s32 %s15, 1
      %p310 = scmp.lt.s32.totalorder %s20, 1
      %s311 = scalar_select %p310, %s20, 1
      %s312 = smul.addr %s311, 4
      %s313 = scalar_lea.vmem %s0, %s312
      %p314 = pneg %p41
      %p315 = pneg %p38
      %p316 = scmp.lt.s32.totalorder %s20, 1
      %s317 = scalar_select %p316, %s20, 1
      %s318 = smul.addr %s317, 4
      %s319 = scalar_lea.vmem %s1, %s318
      %p320 = pneg %p67
      %p321 = pneg %p64
      %p322 = scmp.lt.s32.totalorder %s20, 1
      %s323 = scalar_select %p322, %s20, 1
      %s324 = smul.addr %s323, 4
      %s325 = scalar_lea.vmem %s2, %s324
      %p326 = pneg %p93
      %p327 = pneg %p90
      %p328 = pneg %p114
      %p329 = pneg %p111
      %p330 = pneg %p135
      %p331 = pneg %p132
      %p332 = pneg %p156
      %p333 = pneg %p153
      %p334 = pneg %p177
      %p335 = pneg %p174
      %p336 = pneg %p198
      %p337 = pneg %p195
      %p338 = pneg %p219
      %p339 = pneg %p216
      %p340 = pneg %p245
      %p341 = pneg %p242
      %p342 = scmp.lt.s32.totalorder %s20, 1
      %s343 = scalar_select %p342, %s20, 1
      %s344 = smul.addr %s343, 4
      %s345 = scalar_lea.vmem %s9, %s344
      %p346 = scmp.lt.s32.totalorder %s20, 1
      %s347 = scalar_select %p346, %s20, 1
      %s348 = smul.addr %s347, 4
      %s349 = scalar_lea.vmem %s0, %s348
      %p350 = scmp.lt.s32.totalorder %s20, 1
      %s351 = scalar_select %p350, %s20, 1
      %s352 = smul.addr %s351, 4
      %s353 = scalar_lea.vmem %s1, %s352
      %p354 = scmp.lt.s32.totalorder %s20, 1
      %s355 = scalar_select %p354, %s20, 1
      %s356 = smul.addr %s355, 4
      %s357 = scalar_lea.vmem %s2, %s356
      %p358 = scmp.lt.s32.totalorder %s20, 1
      %s359 = scalar_select %p358, %s20, 1
      %s360 = smul.addr %s359, 4
      %s361 = scalar_lea.vmem %s9, %s360
      %v363 = vld [vmem:[%s357] sm:$0x2]
      %v364 = vunpack.c.l.bf16 %v363
      %v365 = vld [vmem:[%s357] sm:$0x4]
      %v366 = vunpack.c.l.bf16 %v365
      %v367 = vld [vmem:[%s349] sm:$0xf]
      %v368 = vunpack.c.l.bf16 %v367
      %v369 = vld [vmem:[%s353] sm:$0xf]
      %v370 = vld [vmem:[%s3] sm:$0xf]
      %v371 = vld [vmem:[%s3 + $0x4] sm:$0xf]
      %v372 = vld [vmem:[%s3 + $0x8] sm:$0xf]
      %v373 = vld [vmem:[%s3 + $0xc] sm:$0xf]
      %v374 = vld [vmem:[%s4] sm:$0x1]
      %v375 = vunpack.c.l.bf16 %v374
      %v376 = vperm.slane %v375, 0
      %v381 = vunpack.c.l.b16 %v370
      %v382 = vunpack.c.l.b16 %v371
      %v383 = vunpack.c.l.b16 %v372
      %v384 = vunpack.c.l.b16 %v373
      %v385 = vpack.c.b16 %v382, %v381
      %v386 = vpack.c.b16 %v384, %v383
      %vm389 = vcmask 261120
      %v391 = vsel %vm389, %v369, 0
      %393 = vmatpush.bf16.msra.mxu0 0
      %394 = vmatpush.bf16.msra.mxu0 0
      %395 = vmatpush.bf16.msra.mxu0 0
      %396 = vmatpush.bf16.msra.mxu0 0
      %397 = vmatpush.bf16.msra.mxu0 0
      %398 = vmatpush.bf16.msra.mxu0 0
      %399 = vmatpush.bf16.msra.mxu0 %v386
      %400 = vmatpush.bf16.msra.mxu0 %v385
      %401 = vmatmul.bf16.gmra.mxu0 %v391
      %v402 = vpop.f32.mrf.mxu0
      %v403 = vadd.f32 %v376, %v402
      %v404 = vpop.f32.mrf.mxu0
      %405 = vdwg.mxu0
      %v406 = vperm.slane %v364, 2
      %v407 = vmul.f32 %v406, %v403
      %v408 = vadd.f32 %v368, %v407
      %v409 = vsel %vm389, %v408, 0.0
      %410 = vadd.xlane.f32.xlu0 %v409
      %v411 = vpop.xlane.xlu0 %410
      %v412 = vrcp.pop 32.0
      %v413 = vmul.f32 32.0, %v412
      %v414 = vsub.f32 1.0, %v413
      %v415 = vmul.f32 %v412, %v414
      %v416 = vadd.f32 %v412, %v415
      %vm417 = vweird.f32 %v412
      %v418 = vsel %vm417, %v412, %v416
      %v419 = vmul.f32 %v411, %v418
      %v420 = vsub.f32 %v408, %v419
      %v421 = vmul.f32 %v420, %v420
      %v422 = vsel %vm389, %v421, 0.0
      %423 = vadd.xlane.f32.xlu0 %v422
      %v424 = vpop.xlane.xlu0 %423
      %v425 = vmul.f32 %v424, %v418
      %v426 = vadd.f32 %v425, 1e-06
      %v427 = vrsqrt.pop %v426
      %v428 = vmul.f32 %v427, %v426
      %v429 = vmul.f32 %v428, %v427
      %v430 = vmul.f32 0.5, %v429
      %v431 = vsub.f32 1.5, %v430
      %v432 = vmul.f32 %v427, %v431
      %vm433 = vweird.f32 %v426
      %vm434 = vweird.f32 %v427
      %vm435 = vmor %vm433, %vm434
      %v436 = vsel %vm435, %v427, %v432
      %v437 = vmul.f32 %v420, %v436
      %v438 = vadd.f32 %v366, 1.0
      %v439 = vperm.slane %v438, 4
      %v440 = vmul.f32 %v439, %v437
      %v441 = vperm.slane %v364, 3
      %v442 = vadd.f32 %v440, %v441
      %v443 = vpack.c.bf16 %v442, %v442
      %v444 = vld [vmem:[%s5] sm:$0xf]
      %v445 = vld [vmem:[%s5 + $0x4] sm:$0xf]
      %v446 = vld [vmem:[%s5 + $0x8] sm:$0xf]
      %v447 = vld [vmem:[%s5 + $0xc] sm:$0xf]
      %v448 = vld [vmem:[%s6] sm:$0x1]
      %v449 = vunpack.c.l.bf16 %v448
      %v450 = vperm.slane %v449, 0
      %v455 = vunpack.c.l.b16 %v444
      %v456 = vunpack.c.l.b16 %v445
      %v457 = vunpack.c.l.b16 %v446
      %v458 = vunpack.c.l.b16 %v447
      %v459 = vpack.c.b16 %v456, %v455
      %v460 = vpack.c.b16 %v458, %v457
      %v464 = vsel %vm389, %v443, 0
      %466 = vmatpush.bf16.msra.mxu0 0
      %467 = vmatpush.bf16.msra.mxu0 0
      %468 = vmatpush.bf16.msra.mxu0 0
      %469 = vmatpush.bf16.msra.mxu0 0
      %470 = vmatpush.bf16.msra.mxu0 0
      %471 = vmatpush.bf16.msra.mxu0 0
      %472 = vmatpush.bf16.msra.mxu0 %v460
      %473 = vmatpush.bf16.msra.mxu0 %v459
      %474 = vmatmul.bf16.gmra.mxu0 %v464
      %v475 = vpop.f32.mrf.mxu0
      %v476 = vadd.f32 %v450, %v475
      %v477 = vpop.f32.mrf.mxu0
      %478 = vdwg.mxu0
      %v479 = vmul.f32 %v476, 0.5
      %v480 = vmul.f32 %v476, 0.044715
      %v481 = vmul.f32 %v480, %v476
      %v482 = vmul.f32 %v481, %v476
      %v483 = vadd.f32 %v476, %v482
      %v484 = vmul.f32 %v483, 0.7978846
      %v485 = vtanh.pop %v484
      %v486 = vadd.f32 %v485, 1.0
      %v487 = vmul.f32 %v479, %v486
      %v488 = vpack.c.bf16 %v487, %v487
      %v489 = vld [vmem:[%s7] sm:$0xf]
      %v490 = vld [vmem:[%s7 + $0x4] sm:$0xf]
      %v491 = vld [vmem:[%s7 + $0x8] sm:$0xf]
      %v492 = vld [vmem:[%s7 + $0xc] sm:$0xf]
      %v493 = vld [vmem:[%s7 + $0x10] sm:$0xf]
      %v494 = vld [vmem:[%s7 + $0x14] sm:$0xf]
      %v495 = vld [vmem:[%s7 + $0x18] sm:$0xf]
      %v496 = vld [vmem:[%s7 + $0x1c] sm:$0xf]
      %v497 = vld [vmem:[%s8] sm:$0x1]
      %v498 = vunpack.c.l.bf16 %v497
      %v499 = vperm.slane %v498, 0
      %v508 = vunpack.c.l.b16 %v489
      %v509 = vunpack.c.l.b16 %v490
      %v510 = vunpack.c.l.b16 %v491
      %v511 = vunpack.c.l.b16 %v492
      %v512 = vunpack.c.l.b16 %v493
      %v513 = vunpack.c.l.b16 %v494
      %v514 = vunpack.c.l.b16 %v495
      %v515 = vunpack.c.l.b16 %v496
      %v516 = vpack.c.b16 %v509, %v508
      %v517 = vpack.c.b16 %v511, %v510
      %v518 = vpack.c.b16 %v513, %v512
      %v519 = vpack.c.b16 %v515, %v514
      %vm524 = vcmask 523264
      %v526 = vsel %vm524, %v488, 0
      %528 = vmatpush.bf16.msra.mxu0 0
      %529 = vmatpush.bf16.msra.mxu0 0
      %530 = vmatpush.bf16.msra.mxu0 0
      %531 = vmatpush.bf16.msra.mxu0 0
      %532 = vmatpush.bf16.msra.mxu0 %v519
      %533 = vmatpush.bf16.msra.mxu0 %v518
      %534 = vmatpush.bf16.msra.mxu0 %v517
      %535 = vmatpush.bf16.msra.mxu0 %v516
      %536 = vmatmul.bf16.gmra.mxu0 %v526
      %v537 = vpop.f32.mrf.mxu0
      %v538 = vadd.f32 %v499, %v537
      %v539 = vpop.f32.mrf.mxu0
      %540 = vdwg.mxu0
      %v541 = vperm.slane %v366, 5
      %v542 = vmul.f32 %v541, %v538
      %v543 = vadd.f32 %v408, %v542
      %v544 = vpack.c.bf16 %v543, %v543
      %vm545 = vcmask 257024
      %546 = vst.msk [vmem:[%s361] sm:$0xf] %vm545, %v544
      %p547 = scmp.lt.s32.totalorder %s20, 1
      %s548 = scalar_select %p547, %s20, 1
      %s549 = smul.addr %s548, 4
      %s550 = scalar_lea.vmem %s9, %s549
      // Predicated region
      $region57: #{flux_forward.39} parent=55 // pred_check
        %p551 = pneg %p242
      $region58: #{flux_forward.39} parent=55 // pred_check_branch
        %553 = sbr.rel (%p551) target = $region60
      $region59: #{flux_forward.39} parent=55 // pred_region
        _
      $region60: #{flux_forward.39} parent=55 // pred_fallthru
        _
    $region56: #{flux_forward.39} parent=5 // pred_fallthru
      _
    %p554 = scmp.le.s32.totalorder 2, %s15
    // Predicated region
    $region61: #{flux_forward.39} parent=5 // pred_check
      %p555 = pneg %p554
    $region62: #{flux_forward.39} parent=5 // pred_check_branch
      %557 = sbr.rel (%p555) target = $region64
    $region63: #{flux_forward.39} parent=5 // pred_region
      %s558 = ssub.s32 %s15, 2
      // Predicated region
      $region65: #{flux_forward.39} parent=63 // pred_check
        %p559 = pneg %p248
      $region66: #{flux_forward.39} parent=63 // pred_check_branch
        %561 = sbr.rel (%p559) target = $region68
      $region67: #{flux_forward.39} parent=63 // pred_region
        %p562 = scmp.lt.s32.totalorder %s21, 1
        %s563 = scalar_select %p562, %s21, 1
        %s564 = smul.addr %s563, 4
        %s565 = scalar_lea.vmem %s9, %s564
      $region68: #{flux_forward.39} parent=63 // pred_fallthru
        _
    $region64: #{flux_forward.39} parent=5 // pred_fallthru
      _
  $region6: #{flux_forward.39} parent=0 // loop_footer
    %s19 = sadd.s32 1, %s15
  $region7: #{flux_forward.39} parent=0 // loop_footer_branch
    %14 = sbr.rel target = $region3
  $region8: #{flux_forward.39} parent=0 // loop_exit
    _

// kernel: flux_forward.38
$region0: #{flux_forward.38}
  #allocation0 [shape = 'u32[]', space=smem, size = 0x4, offset = 0x4, fixed_abs, tag = 'smem constant byte address 0x4 - core index']
  #allocation1 [shape = 'u32[72,128]{1,0:T(1,128)}', space=vmem, size = 0x9000, scoped, tag = 'internal scratch']
  %s0 = inlined_call_operand.vmem [shape: bf16[2,16,32], index: 0, kind: input, shape index: {}]
  %s1 = inlined_call_operand.vmem [shape: bf16[2,16,32], index: 1, kind: input, shape index: {}]
  %s2 = inlined_call_operand.vmem [shape: bf16[2,6,32], index: 2, kind: input, shape index: {}]
  %s3 = inlined_call_operand.vmem [shape: bf16[32,32], index: 3, kind: input, shape index: {}]
  %s4 = inlined_call_operand.vmem [shape: bf16[1,32], index: 4, kind: input, shape index: {}]
  %s5 = inlined_call_operand.vmem [shape: bf16[32,64], index: 5, kind: input, shape index: {}]
  %s6 = inlined_call_operand.vmem [shape: bf16[1,64], index: 6, kind: input, shape index: {}]
  %s7 = inlined_call_operand.vmem [shape: bf16[64,32], index: 7, kind: input, shape index: {}]
  %s8 = inlined_call_operand.vmem [shape: bf16[1,32], index: 8, kind: input, shape index: {}]
  %s9 = inlined_call_operand.vmem [shape: bf16[2,16,32], index: 9, kind: output, shape index: {}]
  %s10 = sld [smem:[#allocation0]]
  $region69: #{flux_forward.38} parent=0
    _
  %s12 = ssub.s32 1, %s10
  %s13 = scalar_select 0, %s12, %s10
  loop: start=0, step=1, limit=4
  $region2: #{flux_forward.38} parent=0 // loop_pre_header
    _
  $region3: #{flux_forward.38} parent=0 // loop_header
    %s15 = sphi 0, %s19
    %p16 = scmp.ge.s32.totalorder %s15, 4
    %s25 = sphi 0, %s27
    %s28 = sphi 0, %s25
    %s29 = sphi 0, %s28
    %s45 = sphi 0, %s29
    %s51 = sphi 0, %s53
    %s54 = sphi 0, %s51
    %s55 = sphi 0, %s54
    %s71 = sphi 0, %s55
    %s77 = sphi 0, %s79
    %s80 = sphi 0, %s77
    %s81 = sphi 0, %s80
    %s97 = sphi 0, %s81
    %s101 = sphi 0, %s101
    %s103 = sphi 0, %s101
    %s104 = sphi 0, %s103
    %s118 = sphi 0, %s104
    %s122 = sphi 0, %s122
    %s124 = sphi 0, %s122
    %s125 = sphi 0, %s124
    %s139 = sphi 0, %s125
    %s143 = sphi 0, %s143
    %s145 = sphi 0, %s143
    %s146 = sphi 0, %s145
    %s160 = sphi 0, %s146
    %s164 = sphi 0, %s164
    %s166 = sphi 0, %s164
    %s167 = sphi 0, %s166
    %s181 = sphi 0, %s167
    %s185 = sphi 0, %s185
    %s187 = sphi 0, %s185
    %s188 = sphi 0, %s187
    %s202 = sphi 0, %s188
    %s206 = sphi 0, %s206
    %s208 = sphi 0, %s206
    %s209 = sphi 0, %s208
    %s223 = sphi 0, %s209
    %s229 = sphi 0, %s231
    %s232 = sphi 0, %s229
    %s233 = sphi 0, %s232
    %s249 = sphi 0, %s233
  $region4: #{flux_forward.38} parent=0 // loop_header_branch
    %18 = sbr.rel (%p16) target = $region8
  $region5: #{flux_forward.38} parent=0 // loop_body
    %s20 = ssub.s32 %s15, 1
    %s21 = ssub.s32 %s15, 2
    %s22 = sadd.s32 %s15, 1
    %s23 = ssub.s32 %s15, %s22
    %p24 = scmp.eq.s32.totalorder %s23, 0
    %s26 = sadd.s32 %s25, 1
    %s27 = scalar_select %p24, %s25, %s26
    %p30 = pneg %p24
    %p31 = scmp.eq.s32.totalorder %s15, 1
    %p32 = por %p30, %p31
    %p33 = scmp.ne.s32.totalorder %s25, %s28
    %p34 = scmp.eq.s32.totalorder %s15, 0
    %p35 = por %p33, %p34
    %p36 = scmp.ne.s32.totalorder %s25, %s28
    %p37 = scmp.eq.s32.totalorder %s20, 1
    %p38 = por %p36, %p37
    %p39 = scmp.ne.s32.totalorder %s28, %s29
    %p40 = scmp.eq.s32.totalorder %s20, 0
    %p41 = por %p39, %p40
    %p42 = scmp.ne.s32.totalorder %s28, %s29
    %p43 = scmp.eq.s32.totalorder %s21, 1
    %p44 = por %p42, %p43
    %p46 = scmp.ne.s32.totalorder %s29, %s45
    %p47 = scmp.eq.s32.totalorder %s21, 0
    %p48 = por %p46, %p47
    %s49 = ssub.s32 %s15, %s22
    %p50 = scmp.eq.s32.totalorder %s49, 0
    %s52 = sadd.s32 %s51, 1
    %s53 = scalar_select %p50, %s51, %s52
    %p56 = pneg %p50
    %p57 = scmp.eq.s32.totalorder %s15, 1
    %p58 = por %p56, %p57
    %p59 = scmp.ne.s32.totalorder %s51, %s54
    %p60 = scmp.eq.s32.totalorder %s15, 0
    %p61 = por %p59, %p60
    %p62 = scmp.ne.s32.totalorder %s51, %s54
    %p63 = scmp.eq.s32.totalorder %s20, 1
    %p64 = por %p62, %p63
    %p65 = scmp.ne.s32.totalorder %s54, %s55
    %p66 = scmp.eq.s32.totalorder %s20, 0
    %p67 = por %p65, %p66
    %p68 = scmp.ne.s32.totalorder %s54, %s55
    %p69 = scmp.eq.s32.totalorder %s21, 1
    %p70 = por %p68, %p69
    %p72 = scmp.ne.s32.totalorder %s55, %s71
    %p73 = scmp.eq.s32.totalorder %s21, 0
    %p74 = por %p72, %p73
    %s75 = ssub.s32 %s15, %s22
    %p76 = scmp.eq.s32.totalorder %s75, 0
    %s78 = sadd.s32 %s77, 1
    %s79 = scalar_select %p76, %s77, %s78
    %p82 = pneg %p76
    %p83 = scmp.eq.s32.totalorder %s15, 1
    %p84 = por %p82, %p83
    %p85 = scmp.ne.s32.totalorder %s77, %s80
    %p86 = scmp.eq.s32.totalorder %s15, 0
    %p87 = por %p85, %p86
    %p88 = scmp.ne.s32.totalorder %s77, %s80
    %p89 = scmp.eq.s32.totalorder %s20, 1
    %p90 = por %p88, %p89
    %p91 = scmp.ne.s32.totalorder %s80, %s81
    %p92 = scmp.eq.s32.totalorder %s20, 0
    %p93 = por %p91, %p92
    %p94 = scmp.ne.s32.totalorder %s80, %s81
    %p95 = scmp.eq.s32.totalorder %s21, 1
    %p96 = por %p94, %p95
    %p98 = scmp.ne.s32.totalorder %s81, %s97
    %p99 = scmp.eq.s32.totalorder %s21, 0
    %p100 = por %p98, %p99
    %s102 = sadd.s32 %s101, 1
    %p105 = scmp.eq.s32.totalorder %s15, 1
    %p106 = scmp.ne.s32.totalorder %s101, %s103
    %p107 = scmp.eq.s32.totalorder %s15, 0
    %p108 = por %p106, %p107
    %p109 = scmp.ne.s32.totalorder %s101, %s103
    %p110 = scmp.eq.s32.totalorder %s20, 1
    %p111 = por %p109, %p110
    %p112 = scmp.ne.s32.totalorder %s103, %s104
    %p113 = scmp.eq.s32.totalorder %s20, 0
    %p114 = por %p112, %p113
    %p115 = scmp.ne.s32.totalorder %s103, %s104
    %p116 = scmp.eq.s32.totalorder %s21, 1
    %p117 = por %p115, %p116
    %p119 = scmp.ne.s32.totalorder %s104, %s118
    %p120 = scmp.eq.s32.totalorder %s21, 0
    %p121 = por %p119, %p120
    %s123 = sadd.s32 %s122, 1
    %p126 = scmp.eq.s32.totalorder %s15, 1
    %p127 = scmp.ne.s32.totalorder %s122, %s124
    %p128 = scmp.eq.s32.totalorder %s15, 0
    %p129 = por %p127, %p128
    %p130 = scmp.ne.s32.totalorder %s122, %s124
    %p131 = scmp.eq.s32.totalorder %s20, 1
    %p132 = por %p130, %p131
    %p133 = scmp.ne.s32.totalorder %s124, %s125
    %p134 = scmp.eq.s32.totalorder %s20, 0
    %p135 = por %p133, %p134
    %p136 = scmp.ne.s32.totalorder %s124, %s125
    %p137 = scmp.eq.s32.totalorder %s21, 1
    %p138 = por %p136, %p137
    %p140 = scmp.ne.s32.totalorder %s125, %s139
    %p141 = scmp.eq.s32.totalorder %s21, 0
    %p142 = por %p140, %p141
    %s144 = sadd.s32 %s143, 1
    %p147 = scmp.eq.s32.totalorder %s15, 1
    %p148 = scmp.ne.s32.totalorder %s143, %s145
    %p149 = scmp.eq.s32.totalorder %s15, 0
    %p150 = por %p148, %p149
    %p151 = scmp.ne.s32.totalorder %s143, %s145
    %p152 = scmp.eq.s32.totalorder %s20, 1
    %p153 = por %p151, %p152
    %p154 = scmp.ne.s32.totalorder %s145, %s146
    %p155 = scmp.eq.s32.totalorder %s20, 0
    %p156 = por %p154, %p155
    %p157 = scmp.ne.s32.totalorder %s145, %s146
    %p158 = scmp.eq.s32.totalorder %s21, 1
    %p159 = por %p157, %p158
    %p161 = scmp.ne.s32.totalorder %s146, %s160
    %p162 = scmp.eq.s32.totalorder %s21, 0
    %p163 = por %p161, %p162
    %s165 = sadd.s32 %s164, 1
    %p168 = scmp.eq.s32.totalorder %s15, 1
    %p169 = scmp.ne.s32.totalorder %s164, %s166
    %p170 = scmp.eq.s32.totalorder %s15, 0
    %p171 = por %p169, %p170
    %p172 = scmp.ne.s32.totalorder %s164, %s166
    %p173 = scmp.eq.s32.totalorder %s20, 1
    %p174 = por %p172, %p173
    %p175 = scmp.ne.s32.totalorder %s166, %s167
    %p176 = scmp.eq.s32.totalorder %s20, 0
    %p177 = por %p175, %p176
    %p178 = scmp.ne.s32.totalorder %s166, %s167
    %p179 = scmp.eq.s32.totalorder %s21, 1
    %p180 = por %p178, %p179
    %p182 = scmp.ne.s32.totalorder %s167, %s181
    %p183 = scmp.eq.s32.totalorder %s21, 0
    %p184 = por %p182, %p183
    %s186 = sadd.s32 %s185, 1
    %p189 = scmp.eq.s32.totalorder %s15, 1
    %p190 = scmp.ne.s32.totalorder %s185, %s187
    %p191 = scmp.eq.s32.totalorder %s15, 0
    %p192 = por %p190, %p191
    %p193 = scmp.ne.s32.totalorder %s185, %s187
    %p194 = scmp.eq.s32.totalorder %s20, 1
    %p195 = por %p193, %p194
    %p196 = scmp.ne.s32.totalorder %s187, %s188
    %p197 = scmp.eq.s32.totalorder %s20, 0
    %p198 = por %p196, %p197
    %p199 = scmp.ne.s32.totalorder %s187, %s188
    %p200 = scmp.eq.s32.totalorder %s21, 1
    %p201 = por %p199, %p200
    %p203 = scmp.ne.s32.totalorder %s188, %s202
    %p204 = scmp.eq.s32.totalorder %s21, 0
    %p205 = por %p203, %p204
    %s207 = sadd.s32 %s206, 1
    %p210 = scmp.eq.s32.totalorder %s15, 1
    %p211 = scmp.ne.s32.totalorder %s206, %s208
    %p212 = scmp.eq.s32.totalorder %s15, 0
    %p213 = por %p211, %p212
    %p214 = scmp.ne.s32.totalorder %s206, %s208
    %p215 = scmp.eq.s32.totalorder %s20, 1
    %p216 = por %p214, %p215
    %p217 = scmp.ne.s32.totalorder %s208, %s209
    %p218 = scmp.eq.s32.totalorder %s20, 0
    %p219 = por %p217, %p218
    %p220 = scmp.ne.s32.totalorder %s208, %s209
    %p221 = scmp.eq.s32.totalorder %s21, 1
    %p222 = por %p220, %p221
    %p224 = scmp.ne.s32.totalorder %s209, %s223
    %p225 = scmp.eq.s32.totalorder %s21, 0
    %p226 = por %p224, %p225
    %s227 = ssub.s32 %s15, %s22
    %p228 = scmp.eq.s32.totalorder %s227, 0
    %s230 = sadd.s32 %s229, 1
    %s231 = scalar_select %p228, %s229, %s230
    %p234 = pneg %p228
    %p235 = scmp.eq.s32.totalorder %s15, 1
    %p236 = por %p234, %p235
    %p237 = scmp.ne.s32.totalorder %s229, %s232
    %p238 = scmp.eq.s32.totalorder %s15, 0
    %p239 = por %p237, %p238
    %p240 = scmp.ne.s32.totalorder %s229, %s232
    %p241 = scmp.eq.s32.totalorder %s20, 1
    %p242 = por %p240, %p241
    %p243 = scmp.ne.s32.totalorder %s232, %s233
    %p244 = scmp.eq.s32.totalorder %s20, 0
    %p245 = por %p243, %p244
    %p246 = scmp.ne.s32.totalorder %s232, %s233
    %p247 = scmp.eq.s32.totalorder %s21, 1
    %p248 = por %p246, %p247
    %p250 = scmp.ne.s32.totalorder %s233, %s249
    %p251 = scmp.eq.s32.totalorder %s21, 0
    %p252 = por %p250, %p251
    %p253 = scmp.le.s32.totalorder 1, %s15
    %p254 = scmp.lt.s32.totalorder %s15, 3
    %p255 = pnand %p253, %p254
    %p256 = pneg %p255
    // Predicated region
    $region9: #{flux_forward.38} parent=5 // pred_check
      _
    $region10: #{flux_forward.38} parent=5 // pred_check_branch
      %258 = sbr.rel (%p255) target = $region12
    $region11: #{flux_forward.38} parent=5 // pred_region
      %s259 = ssub.s32 %s15, 1
      // Predicated region
      $region13: #{flux_forward.38} parent=11 // pred_check
        %p260 = pneg %p114
      $region14: #{flux_forward.38} parent=11 // pred_check_branch
        %262 = sbr.rel (%p260) target = $region16
      $region15: #{flux_forward.38} parent=11 // pred_region
        _
      $region16: #{flux_forward.38} parent=11 // pred_fallthru
        _
      // Predicated region
      $region17: #{flux_forward.38} parent=11 // pred_check
        %p263 = pneg %p135
      $region18: #{flux_forward.38} parent=11 // pred_check_branch
        %265 = sbr.rel (%p263) target = $region20
      $region19: #{flux_forward.38} parent=11 // pred_region
        _
      $region20: #{flux_forward.38} parent=11 // pred_fallthru
        _
      // Predicated region
      $region21: #{flux_forward.38} parent=11 // pred_check
        %p266 = pneg %p156
      $region22: #{flux_forward.38} parent=11 // pred_check_branch
        %268 = sbr.rel (%p266) target = $region24
      $region23: #{flux_forward.38} parent=11 // pred_region
        _
      $region24: #{flux_forward.38} parent=11 // pred_fallthru
        _
      // Predicated region
      $region25: #{flux_forward.38} parent=11 // pred_check
        %p269 = pneg %p177
      $region26: #{flux_forward.38} parent=11 // pred_check_branch
        %271 = sbr.rel (%p269) target = $region28
      $region27: #{flux_forward.38} parent=11 // pred_region
        _
      $region28: #{flux_forward.38} parent=11 // pred_fallthru
        _
      // Predicated region
      $region29: #{flux_forward.38} parent=11 // pred_check
        %p272 = pneg %p198
      $region30: #{flux_forward.38} parent=11 // pred_check_branch
        %274 = sbr.rel (%p272) target = $region32
      $region31: #{flux_forward.38} parent=11 // pred_region
        _
      $region32: #{flux_forward.38} parent=11 // pred_fallthru
        _
      // Predicated region
      $region33: #{flux_forward.38} parent=11 // pred_check
        %p275 = pneg %p219
      $region34: #{flux_forward.38} parent=11 // pred_check_branch
        %277 = sbr.rel (%p275) target = $region36
      $region35: #{flux_forward.38} parent=11 // pred_region
        _
      $region36: #{flux_forward.38} parent=11 // pred_fallthru
        _
    $region12: #{flux_forward.38} parent=5 // pred_fallthru
      _
    %p278 = scmp.lt.s32.totalorder %s15, 2
    // Predicated region
    $region37: #{flux_forward.38} parent=5 // pred_check
      %p279 = pneg %p278
    $region38: #{flux_forward.38} parent=5 // pred_check_branch
      %281 = sbr.rel (%p279) target = $region40
    $region39: #{flux_forward.38} parent=5 // pred_region
      // Predicated region
      $region41: #{flux_forward.38} parent=39 // pred_check
        %p282 = pneg %p35
      $region42: #{flux_forward.38} parent=39 // pred_check_branch
        %284 = sbr.rel (%p282) target = $region44
      $region43: #{flux_forward.38} parent=39 // pred_region
        %p285 = scmp.lt.s32.totalorder %s15, 1
        %s286 = scalar_select %p285, %s15, 1
        %s287 = smul.addr %s286, 2
        %s288 = smul.addr %s287, 4
        %s289 = scalar_lea.vmem %s0, %s288
      $region44: #{flux_forward.38} parent=39 // pred_fallthru
        _
      // Predicated region
      $region45: #{flux_forward.38} parent=39 // pred_check
        %p290 = pneg %p61
      $region46: #{flux_forward.38} parent=39 // pred_check_branch
        %292 = sbr.rel (%p290) target = $region48
      $region47: #{flux_forward.38} parent=39 // pred_region
        %p293 = scmp.lt.s32.totalorder %s15, 1
        %s294 = scalar_select %p293, %s15, 1
        %s295 = smul.addr %s294, 2
        %s296 = smul.addr %s295, 4
        %s297 = scalar_lea.vmem %s1, %s296
      $region48: #{flux_forward.38} parent=39 // pred_fallthru
        _
      // Predicated region
      $region49: #{flux_forward.38} parent=39 // pred_check
        %p298 = pneg %p87
      $region50: #{flux_forward.38} parent=39 // pred_check_branch
        %300 = sbr.rel (%p298) target = $region52
      $region51: #{flux_forward.38} parent=39 // pred_region
        %p301 = scmp.lt.s32.totalorder %s15, 1
        %s302 = scalar_select %p301, %s15, 1
        %s303 = smul.addr %s302, 4
        %s304 = scalar_lea.vmem %s2, %s303
      $region52: #{flux_forward.38} parent=39 // pred_fallthru
        _
    $region40: #{flux_forward.38} parent=5 // pred_fallthru
      _
    %p305 = scmp.le.s32.totalorder 1, %s15
    %p306 = scmp.lt.s32.totalorder %s15, 3
    %p307 = pnand %p305, %p306
    %p308 = pneg %p307
    // Predicated region
    $region53: #{flux_forward.38} parent=5 // pred_check
      _
    $region54: #{flux_forward.38} parent=5 // pred_check_branch
      %310 = sbr.rel (%p307) target = $region56
    $region55: #{flux_forward.38} parent=5 // pred_region
      %s311 = ssub.s32 %s15, 1
      %p312 = scmp.lt.s32.totalorder %s20, 1
      %s313 = scalar_select %p312, %s20, 1
      %s314 = smul.addr %s313, 2
      %s315 = smul.addr %s314, 4
      %s316 = scalar_lea.vmem %s0, %s315
      %p317 = pneg %p41
      %p318 = pneg %p38
      %p319 = scmp.lt.s32.totalorder %s20, 1
      %s320 = scalar_select %p319, %s20, 1
      %s321 = smul.addr %s320, 2
      %s322 = smul.addr %s321, 4
      %s323 = scalar_lea.vmem %s1, %s322
      %p324 = pneg %p67
      %p325 = pneg %p64
      %p326 = scmp.lt.s32.totalorder %s20, 1
      %s327 = scalar_select %p326, %s20, 1
      %s328 = smul.addr %s327, 4
      %s329 = scalar_lea.vmem %s2, %s328
      %p330 = pneg %p93
      %p331 = pneg %p90
      %p332 = pneg %p114
      %p333 = pneg %p111
      %p334 = pneg %p135
      %p335 = pneg %p132
      %p336 = pneg %p156
      %p337 = pneg %p153
      %p338 = pneg %p177
      %p339 = pneg %p174
      %p340 = pneg %p198
      %p341 = pneg %p195
      %p342 = pneg %p219
      %p343 = pneg %p216
      %p344 = pneg %p245
      %p345 = pneg %p242
      %p346 = scmp.lt.s32.totalorder %s20, 1
      %s347 = scalar_select %p346, %s20, 1
      %s348 = smul.addr %s347, 2
      %s349 = smul.addr %s348, 4
      %s350 = scalar_lea.vmem %s9, %s349
      %p351 = scmp.lt.s32.totalorder %s20, 1
      %s352 = scalar_select %p351, %s20, 1
      %s353 = smul.addr %s352, 2
      %s354 = smul.addr %s353, 4
      %s355 = scalar_lea.vmem %s0, %s354
      %p356 = scmp.lt.s32.totalorder %s20, 1
      %s357 = scalar_select %p356, %s20, 1
      %s358 = smul.addr %s357, 2
      %s359 = smul.addr %s358, 4
      %s360 = scalar_lea.vmem %s1, %s359
      %p361 = scmp.lt.s32.totalorder %s20, 1
      %s362 = scalar_select %p361, %s20, 1
      %s363 = smul.addr %s362, 4
      %s364 = scalar_lea.vmem %s2, %s363
      %p365 = scmp.lt.s32.totalorder %s20, 1
      %s366 = scalar_select %p365, %s20, 1
      %s367 = smul.addr %s366, 2
      %s368 = smul.addr %s367, 4
      %s369 = scalar_lea.vmem %s9, %s368
      %v371 = vld [vmem:[%s364] sm:$0x2]
      %v372 = vunpack.c.l.bf16 %v371
      %v373 = vld [vmem:[%s364] sm:$0x4]
      %v374 = vunpack.c.l.bf16 %v373
      %v375 = vld [vmem:[%s355] sm:$0xf]
      %v376 = vld [vmem:[%s355 + $0x4] sm:$0xf]
      %v377 = vunpack.c.l.bf16 %v375
      %v378 = vunpack.c.l.bf16 %v376
      %v379 = vld [vmem:[%s360] sm:$0xf]
      %v380 = vld [vmem:[%s360 + $0x4] sm:$0xf]
      %v381 = vld [vmem:[%s3] sm:$0xf]
      %v382 = vld [vmem:[%s3 + $0x4] sm:$0xf]
      %v383 = vld [vmem:[%s3 + $0x8] sm:$0xf]
      %v384 = vld [vmem:[%s3 + $0xc] sm:$0xf]
      %v385 = vld [vmem:[%s4] sm:$0x1]
      %v386 = vunpack.c.l.bf16 %v385
      %v387 = vperm.slane %v386, 0
      %v390 = vunpack.c.l.b16 %v379
      %v391 = vunpack.c.l.b16 %v380
      %v392 = vpack.c.b16 %v391, %v390
      %v397 = vunpack.c.l.b16 %v381
      %v398 = vunpack.c.l.b16 %v382
      %v399 = vunpack.c.l.b16 %v383
      %v400 = vunpack.c.l.b16 %v384
      %v401 = vpack.c.b16 %v398, %v397
      %v402 = vpack.c.b16 %v400, %v399
      %vm405 = vcmask 261120
      %v407 = vsel %vm405, %v392, 0
      %409 = vmatpush.bf16.msra.mxu0 0
      %410 = vmatpush.bf16.msra.mxu0 0
      %411 = vmatpush.bf16.msra.mxu0 0
      %412 = vmatpush.bf16.msra.mxu0 0
      %413 = vmatpush.bf16.msra.mxu0 0
      %414 = vmatpush.bf16.msra.mxu0 0
      %415 = vmatpush.bf16.msra.mxu0 %v402
      %416 = vmatpush.bf16.msra.mxu0 %v401
      %417 = vmatmul.bf16.gmra.mxu0 %v407
      %v418 = vpop.f32.mrf.mxu0
      %v419 = vadd.f32 %v387, %v418
      %v420 = vpop.f32.mrf.mxu0
      %v421 = vadd.f32 %v387, %v420
      %422 = vdwg.mxu0
      %v423 = vperm.slane %v372, 2
      %v424 = vmul.f32 %v423, %v419
      %v425 = vmul.f32 %v423, %v421
      %v426 = vadd.f32 %v377, %v424
      %v427 = vadd.f32 %v378, %v425
      %v428 = vsel %vm405, %v426, 0.0
      %429 = vadd.xlane.f32.xlu0 %v428
      %v430 = vpop.xlane.xlu0 %429
      %v431 = vsel %vm405, %v427, 0.0
      %432 = vadd.xlane.f32.xlu0 %v431
      %v433 = vpop.xlane.xlu0 %432
      %v434 = vrcp.pop 32.0
      %v435 = vmul.f32 32.0, %v434
      %v436 = vsub.f32 1.0, %v435
      %v437 = vmul.f32 %v434, %v436
      %v438 = vadd.f32 %v434, %v437
      %vm439 = vweird.f32 %v434
      %v440 = vsel %vm439, %v434, %v438
      %v441 = vmul.f32 %v430, %v440
      %v442 = vmul.f32 %v433, %v440
      %v443 = vsub.f32 %v426, %v441
      %v444 = vsub.f32 %v427, %v442
      %v445 = vmul.f32 %v443, %v443
      %v446 = vmul.f32 %v444, %v444
      %v447 = vsel %vm405, %v445, 0.0
      %448 = vadd.xlane.f32.xlu0 %v447
      %v449 = vpop.xlane.xlu0 %448
      %v450 = vsel %vm405, %v446, 0.0
      %451 = vadd.xlane.f32.xlu0 %v450
      %v452 = vpop.xlane.xlu0 %451
      %v453 = vmul.f32 %v449, %v440
      %v454 = vmul.f32 %v452, %v440
      %v455 = vadd.f32 %v453, 1e-06
      %v456 = vadd.f32 %v454, 1e-06
      %v457 = vrsqrt.pop %v455
      %v458 = vmul.f32 %v457, %v455
      %v459 = vmul.f32 %v458, %v457
      %v460 = vmul.f32 0.5, %v459
      %v461 = vsub.f32 1.5, %v460
      %v462 = vmul.f32 %v457, %v461
      %vm463 = vweird.f32 %v455
      %vm464 = vweird.f32 %v457
      %vm465 = vmor %vm463, %vm464
      %v466 = vsel %vm465, %v457, %v462
      %v467 = vrsqrt.pop %v456
      %v468 = vmul.f32 %v467, %v456
      %v469 = vmul.f32 %v468, %v467
      %v470 = vmul.f32 0.5, %v469
      %v471 = vsub.f32 1.5, %v470
      %v472 = vmul.f32 %v467, %v471
      %vm473 = vweird.f32 %v456
      %vm474 = vweird.f32 %v467
      %vm475 = vmor %vm473, %vm474
      %v476 = vsel %vm475, %v467, %v472
      %v477 = vmul.f32 %v443, %v466
      %v478 = vmul.f32 %v444, %v476
      %v479 = vadd.f32 %v374, 1.0
      %v480 = vperm.slane %v479, 4
      %v481 = vmul.f32 %v480, %v477
      %v482 = vmul.f32 %v480, %v478
      %v483 = vperm.slane %v372, 3
      %v484 = vadd.f32 %v481, %v483
      %v485 = vadd.f32 %v482, %v483
      %v486 = vpack.c.bf16 %v485, %v484
      %v487 = vld [vmem:[%s5] sm:$0xf]
      %v488 = vld [vmem:[%s5 + $0x4] sm:$0xf]
      %v489 = vld [vmem:[%s5 + $0x8] sm:$0xf]
      %v490 = vld [vmem:[%s5 + $0xc] sm:$0xf]
      %v491 = vld [vmem:[%s6] sm:$0x1]
      %v492 = vunpack.c.l.bf16 %v491
      %v493 = vperm.slane %v492, 0
      %v498 = vunpack.c.l.b16 %v487
      %v499 = vunpack.c.l.b16 %v488
      %v500 = vunpack.c.l.b16 %v489
      %v501 = vunpack.c.l.b16 %v490
      %v502 = vpack.c.b16 %v499, %v498
      %v503 = vpack.c.b16 %v501, %v500
      %v507 = vsel %vm405, %v486, 0
      %509 = vmatpush.bf16.msra.mxu0 0
      %510 = vmatpush.bf16.msra.mxu0 0
      %511 = vmatpush.bf16.msra.mxu0 0
      %512 = vmatpush.bf16.msra.mxu0 0
      %513 = vmatpush.bf16.msra.mxu0 0
      %514 = vmatpush.bf16.msra.mxu0 0
      %515 = vmatpush.bf16.msra.mxu0 %v503
      %516 = vmatpush.bf16.msra.mxu0 %v502
      %517 = vmatmul.bf16.gmra.mxu0 %v507
      %v518 = vpop.f32.mrf.mxu0
      %v519 = vadd.f32 %v493, %v518
      %v520 = vpop.f32.mrf.mxu0
      %v521 = vadd.f32 %v493, %v520
      %522 = vdwg.mxu0
      %v523 = vmul.f32 %v519, 0.5
      %v524 = vmul.f32 %v521, 0.5
      %v525 = vmul.f32 %v519, 0.044715
      %v526 = vmul.f32 %v521, 0.044715
      %v527 = vmul.f32 %v525, %v519
      %v528 = vmul.f32 %v526, %v521
      %v529 = vmul.f32 %v527, %v519
      %v530 = vmul.f32 %v528, %v521
      %v531 = vadd.f32 %v519, %v529
      %v532 = vadd.f32 %v521, %v530
      %v533 = vmul.f32 %v531, 0.7978846
      %v534 = vmul.f32 %v532, 0.7978846
      %v535 = vtanh.pop %v533
      %v536 = vtanh.pop %v534
      %v537 = vadd.f32 %v535, 1.0
      %v538 = vadd.f32 %v536, 1.0
      %v539 = vmul.f32 %v523, %v537
      %v540 = vmul.f32 %v524, %v538
      %v541 = vpack.c.bf16 %v540, %v539
      %v542 = vld [vmem:[%s7] sm:$0xf]
      %v543 = vld [vmem:[%s7 + $0x4] sm:$0xf]
      %v544 = vld [vmem:[%s7 + $0x8] sm:$0xf]
      %v545 = vld [vmem:[%s7 + $0xc] sm:$0xf]
      %v546 = vld [vmem:[%s7 + $0x10] sm:$0xf]
      %v547 = vld [vmem:[%s7 + $0x14] sm:$0xf]
      %v548 = vld [vmem:[%s7 + $0x18] sm:$0xf]
      %v549 = vld [vmem:[%s7 + $0x1c] sm:$0xf]
      %v550 = vld [vmem:[%s8] sm:$0x1]
      %v551 = vunpack.c.l.bf16 %v550
      %v552 = vperm.slane %v551, 0
      %v561 = vunpack.c.l.b16 %v542
      %v562 = vunpack.c.l.b16 %v543
      %v563 = vunpack.c.l.b16 %v544
      %v564 = vunpack.c.l.b16 %v545
      %v565 = vunpack.c.l.b16 %v546
      %v566 = vunpack.c.l.b16 %v547
      %v567 = vunpack.c.l.b16 %v548
      %v568 = vunpack.c.l.b16 %v549
      %v569 = vpack.c.b16 %v562, %v561
      %v570 = vpack.c.b16 %v564, %v563
      %v571 = vpack.c.b16 %v566, %v565
      %v572 = vpack.c.b16 %v568, %v567
      %vm577 = vcmask 523264
      %v579 = vsel %vm577, %v541, 0
      %581 = vmatpush.bf16.msra.mxu0 0
      %582 = vmatpush.bf16.msra.mxu0 0
      %583 = vmatpush.bf16.msra.mxu0 0
      %584 = vmatpush.bf16.msra.mxu0 0
      %585 = vmatpush.bf16.msra.mxu0 %v572
      %586 = vmatpush.bf16.msra.mxu0 %v571
      %587 = vmatpush.bf16.msra.mxu0 %v570
      %588 = vmatpush.bf16.msra.mxu0 %v569
      %589 = vmatmul.bf16.gmra.mxu0 %v579
      %v590 = vpop.f32.mrf.mxu0
      %v591 = vadd.f32 %v552, %v590
      %v592 = vpop.f32.mrf.mxu0
      %v593 = vadd.f32 %v552, %v592
      %594 = vdwg.mxu0
      %v595 = vperm.slane %v374, 5
      %v596 = vmul.f32 %v595, %v591
      %v597 = vmul.f32 %v595, %v593
      %v598 = vadd.f32 %v426, %v596
      %v599 = vadd.f32 %v427, %v597
      %v600 = vpack.c.bf16 %v598, %v598
      %v601 = vpack.c.bf16 %v599, %v599
      %vm602 = vcmask 257024
      %603 = vst.msk [vmem:[%s369] sm:$0xf] %vm602, %v600
      %604 = vst.msk [vmem:[%s369 + $0x4] sm:$0xf] %vm602, %v601
      %p605 = scmp.lt.s32.totalorder %s20, 1
      %s606 = scalar_select %p605, %s20, 1
      %s607 = smul.addr %s606, 2
      %s608 = smul.addr %s607, 4
      %s609 = scalar_lea.vmem %s9, %s608
      // Predicated region
      $region57: #{flux_forward.38} parent=55 // pred_check
        %p610 = pneg %p242
      $region58: #{flux_forward.38} parent=55 // pred_check_branch
        %612 = sbr.rel (%p610) target = $region60
      $region59: #{flux_forward.38} parent=55 // pred_region
        _
      $region60: #{flux_forward.38} parent=55 // pred_fallthru
        _
    $region56: #{flux_forward.38} parent=5 // pred_fallthru
      _
    %p613 = scmp.le.s32.totalorder 2, %s15
    // Predicated region
    $region61: #{flux_forward.38} parent=5 // pred_check
      %p614 = pneg %p613
    $region62: #{flux_forward.38} parent=5 // pred_check_branch
      %616 = sbr.rel (%p614) target = $region64
    $region63: #{flux_forward.38} parent=5 // pred_region
      %s617 = ssub.s32 %s15, 2
      // Predicated region
      $region65: #{flux_forward.38} parent=63 // pred_check
        %p618 = pneg %p248
      $region66: #{flux_forward.38} parent=63 // pred_check_branch
        %620 = sbr.rel (%p618) target = $region68
      $region67: #{flux_forward.38} parent=63 // pred_region
        %p621 = scmp.lt.s32.totalorder %s21, 1
        %s622 = scalar_select %p621, %s21, 1
        %s623 = smul.addr %s622, 2
        %s624 = smul.addr %s623, 4
        %s625 = scalar_lea.vmem %s9, %s624
      $region68: #{flux_forward.38} parent=63 // pred_fallthru
        _
    $region64: #{flux_forward.38} parent=5 // pred_fallthru
      _
  $region6: #{flux_forward.38} parent=0 // loop_footer
    %s19 = sadd.s32 1, %s15
  $region7: #{flux_forward.38} parent=0 // loop_footer_branch
    %14 = sbr.rel target = $region3
  $region8: #{flux_forward.38} parent=0 // loop_exit
    _

// kernel: flux_forward.52
$region0: #{flux_forward.52}
  #allocation0 [shape = 'u32[]', space=smem, size = 0x4, offset = 0x4, fixed_abs, tag = 'smem constant byte address 0x4 - core index']
  #allocation1 [shape = 'u32[72,128]{1,0:T(1,128)}', space=vmem, size = 0x9000, scoped, tag = 'internal scratch']
  %s0 = inlined_call_operand.vmem [shape: bf16[2,24,32], index: 0, kind: input, shape index: {}]
  %s1 = inlined_call_operand.vmem [shape: bf16[2,24,32], index: 1, kind: input, shape index: {}]
  %s2 = inlined_call_operand.vmem [shape: bf16[2,24,64], index: 2, kind: input, shape index: {}]
  %s3 = inlined_call_operand.vmem [shape: bf16[2,3,32], index: 3, kind: input, shape index: {}]
  %s4 = inlined_call_operand.vmem [shape: bf16[32,32], index: 4, kind: input, shape index: {}]
  %s5 = inlined_call_operand.vmem [shape: bf16[64,32], index: 5, kind: input, shape index: {}]
  %s6 = inlined_call_operand.vmem [shape: bf16[1,32], index: 6, kind: input, shape index: {}]
  %s7 = inlined_call_operand.vmem [shape: bf16[2,24,32], index: 7, kind: output, shape index: {}]
  %s8 = sld [smem:[#allocation0]]
  $region61: #{flux_forward.52} parent=0
    _
  %s10 = ssub.s32 1, %s8
  %s11 = scalar_select 0, %s10, %s8
  loop: start=0, step=1, limit=4
  $region2: #{flux_forward.52} parent=0 // loop_pre_header
    _
  $region3: #{flux_forward.52} parent=0 // loop_header
    %s13 = sphi 0, %s17
    %p14 = scmp.ge.s32.totalorder %s13, 4
    %s23 = sphi 0, %s25
    %s26 = sphi 0, %s23
    %s27 = sphi 0, %s26
    %s43 = sphi 0, %s27
    %s49 = sphi 0, %s51
    %s52 = sphi 0, %s49
    %s53 = sphi 0, %s52
    %s69 = sphi 0, %s53
    %s75 = sphi 0, %s77
    %s78 = sphi 0, %s75
    %s79 = sphi 0, %s78
    %s95 = sphi 0, %s79
    %s101 = sphi 0, %s103
    %s104 = sphi 0, %s101
    %s105 = sphi 0, %s104
    %s121 = sphi 0, %s105
    %s125 = sphi 0, %s125
    %s127 = sphi 0, %s125
    %s128 = sphi 0, %s127
    %s142 = sphi 0, %s128
    %s146 = sphi 0, %s146
    %s148 = sphi 0, %s146
    %s149 = sphi 0, %s148
    %s163 = sphi 0, %s149
    %s167 = sphi 0, %s167
    %s169 = sphi 0, %s167
    %s170 = sphi 0, %s169
    %s184 = sphi 0, %s170
    %s190 = sphi 0, %s192
    %s193 = sphi 0, %s190
    %s194 = sphi 0, %s193
    %s210 = sphi 0, %s194
  $region4: #{flux_forward.52} parent=0 // loop_header_branch
    %16 = sbr.rel (%p14) target = $region8
  $region5: #{flux_forward.52} parent=0 // loop_body
    %s18 = ssub.s32 %s13, 1
    %s19 = ssub.s32 %s13, 2
    %s20 = sadd.s32 %s13, 1
    %s21 = ssub.s32 %s13, %s20
    %p22 = scmp.eq.s32.totalorder %s21, 0
    %s24 = sadd.s32 %s23, 1
    %s25 = scalar_select %p22, %s23, %s24
    %p28 = pneg %p22
    %p29 = scmp.eq.s32.totalorder %s13, 1
    %p30 = por %p28, %p29
    %p31 = scmp.ne.s32.totalorder %s23, %s26
    %p32 = scmp.eq.s32.totalorder %s13, 0
    %p33 = por %p31, %p32
    %p34 = scmp.ne.s32.totalorder %s23, %s26
    %p35 = scmp.eq.s32.totalorder %s18, 1
    %p36 = por %p34, %p35
    %p37 = scmp.ne.s32.totalorder %s26, %s27
    %p38 = scmp.eq.s32.totalorder %s18, 0
    %p39 = por %p37, %p38
    %p40 = scmp.ne.s32.totalorder %s26, %s27
    %p41 = scmp.eq.s32.totalorder %s19, 1
    %p42 = por %p40, %p41
    %p44 = scmp.ne.s32.totalorder %s27, %s43
    %p45 = scmp.eq.s32.totalorder %s19, 0
    %p46 = por %p44, %p45
    %s47 = ssub.s32 %s13, %s20
    %p48 = scmp.eq.s32.totalorder %s47, 0
    %s50 = sadd.s32 %s49, 1
    %s51 = scalar_select %p48, %s49, %s50
    %p54 = pneg %p48
    %p55 = scmp.eq.s32.totalorder %s13, 1
    %p56 = por %p54, %p55
    %p57 = scmp.ne.s32.totalorder %s49, %s52
    %p58 = scmp.eq.s32.totalorder %s13, 0
    %p59 = por %p57, %p58
    %p60 = scmp.ne.s32.totalorder %s49, %s52
    %p61 = scmp.eq.s32.totalorder %s18, 1
    %p62 = por %p60, %p61
    %p63 = scmp.ne.s32.totalorder %s52, %s53
    %p64 = scmp.eq.s32.totalorder %s18, 0
    %p65 = por %p63, %p64
    %p66 = scmp.ne.s32.totalorder %s52, %s53
    %p67 = scmp.eq.s32.totalorder %s19, 1
    %p68 = por %p66, %p67
    %p70 = scmp.ne.s32.totalorder %s53, %s69
    %p71 = scmp.eq.s32.totalorder %s19, 0
    %p72 = por %p70, %p71
    %s73 = ssub.s32 %s13, %s20
    %p74 = scmp.eq.s32.totalorder %s73, 0
    %s76 = sadd.s32 %s75, 1
    %s77 = scalar_select %p74, %s75, %s76
    %p80 = pneg %p74
    %p81 = scmp.eq.s32.totalorder %s13, 1
    %p82 = por %p80, %p81
    %p83 = scmp.ne.s32.totalorder %s75, %s78
    %p84 = scmp.eq.s32.totalorder %s13, 0
    %p85 = por %p83, %p84
    %p86 = scmp.ne.s32.totalorder %s75, %s78
    %p87 = scmp.eq.s32.totalorder %s18, 1
    %p88 = por %p86, %p87
    %p89 = scmp.ne.s32.totalorder %s78, %s79
    %p90 = scmp.eq.s32.totalorder %s18, 0
    %p91 = por %p89, %p90
    %p92 = scmp.ne.s32.totalorder %s78, %s79
    %p93 = scmp.eq.s32.totalorder %s19, 1
    %p94 = por %p92, %p93
    %p96 = scmp.ne.s32.totalorder %s79, %s95
    %p97 = scmp.eq.s32.totalorder %s19, 0
    %p98 = por %p96, %p97
    %s99 = ssub.s32 %s13, %s20
    %p100 = scmp.eq.s32.totalorder %s99, 0
    %s102 = sadd.s32 %s101, 1
    %s103 = scalar_select %p100, %s101, %s102
    %p106 = pneg %p100
    %p107 = scmp.eq.s32.totalorder %s13, 1
    %p108 = por %p106, %p107
    %p109 = scmp.ne.s32.totalorder %s101, %s104
    %p110 = scmp.eq.s32.totalorder %s13, 0
    %p111 = por %p109, %p110
    %p112 = scmp.ne.s32.totalorder %s101, %s104
    %p113 = scmp.eq.s32.totalorder %s18, 1
    %p114 = por %p112, %p113
    %p115 = scmp.ne.s32.totalorder %s104, %s105
    %p116 = scmp.eq.s32.totalorder %s18, 0
    %p117 = por %p115, %p116
    %p118 = scmp.ne.s32.totalorder %s104, %s105
    %p119 = scmp.eq.s32.totalorder %s19, 1
    %p120 = por %p118, %p119
    %p122 = scmp.ne.s32.totalorder %s105, %s121
    %p123 = scmp.eq.s32.totalorder %s19, 0
    %p124 = por %p122, %p123
    %s126 = sadd.s32 %s125, 1
    %p129 = scmp.eq.s32.totalorder %s13, 1
    %p130 = scmp.ne.s32.totalorder %s125, %s127
    %p131 = scmp.eq.s32.totalorder %s13, 0
    %p132 = por %p130, %p131
    %p133 = scmp.ne.s32.totalorder %s125, %s127
    %p134 = scmp.eq.s32.totalorder %s18, 1
    %p135 = por %p133, %p134
    %p136 = scmp.ne.s32.totalorder %s127, %s128
    %p137 = scmp.eq.s32.totalorder %s18, 0
    %p138 = por %p136, %p137
    %p139 = scmp.ne.s32.totalorder %s127, %s128
    %p140 = scmp.eq.s32.totalorder %s19, 1
    %p141 = por %p139, %p140
    %p143 = scmp.ne.s32.totalorder %s128, %s142
    %p144 = scmp.eq.s32.totalorder %s19, 0
    %p145 = por %p143, %p144
    %s147 = sadd.s32 %s146, 1
    %p150 = scmp.eq.s32.totalorder %s13, 1
    %p151 = scmp.ne.s32.totalorder %s146, %s148
    %p152 = scmp.eq.s32.totalorder %s13, 0
    %p153 = por %p151, %p152
    %p154 = scmp.ne.s32.totalorder %s146, %s148
    %p155 = scmp.eq.s32.totalorder %s18, 1
    %p156 = por %p154, %p155
    %p157 = scmp.ne.s32.totalorder %s148, %s149
    %p158 = scmp.eq.s32.totalorder %s18, 0
    %p159 = por %p157, %p158
    %p160 = scmp.ne.s32.totalorder %s148, %s149
    %p161 = scmp.eq.s32.totalorder %s19, 1
    %p162 = por %p160, %p161
    %p164 = scmp.ne.s32.totalorder %s149, %s163
    %p165 = scmp.eq.s32.totalorder %s19, 0
    %p166 = por %p164, %p165
    %s168 = sadd.s32 %s167, 1
    %p171 = scmp.eq.s32.totalorder %s13, 1
    %p172 = scmp.ne.s32.totalorder %s167, %s169
    %p173 = scmp.eq.s32.totalorder %s13, 0
    %p174 = por %p172, %p173
    %p175 = scmp.ne.s32.totalorder %s167, %s169
    %p176 = scmp.eq.s32.totalorder %s18, 1
    %p177 = por %p175, %p176
    %p178 = scmp.ne.s32.totalorder %s169, %s170
    %p179 = scmp.eq.s32.totalorder %s18, 0
    %p180 = por %p178, %p179
    %p181 = scmp.ne.s32.totalorder %s169, %s170
    %p182 = scmp.eq.s32.totalorder %s19, 1
    %p183 = por %p181, %p182
    %p185 = scmp.ne.s32.totalorder %s170, %s184
    %p186 = scmp.eq.s32.totalorder %s19, 0
    %p187 = por %p185, %p186
    %s188 = ssub.s32 %s13, %s20
    %p189 = scmp.eq.s32.totalorder %s188, 0
    %s191 = sadd.s32 %s190, 1
    %s192 = scalar_select %p189, %s190, %s191
    %p195 = pneg %p189
    %p196 = scmp.eq.s32.totalorder %s13, 1
    %p197 = por %p195, %p196
    %p198 = scmp.ne.s32.totalorder %s190, %s193
    %p199 = scmp.eq.s32.totalorder %s13, 0
    %p200 = por %p198, %p199
    %p201 = scmp.ne.s32.totalorder %s190, %s193
    %p202 = scmp.eq.s32.totalorder %s18, 1
    %p203 = por %p201, %p202
    %p204 = scmp.ne.s32.totalorder %s193, %s194
    %p205 = scmp.eq.s32.totalorder %s18, 0
    %p206 = por %p204, %p205
    %p207 = scmp.ne.s32.totalorder %s193, %s194
    %p208 = scmp.eq.s32.totalorder %s19, 1
    %p209 = por %p207, %p208
    %p211 = scmp.ne.s32.totalorder %s194, %s210
    %p212 = scmp.eq.s32.totalorder %s19, 0
    %p213 = por %p211, %p212
    %p214 = scmp.le.s32.totalorder 1, %s13
    %p215 = scmp.lt.s32.totalorder %s13, 3
    %p216 = pnand %p214, %p215
    %p217 = pneg %p216
    // Predicated region
    $region9: #{flux_forward.52} parent=5 // pred_check
      _
    $region10: #{flux_forward.52} parent=5 // pred_check_branch
      %219 = sbr.rel (%p216) target = $region12
    $region11: #{flux_forward.52} parent=5 // pred_region
      %s220 = ssub.s32 %s13, 1
      // Predicated region
      $region13: #{flux_forward.52} parent=11 // pred_check
        %p221 = pneg %p138
      $region14: #{flux_forward.52} parent=11 // pred_check_branch
        %223 = sbr.rel (%p221) target = $region16
      $region15: #{flux_forward.52} parent=11 // pred_region
        _
      $region16: #{flux_forward.52} parent=11 // pred_fallthru
        _
      // Predicated region
      $region17: #{flux_forward.52} parent=11 // pred_check
        %p224 = pneg %p159
      $region18: #{flux_forward.52} parent=11 // pred_check_branch
        %226 = sbr.rel (%p224) target = $region20
      $region19: #{flux_forward.52} parent=11 // pred_region
        _
      $region20: #{flux_forward.52} parent=11 // pred_fallthru
        _
      // Predicated region
      $region21: #{flux_forward.52} parent=11 // pred_check
        %p227 = pneg %p180
      $region22: #{flux_forward.52} parent=11 // pred_check_branch
        %229 = sbr.rel (%p227) target = $region24
      $region23: #{flux_forward.52} parent=11 // pred_region
        _
      $region24: #{flux_forward.52} parent=11 // pred_fallthru
        _
    $region12: #{flux_forward.52} parent=5 // pred_fallthru
      _
    %p230 = scmp.lt.s32.totalorder %s13, 2
    // Predicated region
    $region25: #{flux_forward.52} parent=5 // pred_check
      %p231 = pneg %p230
    $region26: #{flux_forward.52} parent=5 // pred_check_branch
      %233 = sbr.rel (%p231) target = $region28
    $region27: #{flux_forward.52} parent=5 // pred_region
      // Predicated region
      $region29: #{flux_forward.52} parent=27 // pred_check
        %p234 = pneg %p33
      $region30: #{flux_forward.52} parent=27 // pred_check_branch
        %236 = sbr.rel (%p234) target = $region32
      $region31: #{flux_forward.52} parent=27 // pred_region
        %p237 = scmp.lt.s32.totalorder %s13, 1
        %s238 = scalar_select %p237, %s13, 1
        %s239 = smul.addr %s238, 3
        %s240 = smul.addr %s239, 4
        %s241 = scalar_lea.vmem %s0, %s240
      $region32: #{flux_forward.52} parent=27 // pred_fallthru
        _
      // Predicated region
      $region33: #{flux_forward.52} parent=27 // pred_check
        %p242 = pneg %p59
      $region34: #{flux_forward.52} parent=27 // pred_check_branch
        %244 = sbr.rel (%p242) target = $region36
      $region35: #{flux_forward.52} parent=27 // pred_region
        %p245 = scmp.lt.s32.totalorder %s13, 1
        %s246 = scalar_select %p245, %s13, 1
        %s247 = smul.addr %s246, 3
        %s248 = smul.addr %s247, 4
        %s249 = scalar_lea.vmem %s1, %s248
      $region36: #{flux_forward.52} parent=27 // pred_fallthru
        _
      // Predicated region
      $region37: #{flux_forward.52} parent=27 // pred_check
        %p250 = pneg %p85
      $region38: #{flux_forward.52} parent=27 // pred_check_branch
        %252 = sbr.rel (%p250) target = $region40
      $region39: #{flux_forward.52} parent=27 // pred_region
        %p253 = scmp.lt.s32.totalorder %s13, 1
        %s254 = scalar_select %p253, %s13, 1
        %s255 = smul.addr %s254, 3
        %s256 = smul.addr %s255, 4
        %s257 = scalar_lea.vmem %s2, %s256
      $region40: #{flux_forward.52} parent=27 // pred_fallthru
        _
      // Predicated region
      $region41: #{flux_forward.52} parent=27 // pred_check
        %p258 = pneg %p111
      $region42: #{flux_forward.52} parent=27 // pred_check_branch
        %260 = sbr.rel (%p258) target = $region44
      $region43: #{flux_forward.52} parent=27 // pred_region
        %p261 = scmp.lt.s32.totalorder %s13, 1
        %s262 = scalar_select %p261, %s13, 1
        %s263 = smul.addr %s262, 2
        %s264 = scalar_lea.vmem %s3, %s263
      $region44: #{flux_forward.52} parent=27 // pred_fallthru
        _
    $region28: #{flux_forward.52} parent=5 // pred_fallthru
      _
    %p265 = scmp.le.s32.totalorder 1, %s13
    %p266 = scmp.lt.s32.totalorder %s13, 3
    %p267 = pnand %p265, %p266
    %p268 = pneg %p267
    // Predicated region
    $region45: #{flux_forward.52} parent=5 // pred_check
      _
    $region46: #{flux_forward.52} parent=5 // pred_check_branch
      %270 = sbr.rel (%p267) target = $region48
    $region47: #{flux_forward.52} parent=5 // pred_region
      %s271 = ssub.s32 %s13, 1
      %p272 = scmp.lt.s32.totalorder %s18, 1
      %s273 = scalar_select %p272, %s18, 1
      %s274 = smul.addr %s273, 3
      %s275 = smul.addr %s274, 4
      %s276 = scalar_lea.vmem %s0, %s275
      %p277 = pneg %p39
      %p278 = pneg %p36
      %p279 = scmp.lt.s32.totalorder %s18, 1
      %s280 = scalar_select %p279, %s18, 1
      %s281 = smul.addr %s280, 3
      %s282 = smul.addr %s281, 4
      %s283 = scalar_lea.vmem %s1, %s282
      %p284 = pneg %p65
      %p285 = pneg %p62
      %p286 = scmp.lt.s32.totalorder %s18, 1
      %s287 = scalar_select %p286, %s18, 1
      %s288 = smul.addr %s287, 3
      %s289 = smul.addr %s288, 4
      %s290 = scalar_lea.vmem %s2, %s289
      %p291 = pneg %p91
      %p292 = pneg %p88
      %p293 = scmp.lt.s32.totalorder %s18, 1
      %s294 = scalar_select %p293, %s18, 1
      %s295 = smul.addr %s294, 2
      %s296 = scalar_lea.vmem %s3, %s295
      %p297 = pneg %p117
      %p298 = pneg %p114
      %p299 = pneg %p138
      %p300 = pneg %p135
      %p301 = pneg %p159
      %p302 = pneg %p156
      %p303 = pneg %p180
      %p304 = pneg %p177
      %p305 = pneg %p206
      %p306 = pneg %p203
      %p307 = scmp.lt.s32.totalorder %s18, 1
      %s308 = scalar_select %p307, %s18, 1
      %s309 = smul.addr %s308, 3
      %s310 = smul.addr %s309, 4
      %s311 = scalar_lea.vmem %s7, %s310
      %p312 = scmp.lt.s32.totalorder %s18, 1
      %s313 = scalar_select %p312, %s18, 1
      %s314 = smul.addr %s313, 3
      %s315 = smul.addr %s314, 4
      %s316 = scalar_lea.vmem %s0, %s315
      %p317 = scmp.lt.s32.totalorder %s18, 1
      %s318 = scalar_select %p317, %s18, 1
      %s319 = smul.addr %s318, 3
      %s320 = smul.addr %s319, 4
      %s321 = scalar_lea.vmem %s1, %s320
      %p322 = scmp.lt.s32.totalorder %s18, 1
      %s323 = scalar_select %p322, %s18, 1
      %s324 = smul.addr %s323, 3
      %s325 = smul.addr %s324, 4
      %s326 = scalar_lea.vmem %s2, %s325
      %p327 = scmp.lt.s32.totalorder %s18, 1
      %s328 = scalar_select %p327, %s18, 1
      %s329 = smul.addr %s328, 2
      %s330 = scalar_lea.vmem %s3, %s329
      %p331 = scmp.lt.s32.totalorder %s18, 1
      %s332 = scalar_select %p331, %s18, 1
      %s333 = smul.addr %s332, 3
      %s334 = smul.addr %s333, 4
      %s335 = scalar_lea.vmem %s7, %s334
      %v337 = vld [vmem:[%s330] sm:$0x2]
      %v338 = vunpack.c.l.bf16 %v337
      %v339 = vld [vmem:[%s316] sm:$0xf]
      %v340 = vld [vmem:[%s316 + $0x4] sm:$0xf]
      %v341 = vld [vmem:[%s316 + $0x8] sm:$0xf]
      %v342 = vunpack.c.l.bf16 %v339
      %v343 = vunpack.c.l.bf16 %v340
      %v344 = vunpack.c.l.bf16 %v341
      %v345 = vld [vmem:[%s326] sm:$0xf]
      %v346 = vld [vmem:[%s326 + $0x4] sm:$0xf]
      %v347 = vld [vmem:[%s326 + $0x8] sm:$0xf]
      %v348 = vunpack.c.l.bf16 %v345
      %v349 = vunpack.c.l.bf16 %v346
      %v350 = vunpack.c.l.bf16 %v347
      %v351 = vmul.f32 %v348, 0.5
      %v352 = vmul.f32 %v349, 0.5
      %v353 = vmul.f32 %v350, 0.5
      %v354 = vmul.f32 %v348, 0.044715
      %v355 = vmul.f32 %v349, 0.044715
      %v356 = vmul.f32 %v350, 0.044715
      %v357 = vmul.f32 %v354, %v348
      %v358 = vmul.f32 %v355, %v349
      %v359 = vmul.f32 %v356, %v350
      %v360 = vmul.f32 %v357, %v348
      %v361 = vmul.f32 %v358, %v349
      %v362 = vmul.f32 %v359, %v350
      %v363 = vadd.f32 %v348, %v360
      %v364 = vadd.f32 %v349, %v361
      %v365 = vadd.f32 %v350, %v362
      %v366 = vmul.f32 %v363, 0.7978846
      %v367 = vmul.f32 %v364, 0.7978846
      %v368 = vmul.f32 %v365, 0.7978846
      %v369 = vtanh.pop %v366
      %v370 = vtanh.pop %v367
      %v371 = vtanh.pop %v368
      %v372 = vadd.f32 %v369, 1.0
      %v373 = vadd.f32 %v370, 1.0
      %v374 = vadd.f32 %v371, 1.0
      %v375 = vmul.f32 %v351, %v372
      %v376 = vmul.f32 %v352, %v373
      %v377 = vmul.f32 %v353, %v374
      %v378 = vpack.c.bf16 %v376, %v375
      %v379 = vpack.c.bf16 %v377, %v377
      %v380 = vld [vmem:[%s321] sm:$0xf]
      %v381 = vld [vmem:[%s321 + $0x4] sm:$0xf]
      %v382 = vld [vmem:[%s321 + $0x8] sm:$0xf]
      %v383 = vld [vmem:[%s4] sm:$0xf]
      %v384 = vld [vmem:[%s4 + $0x4] sm:$0xf]
      %v385 = vld [vmem:[%s4 + $0x8] sm:$0xf]
      %v386 = vld [vmem:[%s4 + $0xc] sm:$0xf]
      %v387 = vld [vmem:[%s5] sm:$0xf]
      %v388 = vld [vmem:[%s5 + $0x4] sm:$0xf]
      %v389 = vld [vmem:[%s5 + $0x8] sm:$0xf]
      %v390 = vld [vmem:[%s5 + $0xc] sm:$0xf]
      %v391 = vld [vmem:[%s5 + $0x10] sm:$0xf]
      %v392 = vld [vmem:[%s5 + $0x14] sm:$0xf]
      %v393 = vld [vmem:[%s5 + $0x18] sm:$0xf]
      %v394 = vld [vmem:[%s5 + $0x1c] sm:$0xf]
      %v403 = vunpack.c.l.b16 %v387
      %v404 = vunpack.c.l.b16 %v388
      %v405 = vunpack.c.l.b16 %v389
      %v406 = vunpack.c.l.b16 %v390
      %v407 = vunpack.c.l.b16 %v391
      %v408 = vunpack.c.l.b16 %v392
      %v409 = vunpack.c.l.b16 %v393
      %v410 = vunpack.c.l.b16 %v394
      %v411 = vpack.c.b16 %v404, %v403
      %v412 = vpack.c.b16 %v406, %v405
      %v413 = vpack.c.b16 %v408, %v407
      %v414 = vpack.c.b16 %v410, %v409
      %vm419 = vcmask 523264
      %v421 = vsel %vm419, %v378, 0
      %v424 = vsel %vm419, %v379, 0
      %426 = vmatpush.bf16.msra.mxu0 0
      %427 = vmatpush.bf16.msra.mxu0 0
      %428 = vmatpush.bf16.msra.mxu0 0
      %429 = vmatpush.bf16.msra.mxu0 0
      %430 = vmatpush.bf16.msra.mxu0 %v414
      %431 = vmatpush.bf16.msra.mxu0 %v413
      %432 = vmatpush.bf16.msra.mxu0 %v412
      %433 = vmatpush.bf16.msra.mxu0 %v411
      %434 = vmatmul.bf16.gmra.mxu0 %v421
      %v435 = vpop.f32.mrf.mxu0
      %v436 = vadd.f32 0.0, %v435
      %v437 = vpop.f32.mrf.mxu0
      %v438 = vadd.f32 0.0, %v437
      %439 = vmatmul.bf16.gmra.mxu0 %v424
      %v440 = vpop.f32.mrf.mxu0
      %v441 = vadd.f32 0.0, %v440
      %v442 = vpop.f32.mrf.mxu0
      %443 = vdwg.mxu0
      %v447 = vunpack.c.l.b16 %v380
      %v448 = vunpack.c.l.b16 %v381
      %v449 = vunpack.c.l.b16 %v382
      %v450 = vpack.c.b16 %v448, %v447
      %v451 = vpack.c.b16 %v449, %v449
      %v456 = vunpack.c.l.b16 %v383
      %v457 = vunpack.c.l.b16 %v384
      %v458 = vunpack.c.l.b16 %v385
      %v459 = vunpack.c.l.b16 %v386
      %v460 = vpack.c.b16 %v457, %v456
      %v461 = vpack.c.b16 %v459, %v458
      %vm464 = vcmask 261120
      %v466 = vsel %vm464, %v450, 0
      %v469 = vsel %vm464, %v451, 0
      %471 = vmatpush.bf16.msra.mxu0 0
      %472 = vmatpush.bf16.msra.mxu0 0
      %473 = vmatpush.bf16.msra.mxu0 0
      %474 = vmatpush.bf16.msra.mxu0 0
      %475 = vmatpush.bf16.msra.mxu0 0
      %476 = vmatpush.bf16.msra.mxu0 0
      %477 = vmatpush.bf16.msra.mxu0 %v461
      %478 = vmatpush.bf16.msra.mxu0 %v460
      %479 = vmatmul.bf16.gmra.mxu0 %v466
      %v480 = vpop.f32.mrf.mxu0
      %v481 = vadd.f32 %v436, %v480
      %v482 = vpop.f32.mrf.mxu0
      %v483 = vadd.f32 %v438, %v482
      %484 = vmatmul.bf16.gmra.mxu0 %v469
      %v485 = vpop.f32.mrf.mxu0
      %v486 = vadd.f32 %v441, %v485
      %v487 = vpop.f32.mrf.mxu0
      %488 = vdwg.mxu0
      %v489 = vld [vmem:[%s6] sm:$0x1]
      %v490 = vunpack.c.l.bf16 %v489
      %v491 = vperm.slane %v490, 0
      %v492 = vadd.f32 %v481, %v491
      %v493 = vadd.f32 %v483, %v491
      %v494 = vadd.f32 %v486, %v491
      %v495 = vperm.slane %v338, 2
      %v496 = vmul.f32 %v495, %v492
      %v497 = vmul.f32 %v495, %v493
      %v498 = vmul.f32 %v495, %v494
      %v499 = vadd.f32 %v342, %v496
      %v500 = vadd.f32 %v343, %v497
      %v501 = vadd.f32 %v344, %v498
      %v502 = vpack.c.bf16 %v499, %v499
      %v503 = vpack.c.bf16 %v500, %v500
      %v504 = vpack.c.bf16 %v501, %v501
      %vm505 = vcmask 257024
      %506 = vst.msk [vmem:[%s335] sm:$0xf] %vm505, %v502
      %507 = vst.msk [vmem:[%s335 + $0x4] sm:$0xf] %vm505, %v503
      %508 = vst.msk [vmem:[%s335 + $0x8] sm:$0xf] %vm505, %v504
      %p509 = scmp.lt.s32.totalorder %s18, 1
      %s510 = scalar_select %p509, %s18, 1
      %s511 = smul.addr %s510, 3
      %s512 = smul.addr %s511, 4
      %s513 = scalar_lea.vmem %s7, %s512
      // Predicated region
      $region49: #{flux_forward.52} parent=47 // pred_check
        %p514 = pneg %p203
      $region50: #{flux_forward.52} parent=47 // pred_check_branch
        %516 = sbr.rel (%p514) target = $region52
      $region51: #{flux_forward.52} parent=47 // pred_region
        _
      $region52: #{flux_forward.52} parent=47 // pred_fallthru
        _
    $region48: #{flux_forward.52} parent=5 // pred_fallthru
      _
    %p517 = scmp.le.s32.totalorder 2, %s13
    // Predicated region
    $region53: #{flux_forward.52} parent=5 // pred_check
      %p518 = pneg %p517
    $region54: #{flux_forward.52} parent=5 // pred_check_branch
      %520 = sbr.rel (%p518) target = $region56
    $region55: #{flux_forward.52} parent=5 // pred_region
      %s521 = ssub.s32 %s13, 2
      // Predicated region
      $region57: #{flux_forward.52} parent=55 // pred_check
        %p522 = pneg %p209
      $region58: #{flux_forward.52} parent=55 // pred_check_branch
        %524 = sbr.rel (%p522) target = $region60
      $region59: #{flux_forward.52} parent=55 // pred_region
        %p525 = scmp.lt.s32.totalorder %s19, 1
        %s526 = scalar_select %p525, %s19, 1
        %s527 = smul.addr %s526, 3
        %s528 = smul.addr %s527, 4
        %s529 = scalar_lea.vmem %s7, %s528
      $region60: #{flux_forward.52} parent=55 // pred_fallthru
        _
    $region56: #{flux_forward.52} parent=5 // pred_fallthru
      _
  $region6: #{flux_forward.52} parent=0 // loop_footer
    %s17 = sadd.s32 1, %s13
  $region7: #{flux_forward.52} parent=0 // loop_footer_branch
    %12 = sbr.rel target = $region3
  $region8: #{flux_forward.52} parent=0 // loop_exit
    _

// kernel: flux_forward.50
$region0: #{flux_forward.50}
  #allocation0 [shape = 'u32[]', space=smem, size = 0x4, offset = 0x4, fixed_abs, tag = 'smem constant byte address 0x4 - core index']
  #allocation1 [shape = 'u32[72,128]{1,0:T(1,128)}', space=vmem, size = 0x9000, scoped, tag = 'internal scratch']
  %s0 = inlined_call_operand.vmem [shape: bf16[2,24,32], index: 0, kind: input, shape index: {}]
  %s1 = inlined_call_operand.vmem [shape: bf16[2,3,32], index: 1, kind: input, shape index: {}]
  %s2 = inlined_call_operand.vmem [shape: bf16[32,160], index: 2, kind: input, shape index: {}]
  %s3 = inlined_call_operand.vmem [shape: bf16[1,160], index: 3, kind: input, shape index: {}]
  %s4 = inlined_call_operand.vmem [shape: f32[64,4], index: 4, kind: input, shape index: {}]
  %s5 = inlined_call_operand.vmem [shape: f32[4,64], index: 5, kind: input, shape index: {}]
  %s6 = inlined_call_operand.vmem [shape: f32[1,64], index: 6, kind: input, shape index: {}]
  %s7 = inlined_call_operand.vmem [shape: bf16[2,24,96], index: 7, kind: output, shape index: {0}]
  %s8 = inlined_call_operand.vmem [shape: bf16[2,24,64], index: 8, kind: output, shape index: {1}]
  %9 = xla_tuple %s7, %s8
  %s10 = sld [smem:[#allocation0]]
  $region69: #{flux_forward.50} parent=0
    _
  %s12 = ssub.s32 1, %s10
  %s13 = scalar_select 0, %s12, %s10
  loop: start=0, step=1, limit=4
  $region2: #{flux_forward.50} parent=0 // loop_pre_header
    _
  $region3: #{flux_forward.50} parent=0 // loop_header
    %s15 = sphi 0, %s19
    %p16 = scmp.ge.s32.totalorder %s15, 4
    %s25 = sphi 0, %s27
    %s28 = sphi 0, %s25
    %s29 = sphi 0, %s28
    %s45 = sphi 0, %s29
    %s51 = sphi 0, %s53
    %s54 = sphi 0, %s51
    %s55 = sphi 0, %s54
    %s71 = sphi 0, %s55
    %s75 = sphi 0, %s75
    %s77 = sphi 0, %s75
    %s78 = sphi 0, %s77
    %s92 = sphi 0, %s78
    %s96 = sphi 0, %s96
    %s98 = sphi 0, %s96
    %s99 = sphi 0, %s98
    %s113 = sphi 0, %s99
    %s117 = sphi 0, %s117
    %s119 = sphi 0, %s117
    %s120 = sphi 0, %s119
    %s134 = sphi 0, %s120
    %s138 = sphi 0, %s138
    %s140 = sphi 0, %s138
    %s141 = sphi 0, %s140
    %s155 = sphi 0, %s141
    %s159 = sphi 0, %s159
    %s161 = sphi 0, %s159
    %s162 = sphi 0, %s161
    %s176 = sphi 0, %s162
    %s182 = sphi 0, %s184
    %s185 = sphi 0, %s182
    %s186 = sphi 0, %s185
    %s202 = sphi 0, %s186
    %s208 = sphi 0, %s210
    %s211 = sphi 0, %s208
    %s212 = sphi 0, %s211
    %s228 = sphi 0, %s212
  $region4: #{flux_forward.50} parent=0 // loop_header_branch
    %18 = sbr.rel (%p16) target = $region8
  $region5: #{flux_forward.50} parent=0 // loop_body
    %s20 = ssub.s32 %s15, 1
    %s21 = ssub.s32 %s15, 2
    %s22 = sadd.s32 %s15, 1
    %s23 = ssub.s32 %s15, %s22
    %p24 = scmp.eq.s32.totalorder %s23, 0
    %s26 = sadd.s32 %s25, 1
    %s27 = scalar_select %p24, %s25, %s26
    %p30 = pneg %p24
    %p31 = scmp.eq.s32.totalorder %s15, 1
    %p32 = por %p30, %p31
    %p33 = scmp.ne.s32.totalorder %s25, %s28
    %p34 = scmp.eq.s32.totalorder %s15, 0
    %p35 = por %p33, %p34
    %p36 = scmp.ne.s32.totalorder %s25, %s28
    %p37 = scmp.eq.s32.totalorder %s20, 1
    %p38 = por %p36, %p37
    %p39 = scmp.ne.s32.totalorder %s28, %s29
    %p40 = scmp.eq.s32.totalorder %s20, 0
    %p41 = por %p39, %p40
    %p42 = scmp.ne.s32.totalorder %s28, %s29
    %p43 = scmp.eq.s32.totalorder %s21, 1
    %p44 = por %p42, %p43
    %p46 = scmp.ne.s32.totalorder %s29, %s45
    %p47 = scmp.eq.s32.totalorder %s21, 0
    %p48 = por %p46, %p47
    %s49 = ssub.s32 %s15, %s22
    %p50 = scmp.eq.s32.totalorder %s49, 0
    %s52 = sadd.s32 %s51, 1
    %s53 = scalar_select %p50, %s51, %s52
    %p56 = pneg %p50
    %p57 = scmp.eq.s32.totalorder %s15, 1
    %p58 = por %p56, %p57
    %p59 = scmp.ne.s32.totalorder %s51, %s54
    %p60 = scmp.eq.s32.totalorder %s15, 0
    %p61 = por %p59, %p60
    %p62 = scmp.ne.s32.totalorder %s51, %s54
    %p63 = scmp.eq.s32.totalorder %s20, 1
    %p64 = por %p62, %p63
    %p65 = scmp.ne.s32.totalorder %s54, %s55
    %p66 = scmp.eq.s32.totalorder %s20, 0
    %p67 = por %p65, %p66
    %p68 = scmp.ne.s32.totalorder %s54, %s55
    %p69 = scmp.eq.s32.totalorder %s21, 1
    %p70 = por %p68, %p69
    %p72 = scmp.ne.s32.totalorder %s55, %s71
    %p73 = scmp.eq.s32.totalorder %s21, 0
    %p74 = por %p72, %p73
    %s76 = sadd.s32 %s75, 1
    %p79 = scmp.eq.s32.totalorder %s15, 1
    %p80 = scmp.ne.s32.totalorder %s75, %s77
    %p81 = scmp.eq.s32.totalorder %s15, 0
    %p82 = por %p80, %p81
    %p83 = scmp.ne.s32.totalorder %s75, %s77
    %p84 = scmp.eq.s32.totalorder %s20, 1
    %p85 = por %p83, %p84
    %p86 = scmp.ne.s32.totalorder %s77, %s78
    %p87 = scmp.eq.s32.totalorder %s20, 0
    %p88 = por %p86, %p87
    %p89 = scmp.ne.s32.totalorder %s77, %s78
    %p90 = scmp.eq.s32.totalorder %s21, 1
    %p91 = por %p89, %p90
    %p93 = scmp.ne.s32.totalorder %s78, %s92
    %p94 = scmp.eq.s32.totalorder %s21, 0
    %p95 = por %p93, %p94
    %s97 = sadd.s32 %s96, 1
    %p100 = scmp.eq.s32.totalorder %s15, 1
    %p101 = scmp.ne.s32.totalorder %s96, %s98
    %p102 = scmp.eq.s32.totalorder %s15, 0
    %p103 = por %p101, %p102
    %p104 = scmp.ne.s32.totalorder %s96, %s98
    %p105 = scmp.eq.s32.totalorder %s20, 1
    %p106 = por %p104, %p105
    %p107 = scmp.ne.s32.totalorder %s98, %s99
    %p108 = scmp.eq.s32.totalorder %s20, 0
    %p109 = por %p107, %p108
    %p110 = scmp.ne.s32.totalorder %s98, %s99
    %p111 = scmp.eq.s32.totalorder %s21, 1
    %p112 = por %p110, %p111
    %p114 = scmp.ne.s32.totalorder %s99, %s113
    %p115 = scmp.eq.s32.totalorder %s21, 0
    %p116 = por %p114, %p115
    %s118 = sadd.s32 %s117, 1
    %p121 = scmp.eq.s32.totalorder %s15, 1
    %p122 = scmp.ne.s32.totalorder %s117, %s119
    %p123 = scmp.eq.s32.totalorder %s15, 0
    %p124 = por %p122, %p123
    %p125 = scmp.ne.s32.totalorder %s117, %s119
    %p126 = scmp.eq.s32.totalorder %s20, 1
    %p127 = por %p125, %p126
    %p128 = scmp.ne.s32.totalorder %s119, %s120
    %p129 = scmp.eq.s32.totalorder %s20, 0
    %p130 = por %p128, %p129
    %p131 = scmp.ne.s32.totalorder %s119, %s120
    %p132 = scmp.eq.s32.totalorder %s21, 1
    %p133 = por %p131, %p132
    %p135 = scmp.ne.s32.totalorder %s120, %s134
    %p136 = scmp.eq.s32.totalorder %s21, 0
    %p137 = por %p135, %p136
    %s139 = sadd.s32 %s138, 1
    %p142 = scmp.eq.s32.totalorder %s15, 1
    %p143 = scmp.ne.s32.totalorder %s138, %s140
    %p144 = scmp.eq.s32.totalorder %s15, 0
    %p145 = por %p143, %p144
    %p146 = scmp.ne.s32.totalorder %s138, %s140
    %p147 = scmp.eq.s32.totalorder %s20, 1
    %p148 = por %p146, %p147
    %p149 = scmp.ne.s32.totalorder %s140, %s141
    %p150 = scmp.eq.s32.totalorder %s20, 0
    %p151 = por %p149, %p150
    %p152 = scmp.ne.s32.totalorder %s140, %s141
    %p153 = scmp.eq.s32.totalorder %s21, 1
    %p154 = por %p152, %p153
    %p156 = scmp.ne.s32.totalorder %s141, %s155
    %p157 = scmp.eq.s32.totalorder %s21, 0
    %p158 = por %p156, %p157
    %s160 = sadd.s32 %s159, 1
    %p163 = scmp.eq.s32.totalorder %s15, 1
    %p164 = scmp.ne.s32.totalorder %s159, %s161
    %p165 = scmp.eq.s32.totalorder %s15, 0
    %p166 = por %p164, %p165
    %p167 = scmp.ne.s32.totalorder %s159, %s161
    %p168 = scmp.eq.s32.totalorder %s20, 1
    %p169 = por %p167, %p168
    %p170 = scmp.ne.s32.totalorder %s161, %s162
    %p171 = scmp.eq.s32.totalorder %s20, 0
    %p172 = por %p170, %p171
    %p173 = scmp.ne.s32.totalorder %s161, %s162
    %p174 = scmp.eq.s32.totalorder %s21, 1
    %p175 = por %p173, %p174
    %p177 = scmp.ne.s32.totalorder %s162, %s176
    %p178 = scmp.eq.s32.totalorder %s21, 0
    %p179 = por %p177, %p178
    %s180 = ssub.s32 %s15, %s22
    %p181 = scmp.eq.s32.totalorder %s180, 0
    %s183 = sadd.s32 %s182, 1
    %s184 = scalar_select %p181, %s182, %s183
    %p187 = pneg %p181
    %p188 = scmp.eq.s32.totalorder %s15, 1
    %p189 = por %p187, %p188
    %p190 = scmp.ne.s32.totalorder %s182, %s185
    %p191 = scmp.eq.s32.totalorder %s15, 0
    %p192 = por %p190, %p191
    %p193 = scmp.ne.s32.totalorder %s182, %s185
    %p194 = scmp.eq.s32.totalorder %s20, 1
    %p195 = por %p193, %p194
    %p196 = scmp.ne.s32.totalorder %s185, %s186
    %p197 = scmp.eq.s32.totalorder %s20, 0
    %p198 = por %p196, %p197
    %p199 = scmp.ne.s32.totalorder %s185, %s186
    %p200 = scmp.eq.s32.totalorder %s21, 1
    %p201 = por %p199, %p200
    %p203 = scmp.ne.s32.totalorder %s186, %s202
    %p204 = scmp.eq.s32.totalorder %s21, 0
    %p205 = por %p203, %p204
    %s206 = ssub.s32 %s15, %s22
    %p207 = scmp.eq.s32.totalorder %s206, 0
    %s209 = sadd.s32 %s208, 1
    %s210 = scalar_select %p207, %s208, %s209
    %p213 = pneg %p207
    %p214 = scmp.eq.s32.totalorder %s15, 1
    %p215 = por %p213, %p214
    %p216 = scmp.ne.s32.totalorder %s208, %s211
    %p217 = scmp.eq.s32.totalorder %s15, 0
    %p218 = por %p216, %p217
    %p219 = scmp.ne.s32.totalorder %s208, %s211
    %p220 = scmp.eq.s32.totalorder %s20, 1
    %p221 = por %p219, %p220
    %p222 = scmp.ne.s32.totalorder %s211, %s212
    %p223 = scmp.eq.s32.totalorder %s20, 0
    %p224 = por %p222, %p223
    %p225 = scmp.ne.s32.totalorder %s211, %s212
    %p226 = scmp.eq.s32.totalorder %s21, 1
    %p227 = por %p225, %p226
    %p229 = scmp.ne.s32.totalorder %s212, %s228
    %p230 = scmp.eq.s32.totalorder %s21, 0
    %p231 = por %p229, %p230
    %p232 = scmp.le.s32.totalorder 1, %s15
    %p233 = scmp.lt.s32.totalorder %s15, 3
    %p234 = pnand %p232, %p233
    %p235 = pneg %p234
    // Predicated region
    $region9: #{flux_forward.50} parent=5 // pred_check
      _
    $region10: #{flux_forward.50} parent=5 // pred_check_branch
      %237 = sbr.rel (%p234) target = $region12
    $region11: #{flux_forward.50} parent=5 // pred_region
      %s238 = ssub.s32 %s15, 1
      // Predicated region
      $region13: #{flux_forward.50} parent=11 // pred_check
        %p239 = pneg %p88
      $region14: #{flux_forward.50} parent=11 // pred_check_branch
        %241 = sbr.rel (%p239) target = $region16
      $region15: #{flux_forward.50} parent=11 // pred_region
        _
      $region16: #{flux_forward.50} parent=11 // pred_fallthru
        _
      // Predicated region
      $region17: #{flux_forward.50} parent=11 // pred_check
        %p242 = pneg %p109
      $region18: #{flux_forward.50} parent=11 // pred_check_branch
        %244 = sbr.rel (%p242) target = $region20
      $region19: #{flux_forward.50} parent=11 // pred_region
        _
      $region20: #{flux_forward.50} parent=11 // pred_fallthru
        _
      // Predicated region
      $region21: #{flux_forward.50} parent=11 // pred_check
        %p245 = pneg %p130
      $region22: #{flux_forward.50} parent=11 // pred_check_branch
        %247 = sbr.rel (%p245) target = $region24
      $region23: #{flux_forward.50} parent=11 // pred_region
        _
      $region24: #{flux_forward.50} parent=11 // pred_fallthru
        _
      // Predicated region
      $region25: #{flux_forward.50} parent=11 // pred_check
        %p248 = pneg %p151
      $region26: #{flux_forward.50} parent=11 // pred_check_branch
        %250 = sbr.rel (%p248) target = $region28
      $region27: #{flux_forward.50} parent=11 // pred_region
        _
      $region28: #{flux_forward.50} parent=11 // pred_fallthru
        _
      // Predicated region
      $region29: #{flux_forward.50} parent=11 // pred_check
        %p251 = pneg %p172
      $region30: #{flux_forward.50} parent=11 // pred_check_branch
        %253 = sbr.rel (%p251) target = $region32
      $region31: #{flux_forward.50} parent=11 // pred_region
        _
      $region32: #{flux_forward.50} parent=11 // pred_fallthru
        _
    $region12: #{flux_forward.50} parent=5 // pred_fallthru
      _
    %p254 = scmp.lt.s32.totalorder %s15, 2
    // Predicated region
    $region33: #{flux_forward.50} parent=5 // pred_check
      %p255 = pneg %p254
    $region34: #{flux_forward.50} parent=5 // pred_check_branch
      %257 = sbr.rel (%p255) target = $region36
    $region35: #{flux_forward.50} parent=5 // pred_region
      // Predicated region
      $region37: #{flux_forward.50} parent=35 // pred_check
        %p258 = pneg %p35
      $region38: #{flux_forward.50} parent=35 // pred_check_branch
        %260 = sbr.rel (%p258) target = $region40
      $region39: #{flux_forward.50} parent=35 // pred_region
        %p261 = scmp.lt.s32.totalorder %s15, 1
        %s262 = scalar_select %p261, %s15, 1
        %s263 = smul.addr %s262, 3
        %s264 = smul.addr %s263, 4
        %s265 = scalar_lea.vmem %s0, %s264
      $region40: #{flux_forward.50} parent=35 // pred_fallthru
        _
      // Predicated region
      $region41: #{flux_forward.50} parent=35 // pred_check
        %p266 = pneg %p61
      $region42: #{flux_forward.50} parent=35 // pred_check_branch
        %268 = sbr.rel (%p266) target = $region44
      $region43: #{flux_forward.50} parent=35 // pred_region
        %p269 = scmp.lt.s32.totalorder %s15, 1
        %s270 = scalar_select %p269, %s15, 1
        %s271 = smul.addr %s270, 2
        %s272 = scalar_lea.vmem %s1, %s271
      $region44: #{flux_forward.50} parent=35 // pred_fallthru
        _
    $region36: #{flux_forward.50} parent=5 // pred_fallthru
      _
    %p273 = scmp.le.s32.totalorder 1, %s15
    %p274 = scmp.lt.s32.totalorder %s15, 3
    %p275 = pnand %p273, %p274
    %p276 = pneg %p275
    // Predicated region
    $region45: #{flux_forward.50} parent=5 // pred_check
      _
    $region46: #{flux_forward.50} parent=5 // pred_check_branch
      %278 = sbr.rel (%p275) target = $region48
    $region47: #{flux_forward.50} parent=5 // pred_region
      %s279 = ssub.s32 %s15, 1
      %p280 = scmp.lt.s32.totalorder %s20, 1
      %s281 = scalar_select %p280, %s20, 1
      %s282 = smul.addr %s281, 3
      %s283 = smul.addr %s282, 4
      %s284 = scalar_lea.vmem %s0, %s283
      %p285 = pneg %p41
      %p286 = pneg %p38
      %p287 = scmp.lt.s32.totalorder %s20, 1
      %s288 = scalar_select %p287, %s20, 1
      %s289 = smul.addr %s288, 2
      %s290 = scalar_lea.vmem %s1, %s289
      %p291 = pneg %p67
      %p292 = pneg %p64
      %p293 = pneg %p88
      %p294 = pneg %p85
      %p295 = pneg %p109
      %p296 = pneg %p106
      %p297 = pneg %p130
      %p298 = pneg %p127
      %p299 = pneg %p151
      %p300 = pneg %p148
      %p301 = pneg %p172
      %p302 = pneg %p169
      %p303 = pneg %p198
      %p304 = pneg %p195
      %p305 = scmp.lt.s32.totalorder %s20, 1
      %s306 = scalar_select %p305, %s20, 1
      %s307 = smul.addr %s306, 3
      %s308 = smul.addr %s307, 4
      %s309 = scalar_lea.vmem %s7, %s308
      %p310 = pneg %p224
      %p311 = pneg %p221
      %p312 = scmp.lt.s32.totalorder %s20, 1
      %s313 = scalar_select %p312, %s20, 1
      %s314 = smul.addr %s313, 3
      %s315 = smul.addr %s314, 4
      %s316 = scalar_lea.vmem %s8, %s315
      %p317 = scmp.lt.s32.totalorder %s20, 1
      %s318 = scalar_select %p317, %s20, 1
      %s319 = smul.addr %s318, 3
      %s320 = smul.addr %s319, 4
      %s321 = scalar_lea.vmem %s0, %s320
      %p322 = scmp.lt.s32.totalorder %s20, 1
      %s323 = scalar_select %p322, %s20, 1
      %s324 = smul.addr %s323, 2
      %s325 = scalar_lea.vmem %s1, %s324
      %p326 = scmp.lt.s32.totalorder %s20, 1
      %s327 = scalar_select %p326, %s20, 1
      %s328 = smul.addr %s327, 3
      %s329 = smul.addr %s328, 4
      %s330 = scalar_lea.vmem %s7, %s329
      %p331 = scmp.lt.s32.totalorder %s20, 1
      %s332 = scalar_select %p331, %s20, 1
      %s333 = smul.addr %s332, 3
      %s334 = smul.addr %s333, 4
      %s335 = scalar_lea.vmem %s8, %s334
      %v337 = vld [vmem:[%s321] sm:$0xf]
      %v338 = vld [vmem:[%s321 + $0x4] sm:$0xf]
      %v339 = vld [vmem:[%s321 + $0x8] sm:$0xf]
      %v340 = vunpack.c.l.bf16 %v337
      %v341 = vunpack.c.l.bf16 %v338
      %v342 = vunpack.c.l.bf16 %v339
      %v343 = vld [vmem:[%s325] sm:$0x1]
      %v344 = vunpack.c.l.bf16 %v343
      %vm345 = vcmask 261120
      %v346 = vsel %vm345, %v340, 0.0
      %347 = vadd.xlane.f32.xlu0 %v346
      %v348 = vpop.xlane.xlu0 %347
      %v349 = vsel %vm345, %v341, 0.0
      %350 = vadd.xlane.f32.xlu0 %v349
      %v351 = vpop.xlane.xlu0 %350
      %v352 = vsel %vm345, %v342, 0.0
      %353 = vadd.xlane.f32.xlu0 %v352
      %v354 = vpop.xlane.xlu0 %353
      %v355 = vrcp.pop 32.0
      %v356 = vmul.f32 32.0, %v355
      %v357 = vsub.f32 1.0, %v356
      %v358 = vmul.f32 %v355, %v357
      %v359 = vadd.f32 %v355, %v358
      %vm360 = vweird.f32 %v355
      %v361 = vsel %vm360, %v355, %v359
      %v362 = vmul.f32 %v348, %v361
      %v363 = vmul.f32 %v351, %v361
      %v364 = vmul.f32 %v354, %v361
      %v365 = vsub.f32 %v340, %v362
      %v366 = vsub.f32 %v341, %v363
      %v367 = vsub.f32 %v342, %v364
      %v368 = vmul.f32 %v365, %v365
      %v369 = vmul.f32 %v366, %v366
      %v370 = vmul.f32 %v367, %v367
      %v371 = vsel %vm345, %v368, 0.0
      %372 = vadd.xlane.f32.xlu0 %v371
      %v373 = vpop.xlane.xlu0 %372
      %v374 = vsel %vm345, %v369, 0.0
      %375 = vadd.xlane.f32.xlu0 %v374
      %v376 = vpop.xlane.xlu0 %375
      %v377 = vsel %vm345, %v370, 0.0
      %378 = vadd.xlane.f32.xlu0 %v377
      %v379 = vpop.xlane.xlu0 %378
      %v380 = vmul.f32 %v373, %v361
      %v381 = vmul.f32 %v376, %v361
      %v382 = vmul.f32 %v379, %v361
      %v383 = vadd.f32 %v380, 1e-06
      %v384 = vadd.f32 %v381, 1e-06
      %v385 = vadd.f32 %v382, 1e-06
      %v386 = vrsqrt.pop %v383
      %v387 = vmul.f32 %v386, %v383
      %v388 = vmul.f32 %v387, %v386
      %v389 = vmul.f32 0.5, %v388
      %v390 = vsub.f32 1.5, %v389
      %v391 = vmul.f32 %v386, %v390
      %vm392 = vweird.f32 %v383
      %vm393 = vweird.f32 %v386
      %vm394 = vmor %vm392, %vm393
      %v395 = vsel %vm394, %v386, %v391
      %v396 = vrsqrt.pop %v384
      %v397 = vmul.f32 %v396, %v384
      %v398 = vmul.f32 %v397, %v396
      %v399 = vmul.f32 0.5, %v398
      %v400 = vsub.f32 1.5, %v399
      %v401 = vmul.f32 %v396, %v400
      %vm402 = vweird.f32 %v384
      %vm403 = vweird.f32 %v396
      %vm404 = vmor %vm402, %vm403
      %v405 = vsel %vm404, %v396, %v401
      %v406 = vrsqrt.pop %v385
      %v407 = vmul.f32 %v406, %v385
      %v408 = vmul.f32 %v407, %v406
      %v409 = vmul.f32 0.5, %v408
      %v410 = vsub.f32 1.5, %v409
      %v411 = vmul.f32 %v406, %v410
      %vm412 = vweird.f32 %v385
      %vm413 = vweird.f32 %v406
      %vm414 = vmor %vm412, %vm413
      %v415 = vsel %vm414, %v406, %v411
      %v416 = vmul.f32 %v365, %v395
      %v417 = vmul.f32 %v366, %v405
      %v418 = vmul.f32 %v367, %v415
      %v419 = vadd.f32 %v344, 1.0
      %v420 = vperm.slane %v419, 1
      %v421 = vmul.f32 %v420, %v416
      %v422 = vmul.f32 %v420, %v417
      %v423 = vmul.f32 %v420, %v418
      %v424 = vperm.slane %v344, 0
      %v425 = vadd.f32 %v421, %v424
      %v426 = vadd.f32 %v422, %v424
      %v427 = vadd.f32 %v423, %v424
      %v428 = vpack.c.bf16 %v426, %v425
      %v429 = vpack.c.bf16 %v427, %v427
      %v430 = vld [vmem:[%s2] sm:$0xff]
      %v431 = vld [vmem:[%s2 + $0x8] sm:$0xff]
      %v432 = vld [vmem:[%s2 + $0x10] sm:$0xff]
      %v433 = vld [vmem:[%s2 + $0x18] sm:$0xff]
      %v434 = vld [vmem:[%s3] sm:$0x3]
      %v435 = vunpack.c.l.bf16 %v434
      %v437 = vperm.slane %v435, 0
      %v438 = vperm.slane %v435, 2
      %v441 = vperm.slane %v437, 0
      %v442 = vperm.slane %v438, 0
      %v447 = vunpack.c.l.b16 %v430
      %v448 = vunpack.c.h.b16 %v430
      %v449 = vunpack.c.l.b16 %v431
      %v450 = vunpack.c.h.b16 %v431
      %v451 = vunpack.c.l.b16 %v432
      %v452 = vunpack.c.h.b16 %v432
      %v453 = vunpack.c.l.b16 %v433
      %v454 = vunpack.c.h.b16 %v433
      %v455 = vpack.c.b16 %v449, %v447
      %v456 = vpack.c.b16 %v450, %v448
      %v457 = vpack.c.b16 %v453, %v451
      %v458 = vpack.c.b16 %v454, %v452
      %v464 = vsel %vm345, %v428, 0
      %v467 = vsel %vm345, %v429, 0
      %469 = vmatpush.bf16.msra.mxu0 0
      %470 = vmatpush.bf16.msra.mxu0 0
      %471 = vmatpush.bf16.msra.mxu0 0
      %472 = vmatpush.bf16.msra.mxu0 0
      %473 = vmatpush.bf16.msra.mxu0 0
      %474 = vmatpush.bf16.msra.mxu0 0
      %475 = vmatpush.bf16.msra.mxu0 %v457
      %476 = vmatpush.bf16.msra.mxu0 %v455
      %477 = vmatmul.bf16.gmra.mxu0 %v464
      %v478 = vpop.f32.mrf.mxu0
      %v479 = vadd.f32 %v441, %v478
      %v480 = vpop.f32.mrf.mxu0
      %v481 = vadd.f32 %v441, %v480
      %482 = vmatmul.bf16.gmra.mxu0 %v467
      %v483 = vpop.f32.mrf.mxu0
      %v484 = vadd.f32 %v441, %v483
      %v485 = vpop.f32.mrf.mxu0
      %486 = vdwg.mxu0
      %487 = vmatpush.bf16.msra.mxu0 0
      %488 = vmatpush.bf16.msra.mxu0 0
      %489 = vmatpush.bf16.msra.mxu0 0
      %490 = vmatpush.bf16.msra.mxu0 0
      %491 = vmatpush.bf16.msra.mxu0 0
      %492 = vmatpush.bf16.msra.mxu0 0
      %493 = vmatpush.bf16.msra.mxu0 %v458
      %494 = vmatpush.bf16.msra.mxu0 %v456
      %495 = vmatmul.bf16.gmra.mxu0 %v464
      %v496 = vpop.f32.mrf.mxu0
      %v497 = vadd.f32 %v442, %v496
      %v498 = vpop.f32.mrf.mxu0
      %v499 = vadd.f32 %v442, %v498
      %500 = vmatmul.bf16.gmra.mxu0 %v467
      %v501 = vpop.f32.mrf.mxu0
      %v502 = vadd.f32 %v442, %v501
      %v503 = vpop.f32.mrf.mxu0
      %504 = vdwg.mxu0
      %v505 = vmul.f32 %v479, %v479
      %v506 = vmul.f32 %v481, %v481
      %v507 = vmul.f32 %v484, %v484
      %v508 = vld [vmem:[%s4] sm:$0xff]
      %v509 = vld [vmem:[%s4 + $0x8] sm:$0xff]
      %v510 = vld [vmem:[%s4 + $0x10] sm:$0xff]
      %v511 = vld [vmem:[%s4 + $0x18] sm:$0xff]
      %v512 = vld [vmem:[%s4 + $0x20] sm:$0xff]
      %v513 = vld [vmem:[%s4 + $0x28] sm:$0xff]
      %v514 = vld [vmem:[%s4 + $0x30] sm:$0xff]
      %v515 = vld [vmem:[%s4 + $0x38] sm:$0xff]
      %vm516 = vcmask 523264
      %v518 = vsel %vm516, %v505, 0
      %v521 = vsel %vm516, %v506, 0
      %v524 = vsel %vm516, %v507, 0
      %526 = vmatpush.msra.mxu0 0.0
      %527 = vmatpush.msra.mxu0 0.0
      %528 = vmatpush.msra.mxu0 0.0
      %529 = vmatpush.msra.mxu0 0.0
      %530 = vmatpush.msra.mxu0 0.0
      %531 = vmatpush.msra.mxu0 0.0
      %532 = vmatpush.msra.mxu0 0.0
      %533 = vmatpush.msra.mxu0 0.0
      %534 = vmatpush.msra.mxu0 %v515
      %535 = vmatpush.msra.mxu0 %v514
      %536 = vmatpush.msra.mxu0 %v513
      %537 = vmatpush.msra.mxu0 %v512
      %538 = vmatpush.msra.mxu0 %v511
      %539 = vmatpush.msra.mxu0 %v510
      %540 = vmatpush.msra.mxu0 %v509
      %541 = vmatpush.msra.mxu0 %v508
      %542 = vmatmul.f32.gmra.mxu0 %v518
      %v543 = vpop.f32.mrf.mxu0
      %v544 = vadd.f32 0.0, %v543
      %545 = vmatmul.f32.gmra.mxu0 %v521
      %v546 = vpop.f32.mrf.mxu0
      %v547 = vadd.f32 0.0, %v546
      %548 = vmatmul.f32.gmra.mxu0 %v524
      %v549 = vpop.f32.mrf.mxu0
      %v550 = vadd.f32 0.0, %v549
      %551 = vdwg.mxu0
      %v552 = vmul.f32 %v544, 0.0625
      %v553 = vmul.f32 %v547, 0.0625
      %v554 = vmul.f32 %v550, 0.0625
      %v555 = vadd.f32 %v552, 1e-06
      %v556 = vadd.f32 %v553, 1e-06
      %v557 = vadd.f32 %v554, 1e-06
      %v558 = vrsqrt.pop %v555
      %v559 = vmul.f32 %v558, %v555
      %v560 = vmul.f32 %v559, %v558
      %v561 = vmul.f32 0.5, %v560
      %v562 = vsub.f32 1.5, %v561
      %v563 = vmul.f32 %v558, %v562
      %vm564 = vweird.f32 %v555
      %vm565 = vweird.f32 %v558
      %vm566 = vmor %vm564, %vm565
      %v567 = vsel %vm566, %v558, %v563
      %v568 = vrsqrt.pop %v556
      %v569 = vmul.f32 %v568, %v556
      %v570 = vmul.f32 %v569, %v568
      %v571 = vmul.f32 0.5, %v570
      %v572 = vsub.f32 1.5, %v571
      %v573 = vmul.f32 %v568, %v572
      %vm574 = vweird.f32 %v556
      %vm575 = vweird.f32 %v568
      %vm576 = vmor %vm574, %vm575
      %v577 = vsel %vm576, %v568, %v573
      %v578 = vrsqrt.pop %v557
      %v579 = vmul.f32 %v578, %v557
      %v580 = vmul.f32 %v579, %v578
      %v581 = vmul.f32 0.5, %v580
      %v582 = vsub.f32 1.5, %v581
      %v583 = vmul.f32 %v578, %v582
      %vm584 = vweird.f32 %v557
      %vm585 = vweird.f32 %v578
      %vm586 = vmor %vm584, %vm585
      %v587 = vsel %vm586, %v578, %v583
      %v588 = vld [vmem:[%s5] sm:$0xf]
      %vm589 = vcmask 31744
      %v591 = vsel %vm589, %v567, 0
      %v594 = vsel %vm589, %v577, 0
      %v597 = vsel %vm589, %v587, 0
      %vm599 = vcmask 1043456
      %v601 = vsel %vm599, %v588, 0
      %603 = vmatpush.msra.mxu0 0.0
      %604 = vmatpush.msra.mxu0 0.0
      %605 = vmatpush.msra.mxu0 0.0
      %606 = vmatpush.msra.mxu0 0.0
      %607 = vmatpush.msra.mxu0 0.0
      %608 = vmatpush.msra.mxu0 0.0
      %609 = vmatpush.msra.mxu0 0.0
      %610 = vmatpush.msra.mxu0 0.0
      %611 = vmatpush.msra.mxu0 0.0
      %612 = vmatpush.msra.mxu0 0.0
      %613 = vmatpush.msra.mxu0 0.0
      %614 = vmatpush.msra.mxu0 0.0
      %615 = vmatpush.msra.mxu0 0.0
      %616 = vmatpush.msra.mxu0 0.0
      %617 = vmatpush.msra.mxu0 0.0
      %618 = vmatpush.msra.mxu0 %v601
      %619 = vmatmul.f32.gmra.mxu0 %v591
      %v620 = vpop.f32.mrf.mxu0
      %v621 = vadd.f32 0.0, %v620
      %622 = vmatmul.f32.gmra.mxu0 %v594
      %v623 = vpop.f32.mrf.mxu0
      %v624 = vadd.f32 0.0, %v623
      %625 = vmatmul.f32.gmra.mxu0 %v597
      %v626 = vpop.f32.mrf.mxu0
      %v627 = vadd.f32 0.0, %v626
      %628 = vdwg.mxu0
      %v629 = vmul.f32 %v479, %v621
      %v630 = vmul.f32 %v481, %v624
      %v631 = vmul.f32 %v484, %v627
      %v632 = vld [vmem:[%s6] sm:$0x1]
      %v634 = vperm.slane %v632, 0
      %v636 = vmul.f32 %v629, %v634
      %v637 = vmul.f32 %v630, %v634
      %v638 = vmul.f32 %v631, %v634
      %v639 = vpack.c.bf16 %v636, %v636
      %v640 = vpack.c.bf16 %v637, %v637
      %v641 = vpack.c.bf16 %v638, %v638
      %vm642 = vcmask 519168
      %643 = vst.msk [vmem:[%s330] sm:$0xf] %vm642, %v639
      %644 = vst.msk [vmem:[%s330 + $0x4] sm:$0xf] %vm642, %v640
      %645 = vst.msk [vmem:[%s330 + $0x8] sm:$0xf] %vm642, %v641
      %v646 = vpack.c.bf16 %v479, %v479
      %v647 = vpack.c.bf16 %v481, %v481
      %v648 = vpack.c.bf16 %v484, %v484
      %vm649 = vcmask 781824
      %650 = vst.msk [vmem:[%s330] sm:$0xf] %vm649, %v646
      %651 = vst.msk [vmem:[%s330 + $0x4] sm:$0xf] %vm649, %v647
      %652 = vst.msk [vmem:[%s330 + $0x8] sm:$0xf] %vm649, %v648
      %v653 = vpack.c.bf16 %v497, %v479
      %v654 = vpack.c.bf16 %v499, %v481
      %v655 = vpack.c.bf16 %v502, %v484
      %659 = vrot.lane.b32.xlu0 %v653, 32
      %v660 = vpop.permute.xlu0 %659
      %661 = vrot.lane.b32.xlu0 %v654, 32
      %v662 = vpop.permute.xlu0 %661
      %663 = vrot.lane.b32.xlu0 %v655, 32
      %v664 = vpop.permute.xlu0 %663
      %v665 = vrot.slane %v660, 4
      %v666 = vrot.slane %v662, 4
      %v667 = vrot.slane %v664, 4
      %vm668 = vcmask 261120
      %v669 = vsel %vm668, %v660, %v665
      %v670 = vsel %vm668, %v662, %v666
      %v671 = vsel %vm668, %v664, %v667
      %675 = vst.msk [vmem:[%s335] sm:$0xf] %vm642, %v669
      %676 = vst.msk [vmem:[%s335 + $0x4] sm:$0xf] %vm642, %v670
      %677 = vst.msk [vmem:[%s335 + $0x8] sm:$0xf] %vm642, %v671
      %p678 = scmp.lt.s32.totalorder %s20, 1
      %s679 = scalar_select %p678, %s20, 1
      %s680 = smul.addr %s679, 3
      %s681 = smul.addr %s680, 4
      %s682 = scalar_lea.vmem %s7, %s681
      %p683 = scmp.lt.s32.totalorder %s20, 1
      %s684 = scalar_select %p683, %s20, 1
      %s685 = smul.addr %s684, 3
      %s686 = smul.addr %s685, 4
      %s687 = scalar_lea.vmem %s8, %s686
      // Predicated region
      $region49: #{flux_forward.50} parent=47 // pred_check
        %p688 = pneg %p195
      $region50: #{flux_forward.50} parent=47 // pred_check_branch
        %690 = sbr.rel (%p688) target = $region52
      $region51: #{flux_forward.50} parent=47 // pred_region
        _
      $region52: #{flux_forward.50} parent=47 // pred_fallthru
        _
      // Predicated region
      $region53: #{flux_forward.50} parent=47 // pred_check
        %p691 = pneg %p221
      $region54: #{flux_forward.50} parent=47 // pred_check_branch
        %693 = sbr.rel (%p691) target = $region56
      $region55: #{flux_forward.50} parent=47 // pred_region
        _
      $region56: #{flux_forward.50} parent=47 // pred_fallthru
        _
    $region48: #{flux_forward.50} parent=5 // pred_fallthru
      _
    %p694 = scmp.le.s32.totalorder 2, %s15
    // Predicated region
    $region57: #{flux_forward.50} parent=5 // pred_check
      %p695 = pneg %p694
    $region58: #{flux_forward.50} parent=5 // pred_check_branch
      %697 = sbr.rel (%p695) target = $region60
    $region59: #{flux_forward.50} parent=5 // pred_region
      %s698 = ssub.s32 %s15, 2
      // Predicated region
      $region61: #{flux_forward.50} parent=59 // pred_check
        %p699 = pneg %p201
      $region62: #{flux_forward.50} parent=59 // pred_check_branch
        %701 = sbr.rel (%p699) target = $region64
      $region63: #{flux_forward.50} parent=59 // pred_region
        %p702 = scmp.lt.s32.totalorder %s21, 1
        %s703 = scalar_select %p702, %s21, 1
        %s704 = smul.addr %s703, 3
        %s705 = smul.addr %s704, 4
        %s706 = scalar_lea.vmem %s7, %s705
      $region64: #{flux_forward.50} parent=59 // pred_fallthru
        _
      // Predicated region
      $region65: #{flux_forward.50} parent=59 // pred_check
        %p707 = pneg %p227
      $region66: #{flux_forward.50} parent=59 // pred_check_branch
        %709 = sbr.rel (%p707) target = $region68
      $region67: #{flux_forward.50} parent=59 // pred_region
        %p710 = scmp.lt.s32.totalorder %s21, 1
        %s711 = scalar_select %p710, %s21, 1
        %s712 = smul.addr %s711, 3
        %s713 = smul.addr %s712, 4
        %s714 = scalar_lea.vmem %s8, %s713
      $region68: #{flux_forward.50} parent=59 // pred_fallthru
        _
    $region60: #{flux_forward.50} parent=5 // pred_fallthru
      _
  $region6: #{flux_forward.50} parent=0 // loop_footer
    %s19 = sadd.s32 1, %s15
  $region7: #{flux_forward.50} parent=0 // loop_footer_branch
    %14 = sbr.rel target = $region3
  $region8: #{flux_forward.50} parent=0 // loop_exit
    _

// kernel: flux_forward.59
$region0: #{flux_forward.59}
  #allocation0 [shape = 'u32[]', space=smem, size = 0x4, offset = 0x4, fixed_abs, tag = 'smem constant byte address 0x4 - core index']
  #allocation1 [shape = 'u32[72,128]{1,0:T(1,128)}', space=vmem, size = 0x9000, scoped, tag = 'internal scratch']
  %s0 = inlined_call_operand.vmem [shape: bf16[2,16,32], index: 0, kind: input, shape index: {}]
  %s1 = inlined_call_operand.vmem [shape: bf16[2,2,32], index: 1, kind: input, shape index: {}]
  %s2 = inlined_call_operand.vmem [shape: bf16[32,4], index: 2, kind: input, shape index: {}]
  %s3 = inlined_call_operand.vmem [shape: bf16[1,4], index: 3, kind: input, shape index: {}]
  %s4 = inlined_call_operand.vmem [shape: bf16[2,16,4], index: 4, kind: output, shape index: {}]
  %s5 = sld [smem:[#allocation0]]
  $region49: #{flux_forward.59} parent=0
    _
  %s7 = ssub.s32 1, %s5
  %s8 = scalar_select 0, %s7, %s5
  loop: start=0, step=1, limit=4
  $region2: #{flux_forward.59} parent=0 // loop_pre_header
    _
  $region3: #{flux_forward.59} parent=0 // loop_header
    %s10 = sphi 0, %s14
    %p11 = scmp.ge.s32.totalorder %s10, 4
    %s20 = sphi 0, %s22
    %s23 = sphi 0, %s20
    %s24 = sphi 0, %s23
    %s40 = sphi 0, %s24
    %s46 = sphi 0, %s48
    %s49 = sphi 0, %s46
    %s50 = sphi 0, %s49
    %s66 = sphi 0, %s50
    %s70 = sphi 0, %s70
    %s72 = sphi 0, %s70
    %s73 = sphi 0, %s72
    %s87 = sphi 0, %s73
    %s91 = sphi 0, %s91
    %s93 = sphi 0, %s91
    %s94 = sphi 0, %s93
    %s108 = sphi 0, %s94
    %s114 = sphi 0, %s116
    %s117 = sphi 0, %s114
    %s118 = sphi 0, %s117
    %s134 = sphi 0, %s118
  $region4: #{flux_forward.59} parent=0 // loop_header_branch
    %13 = sbr.rel (%p11) target = $region8
  $region5: #{flux_forward.59} parent=0 // loop_body
    %s15 = ssub.s32 %s10, 1
    %s16 = ssub.s32 %s10, 2
    %s17 = sadd.s32 %s10, 1
    %s18 = ssub.s32 %s10, %s17
    %p19 = scmp.eq.s32.totalorder %s18, 0
    %s21 = sadd.s32 %s20, 1
    %s22 = scalar_select %p19, %s20, %s21
    %p25 = pneg %p19
    %p26 = scmp.eq.s32.totalorder %s10, 1
    %p27 = por %p25, %p26
    %p28 = scmp.ne.s32.totalorder %s20, %s23
    %p29 = scmp.eq.s32.totalorder %s10, 0
    %p30 = por %p28, %p29
    %p31 = scmp.ne.s32.totalorder %s20, %s23
    %p32 = scmp.eq.s32.totalorder %s15, 1
    %p33 = por %p31, %p32
    %p34 = scmp.ne.s32.totalorder %s23, %s24
    %p35 = scmp.eq.s32.totalorder %s15, 0
    %p36 = por %p34, %p35
    %p37 = scmp.ne.s32.totalorder %s23, %s24
    %p38 = scmp.eq.s32.totalorder %s16, 1
    %p39 = por %p37, %p38
    %p41 = scmp.ne.s32.totalorder %s24, %s40
    %p42 = scmp.eq.s32.totalorder %s16, 0
    %p43 = por %p41, %p42
    %s44 = ssub.s32 %s10, %s17
    %p45 = scmp.eq.s32.totalorder %s44, 0
    %s47 = sadd.s32 %s46, 1
    %s48 = scalar_select %p45, %s46, %s47
    %p51 = pneg %p45
    %p52 = scmp.eq.s32.totalorder %s10, 1
    %p53 = por %p51, %p52
    %p54 = scmp.ne.s32.totalorder %s46, %s49
    %p55 = scmp.eq.s32.totalorder %s10, 0
    %p56 = por %p54, %p55
    %p57 = scmp.ne.s32.totalorder %s46, %s49
    %p58 = scmp.eq.s32.totalorder %s15, 1
    %p59 = por %p57, %p58
    %p60 = scmp.ne.s32.totalorder %s49, %s50
    %p61 = scmp.eq.s32.totalorder %s15, 0
    %p62 = por %p60, %p61
    %p63 = scmp.ne.s32.totalorder %s49, %s50
    %p64 = scmp.eq.s32.totalorder %s16, 1
    %p65 = por %p63, %p64
    %p67 = scmp.ne.s32.totalorder %s50, %s66
    %p68 = scmp.eq.s32.totalorder %s16, 0
    %p69 = por %p67, %p68
    %s71 = sadd.s32 %s70, 1
    %p74 = scmp.eq.s32.totalorder %s10, 1
    %p75 = scmp.ne.s32.totalorder %s70, %s72
    %p76 = scmp.eq.s32.totalorder %s10, 0
    %p77 = por %p75, %p76
    %p78 = scmp.ne.s32.totalorder %s70, %s72
    %p79 = scmp.eq.s32.totalorder %s15, 1
    %p80 = por %p78, %p79
    %p81 = scmp.ne.s32.totalorder %s72, %s73
    %p82 = scmp.eq.s32.totalorder %s15, 0
    %p83 = por %p81, %p82
    %p84 = scmp.ne.s32.totalorder %s72, %s73
    %p85 = scmp.eq.s32.totalorder %s16, 1
    %p86 = por %p84, %p85
    %p88 = scmp.ne.s32.totalorder %s73, %s87
    %p89 = scmp.eq.s32.totalorder %s16, 0
    %p90 = por %p88, %p89
    %s92 = sadd.s32 %s91, 1
    %p95 = scmp.eq.s32.totalorder %s10, 1
    %p96 = scmp.ne.s32.totalorder %s91, %s93
    %p97 = scmp.eq.s32.totalorder %s10, 0
    %p98 = por %p96, %p97
    %p99 = scmp.ne.s32.totalorder %s91, %s93
    %p100 = scmp.eq.s32.totalorder %s15, 1
    %p101 = por %p99, %p100
    %p102 = scmp.ne.s32.totalorder %s93, %s94
    %p103 = scmp.eq.s32.totalorder %s15, 0
    %p104 = por %p102, %p103
    %p105 = scmp.ne.s32.totalorder %s93, %s94
    %p106 = scmp.eq.s32.totalorder %s16, 1
    %p107 = por %p105, %p106
    %p109 = scmp.ne.s32.totalorder %s94, %s108
    %p110 = scmp.eq.s32.totalorder %s16, 0
    %p111 = por %p109, %p110
    %s112 = ssub.s32 %s10, %s17
    %p113 = scmp.eq.s32.totalorder %s112, 0
    %s115 = sadd.s32 %s114, 1
    %s116 = scalar_select %p113, %s114, %s115
    %p119 = pneg %p113
    %p120 = scmp.eq.s32.totalorder %s10, 1
    %p121 = por %p119, %p120
    %p122 = scmp.ne.s32.totalorder %s114, %s117
    %p123 = scmp.eq.s32.totalorder %s10, 0
    %p124 = por %p122, %p123
    %p125 = scmp.ne.s32.totalorder %s114, %s117
    %p126 = scmp.eq.s32.totalorder %s15, 1
    %p127 = por %p125, %p126
    %p128 = scmp.ne.s32.totalorder %s117, %s118
    %p129 = scmp.eq.s32.totalorder %s15, 0
    %p130 = por %p128, %p129
    %p131 = scmp.ne.s32.totalorder %s117, %s118
    %p132 = scmp.eq.s32.totalorder %s16, 1
    %p133 = por %p131, %p132
    %p135 = scmp.ne.s32.totalorder %s118, %s134
    %p136 = scmp.eq.s32.totalorder %s16, 0
    %p137 = por %p135, %p136
    %p138 = scmp.le.s32.totalorder 1, %s10
    %p139 = scmp.lt.s32.totalorder %s10, 3
    %p140 = pnand %p138, %p139
    %p141 = pneg %p140
    // Predicated region
    $region9: #{flux_forward.59} parent=5 // pred_check
      _
    $region10: #{flux_forward.59} parent=5 // pred_check_branch
      %143 = sbr.rel (%p140) target = $region12
    $region11: #{flux_forward.59} parent=5 // pred_region
      %s144 = ssub.s32 %s10, 1
      // Predicated region
      $region13: #{flux_forward.59} parent=11 // pred_check
        %p145 = pneg %p83
      $region14: #{flux_forward.59} parent=11 // pred_check_branch
        %147 = sbr.rel (%p145) target = $region16
      $region15: #{flux_forward.59} parent=11 // pred_region
        _
      $region16: #{flux_forward.59} parent=11 // pred_fallthru
        _
      // Predicated region
      $region17: #{flux_forward.59} parent=11 // pred_check
        %p148 = pneg %p104
      $region18: #{flux_forward.59} parent=11 // pred_check_branch
        %150 = sbr.rel (%p148) target = $region20
      $region19: #{flux_forward.59} parent=11 // pred_region
        _
      $region20: #{flux_forward.59} parent=11 // pred_fallthru
        _
    $region12: #{flux_forward.59} parent=5 // pred_fallthru
      _
    %p151 = scmp.lt.s32.totalorder %s10, 2
    // Predicated region
    $region21: #{flux_forward.59} parent=5 // pred_check
      %p152 = pneg %p151
    $region22: #{flux_forward.59} parent=5 // pred_check_branch
      %154 = sbr.rel (%p152) target = $region24
    $region23: #{flux_forward.59} parent=5 // pred_region
      // Predicated region
      $region25: #{flux_forward.59} parent=23 // pred_check
        %p155 = pneg %p30
      $region26: #{flux_forward.59} parent=23 // pred_check_branch
        %157 = sbr.rel (%p155) target = $region28
      $region27: #{flux_forward.59} parent=23 // pred_region
        %p158 = scmp.lt.s32.totalorder %s10, 1
        %s159 = scalar_select %p158, %s10, 1
        %s160 = smul.addr %s159, 2
        %s161 = smul.addr %s160, 4
        %s162 = scalar_lea.vmem %s0, %s161
      $region28: #{flux_forward.59} parent=23 // pred_fallthru
        _
      // Predicated region
      $region29: #{flux_forward.59} parent=23 // pred_check
        %p163 = pneg %p56
      $region30: #{flux_forward.59} parent=23 // pred_check_branch
        %165 = sbr.rel (%p163) target = $region32
      $region31: #{flux_forward.59} parent=23 // pred_region
        %p166 = scmp.lt.s32.totalorder %s10, 1
        %s167 = scalar_select %p166, %s10, 1
        %s168 = scalar_lea.vmem %s1, %s167
      $region32: #{flux_forward.59} parent=23 // pred_fallthru
        _
    $region24: #{flux_forward.59} parent=5 // pred_fallthru
      _
    %p169 = scmp.le.s32.totalorder 1, %s10
    %p170 = scmp.lt.s32.totalorder %s10, 3
    %p171 = pnand %p169, %p170
    %p172 = pneg %p171
    // Predicated region
    $region33: #{flux_forward.59} parent=5 // pred_check
      _
    $region34: #{flux_forward.59} parent=5 // pred_check_branch
      %174 = sbr.rel (%p171) target = $region36
    $region35: #{flux_forward.59} parent=5 // pred_region
      %s175 = ssub.s32 %s10, 1
      %p176 = scmp.lt.s32.totalorder %s15, 1
      %s177 = scalar_select %p176, %s15, 1
      %s178 = smul.addr %s177, 2
      %s179 = smul.addr %s178, 4
      %s180 = scalar_lea.vmem %s0, %s179
      %p181 = pneg %p36
      %p182 = pneg %p33
      %p183 = scmp.lt.s32.totalorder %s15, 1
      %s184 = scalar_select %p183, %s15, 1
      %s185 = scalar_lea.vmem %s1, %s184
      %p186 = pneg %p62
      %p187 = pneg %p59
      %p188 = pneg %p83
      %p189 = pneg %p80
      %p190 = pneg %p104
      %p191 = pneg %p101
      %p192 = pneg %p130
      %p193 = pneg %p127
      %p194 = scmp.lt.s32.totalorder %s15, 1
      %s195 = scalar_select %p194, %s15, 1
      %s196 = smul.addr %s195, 2
      %s197 = smul.addr %s196, 4
      %s198 = scalar_lea.vmem %s4, %s197
      %p199 = scmp.lt.s32.totalorder %s15, 1
      %s200 = scalar_select %p199, %s15, 1
      %s201 = smul.addr %s200, 2
      %s202 = smul.addr %s201, 4
      %s203 = scalar_lea.vmem %s0, %s202
      %p204 = scmp.lt.s32.totalorder %s15, 1
      %s205 = scalar_select %p204, %s15, 1
      %s206 = scalar_lea.vmem %s1, %s205
      %p207 = scmp.lt.s32.totalorder %s15, 1
      %s208 = scalar_select %p207, %s15, 1
      %s209 = smul.addr %s208, 2
      %s210 = smul.addr %s209, 4
      %s211 = scalar_lea.vmem %s4, %s210
      %v213 = vld [vmem:[%s203] sm:$0xf]
      %v214 = vld [vmem:[%s203 + $0x4] sm:$0xf]
      %v215 = vunpack.c.l.bf16 %v213
      %v216 = vunpack.c.l.bf16 %v214
      %v217 = vld [vmem:[%s206] sm:$0x1]
      %v218 = vunpack.c.l.bf16 %v217
      %vm219 = vcmask 261120
      %v220 = vsel %vm219, %v215, 0.0
      %221 = vadd.xlane.f32.xlu0 %v220
      %v222 = vpop.xlane.xlu0 %221
      %v223 = vsel %vm219, %v216, 0.0
      %224 = vadd.xlane.f32.xlu0 %v223
      %v225 = vpop.xlane.xlu0 %224
      %v226 = vrcp.pop 32.0
      %v227 = vmul.f32 32.0, %v226
      %v228 = vsub.f32 1.0, %v227
      %v229 = vmul.f32 %v226, %v228
      %v230 = vadd.f32 %v226, %v229
      %vm231 = vweird.f32 %v226
      %v232 = vsel %vm231, %v226, %v230
      %v233 = vmul.f32 %v222, %v232
      %v234 = vmul.f32 %v225, %v232
      %v235 = vsub.f32 %v215, %v233
      %v236 = vsub.f32 %v216, %v234
      %v237 = vmul.f32 %v235, %v235
      %v238 = vmul.f32 %v236, %v236
      %v239 = vsel %vm219, %v237, 0.0
      %240 = vadd.xlane.f32.xlu0 %v239
      %v241 = vpop.xlane.xlu0 %240
      %v242 = vsel %vm219, %v238, 0.0
      %243 = vadd.xlane.f32.xlu0 %v242
      %v244 = vpop.xlane.xlu0 %243
      %v245 = vmul.f32 %v241, %v232
      %v246 = vmul.f32 %v244, %v232
      %v247 = vadd.f32 %v245, 1e-06
      %v248 = vadd.f32 %v246, 1e-06
      %v249 = vrsqrt.pop %v247
      %v250 = vmul.f32 %v249, %v247
      %v251 = vmul.f32 %v250, %v249
      %v252 = vmul.f32 0.5, %v251
      %v253 = vsub.f32 1.5, %v252
      %v254 = vmul.f32 %v249, %v253
      %vm255 = vweird.f32 %v247
      %vm256 = vweird.f32 %v249
      %vm257 = vmor %vm255, %vm256
      %v258 = vsel %vm257, %v249, %v254
      %v259 = vrsqrt.pop %v248
      %v260 = vmul.f32 %v259, %v248
      %v261 = vmul.f32 %v260, %v259
      %v262 = vmul.f32 0.5, %v261
      %v263 = vsub.f32 1.5, %v262
      %v264 = vmul.f32 %v259, %v263
      %vm265 = vweird.f32 %v248
      %vm266 = vweird.f32 %v259
      %vm267 = vmor %vm265, %vm266
      %v268 = vsel %vm267, %v259, %v264
      %v269 = vmul.f32 %v235, %v258
      %v270 = vmul.f32 %v236, %v268
      %v271 = vadd.f32 %v218, 1.0
      %v272 = vperm.slane %v271, 1
      %v273 = vmul.f32 %v272, %v269
      %v274 = vmul.f32 %v272, %v270
      %v275 = vperm.slane %v218, 0
      %v276 = vadd.f32 %v273, %v275
      %v277 = vadd.f32 %v274, %v275
      %v278 = vpack.c.bf16 %v277, %v276
      %v279 = vld [vmem:[%s2] sm:$0xf]
      %v280 = vld [vmem:[%s2 + $0x4] sm:$0xf]
      %v281 = vld [vmem:[%s2 + $0x8] sm:$0xf]
      %v282 = vld [vmem:[%s2 + $0xc] sm:$0xf]
      %v283 = vld [vmem:[%s3] sm:$0x1]
      %v284 = vunpack.c.l.bf16 %v283
      %v285 = vperm.slane %v284, 0
      %v290 = vunpack.c.l.b16 %v279
      %v291 = vunpack.c.l.b16 %v280
      %v292 = vunpack.c.l.b16 %v281
      %v293 = vunpack.c.l.b16 %v282
      %v294 = vpack.c.b16 %v291, %v290
      %v295 = vpack.c.b16 %v293, %v292
      %v299 = vsel %vm219, %v278, 0
      %301 = vmatpush.bf16.msra.mxu0 0
      %302 = vmatpush.bf16.msra.mxu0 0
      %303 = vmatpush.bf16.msra.mxu0 0
      %304 = vmatpush.bf16.msra.mxu0 0
      %305 = vmatpush.bf16.msra.mxu0 0
      %306 = vmatpush.bf16.msra.mxu0 0
      %307 = vmatpush.bf16.msra.mxu0 %v295
      %308 = vmatpush.bf16.msra.mxu0 %v294
      %309 = vmatmul.bf16.gmra.mxu0 %v299
      %v310 = vpop.f32.mrf.mxu0
      %v311 = vadd.f32 %v285, %v310
      %v312 = vpop.f32.mrf.mxu0
      %v313 = vadd.f32 %v285, %v312
      %314 = vdwg.mxu0
      %v315 = vpack.c.bf16 %v311, %v311
      %v316 = vpack.c.bf16 %v313, %v313
      %vm317 = vcmask 27648
      %318 = vst.msk [vmem:[%s211] sm:$0xf] %vm317, %v315
      %319 = vst.msk [vmem:[%s211 + $0x4] sm:$0xf] %vm317, %v316
      %p320 = scmp.lt.s32.totalorder %s15, 1
      %s321 = scalar_select %p320, %s15, 1
      %s322 = smul.addr %s321, 2
      %s323 = smul.addr %s322, 4
      %s324 = scalar_lea.vmem %s4, %s323
      // Predicated region
      $region37: #{flux_forward.59} parent=35 // pred_check
        %p325 = pneg %p127
      $region38: #{flux_forward.59} parent=35 // pred_check_branch
        %327 = sbr.rel (%p325) target = $region40
      $region39: #{flux_forward.59} parent=35 // pred_region
        _
      $region40: #{flux_forward.59} parent=35 // pred_fallthru
        _
    $region36: #{flux_forward.59} parent=5 // pred_fallthru
      _
    %p328 = scmp.le.s32.totalorder 2, %s10
    // Predicated region
    $region41: #{flux_forward.59} parent=5 // pred_check
      %p329 = pneg %p328
    $region42: #{flux_forward.59} parent=5 // pred_check_branch
      %331 = sbr.rel (%p329) target = $region44
    $region43: #{flux_forward.59} parent=5 // pred_region
      %s332 = ssub.s32 %s10, 2
      // Predicated region
      $region45: #{flux_forward.59} parent=43 // pred_check
        %p333 = pneg %p133
      $region46: #{flux_forward.59} parent=43 // pred_check_branch
        %335 = sbr.rel (%p333) target = $region48
      $region47: #{flux_forward.59} parent=43 // pred_region
        %p336 = scmp.lt.s32.totalorder %s16, 1
        %s337 = scalar_select %p336, %s16, 1
        %s338 = smul.addr %s337, 2
        %s339 = smul.addr %s338, 4
        %s340 = scalar_lea.vmem %s4, %s339
      $region48: #{flux_forward.59} parent=43 // pred_fallthru
        _
    $region44: #{flux_forward.59} parent=5 // pred_fallthru
      _
  $region6: #{flux_forward.59} parent=0 // loop_footer
    %s14 = sadd.s32 1, %s10
  $region7: #{flux_forward.59} parent=0 // loop_footer_branch
    %9 = sbr.rel target = $region3
  $region8: #{flux_forward.59} parent=0 // loop_exit
    _

</llo_original>
